<compile_context>
chip_gen: v5e
topology: v5e:2x2
jax: 0.10.0
libtpu: 0.0.40
codegen_flags: <defaults>
</compile_context>

<pallas_src>
import jax
import jax.numpy as jnp
from jax.experimental import pallas as pl
from jax.experimental.pallas import tpu as pltpu

BN_EPS = 1e-5
LANE = 128
MLP_DIMS = (1024, 1024, 512)


# ---------------------------------------------------------------------------
# Kernel
# ---------------------------------------------------------------------------
def _conv1d_k3_flat(h, w_ref, b_ref, not_first, not_last):
    """Conv1d(kernel_size=3, padding=1) as ONE fused matmul over the 3 taps.

    h:        (BL, Cin) f32 activations, rows = flattened (batch, seq).
    w_ref:    (Cin, 3*Cout) bf16, taps for [x[l-1], x[l], x[l+1]] concatenated.
    b_ref:    (1, Cout) f32 bias.
    not_first / not_last: (BL, Cout) f32 masks that zero the first / last row
    of every sequence (this also prevents leakage across batch boundaries
    when shifting along the flattened row axis).
    """
    y = jnp.dot(h.astype(jnp.bfloat16), w_ref[...],
                preferred_element_type=jnp.float32)          # (BL, 3*Cout) f32
    c = y.shape[-1] // 3
    p_prev, p_mid, p_next = y[:, :c], y[:, c:2 * c], y[:, 2 * c:]
    zrow = jnp.zeros((1, c), jnp.float32)
    # TODO(synk): the two shifted copies could use pltpu.roll (XLU) instead of
    #             concatenate to avoid materializing the shifted panels.
    prev = jnp.concatenate([zrow, p_prev[:-1, :]], axis=0) * not_first  # y[l]+=W0 x[l-1]
    nxt = jnp.concatenate([p_next[1:, :], zrow], axis=0) * not_last     # y[l]+=W2 x[l+1]
    return p_mid + prev + nxt + b_ref[...]


def _bottleneck_block(x, params, not_first, not_last):
    """Bottleneck residual block; eval-mode BatchNorm folded to scale/shift."""
    s1, t1, w1, c1, s2, t2, w2, c2 = params
    h = x * s1[...] + t1[...]                                           # bn1
    h = jnp.maximum(_conv1d_k3_flat(h, w1, c1, not_first, not_last), 0.0)
    h = h * s2[...] + t2[...]                                           # bn2
    h = jnp.maximum(_conv1d_k3_flat(h, w2, c2, not_first, not_last), 0.0)
    return h + x                                                        # residual


def cnn_kernel(ids_ref, poolw_ref, emb_ref, *refs):
    out_ref = refs[-1]
    blk1, blk2, mlp = refs[0:8], refs[8:16], refs[16:24]

    bb, seq = ids_ref.shape
    vp, emb_dim = emb_ref.shape
    bl = bb * seq

    # ---- embedding lookup: one_hot(ids) @ table as a bf16 MXU matmul ----
    ids = ids_ref[...]
    iota_v = jax.lax.broadcasted_iota(jnp.int32, (bb, seq, vp), 2)
    onehot = jnp.where(iota_v == ids[:, :, None], 1.0, 0.0).astype(jnp.bfloat16)
    x = jnp.dot(onehot.reshape(bl, vp), emb_ref[...],
                preferred_element_type=jnp.float32)          # (BL, emb) f32

    # ---- per-row sequence-boundary masks (built once, reused by all convs) --
    l_pos = jax.lax.broadcasted_iota(jnp.int32, (bb, seq, LANE), 1).reshape(bl, LANE)
    not_first = (l_pos != 0).astype(jnp.float32)
    not_last = (l_pos != (seq - 1)).astype(jnp.float32)

    x = _bottleneck_block(x, blk1, not_first, not_last)      # layer1
    x = _bottleneck_block(x, blk2, not_first, not_last)      # layer2

    # ---- masked average pooling (mask/length folded into pooling weights) --
    pooled = jnp.sum(x.reshape(bb, seq, emb_dim) * poolw_ref[...], axis=1)

    # ---- MLP head (Dropout(0.1) is identity in eval mode) ----
    w1, b1, w2, b2, w3, b3, w4, b4 = mlp
    h = jnp.dot(pooled.astype(jnp.bfloat16), w1[...], preferred_element_type=jnp.float32)
    h = jnp.maximum(h + b1[...], 0.0)
    h = jnp.dot(h.astype(jnp.bfloat16), w2[...], preferred_element_type=jnp.float32)
    h = jnp.maximum(h + b2[...], 0.0)
    h = jnp.dot(h.astype(jnp.bfloat16), w3[...], preferred_element_type=jnp.float32)
    h = jnp.maximum(h + b3[...], 0.0)
    h = jnp.dot(h.astype(jnp.bfloat16), w4[...], preferred_element_type=jnp.float32)
    out_ref[...] = (h + b4[...]).astype(out_ref.dtype)


# ---------------------------------------------------------------------------
# pallas_call wrapper
# ---------------------------------------------------------------------------
def _const_spec(shape):
    zero_idx = (0,) * len(shape)
    return pl.BlockSpec(shape, lambda i, _z=zero_idx: _z)


def _vmem_limit_bytes():
    # v5e/v6e have 128 MiB physical VMEM, v7x 64 MiB; leave DMA headroom.
    try:
        cap = int(pltpu.get_tpu_info().vmem_capacity_bytes)
    except Exception:
        cap = 64 << 20
    return int(max(32 << 20, min(cap - (16 << 20), 100 << 20)))


def _pick_block_b(batch, seq_len):
    """Batch tile: cap rows*seq (per-tile f32 activations up to 384 lanes),
    prefer >= 2 tiles so both v7x TensorCores get work, keep multiples of 8."""
    if batch <= 8:
        return batch
    cap = max(8, min(256, 4096 // max(seq_len, 1)))
    half = pl.cdiv(batch, 2)
    bb = max(8, min(cap, half))
    return max(8, (bb // 8) * 8)


def cnn_forward(ids, mask, prep, num_classes, *, block_b=None):
    """ids: (B, L) int, mask: (B, L) float/bool -> logits (B, num_classes) f32."""
    B, L = ids.shape
    c_pad = prep["mlp"][-1][0].shape[1]

    mask_f = mask.astype(jnp.float32)
    # Fold mask and 1/length into per-position pooling weights (rows whose mask
    # is all-zero get 0 instead of torch's 0/0 NaN).
    pool_w = (mask_f / jnp.maximum(mask_f.sum(axis=1, keepdims=True), 1e-9))[:, :, None]

    if block_b is None:
        block_b = _pick_block_b(B, L)
    Bp = pl.cdiv(B, block_b) * block_b

    ids = ids.astype(jnp.int32)
    if Bp != B:
        ids = jnp.pad(ids, ((0, Bp - B), (0, 0)))
        pool_w = jnp.pad(pool_w, ((0, Bp - B), (0, 0), (0, 0)))

    flat = [prep["emb"], *prep["block1"], *prep["block2"]]
    for w, b in prep["mlp"]:
        flat += [w, b]

    in_specs = [
        pl.BlockSpec((block_b, L), lambda i: (i, 0)),
        pl.BlockSpec((block_b, L, 1), lambda i: (i, 0, 0)),
    ] + [_const_spec(a.shape) for a in flat]

    logits = pl.pallas_call(
        cnn_kernel,
        out_shape=jax.ShapeDtypeStruct((Bp, c_pad), jnp.float32),
        grid_spec=pltpu.PrefetchScalarGridSpec(
            num_scalar_prefetch=0,
            grid=(Bp // block_b,),
            in_specs=in_specs,
            out_specs=pl.BlockSpec((block_b, c_pad), lambda i: (i, 0)),
        ),
        compiler_params=pltpu.CompilerParams(
            dimension_semantics=("parallel",),
            vmem_limit_bytes=_vmem_limit_bytes(),
        ),
    )(ids, pool_w, *flat)
    return logits[:B, :num_classes]


# ---------------------------------------------------------------------------
# Parameter init (PyTorch-default) and kernel-layout preparation
# ---------------------------------------------------------------------------
def _uniform(key, shape, bound):
    return jax.random.uniform(key, shape, jnp.float32, -bound, bound)


def init_conv1d(key, cin, cout, k=3):
    kw, kb = jax.random.split(key)
    bound = 1.0 / (cin * k) ** 0.5
    return _uniform(kw, (cout, cin, k), bound), _uniform(kb, (cout,), bound)


def init_linear(key, fin, fout):
    kw, kb = jax.random.split(key)
    bound = 1.0 / fin ** 0.5
    return _uniform(kw, (fout, fin), bound), _uniform(kb, (fout,), bound)


def init_bn(c):
    return dict(gamma=jnp.ones((c,), jnp.float32), beta=jnp.zeros((c,), jnp.float32),
                mean=jnp.zeros((c,), jnp.float32), var=jnp.ones((c,), jnp.float32))


def init_block(key, cin, cout):
    k1, k2 = jax.random.split(key)
    return dict(bn1=init_bn(cin), conv1=init_conv1d(k1, cin, cout // 2),
                bn2=init_bn(cout // 2), conv2=init_conv1d(k2, cout // 2, cout))


def init_cnn(key, num_embeddings, emb_dim=128, hidden_dim=128, num_classes=3):
    ke, kb1, kb2, k1, k2, k3, k4 = jax.random.split(key, 7)
    emb = jax.random.normal(ke, (num_embeddings, emb_dim), jnp.float32)
    emb = emb.at[0].set(0.0)                       # padding_idx=0
    return dict(
        emb=emb,
        block1=init_block(kb1, emb_dim, hidden_dim),
        block2=init_block(kb2, hidden_dim, hidden_dim),
        mlp=[init_linear(k1, hidden_dim, MLP_DIMS[0]),
             init_linear(k2, MLP_DIMS[0], MLP_DIMS[1]),
             init_linear(k3, MLP_DIMS[1], MLP_DIMS[2]),
             init_linear(k4, MLP_DIMS[2], num_classes)],
    )


def _fold_bn(bn, pad_to):
    scale = bn["gamma"] / jnp.sqrt(bn["var"] + BN_EPS)
    shift = bn["beta"] - bn["mean"] * scale
    c = scale.shape[0]
    if pad_to > c:                                  # padded lanes stay exactly 0
        scale = jnp.pad(scale, (0, pad_to - c), constant_values=1.0)
        shift = jnp.pad(shift, (0, pad_to - c))
    return (scale.reshape(1, -1).astype(jnp.float32),
            shift.reshape(1, -1).astype(jnp.float32))


def _prep_conv(conv, cin_pad, cout_pad):
    w, b = conv                                     # torch layout (Cout, Cin, K=3)
    cout, cin, _ = w.shape
    wt = jnp.transpose(w, (2, 1, 0))                # (K, Cin, Cout)
    wt = jnp.pad(wt, ((0, 0), (0, cin_pad - cin), (0, cout_pad - cout)))
    w_cat = jnp.concatenate([wt[0], wt[1], wt[2]], axis=1)   # (Cin_pad, 3*Cout_pad)
    bias = jnp.pad(b, (0, cout_pad - cout)).reshape(1, -1).astype(jnp.float32)
    return w_cat.astype(jnp.bfloat16), bias


def _prep_block(blk):
    cin = blk["bn1"]["gamma"].shape[0]
    mid = blk["bn2"]["gamma"].shape[0]
    mid_pad = pl.cdiv(mid, LANE) * LANE             # pad bottleneck mid to 128 lanes
    s1, t1 = _fold_bn(blk["bn1"], cin)
    w1, c1 = _prep_conv(blk["conv1"], cin, mid_pad)
    s2, t2 = _fold_bn(blk["bn2"], mid_pad)
    w2, c2 = _prep_conv(blk["conv2"], mid_pad, cin)
    return (s1, t1, w1, c1, s2, t2, w2, c2)


def prepare_params(params, num_classes):
    V, E = params["emb"].shape
    if E != LANE:
        raise NotImplementedError("kernel assumes emb_dim == hidden_dim == 128")
    Vp = pl.cdiv(V, LANE) * LANE                    # lane-pad the vocabulary
    emb = params["emb"]
    if Vp != V:
        emb = jnp.pad(emb, ((0, Vp - V), (0, 0)))
    emb = emb.astype(jnp.bfloat16)

    # Final layer zero-padded to a multiple of 128 output lanes so the store is
    # lane-dense (unmasked vst); logits are sliced outside the kernel.
    c_pad = max(LANE, pl.cdiv(num_classes, LANE) * LANE)
    mlp = []
    n = len(params["mlp"])
    for li, (w, b) in enumerate(params["mlp"]):
        wt = jnp.transpose(w)                       # (in, out) == W.T
        bb = b.reshape(1, -1)
        if li == n - 1 and c_pad > wt.shape[1]:
            pad = c_pad - wt.shape[1]
            wt = jnp.pad(wt, ((0, 0), (0, pad)))
            bb = jnp.pad(bb, ((0, 0), (0, pad)))
        mlp.append((wt.astype(jnp.bfloat16), bb.astype(jnp.float32)))

    return dict(emb=emb,
                block1=_prep_block(params["block1"]),
                block2=_prep_block(params["block2"]),
                mlp=mlp)


# ---------------------------------------------------------------------------
# Pure-JAX reference (mirrors the kernel math, incl. bf16 weights/casts)
# ---------------------------------------------------------------------------
def reference_forward(ids, mask, prep, num_classes):
    emb = prep["emb"].astype(jnp.float32)
    x = emb[ids]                                    # (B, L, E)

    def conv(h, w_cat, bias):
        hb = h.astype(jnp.bfloat16).astype(jnp.float32)
        y = jnp.einsum("blc,cd->bld", hb, w_cat.astype(jnp.float32),
                       precision=jax.lax.Precision.HIGHEST)
        c = y.shape[-1] // 3
        p0, p1, p2 = y[..., :c], y[..., c:2 * c], y[..., 2 * c:]
        z = jnp.zeros_like(p0[:, :1])
        prev = jnp.concatenate([z, p0[:, :-1]], axis=1)
        nxt = jnp.concatenate([p2[:, 1:], z], axis=1)
        return p1 + prev + nxt + bias

    def block(h, p):
        s1, t1, w1, c1, s2, t2, w2, c2 = p
        r = h
        h = jnp.maximum(conv(h * s1 + t1, w1, c1), 0.0)
        h = jnp.maximum(conv(h * s2 + t2, w2, c2), 0.0)
        return h + r

    x = block(x, prep["block1"])
    x = block(x, prep["block2"])

    m = mask.astype(jnp.float32)
    pw = m / jnp.maximum(m.sum(axis=1, keepdims=True), 1e-9)
    h = jnp.sum(x * pw[:, :, None], axis=1)

    for li, (w, b) in enumerate(prep["mlp"]):
        h = jnp.dot(h.astype(jnp.bfloat16).astype(jnp.float32), w.astype(jnp.float32),
                    precision=jax.lax.Precision.HIGHEST) + b
        if li < len(prep["mlp"]) - 1:
            h = jnp.maximum(h, 0.0)
    return h[:, :num_classes]


if __name__ == "__main__":
    B, L = 2, 16
    NUM_EMB = 64          # small vocabulary for the demo
    EMB_DIM = 128         # module default
    HIDDEN = 128          # module default
    NUM_CLASSES = 3       # module default

    key = jax.random.PRNGKey(0)
    kp, kid = jax.random.split(key)
    params = init_cnn(kp, NUM_EMB, EMB_DIM, HIDDEN, NUM_CLASSES)
    prep = prepare_params(params, NUM_CLASSES)

    # token ids (0 == padding_idx) and the matching float mask
    lengths = jnp.array([L, L // 2], dtype=jnp.int32)
    mask = (jnp.arange(L)[None, :] < lengths[:, None]).astype(jnp.float32)
    ids = jax.random.randint(kid, (B, L), 1, NUM_EMB)
    ids = jnp.where(mask > 0, ids, 0).astype(jnp.int32)

    logits = cnn_forward(ids, mask, prep, NUM_CLASSES)
    logits = jax.block_until_ready(logits)

    ref = reference_forward(ids, mask, prep, NUM_CLASSES)
    assert logits.shape == (B, NUM_CLASSES)
    max_err = float(jnp.max(jnp.abs(logits - ref)))
    assert jnp.allclose(logits, ref, atol=2e-2, rtol=2e-2), f"mismatch: {max_err}"
    print("KERNEL_OK")
</pallas_src>

<mosaic_0001>
module attributes {stable_mosaic.version = 11 : i64} {
  func.func @cnn_kernel(%arg0: i32, %arg1: memref<2x16xi32, #tpu.memory_space<vmem>>, %arg2: memref<2x16x1xf32, #tpu.memory_space<vmem>>, %arg3: memref<128x128xbf16, #tpu.memory_space<vmem>>, %arg4: memref<1x128xf32, #tpu.memory_space<vmem>>, %arg5: memref<1x128xf32, #tpu.memory_space<vmem>>, %arg6: memref<128x384xbf16, #tpu.memory_space<vmem>>, %arg7: memref<1x128xf32, #tpu.memory_space<vmem>>, %arg8: memref<1x128xf32, #tpu.memory_space<vmem>>, %arg9: memref<1x128xf32, #tpu.memory_space<vmem>>, %arg10: memref<128x384xbf16, #tpu.memory_space<vmem>>, %arg11: memref<1x128xf32, #tpu.memory_space<vmem>>, %arg12: memref<1x128xf32, #tpu.memory_space<vmem>>, %arg13: memref<1x128xf32, #tpu.memory_space<vmem>>, %arg14: memref<128x384xbf16, #tpu.memory_space<vmem>>, %arg15: memref<1x128xf32, #tpu.memory_space<vmem>>, %arg16: memref<1x128xf32, #tpu.memory_space<vmem>>, %arg17: memref<1x128xf32, #tpu.memory_space<vmem>>, %arg18: memref<128x384xbf16, #tpu.memory_space<vmem>>, %arg19: memref<1x128xf32, #tpu.memory_space<vmem>>, %arg20: memref<128x1024xbf16, #tpu.memory_space<vmem>>, %arg21: memref<1x1024xf32, #tpu.memory_space<vmem>>, %arg22: memref<1024x1024xbf16, #tpu.memory_space<vmem>>, %arg23: memref<1x1024xf32, #tpu.memory_space<vmem>>, %arg24: memref<1024x512xbf16, #tpu.memory_space<vmem>>, %arg25: memref<1x512xf32, #tpu.memory_space<vmem>>, %arg26: memref<512x128xbf16, #tpu.memory_space<vmem>>, %arg27: memref<1x128xf32, #tpu.memory_space<vmem>>, %arg28: memref<2x128xf32, #tpu.memory_space<vmem>>) attributes {dimension_semantics = [#tpu.dimension_semantics<parallel>], iteration_bounds = array<i64: 1>, scalar_prefetch = 0 : i64, scratch_operands = 0 : i64, tpu.core_type = #tpu.core_type<tc>, window_params = [{transform_indices = @transform_0, window_bounds = array<i64: 2, 16>}, {transform_indices = @transform_1, window_bounds = array<i64: 2, 16, 1>}, {pipeline_mode = #tpu.pipeline_mode<synchronous>, transform_indices = @transform_2, window_bounds = array<i64: 128, 128>}, {pipeline_mode = #tpu.pipeline_mode<synchronous>, transform_indices = @transform_3, window_bounds = array<i64: 1, 128>}, {pipeline_mode = #tpu.pipeline_mode<synchronous>, transform_indices = @transform_4, window_bounds = array<i64: 1, 128>}, {pipeline_mode = #tpu.pipeline_mode<synchronous>, transform_indices = @transform_5, window_bounds = array<i64: 128, 384>}, {pipeline_mode = #tpu.pipeline_mode<synchronous>, transform_indices = @transform_6, window_bounds = array<i64: 1, 128>}, {pipeline_mode = #tpu.pipeline_mode<synchronous>, transform_indices = @transform_7, window_bounds = array<i64: 1, 128>}, {pipeline_mode = #tpu.pipeline_mode<synchronous>, transform_indices = @transform_8, window_bounds = array<i64: 1, 128>}, {pipeline_mode = #tpu.pipeline_mode<synchronous>, transform_indices = @transform_9, window_bounds = array<i64: 128, 384>}, {pipeline_mode = #tpu.pipeline_mode<synchronous>, transform_indices = @transform_10, window_bounds = array<i64: 1, 128>}, {pipeline_mode = #tpu.pipeline_mode<synchronous>, transform_indices = @transform_11, window_bounds = array<i64: 1, 128>}, {pipeline_mode = #tpu.pipeline_mode<synchronous>, transform_indices = @transform_12, window_bounds = array<i64: 1, 128>}, {pipeline_mode = #tpu.pipeline_mode<synchronous>, transform_indices = @transform_13, window_bounds = array<i64: 128, 384>}, {pipeline_mode = #tpu.pipeline_mode<synchronous>, transform_indices = @transform_14, window_bounds = array<i64: 1, 128>}, {pipeline_mode = #tpu.pipeline_mode<synchronous>, transform_indices = @transform_15, window_bounds = array<i64: 1, 128>}, {pipeline_mode = #tpu.pipeline_mode<synchronous>, transform_indices = @transform_16, window_bounds = array<i64: 1, 128>}, {pipeline_mode = #tpu.pipeline_mode<synchronous>, transform_indices = @transform_17, window_bounds = array<i64: 128, 384>}, {pipeline_mode = #tpu.pipeline_mode<synchronous>, transform_indices = @transform_18, window_bounds = array<i64: 1, 128>}, {pipeline_mode = #tpu.pipeline_mode<synchronous>, transform_indices = @transform_19, window_bounds = array<i64: 128, 1024>}, {pipeline_mode = #tpu.pipeline_mode<synchronous>, transform_indices = @transform_20, window_bounds = array<i64: 1, 1024>}, {pipeline_mode = #tpu.pipeline_mode<synchronous>, transform_indices = @transform_21, window_bounds = array<i64: 1024, 1024>}, {pipeline_mode = #tpu.pipeline_mode<synchronous>, transform_indices = @transform_22, window_bounds = array<i64: 1, 1024>}, {pipeline_mode = #tpu.pipeline_mode<synchronous>, transform_indices = @transform_23, window_bounds = array<i64: 1024, 512>}, {pipeline_mode = #tpu.pipeline_mode<synchronous>, transform_indices = @transform_24, window_bounds = array<i64: 1, 512>}, {pipeline_mode = #tpu.pipeline_mode<synchronous>, transform_indices = @transform_25, window_bounds = array<i64: 512, 128>}, {pipeline_mode = #tpu.pipeline_mode<synchronous>, transform_indices = @transform_26, window_bounds = array<i64: 1, 128>}, {transform_indices = @transform_27, window_bounds = array<i64: 2, 128>}]} {
    %c0 = arith.constant 0 : index
    %c0_0 = arith.constant 0 : index
    %0 = vector.load %arg1[%c0, %c0_0] : memref<2x16xi32, #tpu.memory_space<vmem>>, vector<2x16xi32>
    %1 = tpu.iota {dimensions = array<i32: 2>} : vector<2x16x128xi32>
    %2 = vector.shape_cast %0 : vector<2x16xi32> to vector<2x16x1xi32>
    %3 = vector.broadcast %2 : vector<2x16x1xi32> to vector<2x16x128xi32>
    %4 = arith.cmpi eq, %1, %3 : vector<2x16x128xi32>
    %cst = arith.constant 1.000000e+00 : f32
    %cst_1 = arith.constant 0.000000e+00 : f32
    %5 = vector.broadcast %cst : f32 to vector<2x16x128xf32>
    %6 = vector.broadcast %cst_1 : f32 to vector<2x16x128xf32>
    %7 = arith.select %4, %5, %6 : vector<2x16x128xi1>, vector<2x16x128xf32>
    %8 = arith.truncf %7 : vector<2x16x128xf32> to vector<2x16x128xbf16>
    %9 = vector.shape_cast %8 : vector<2x16x128xbf16> to vector<32x128xbf16>
    %c0_2 = arith.constant 0 : index
    %c0_3 = arith.constant 0 : index
    %10 = vector.load %arg3[%c0_2, %c0_3] : memref<128x128xbf16, #tpu.memory_space<vmem>>, vector<128x128xbf16>
    %cst_4 = arith.constant dense<0.000000e+00> : vector<32x128xf32>
    %11 = tpu.matmul %9, %10, %cst_4 {dimension_numbers = #tpu.dot_dimension_numbers<[1], [0], [0], [1], [0, 0, 1, 1], [], []>} : vector<32x128xbf16>, vector<128x128xbf16>, vector<32x128xf32> -> vector<32x128xf32>
    %12 = tpu.iota {dimensions = array<i32: 1>} : vector<2x16x128xi32>
    %13 = vector.shape_cast %12 : vector<2x16x128xi32> to vector<32x128xi32>
    %c0_i32 = arith.constant 0 : i32
    %14 = vector.broadcast %c0_i32 : i32 to vector<32x128xi32>
    %15 = arith.cmpi ne, %13, %14 : vector<32x128xi32>
    %16 = arith.extui %15 : vector<32x128xi1> to vector<32x128xi32>
    %17 = arith.sitofp %16 : vector<32x128xi32> to vector<32x128xf32>
    %c15_i32 = arith.constant 15 : i32
    %18 = vector.broadcast %c15_i32 : i32 to vector<32x128xi32>
    %19 = arith.cmpi ne, %13, %18 : vector<32x128xi32>
    %20 = arith.extui %19 : vector<32x128xi1> to vector<32x128xi32>
    %21 = arith.sitofp %20 : vector<32x128xi32> to vector<32x128xf32>
    %c0_5 = arith.constant 0 : index
    %c0_6 = arith.constant 0 : index
    %22 = vector.load %arg4[%c0_5, %c0_6] : memref<1x128xf32, #tpu.memory_space<vmem>>, vector<1x128xf32>
    %23 = vector.broadcast %22 : vector<1x128xf32> to vector<32x128xf32>
    %24 = arith.mulf %11, %23 : vector<32x128xf32>
    %c0_7 = arith.constant 0 : index
    %c0_8 = arith.constant 0 : index
    %25 = vector.load %arg5[%c0_7, %c0_8] : memref<1x128xf32, #tpu.memory_space<vmem>>, vector<1x128xf32>
    %26 = vector.broadcast %25 : vector<1x128xf32> to vector<32x128xf32>
    %27 = arith.addf %24, %26 : vector<32x128xf32>
    %28 = arith.truncf %27 : vector<32x128xf32> to vector<32x128xbf16>
    %c0_9 = arith.constant 0 : index
    %c0_10 = arith.constant 0 : index
    %29 = vector.load %arg6[%c0_9, %c0_10] : memref<128x384xbf16, #tpu.memory_space<vmem>>, vector<128x384xbf16>
    %cst_11 = arith.constant dense<0.000000e+00> : vector<32x384xf32>
    %30 = tpu.matmul %28, %29, %cst_11 {dimension_numbers = #tpu.dot_dimension_numbers<[1], [0], [0], [1], [0, 0, 1, 1], [], []>} : vector<32x128xbf16>, vector<128x384xbf16>, vector<32x384xf32> -> vector<32x384xf32>
    %31 = vector.extract_strided_slice %30 {offsets = [0, 0], sizes = [32, 128], strides = [1, 1]} : vector<32x384xf32> to vector<32x128xf32>
    %32 = vector.extract_strided_slice %30 {offsets = [0, 128], sizes = [32, 128], strides = [1, 1]} : vector<32x384xf32> to vector<32x128xf32>
    %33 = vector.extract_strided_slice %30 {offsets = [0, 256], sizes = [32, 128], strides = [1, 1]} : vector<32x384xf32> to vector<32x128xf32>
    %cst_12 = arith.constant 0.000000e+00 : f32
    %34 = vector.broadcast %cst_12 : f32 to vector<1x128xf32>
    %35 = vector.extract_strided_slice %31 {offsets = [0, 0], sizes = [31, 128], strides = [1, 1]} : vector<32x128xf32> to vector<31x128xf32>
    %36 = tpu.concatenate %34, %35 in 0 : vector<1x128xf32>, vector<31x128xf32> -> vector<32x128xf32>
    %37 = arith.mulf %36, %17 : vector<32x128xf32>
    %38 = vector.extract_strided_slice %33 {offsets = [1, 0], sizes = [31, 128], strides = [1, 1]} : vector<32x128xf32> to vector<31x128xf32>
    %39 = tpu.concatenate %38, %34 in 0 : vector<31x128xf32>, vector<1x128xf32> -> vector<32x128xf32>
    %40 = arith.mulf %39, %21 : vector<32x128xf32>
    %41 = arith.addf %32, %37 : vector<32x128xf32>
    %42 = arith.addf %41, %40 : vector<32x128xf32>
    %c0_13 = arith.constant 0 : index
    %c0_14 = arith.constant 0 : index
    %43 = vector.load %arg7[%c0_13, %c0_14] : memref<1x128xf32, #tpu.memory_space<vmem>>, vector<1x128xf32>
    %44 = vector.broadcast %43 : vector<1x128xf32> to vector<32x128xf32>
    %45 = arith.addf %42, %44 : vector<32x128xf32>
    %cst_15 = arith.constant 0.000000e+00 : f32
    %46 = vector.broadcast %cst_15 : f32 to vector<32x128xf32>
    %47 = arith.maximumf %45, %46 : vector<32x128xf32>
    %c0_16 = arith.constant 0 : index
    %c0_17 = arith.constant 0 : index
    %48 = vector.load %arg8[%c0_16, %c0_17] : memref<1x128xf32, #tpu.memory_space<vmem>>, vector<1x128xf32>
    %49 = vector.broadcast %48 : vector<1x128xf32> to vector<32x128xf32>
    %50 = arith.mulf %47, %49 : vector<32x128xf32>
    %c0_18 = arith.constant 0 : index
    %c0_19 = arith.constant 0 : index
    %51 = vector.load %arg9[%c0_18, %c0_19] : memref<1x128xf32, #tpu.memory_space<vmem>>, vector<1x128xf32>
    %52 = vector.broadcast %51 : vector<1x128xf32> to vector<32x128xf32>
    %53 = arith.addf %50, %52 : vector<32x128xf32>
    %54 = arith.truncf %53 : vector<32x128xf32> to vector<32x128xbf16>
    %c0_20 = arith.constant 0 : index
    %c0_21 = arith.constant 0 : index
    %55 = vector.load %arg10[%c0_20, %c0_21] : memref<128x384xbf16, #tpu.memory_space<vmem>>, vector<128x384xbf16>
    %cst_22 = arith.constant dense<0.000000e+00> : vector<32x384xf32>
    %56 = tpu.matmul %54, %55, %cst_22 {dimension_numbers = #tpu.dot_dimension_numbers<[1], [0], [0], [1], [0, 0, 1, 1], [], []>} : vector<32x128xbf16>, vector<128x384xbf16>, vector<32x384xf32> -> vector<32x384xf32>
    %57 = vector.extract_strided_slice %56 {offsets = [0, 0], sizes = [32, 128], strides = [1, 1]} : vector<32x384xf32> to vector<32x128xf32>
    %58 = vector.extract_strided_slice %56 {offsets = [0, 128], sizes = [32, 128], strides = [1, 1]} : vector<32x384xf32> to vector<32x128xf32>
    %59 = vector.extract_strided_slice %56 {offsets = [0, 256], sizes = [32, 128], strides = [1, 1]} : vector<32x384xf32> to vector<32x128xf32>
    %cst_23 = arith.constant 0.000000e+00 : f32
    %60 = vector.broadcast %cst_23 : f32 to vector<1x128xf32>
    %61 = vector.extract_strided_slice %57 {offsets = [0, 0], sizes = [31, 128], strides = [1, 1]} : vector<32x128xf32> to vector<31x128xf32>
    %62 = tpu.concatenate %60, %61 in 0 : vector<1x128xf32>, vector<31x128xf32> -> vector<32x128xf32>
    %63 = arith.mulf %62, %17 : vector<32x128xf32>
    %64 = vector.extract_strided_slice %59 {offsets = [1, 0], sizes = [31, 128], strides = [1, 1]} : vector<32x128xf32> to vector<31x128xf32>
    %65 = tpu.concatenate %64, %60 in 0 : vector<31x128xf32>, vector<1x128xf32> -> vector<32x128xf32>
    %66 = arith.mulf %65, %21 : vector<32x128xf32>
    %67 = arith.addf %58, %63 : vector<32x128xf32>
    %68 = arith.addf %67, %66 : vector<32x128xf32>
    %c0_24 = arith.constant 0 : index
    %c0_25 = arith.constant 0 : index
    %69 = vector.load %arg11[%c0_24, %c0_25] : memref<1x128xf32, #tpu.memory_space<vmem>>, vector<1x128xf32>
    %70 = vector.broadcast %69 : vector<1x128xf32> to vector<32x128xf32>
    %71 = arith.addf %68, %70 : vector<32x128xf32>
    %cst_26 = arith.constant 0.000000e+00 : f32
    %72 = vector.broadcast %cst_26 : f32 to vector<32x128xf32>
    %73 = arith.maximumf %71, %72 : vector<32x128xf32>
    %74 = arith.addf %73, %11 : vector<32x128xf32>
    %c0_27 = arith.constant 0 : index
    %c0_28 = arith.constant 0 : index
    %75 = vector.load %arg12[%c0_27, %c0_28] : memref<1x128xf32, #tpu.memory_space<vmem>>, vector<1x128xf32>
    %76 = vector.broadcast %75 : vector<1x128xf32> to vector<32x128xf32>
    %77 = arith.mulf %74, %76 : vector<32x128xf32>
    %c0_29 = arith.constant 0 : index
    %c0_30 = arith.constant 0 : index
    %78 = vector.load %arg13[%c0_29, %c0_30] : memref<1x128xf32, #tpu.memory_space<vmem>>, vector<1x128xf32>
    %79 = vector.broadcast %78 : vector<1x128xf32> to vector<32x128xf32>
    %80 = arith.addf %77, %79 : vector<32x128xf32>
    %81 = arith.truncf %80 : vector<32x128xf32> to vector<32x128xbf16>
    %c0_31 = arith.constant 0 : index
    %c0_32 = arith.constant 0 : index
    %82 = vector.load %arg14[%c0_31, %c0_32] : memref<128x384xbf16, #tpu.memory_space<vmem>>, vector<128x384xbf16>
    %cst_33 = arith.constant dense<0.000000e+00> : vector<32x384xf32>
    %83 = tpu.matmul %81, %82, %cst_33 {dimension_numbers = #tpu.dot_dimension_numbers<[1], [0], [0], [1], [0, 0, 1, 1], [], []>} : vector<32x128xbf16>, vector<128x384xbf16>, vector<32x384xf32> -> vector<32x384xf32>
    %84 = vector.extract_strided_slice %83 {offsets = [0, 0], sizes = [32, 128], strides = [1, 1]} : vector<32x384xf32> to vector<32x128xf32>
    %85 = vector.extract_strided_slice %83 {offsets = [0, 128], sizes = [32, 128], strides = [1, 1]} : vector<32x384xf32> to vector<32x128xf32>
    %86 = vector.extract_strided_slice %83 {offsets = [0, 256], sizes = [32, 128], strides = [1, 1]} : vector<32x384xf32> to vector<32x128xf32>
    %cst_34 = arith.constant 0.000000e+00 : f32
    %87 = vector.broadcast %cst_34 : f32 to vector<1x128xf32>
    %88 = vector.extract_strided_slice %84 {offsets = [0, 0], sizes = [31, 128], strides = [1, 1]} : vector<32x128xf32> to vector<31x128xf32>
    %89 = tpu.concatenate %87, %88 in 0 : vector<1x128xf32>, vector<31x128xf32> -> vector<32x128xf32>
    %90 = arith.mulf %89, %17 : vector<32x128xf32>
    %91 = vector.extract_strided_slice %86 {offsets = [1, 0], sizes = [31, 128], strides = [1, 1]} : vector<32x128xf32> to vector<31x128xf32>
    %92 = tpu.concatenate %91, %87 in 0 : vector<31x128xf32>, vector<1x128xf32> -> vector<32x128xf32>
    %93 = arith.mulf %92, %21 : vector<32x128xf32>
    %94 = arith.addf %85, %90 : vector<32x128xf32>
    %95 = arith.addf %94, %93 : vector<32x128xf32>
    %c0_35 = arith.constant 0 : index
    %c0_36 = arith.constant 0 : index
    %96 = vector.load %arg15[%c0_35, %c0_36] : memref<1x128xf32, #tpu.memory_space<vmem>>, vector<1x128xf32>
    %97 = vector.broadcast %96 : vector<1x128xf32> to vector<32x128xf32>
    %98 = arith.addf %95, %97 : vector<32x128xf32>
    %cst_37 = arith.constant 0.000000e+00 : f32
    %99 = vector.broadcast %cst_37 : f32 to vector<32x128xf32>
    %100 = arith.maximumf %98, %99 : vector<32x128xf32>
    %c0_38 = arith.constant 0 : index
    %c0_39 = arith.constant 0 : index
    %101 = vector.load %arg16[%c0_38, %c0_39] : memref<1x128xf32, #tpu.memory_space<vmem>>, vector<1x128xf32>
    %102 = vector.broadcast %101 : vector<1x128xf32> to vector<32x128xf32>
    %103 = arith.mulf %100, %102 : vector<32x128xf32>
    %c0_40 = arith.constant 0 : index
    %c0_41 = arith.constant 0 : index
    %104 = vector.load %arg17[%c0_40, %c0_41] : memref<1x128xf32, #tpu.memory_space<vmem>>, vector<1x128xf32>
    %105 = vector.broadcast %104 : vector<1x128xf32> to vector<32x128xf32>
    %106 = arith.addf %103, %105 : vector<32x128xf32>
    %107 = arith.truncf %106 : vector<32x128xf32> to vector<32x128xbf16>
    %c0_42 = arith.constant 0 : index
    %c0_43 = arith.constant 0 : index
    %108 = vector.load %arg18[%c0_42, %c0_43] : memref<128x384xbf16, #tpu.memory_space<vmem>>, vector<128x384xbf16>
    %cst_44 = arith.constant dense<0.000000e+00> : vector<32x384xf32>
    %109 = tpu.matmul %107, %108, %cst_44 {dimension_numbers = #tpu.dot_dimension_numbers<[1], [0], [0], [1], [0, 0, 1, 1], [], []>} : vector<32x128xbf16>, vector<128x384xbf16>, vector<32x384xf32> -> vector<32x384xf32>
    %110 = vector.extract_strided_slice %109 {offsets = [0, 0], sizes = [32, 128], strides = [1, 1]} : vector<32x384xf32> to vector<32x128xf32>
    %111 = vector.extract_strided_slice %109 {offsets = [0, 128], sizes = [32, 128], strides = [1, 1]} : vector<32x384xf32> to vector<32x128xf32>
    %112 = vector.extract_strided_slice %109 {offsets = [0, 256], sizes = [32, 128], strides = [1, 1]} : vector<32x384xf32> to vector<32x128xf32>
    %cst_45 = arith.constant 0.000000e+00 : f32
    %113 = vector.broadcast %cst_45 : f32 to vector<1x128xf32>
    %114 = vector.extract_strided_slice %110 {offsets = [0, 0], sizes = [31, 128], strides = [1, 1]} : vector<32x128xf32> to vector<31x128xf32>
    %115 = tpu.concatenate %113, %114 in 0 : vector<1x128xf32>, vector<31x128xf32> -> vector<32x128xf32>
    %116 = arith.mulf %115, %17 : vector<32x128xf32>
    %117 = vector.extract_strided_slice %112 {offsets = [1, 0], sizes = [31, 128], strides = [1, 1]} : vector<32x128xf32> to vector<31x128xf32>
    %118 = tpu.concatenate %117, %113 in 0 : vector<31x128xf32>, vector<1x128xf32> -> vector<32x128xf32>
    %119 = arith.mulf %118, %21 : vector<32x128xf32>
    %120 = arith.addf %111, %116 : vector<32x128xf32>
    %121 = arith.addf %120, %119 : vector<32x128xf32>
    %c0_46 = arith.constant 0 : index
    %c0_47 = arith.constant 0 : index
    %122 = vector.load %arg19[%c0_46, %c0_47] : memref<1x128xf32, #tpu.memory_space<vmem>>, vector<1x128xf32>
    %123 = vector.broadcast %122 : vector<1x128xf32> to vector<32x128xf32>
    %124 = arith.addf %121, %123 : vector<32x128xf32>
    %cst_48 = arith.constant 0.000000e+00 : f32
    %125 = vector.broadcast %cst_48 : f32 to vector<32x128xf32>
    %126 = arith.maximumf %124, %125 : vector<32x128xf32>
    %127 = arith.addf %126, %74 : vector<32x128xf32>
    %128 = vector.shape_cast %127 : vector<32x128xf32> to vector<2x16x128xf32>
    %c0_49 = arith.constant 0 : index
    %c0_50 = arith.constant 0 : index
    %c0_51 = arith.constant 0 : index
    %129 = vector.load %arg2[%c0_49, %c0_50, %c0_51] : memref<2x16x1xf32, #tpu.memory_space<vmem>>, vector<2x16x1xf32>
    %130 = vector.broadcast %129 : vector<2x16x1xf32> to vector<2x16x128xf32>
    %131 = arith.mulf %128, %130 : vector<2x16x128xf32>
    %cst_52 = arith.constant dense<0.000000e+00> : vector<2x128xf32>
    %132 = vector.multi_reduction <add>, %131, %cst_52 [1] : vector<2x16x128xf32> to vector<2x128xf32>
    %133 = arith.truncf %132 : vector<2x128xf32> to vector<2x128xbf16>
    %c0_53 = arith.constant 0 : index
    %c0_54 = arith.constant 0 : index
    %134 = vector.load %arg20[%c0_53, %c0_54] : memref<128x1024xbf16, #tpu.memory_space<vmem>>, vector<128x1024xbf16>
    %cst_55 = arith.constant dense<0.000000e+00> : vector<2x1024xf32>
    %135 = tpu.matmul %133, %134, %cst_55 {dimension_numbers = #tpu.dot_dimension_numbers<[1], [0], [0], [1], [0, 0, 1, 1], [], []>} : vector<2x128xbf16>, vector<128x1024xbf16>, vector<2x1024xf32> -> vector<2x1024xf32>
    %c0_56 = arith.constant 0 : index
    %c0_57 = arith.constant 0 : index
    %136 = vector.load %arg21[%c0_56, %c0_57] : memref<1x1024xf32, #tpu.memory_space<vmem>>, vector<1x1024xf32>
    %137 = vector.broadcast %136 : vector<1x1024xf32> to vector<2x1024xf32>
    %138 = arith.addf %135, %137 : vector<2x1024xf32>
    %cst_58 = arith.constant 0.000000e+00 : f32
    %139 = vector.broadcast %cst_58 : f32 to vector<2x1024xf32>
    %140 = arith.maximumf %138, %139 : vector<2x1024xf32>
    %141 = arith.truncf %140 : vector<2x1024xf32> to vector<2x1024xbf16>
    %c0_59 = arith.constant 0 : index
    %c0_60 = arith.constant 0 : index
    %142 = vector.load %arg22[%c0_59, %c0_60] : memref<1024x1024xbf16, #tpu.memory_space<vmem>>, vector<1024x1024xbf16>
    %cst_61 = arith.constant dense<0.000000e+00> : vector<2x1024xf32>
    %143 = tpu.matmul %141, %142, %cst_61 {dimension_numbers = #tpu.dot_dimension_numbers<[1], [0], [0], [1], [0, 0, 1, 1], [], []>} : vector<2x1024xbf16>, vector<1024x1024xbf16>, vector<2x1024xf32> -> vector<2x1024xf32>
    %c0_62 = arith.constant 0 : index
    %c0_63 = arith.constant 0 : index
    %144 = vector.load %arg23[%c0_62, %c0_63] : memref<1x1024xf32, #tpu.memory_space<vmem>>, vector<1x1024xf32>
    %145 = vector.broadcast %144 : vector<1x1024xf32> to vector<2x1024xf32>
    %146 = arith.addf %143, %145 : vector<2x1024xf32>
    %cst_64 = arith.constant 0.000000e+00 : f32
    %147 = vector.broadcast %cst_64 : f32 to vector<2x1024xf32>
    %148 = arith.maximumf %146, %147 : vector<2x1024xf32>
    %149 = arith.truncf %148 : vector<2x1024xf32> to vector<2x1024xbf16>
    %c0_65 = arith.constant 0 : index
    %c0_66 = arith.constant 0 : index
    %150 = vector.load %arg24[%c0_65, %c0_66] : memref<1024x512xbf16, #tpu.memory_space<vmem>>, vector<1024x512xbf16>
    %cst_67 = arith.constant dense<0.000000e+00> : vector<2x512xf32>
    %151 = tpu.matmul %149, %150, %cst_67 {dimension_numbers = #tpu.dot_dimension_numbers<[1], [0], [0], [1], [0, 0, 1, 1], [], []>} : vector<2x1024xbf16>, vector<1024x512xbf16>, vector<2x512xf32> -> vector<2x512xf32>
    %c0_68 = arith.constant 0 : index
    %c0_69 = arith.constant 0 : index
    %152 = vector.load %arg25[%c0_68, %c0_69] : memref<1x512xf32, #tpu.memory_space<vmem>>, vector<1x512xf32>
    %153 = vector.broadcast %152 : vector<1x512xf32> to vector<2x512xf32>
    %154 = arith.addf %151, %153 : vector<2x512xf32>
    %cst_70 = arith.constant 0.000000e+00 : f32
    %155 = vector.broadcast %cst_70 : f32 to vector<2x512xf32>
    %156 = arith.maximumf %154, %155 : vector<2x512xf32>
    %157 = arith.truncf %156 : vector<2x512xf32> to vector<2x512xbf16>
    %c0_71 = arith.constant 0 : index
    %c0_72 = arith.constant 0 : index
    %158 = vector.load %arg26[%c0_71, %c0_72] : memref<512x128xbf16, #tpu.memory_space<vmem>>, vector<512x128xbf16>
    %cst_73 = arith.constant dense<0.000000e+00> : vector<2x128xf32>
    %159 = tpu.matmul %157, %158, %cst_73 {dimension_numbers = #tpu.dot_dimension_numbers<[1], [0], [0], [1], [0, 0, 1, 1], [], []>} : vector<2x512xbf16>, vector<512x128xbf16>, vector<2x128xf32> -> vector<2x128xf32>
    %c0_74 = arith.constant 0 : index
    %c0_75 = arith.constant 0 : index
    %160 = vector.load %arg27[%c0_74, %c0_75] : memref<1x128xf32, #tpu.memory_space<vmem>>, vector<1x128xf32>
    %161 = vector.broadcast %160 : vector<1x128xf32> to vector<2x128xf32>
    %162 = arith.addf %159, %161 : vector<2x128xf32>
    %c0_76 = arith.constant 0 : index
    %c0_77 = arith.constant 0 : index
    %163 = vector.load %arg28[%c0_76, %c0_77] : memref<2x128xf32, #tpu.memory_space<vmem>>, vector<2x128xf32>
    tpu.vector_store %arg28[%c0_76, %c0_77], %162 {strides = array<i32>} : memref<2x128xf32, #tpu.memory_space<vmem>>, vector<2x128xf32>,
    return
  }
  func.func @transform_0(%arg0: i32) -> (i32, i32) {
    %c0_i32 = arith.constant 0 : i32
    %c0_i32_0 = arith.constant 0 : i32
    return %arg0, %c0_i32 : i32, i32
  }
  func.func @transform_1(%arg0: i32) -> (i32, i32, i32) {
    %c0_i32 = arith.constant 0 : i32
    %c0_i32_0 = arith.constant 0 : i32
    %c0_i32_1 = arith.constant 0 : i32
    return %arg0, %c0_i32, %c0_i32_0 : i32, i32, i32
  }
  func.func @transform_2(%arg0: i32) -> (i32, i32) {
    %c0_i32 = arith.constant 0 : i32
    %c0_i32_0 = arith.constant 0 : i32
    %c0_i32_1 = arith.constant 0 : i32
    return %c0_i32, %c0_i32_0 : i32, i32
  }
  func.func @transform_3(%arg0: i32) -> (i32, i32) {
    %c0_i32 = arith.constant 0 : i32
    %c0_i32_0 = arith.constant 0 : i32
    %c0_i32_1 = arith.constant 0 : i32
    return %c0_i32, %c0_i32_0 : i32, i32
  }
  func.func @transform_4(%arg0: i32) -> (i32, i32) {
    %c0_i32 = arith.constant 0 : i32
    %c0_i32_0 = arith.constant 0 : i32
    %c0_i32_1 = arith.constant 0 : i32
    return %c0_i32, %c0_i32_0 : i32, i32
  }
  func.func @transform_5(%arg0: i32) -> (i32, i32) {
    %c0_i32 = arith.constant 0 : i32
    %c0_i32_0 = arith.constant 0 : i32
    %c0_i32_1 = arith.constant 0 : i32
    return %c0_i32, %c0_i32_0 : i32, i32
  }
  func.func @transform_6(%arg0: i32) -> (i32, i32) {
    %c0_i32 = arith.constant 0 : i32
    %c0_i32_0 = arith.constant 0 : i32
    %c0_i32_1 = arith.constant 0 : i32
    return %c0_i32, %c0_i32_0 : i32, i32
  }
  func.func @transform_7(%arg0: i32) -> (i32, i32) {
    %c0_i32 = arith.constant 0 : i32
    %c0_i32_0 = arith.constant 0 : i32
    %c0_i32_1 = arith.constant 0 : i32
    return %c0_i32, %c0_i32_0 : i32, i32
  }
  func.func @transform_8(%arg0: i32) -> (i32, i32) {
    %c0_i32 = arith.constant 0 : i32
    %c0_i32_0 = arith.constant 0 : i32
    %c0_i32_1 = arith.constant 0 : i32
    return %c0_i32, %c0_i32_0 : i32, i32
  }
  func.func @transform_9(%arg0: i32) -> (i32, i32) {
    %c0_i32 = arith.constant 0 : i32
    %c0_i32_0 = arith.constant 0 : i32
    %c0_i32_1 = arith.constant 0 : i32
    return %c0_i32, %c0_i32_0 : i32, i32
  }
  func.func @transform_10(%arg0: i32) -> (i32, i32) {
    %c0_i32 = arith.constant 0 : i32
    %c0_i32_0 = arith.constant 0 : i32
    %c0_i32_1 = arith.constant 0 : i32
    return %c0_i32, %c0_i32_0 : i32, i32
  }
  func.func @transform_11(%arg0: i32) -> (i32, i32) {
    %c0_i32 = arith.constant 0 : i32
    %c0_i32_0 = arith.constant 0 : i32
    %c0_i32_1 = arith.constant 0 : i32
    return %c0_i32, %c0_i32_0 : i32, i32
  }
  func.func @transform_12(%arg0: i32) -> (i32, i32) {
    %c0_i32 = arith.constant 0 : i32
    %c0_i32_0 = arith.constant 0 : i32
    %c0_i32_1 = arith.constant 0 : i32
    return %c0_i32, %c0_i32_0 : i32, i32
  }
  func.func @transform_13(%arg0: i32) -> (i32, i32) {
    %c0_i32 = arith.constant 0 : i32
    %c0_i32_0 = arith.constant 0 : i32
    %c0_i32_1 = arith.constant 0 : i32
    return %c0_i32, %c0_i32_0 : i32, i32
  }
  func.func @transform_14(%arg0: i32) -> (i32, i32) {
    %c0_i32 = arith.constant 0 : i32
    %c0_i32_0 = arith.constant 0 : i32
    %c0_i32_1 = arith.constant 0 : i32
    return %c0_i32, %c0_i32_0 : i32, i32
  }
  func.func @transform_15(%arg0: i32) -> (i32, i32) {
    %c0_i32 = arith.constant 0 : i32
    %c0_i32_0 = arith.constant 0 : i32
    %c0_i32_1 = arith.constant 0 : i32
    return %c0_i32, %c0_i32_0 : i32, i32
  }
  func.func @transform_16(%arg0: i32) -> (i32, i32) {
    %c0_i32 = arith.constant 0 : i32
    %c0_i32_0 = arith.constant 0 : i32
    %c0_i32_1 = arith.constant 0 : i32
    return %c0_i32, %c0_i32_0 : i32, i32
  }
  func.func @transform_17(%arg0: i32) -> (i32, i32) {
    %c0_i32 = arith.constant 0 : i32
    %c0_i32_0 = arith.constant 0 : i32
    %c0_i32_1 = arith.constant 0 : i32
    return %c0_i32, %c0_i32_0 : i32, i32
  }
  func.func @transform_18(%arg0: i32) -> (i32, i32) {
    %c0_i32 = arith.constant 0 : i32
    %c0_i32_0 = arith.constant 0 : i32
    %c0_i32_1 = arith.constant 0 : i32
    return %c0_i32, %c0_i32_0 : i32, i32
  }
  func.func @transform_19(%arg0: i32) -> (i32, i32) {
    %c0_i32 = arith.constant 0 : i32
    %c0_i32_0 = arith.constant 0 : i32
    %c0_i32_1 = arith.constant 0 : i32
    return %c0_i32, %c0_i32_0 : i32, i32
  }
  func.func @transform_20(%arg0: i32) -> (i32, i32) {
    %c0_i32 = arith.constant 0 : i32
    %c0_i32_0 = arith.constant 0 : i32
    %c0_i32_1 = arith.constant 0 : i32
    return %c0_i32, %c0_i32_0 : i32, i32
  }
  func.func @transform_21(%arg0: i32) -> (i32, i32) {
    %c0_i32 = arith.constant 0 : i32
    %c0_i32_0 = arith.constant 0 : i32
    %c0_i32_1 = arith.constant 0 : i32
    return %c0_i32, %c0_i32_0 : i32, i32
  }
  func.func @transform_22(%arg0: i32) -> (i32, i32) {
    %c0_i32 = arith.constant 0 : i32
    %c0_i32_0 = arith.constant 0 : i32
    %c0_i32_1 = arith.constant 0 : i32
    return %c0_i32, %c0_i32_0 : i32, i32
  }
  func.func @transform_23(%arg0: i32) -> (i32, i32) {
    %c0_i32 = arith.constant 0 : i32
    %c0_i32_0 = arith.constant 0 : i32
    %c0_i32_1 = arith.constant 0 : i32
    return %c0_i32, %c0_i32_0 : i32, i32
  }
  func.func @transform_24(%arg0: i32) -> (i32, i32) {
    %c0_i32 = arith.constant 0 : i32
    %c0_i32_0 = arith.constant 0 : i32
    %c0_i32_1 = arith.constant 0 : i32
    return %c0_i32, %c0_i32_0 : i32, i32
  }
  func.func @transform_25(%arg0: i32) -> (i32, i32) {
    %c0_i32 = arith.constant 0 : i32
    %c0_i32_0 = arith.constant 0 : i32
    %c0_i32_1 = arith.constant 0 : i32
    return %c0_i32, %c0_i32_0 : i32, i32
  }
  func.func @transform_26(%arg0: i32) -> (i32, i32) {
    %c0_i32 = arith.constant 0 : i32
    %c0_i32_0 = arith.constant 0 : i32
    %c0_i32_1 = arith.constant 0 : i32
    return %c0_i32, %c0_i32_0 : i32, i32
  }
  func.func @transform_27(%arg0: i32) -> (i32, i32) {
    %c0_i32 = arith.constant 0 : i32
    %c0_i32_0 = arith.constant 0 : i32
    return %arg0, %c0_i32 : i32, i32
  }
}

</mosaic_0001>

<llo_original>
// kernel: tpu_custom_call.1
$region0: #{tpu_custom_call.1}
  #allocation0 [shape = 'u32[]', space=smem, size = 0x4, offset = 0x4, fixed_abs, tag = 'smem constant byte address 0x4 - core index']
  #allocation1 [shape = 'u32[72,128]{1,0:T(1,128)}', space=vmem, size = 0x9000, scoped, tag = 'internal scratch']
  %s0 = inlined_call_operand.hbm [shape: s32[2,16], index: 0, kind: input, shape index: {}]
  %s1 = inlined_call_operand.vmem [shape: f32[2,16,1], index: 1, kind: input, shape index: {}]
  %s2 = inlined_call_operand.hbm [shape: bf16[128,128], index: 2, kind: input, shape index: {}]
  %s3 = inlined_call_operand.hbm [shape: f32[1,128], index: 3, kind: input, shape index: {}]
  %s4 = inlined_call_operand.hbm [shape: f32[1,128], index: 4, kind: input, shape index: {}]
  %s5 = inlined_call_operand.hbm [shape: bf16[128,384], index: 5, kind: input, shape index: {}]
  %s6 = inlined_call_operand.hbm [shape: f32[1,128], index: 6, kind: input, shape index: {}]
  %s7 = inlined_call_operand.hbm [shape: f32[1,128], index: 7, kind: input, shape index: {}]
  %s8 = inlined_call_operand.hbm [shape: f32[1,128], index: 8, kind: input, shape index: {}]
  %s9 = inlined_call_operand.hbm [shape: bf16[128,384], index: 9, kind: input, shape index: {}]
  %s10 = inlined_call_operand.hbm [shape: f32[1,128], index: 10, kind: input, shape index: {}]
  %s11 = inlined_call_operand.hbm [shape: f32[1,128], index: 11, kind: input, shape index: {}]
  %s12 = inlined_call_operand.hbm [shape: f32[1,128], index: 12, kind: input, shape index: {}]
  %s13 = inlined_call_operand.hbm [shape: bf16[128,384], index: 13, kind: input, shape index: {}]
  %s14 = inlined_call_operand.hbm [shape: f32[1,128], index: 14, kind: input, shape index: {}]
  %s15 = inlined_call_operand.hbm [shape: f32[1,128], index: 15, kind: input, shape index: {}]
  %s16 = inlined_call_operand.hbm [shape: f32[1,128], index: 16, kind: input, shape index: {}]
  %s17 = inlined_call_operand.hbm [shape: bf16[128,384], index: 17, kind: input, shape index: {}]
  %s18 = inlined_call_operand.hbm [shape: f32[1,128], index: 18, kind: input, shape index: {}]
  %s19 = inlined_call_operand.hbm [shape: bf16[128,1024], index: 19, kind: input, shape index: {}]
  %s20 = inlined_call_operand.hbm [shape: f32[1,1024], index: 20, kind: input, shape index: {}]
  %s21 = inlined_call_operand.hbm [shape: bf16[1024,1024], index: 21, kind: input, shape index: {}]
  %s22 = inlined_call_operand.hbm [shape: f32[1,1024], index: 22, kind: input, shape index: {}]
  %s23 = inlined_call_operand.hbm [shape: bf16[1024,512], index: 23, kind: input, shape index: {}]
  %s24 = inlined_call_operand.hbm [shape: f32[1,512], index: 24, kind: input, shape index: {}]
  %s25 = inlined_call_operand.hbm [shape: bf16[512,128], index: 25, kind: input, shape index: {}]
  %s26 = inlined_call_operand.hbm [shape: f32[1,128], index: 26, kind: input, shape index: {}]
  %s27 = inlined_call_operand.hbm [shape: f32[2,128], index: 27, kind: output, shape index: {}]
  %s28 = sld [smem:[#allocation0]]
  $region222: #{tpu_custom_call.1} parent=0
    _
  %s30 = ssub.s32 1, %s28
  %s31 = scalar_select 0, %s30, %s28
  $region1: #{tpu_custom_call.1} parent=0
    #allocation2 [shape = 'u8[1024]{0}', space=vmem, size = 0x400, scoped, tag = 'input window, operand 0, single buffered']
    #allocation3 [shape = 's32[1]{0}', space=sflag, size = 0x4, scoped, tag = 'scoped memory for tpu_custom_call.1']
    #allocation4 [shape = 's32[1]{0}', space=sflag, size = 0x4, scoped, tag = 'scoped memory for tpu_custom_call.1']
    #allocation5 [shape = 'u8[32768]{0}', space=vmem, size = 0x8000, scoped, tag = 'input window, operand 2, single buffered']
    #allocation6 [shape = 's32[1]{0}', space=sflag, size = 0x4, scoped, tag = 'scoped memory for tpu_custom_call.1']
    #allocation7 [shape = 'u8[512]{0}', space=vmem, size = 0x400, scoped, tag = 'input window, operand 3, single buffered']
    #allocation8 [shape = 'u8[512]{0}', space=vmem, size = 0x400, scoped, tag = 'input window, operand 4, single buffered']
    #allocation9 [shape = 's32[1]{0}', space=sflag, size = 0x4, scoped, tag = 'scoped memory for tpu_custom_call.1']
    #allocation10 [shape = 'u8[98304]{0}', space=vmem, size = 0x18000, scoped, tag = 'input window, operand 5, single buffered']
    #allocation11 [shape = 'u8[512]{0}', space=vmem, size = 0x400, scoped, tag = 'input window, operand 6, single buffered']
    #allocation12 [shape = 's32[1]{0}', space=sflag, size = 0x4, scoped, tag = 'scoped memory for tpu_custom_call.1']
    #allocation13 [shape = 'u8[512]{0}', space=vmem, size = 0x400, scoped, tag = 'input window, operand 7, single buffered']
    #allocation14 [shape = 'u8[512]{0}', space=vmem, size = 0x400, scoped, tag = 'input window, operand 8, single buffered']
    #allocation15 [shape = 's32[1]{0}', space=sflag, size = 0x4, scoped, tag = 'scoped memory for tpu_custom_call.1']
    #allocation16 [shape = 'u8[98304]{0}', space=vmem, size = 0x18000, scoped, tag = 'input window, operand 9, single buffered']
    #allocation17 [shape = 'u8[512]{0}', space=vmem, size = 0x400, scoped, tag = 'input window, operand 10, single buffered']
    #allocation18 [shape = 's32[1]{0}', space=sflag, size = 0x4, scoped, tag = 'scoped memory for tpu_custom_call.1']
    #allocation19 [shape = 'u8[512]{0}', space=vmem, size = 0x400, scoped, tag = 'input window, operand 11, single buffered']
    #allocation20 [shape = 'u8[512]{0}', space=vmem, size = 0x400, scoped, tag = 'input window, operand 12, single buffered']
    #allocation21 [shape = 's32[1]{0}', space=sflag, size = 0x4, scoped, tag = 'scoped memory for tpu_custom_call.1']
    #allocation22 [shape = 'u8[98304]{0}', space=vmem, size = 0x18000, scoped, tag = 'input window, operand 13, single buffered']
    #allocation23 [shape = 'u8[512]{0}', space=vmem, size = 0x400, scoped, tag = 'input window, operand 14, single buffered']
    #allocation24 [shape = 's32[1]{0}', space=sflag, size = 0x4, scoped, tag = 'scoped memory for tpu_custom_call.1']
    #allocation25 [shape = 'u8[512]{0}', space=vmem, size = 0x400, scoped, tag = 'input window, operand 15, single buffered']
    #allocation26 [shape = 'u8[512]{0}', space=vmem, size = 0x400, scoped, tag = 'input window, operand 16, single buffered']
    #allocation27 [shape = 's32[1]{0}', space=sflag, size = 0x4, scoped, tag = 'scoped memory for tpu_custom_call.1']
    #allocation28 [shape = 'u8[98304]{0}', space=vmem, size = 0x18000, scoped, tag = 'input window, operand 17, single buffered']
    #allocation29 [shape = 'u8[512]{0}', space=vmem, size = 0x400, scoped, tag = 'input window, operand 18, single buffered']
    #allocation30 [shape = 's32[1]{0}', space=sflag, size = 0x4, scoped, tag = 'scoped memory for tpu_custom_call.1']
    #allocation31 [shape = 'u8[262144]{0}', space=vmem, size = 0x40000, scoped, tag = 'input window, operand 19, single buffered']
    #allocation32 [shape = 'u8[4096]{0}', space=vmem, size = 0x1000, scoped, tag = 'input window, operand 20, single buffered']
    #allocation33 [shape = 's32[1]{0}', space=sflag, size = 0x4, scoped, tag = 'scoped memory for tpu_custom_call.1']
    #allocation34 [shape = 'u8[2097152]{0}', space=vmem, size = 0x200000, scoped, tag = 'input window, operand 21, single buffered']
    #allocation35 [shape = 'u8[4096]{0}', space=vmem, size = 0x1000, scoped, tag = 'input window, operand 22, single buffered']
    #allocation36 [shape = 's32[1]{0}', space=sflag, size = 0x4, scoped, tag = 'scoped memory for tpu_custom_call.1']
    #allocation37 [shape = 'u8[1048576]{0}', space=vmem, size = 0x100000, scoped, tag = 'input window, operand 23, single buffered']
    #allocation38 [shape = 'u8[2048]{0}', space=vmem, size = 0x800, scoped, tag = 'input window, operand 24, single buffered']
    #allocation39 [shape = 's32[1]{0}', space=sflag, size = 0x4, scoped, tag = 'scoped memory for tpu_custom_call.1']
    #allocation40 [shape = 'u8[131072]{0}', space=vmem, size = 0x20000, scoped, tag = 'input window, operand 25, single buffered']
    #allocation41 [shape = 'u8[512]{0}', space=vmem, size = 0x400, scoped, tag = 'input window, operand 26, single buffered']
    #allocation42 [shape = 's32[1]{0}', space=sflag, size = 0x4, scoped, tag = 'scoped memory for tpu_custom_call.1']
    #allocation43 [shape = 'u8[1024]{0}', space=vmem, size = 0x400, scoped, tag = 'output window, operand 0, single buffered']
    %32 = vsyncpa [#allocation3], 0
    %33 = vsyncpa [#allocation6], 0
    %34 = vsyncpa [#allocation9], 0
    %35 = vsyncpa [#allocation12], 0
    %36 = vsyncpa [#allocation15], 0
    %37 = vsyncpa [#allocation18], 0
    %38 = vsyncpa [#allocation21], 0
    %39 = vsyncpa [#allocation24], 0
    %40 = vsyncpa [#allocation27], 0
    %41 = vsyncpa [#allocation30], 0
    %42 = vsyncpa [#allocation33], 0
    %43 = vsyncpa [#allocation36], 0
    %44 = vsyncpa [#allocation39], 0
    %45 = vsyncpa [#allocation42], 0
    %46 = vsyncpa [#allocation4], 0
    // Predicated region
    $region2: #{tpu_custom_call.1} parent=1 // pred_check
      _
    $region3: #{tpu_custom_call.1} parent=1 // pred_check_branch
      %48 = sbr.rel (0) target = $region5
    $region4: #{tpu_custom_call.1} parent=1 // pred_region
      %50 = vsyncadd [#allocation3], 0
      %s52 = sshll.u32 %s0, 4
      %s53 = int_to_ptr.hbm [resolvable:$true] %s52
      %s54 = sshll.u32 [#allocation2], 4
      %s55 = int_to_ptr.vmem [resolvable:$true] %s54
      %57 = dma.hbm_to_vmem [thread:$0]  %s53, 32, %s55, [#allocation3]
    $region5: #{tpu_custom_call.1} parent=1 // pred_fallthru
      _
    // Predicated region
    $region6: #{tpu_custom_call.1} parent=1 // pred_check
      _
    $region7: #{tpu_custom_call.1} parent=1 // pred_check_branch
      %59 = sbr.rel (0) target = $region9
    $region8: #{tpu_custom_call.1} parent=1 // pred_region
      _
    $region9: #{tpu_custom_call.1} parent=1 // pred_fallthru
      _
    // Predicated region
    $region10: #{tpu_custom_call.1} parent=1 // pred_check
      _
    $region11: #{tpu_custom_call.1} parent=1 // pred_check_branch
      %61 = sbr.rel (0) target = $region13
    $region12: #{tpu_custom_call.1} parent=1 // pred_region
      %63 = vsyncadd [#allocation6], 0
      %s64 = sshll.u32 %s2, 4
      %s65 = int_to_ptr.hbm [resolvable:$true] %s64
      %s66 = sshll.u32 [#allocation5], 4
      %s67 = int_to_ptr.vmem [resolvable:$true] %s66
      %72 = dma.hbm_to_vmem [thread:$0]  %s65, 1024, %s67, [#allocation6], 64, 64, 4
    $region13: #{tpu_custom_call.1} parent=1 // pred_fallthru
      _
    // Predicated region
    $region14: #{tpu_custom_call.1} parent=1 // pred_check
      _
    $region15: #{tpu_custom_call.1} parent=1 // pred_check_branch
      %74 = sbr.rel (0) target = $region17
    $region16: #{tpu_custom_call.1} parent=1 // pred_region
      %76 = vsyncadd [#allocation6], 0
      %s78 = sshll.u32 %s3, 4
      %s79 = int_to_ptr.hbm [resolvable:$true] %s78
      %s80 = sshll.u32 [#allocation7], 4
      %s81 = int_to_ptr.vmem [resolvable:$true] %s80
      %83 = dma.hbm_to_vmem [thread:$0]  %s79, 16, %s81, [#allocation6]
    $region17: #{tpu_custom_call.1} parent=1 // pred_fallthru
      _
    // Predicated region
    $region18: #{tpu_custom_call.1} parent=1 // pred_check
      _
    $region19: #{tpu_custom_call.1} parent=1 // pred_check_branch
      %85 = sbr.rel (0) target = $region21
    $region20: #{tpu_custom_call.1} parent=1 // pred_region
      %87 = vsyncadd [#allocation9], 0
      %s89 = sshll.u32 %s4, 4
      %s90 = int_to_ptr.hbm [resolvable:$true] %s89
      %s91 = sshll.u32 [#allocation8], 4
      %s92 = int_to_ptr.vmem [resolvable:$true] %s91
      %94 = dma.hbm_to_vmem [thread:$0]  %s90, 16, %s92, [#allocation9]
    $region21: #{tpu_custom_call.1} parent=1 // pred_fallthru
      _
    // Predicated region
    $region22: #{tpu_custom_call.1} parent=1 // pred_check
      _
    $region23: #{tpu_custom_call.1} parent=1 // pred_check_branch
      %96 = sbr.rel (0) target = $region25
    $region24: #{tpu_custom_call.1} parent=1 // pred_region
      %98 = vsyncadd [#allocation9], 0
      %s99 = sshll.u32 %s5, 4
      %s100 = int_to_ptr.hbm [resolvable:$true] %s99
      %s101 = sshll.u32 [#allocation10], 4
      %s102 = int_to_ptr.vmem [resolvable:$true] %s101
      %107 = dma.hbm_to_vmem [thread:$0]  %s100, 3072, %s102, [#allocation9], 192, 192, 12
    $region25: #{tpu_custom_call.1} parent=1 // pred_fallthru
      _
    // Predicated region
    $region26: #{tpu_custom_call.1} parent=1 // pred_check
      _
    $region27: #{tpu_custom_call.1} parent=1 // pred_check_branch
      %109 = sbr.rel (0) target = $region29
    $region28: #{tpu_custom_call.1} parent=1 // pred_region
      %111 = vsyncadd [#allocation12], 0
      %s113 = sshll.u32 %s6, 4
      %s114 = int_to_ptr.hbm [resolvable:$true] %s113
      %s115 = sshll.u32 [#allocation11], 4
      %s116 = int_to_ptr.vmem [resolvable:$true] %s115
      %118 = dma.hbm_to_vmem [thread:$0]  %s114, 16, %s116, [#allocation12]
    $region29: #{tpu_custom_call.1} parent=1 // pred_fallthru
      _
    // Predicated region
    $region30: #{tpu_custom_call.1} parent=1 // pred_check
      _
    $region31: #{tpu_custom_call.1} parent=1 // pred_check_branch
      %120 = sbr.rel (0) target = $region33
    $region32: #{tpu_custom_call.1} parent=1 // pred_region
      %122 = vsyncadd [#allocation12], 0
      %s124 = sshll.u32 %s7, 4
      %s125 = int_to_ptr.hbm [resolvable:$true] %s124
      %s126 = sshll.u32 [#allocation13], 4
      %s127 = int_to_ptr.vmem [resolvable:$true] %s126
      %129 = dma.hbm_to_vmem [thread:$0]  %s125, 16, %s127, [#allocation12]
    $region33: #{tpu_custom_call.1} parent=1 // pred_fallthru
      _
    // Predicated region
    $region34: #{tpu_custom_call.1} parent=1 // pred_check
      _
    $region35: #{tpu_custom_call.1} parent=1 // pred_check_branch
      %131 = sbr.rel (0) target = $region37
    $region36: #{tpu_custom_call.1} parent=1 // pred_region
      %133 = vsyncadd [#allocation15], 0
      %s135 = sshll.u32 %s8, 4
      %s136 = int_to_ptr.hbm [resolvable:$true] %s135
      %s137 = sshll.u32 [#allocation14], 4
      %s138 = int_to_ptr.vmem [resolvable:$true] %s137
      %140 = dma.hbm_to_vmem [thread:$0]  %s136, 16, %s138, [#allocation15]
    $region37: #{tpu_custom_call.1} parent=1 // pred_fallthru
      _
    // Predicated region
    $region38: #{tpu_custom_call.1} parent=1 // pred_check
      _
    $region39: #{tpu_custom_call.1} parent=1 // pred_check_branch
      %142 = sbr.rel (0) target = $region41
    $region40: #{tpu_custom_call.1} parent=1 // pred_region
      %144 = vsyncadd [#allocation15], 0
      %s145 = sshll.u32 %s9, 4
      %s146 = int_to_ptr.hbm [resolvable:$true] %s145
      %s147 = sshll.u32 [#allocation16], 4
      %s148 = int_to_ptr.vmem [resolvable:$true] %s147
      %153 = dma.hbm_to_vmem [thread:$0]  %s146, 3072, %s148, [#allocation15], 192, 192, 12
    $region41: #{tpu_custom_call.1} parent=1 // pred_fallthru
      _
    // Predicated region
    $region42: #{tpu_custom_call.1} parent=1 // pred_check
      _
    $region43: #{tpu_custom_call.1} parent=1 // pred_check_branch
      %155 = sbr.rel (0) target = $region45
    $region44: #{tpu_custom_call.1} parent=1 // pred_region
      %157 = vsyncadd [#allocation18], 0
      %s159 = sshll.u32 %s10, 4
      %s160 = int_to_ptr.hbm [resolvable:$true] %s159
      %s161 = sshll.u32 [#allocation17], 4
      %s162 = int_to_ptr.vmem [resolvable:$true] %s161
      %164 = dma.hbm_to_vmem [thread:$0]  %s160, 16, %s162, [#allocation18]
    $region45: #{tpu_custom_call.1} parent=1 // pred_fallthru
      _
    // Predicated region
    $region46: #{tpu_custom_call.1} parent=1 // pred_check
      _
    $region47: #{tpu_custom_call.1} parent=1 // pred_check_branch
      %166 = sbr.rel (0) target = $region49
    $region48: #{tpu_custom_call.1} parent=1 // pred_region
      %168 = vsyncadd [#allocation18], 0
      %s170 = sshll.u32 %s11, 4
      %s171 = int_to_ptr.hbm [resolvable:$true] %s170
      %s172 = sshll.u32 [#allocation19], 4
      %s173 = int_to_ptr.vmem [resolvable:$true] %s172
      %175 = dma.hbm_to_vmem [thread:$0]  %s171, 16, %s173, [#allocation18]
    $region49: #{tpu_custom_call.1} parent=1 // pred_fallthru
      _
    // Predicated region
    $region50: #{tpu_custom_call.1} parent=1 // pred_check
      _
    $region51: #{tpu_custom_call.1} parent=1 // pred_check_branch
      %177 = sbr.rel (0) target = $region53
    $region52: #{tpu_custom_call.1} parent=1 // pred_region
      %179 = vsyncadd [#allocation21], 0
      %s181 = sshll.u32 %s12, 4
      %s182 = int_to_ptr.hbm [resolvable:$true] %s181
      %s183 = sshll.u32 [#allocation20], 4
      %s184 = int_to_ptr.vmem [resolvable:$true] %s183
      %186 = dma.hbm_to_vmem [thread:$0]  %s182, 16, %s184, [#allocation21]
    $region53: #{tpu_custom_call.1} parent=1 // pred_fallthru
      _
    // Predicated region
    $region54: #{tpu_custom_call.1} parent=1 // pred_check
      _
    $region55: #{tpu_custom_call.1} parent=1 // pred_check_branch
      %188 = sbr.rel (0) target = $region57
    $region56: #{tpu_custom_call.1} parent=1 // pred_region
      %190 = vsyncadd [#allocation21], 0
      %s191 = sshll.u32 %s13, 4
      %s192 = int_to_ptr.hbm [resolvable:$true] %s191
      %s193 = sshll.u32 [#allocation22], 4
      %s194 = int_to_ptr.vmem [resolvable:$true] %s193
      %199 = dma.hbm_to_vmem [thread:$0]  %s192, 3072, %s194, [#allocation21], 192, 192, 12
    $region57: #{tpu_custom_call.1} parent=1 // pred_fallthru
      _
    // Predicated region
    $region58: #{tpu_custom_call.1} parent=1 // pred_check
      _
    $region59: #{tpu_custom_call.1} parent=1 // pred_check_branch
      %201 = sbr.rel (0) target = $region61
    $region60: #{tpu_custom_call.1} parent=1 // pred_region
      %203 = vsyncadd [#allocation24], 0
      %s205 = sshll.u32 %s14, 4
      %s206 = int_to_ptr.hbm [resolvable:$true] %s205
      %s207 = sshll.u32 [#allocation23], 4
      %s208 = int_to_ptr.vmem [resolvable:$true] %s207
      %210 = dma.hbm_to_vmem [thread:$0]  %s206, 16, %s208, [#allocation24]
    $region61: #{tpu_custom_call.1} parent=1 // pred_fallthru
      _
    // Predicated region
    $region62: #{tpu_custom_call.1} parent=1 // pred_check
      _
    $region63: #{tpu_custom_call.1} parent=1 // pred_check_branch
      %212 = sbr.rel (0) target = $region65
    $region64: #{tpu_custom_call.1} parent=1 // pred_region
      %214 = vsyncadd [#allocation24], 0
      %s216 = sshll.u32 %s15, 4
      %s217 = int_to_ptr.hbm [resolvable:$true] %s216
      %s218 = sshll.u32 [#allocation25], 4
      %s219 = int_to_ptr.vmem [resolvable:$true] %s218
      %221 = dma.hbm_to_vmem [thread:$0]  %s217, 16, %s219, [#allocation24]
    $region65: #{tpu_custom_call.1} parent=1 // pred_fallthru
      _
    // Predicated region
    $region66: #{tpu_custom_call.1} parent=1 // pred_check
      _
    $region67: #{tpu_custom_call.1} parent=1 // pred_check_branch
      %223 = sbr.rel (0) target = $region69
    $region68: #{tpu_custom_call.1} parent=1 // pred_region
      %225 = vsyncadd [#allocation27], 0
      %s227 = sshll.u32 %s16, 4
      %s228 = int_to_ptr.hbm [resolvable:$true] %s227
      %s229 = sshll.u32 [#allocation26], 4
      %s230 = int_to_ptr.vmem [resolvable:$true] %s229
      %232 = dma.hbm_to_vmem [thread:$0]  %s228, 16, %s230, [#allocation27]
    $region69: #{tpu_custom_call.1} parent=1 // pred_fallthru
      _
    // Predicated region
    $region70: #{tpu_custom_call.1} parent=1 // pred_check
      _
    $region71: #{tpu_custom_call.1} parent=1 // pred_check_branch
      %234 = sbr.rel (0) target = $region73
    $region72: #{tpu_custom_call.1} parent=1 // pred_region
      %236 = vsyncadd [#allocation27], 0
      %s237 = sshll.u32 %s17, 4
      %s238 = int_to_ptr.hbm [resolvable:$true] %s237
      %s239 = sshll.u32 [#allocation28], 4
      %s240 = int_to_ptr.vmem [resolvable:$true] %s239
      %245 = dma.hbm_to_vmem [thread:$0]  %s238, 3072, %s240, [#allocation27], 192, 192, 12
    $region73: #{tpu_custom_call.1} parent=1 // pred_fallthru
      _
    // Predicated region
    $region74: #{tpu_custom_call.1} parent=1 // pred_check
      _
    $region75: #{tpu_custom_call.1} parent=1 // pred_check_branch
      %247 = sbr.rel (0) target = $region77
    $region76: #{tpu_custom_call.1} parent=1 // pred_region
      %249 = vsyncadd [#allocation30], 0
      %s251 = sshll.u32 %s18, 4
      %s252 = int_to_ptr.hbm [resolvable:$true] %s251
      %s253 = sshll.u32 [#allocation29], 4
      %s254 = int_to_ptr.vmem [resolvable:$true] %s253
      %256 = dma.hbm_to_vmem [thread:$0]  %s252, 16, %s254, [#allocation30]
    $region77: #{tpu_custom_call.1} parent=1 // pred_fallthru
      _
    // Predicated region
    $region78: #{tpu_custom_call.1} parent=1 // pred_check
      _
    $region79: #{tpu_custom_call.1} parent=1 // pred_check_branch
      %258 = sbr.rel (0) target = $region81
    $region80: #{tpu_custom_call.1} parent=1 // pred_region
      %260 = vsyncadd [#allocation30], 0
      %s261 = sshll.u32 %s19, 4
      %s262 = int_to_ptr.hbm [resolvable:$true] %s261
      %s263 = sshll.u32 [#allocation31], 4
      %s264 = int_to_ptr.vmem [resolvable:$true] %s263
      %269 = dma.hbm_to_vmem [thread:$0]  %s262, 8192, %s264, [#allocation30], 512, 512, 32
    $region81: #{tpu_custom_call.1} parent=1 // pred_fallthru
      _
    // Predicated region
    $region82: #{tpu_custom_call.1} parent=1 // pred_check
      _
    $region83: #{tpu_custom_call.1} parent=1 // pred_check_branch
      %271 = sbr.rel (0) target = $region85
    $region84: #{tpu_custom_call.1} parent=1 // pred_region
      %273 = vsyncadd [#allocation33], 0
      %s275 = sshll.u32 %s20, 4
      %s276 = int_to_ptr.hbm [resolvable:$true] %s275
      %s277 = sshll.u32 [#allocation32], 4
      %s278 = int_to_ptr.vmem [resolvable:$true] %s277
      %280 = dma.hbm_to_vmem [thread:$0]  %s276, 128, %s278, [#allocation33]
    $region85: #{tpu_custom_call.1} parent=1 // pred_fallthru
      _
    // Predicated region
    $region86: #{tpu_custom_call.1} parent=1 // pred_check
      _
    $region87: #{tpu_custom_call.1} parent=1 // pred_check_branch
      %282 = sbr.rel (0) target = $region89
    $region88: #{tpu_custom_call.1} parent=1 // pred_region
      %284 = vsyncadd [#allocation33], 0
      %s285 = sshll.u32 %s21, 4
      %s286 = int_to_ptr.hbm [resolvable:$true] %s285
      %s287 = sshll.u32 [#allocation34], 4
      %s288 = int_to_ptr.vmem [resolvable:$true] %s287
      %293 = dma.hbm_to_vmem [thread:$0]  %s286, 65536, %s288, [#allocation33], 512, 512, 32
    $region89: #{tpu_custom_call.1} parent=1 // pred_fallthru
      _
    // Predicated region
    $region90: #{tpu_custom_call.1} parent=1 // pred_check
      _
    $region91: #{tpu_custom_call.1} parent=1 // pred_check_branch
      %295 = sbr.rel (0) target = $region93
    $region92: #{tpu_custom_call.1} parent=1 // pred_region
      %297 = vsyncadd [#allocation36], 0
      %s299 = sshll.u32 %s22, 4
      %s300 = int_to_ptr.hbm [resolvable:$true] %s299
      %s301 = sshll.u32 [#allocation35], 4
      %s302 = int_to_ptr.vmem [resolvable:$true] %s301
      %304 = dma.hbm_to_vmem [thread:$0]  %s300, 128, %s302, [#allocation36]
    $region93: #{tpu_custom_call.1} parent=1 // pred_fallthru
      _
    // Predicated region
    $region94: #{tpu_custom_call.1} parent=1 // pred_check
      _
    $region95: #{tpu_custom_call.1} parent=1 // pred_check_branch
      %306 = sbr.rel (0) target = $region97
    $region96: #{tpu_custom_call.1} parent=1 // pred_region
      %308 = vsyncadd [#allocation36], 0
      %s309 = sshll.u32 %s23, 4
      %s310 = int_to_ptr.hbm [resolvable:$true] %s309
      %s311 = sshll.u32 [#allocation37], 4
      %s312 = int_to_ptr.vmem [resolvable:$true] %s311
      %317 = dma.hbm_to_vmem [thread:$0]  %s310, 32768, %s312, [#allocation36], 256, 256, 16
    $region97: #{tpu_custom_call.1} parent=1 // pred_fallthru
      _
    // Predicated region
    $region98: #{tpu_custom_call.1} parent=1 // pred_check
      _
    $region99: #{tpu_custom_call.1} parent=1 // pred_check_branch
      %319 = sbr.rel (0) target = $region101
    $region100: #{tpu_custom_call.1} parent=1 // pred_region
      %321 = vsyncadd [#allocation39], 0
      %s323 = sshll.u32 %s24, 4
      %s324 = int_to_ptr.hbm [resolvable:$true] %s323
      %s325 = sshll.u32 [#allocation38], 4
      %s326 = int_to_ptr.vmem [resolvable:$true] %s325
      %328 = dma.hbm_to_vmem [thread:$0]  %s324, 64, %s326, [#allocation39]
    $region101: #{tpu_custom_call.1} parent=1 // pred_fallthru
      _
    // Predicated region
    $region102: #{tpu_custom_call.1} parent=1 // pred_check
      _
    $region103: #{tpu_custom_call.1} parent=1 // pred_check_branch
      %330 = sbr.rel (0) target = $region105
    $region104: #{tpu_custom_call.1} parent=1 // pred_region
      %332 = vsyncadd [#allocation39], 0
      %s333 = sshll.u32 %s25, 4
      %s334 = int_to_ptr.hbm [resolvable:$true] %s333
      %s335 = sshll.u32 [#allocation40], 4
      %s336 = int_to_ptr.vmem [resolvable:$true] %s335
      %341 = dma.hbm_to_vmem [thread:$0]  %s334, 4096, %s336, [#allocation39], 64, 64, 4
    $region105: #{tpu_custom_call.1} parent=1 // pred_fallthru
      _
    // Predicated region
    $region106: #{tpu_custom_call.1} parent=1 // pred_check
      _
    $region107: #{tpu_custom_call.1} parent=1 // pred_check_branch
      %343 = sbr.rel (0) target = $region109
    $region108: #{tpu_custom_call.1} parent=1 // pred_region
      %345 = vsyncadd [#allocation42], 0
      %s347 = sshll.u32 %s26, 4
      %s348 = int_to_ptr.hbm [resolvable:$true] %s347
      %s349 = sshll.u32 [#allocation41], 4
      %s350 = int_to_ptr.vmem [resolvable:$true] %s349
      %352 = dma.hbm_to_vmem [thread:$0]  %s348, 16, %s350, [#allocation42]
    $region109: #{tpu_custom_call.1} parent=1 // pred_fallthru
      _
    // Predicated region
    $region110: #{tpu_custom_call.1} parent=1 // pred_check
      _
    $region111: #{tpu_custom_call.1} parent=1 // pred_check_branch
      %354 = sbr.rel (0) target = $region113
    $region112: #{tpu_custom_call.1} parent=1 // pred_region
      %356 = dma.done [#allocation3], 32
    $region113: #{tpu_custom_call.1} parent=1 // pred_fallthru
      _
    // Predicated region
    $region114: #{tpu_custom_call.1} parent=1 // pred_check
      _
    $region115: #{tpu_custom_call.1} parent=1 // pred_check_branch
      %358 = sbr.rel (0) target = $region117
    $region116: #{tpu_custom_call.1} parent=1 // pred_region
      %360 = dma.done [#allocation6], 1024
    $region117: #{tpu_custom_call.1} parent=1 // pred_fallthru
      _
    // Predicated region
    $region118: #{tpu_custom_call.1} parent=1 // pred_check
      _
    $region119: #{tpu_custom_call.1} parent=1 // pred_check_branch
      %362 = sbr.rel (0) target = $region121
    $region120: #{tpu_custom_call.1} parent=1 // pred_region
      %364 = dma.done [#allocation6], 16
    $region121: #{tpu_custom_call.1} parent=1 // pred_fallthru
      _
    // Predicated region
    $region122: #{tpu_custom_call.1} parent=1 // pred_check
      _
    $region123: #{tpu_custom_call.1} parent=1 // pred_check_branch
      %366 = sbr.rel (0) target = $region125
    $region124: #{tpu_custom_call.1} parent=1 // pred_region
      %368 = dma.done [#allocation9], 16
    $region125: #{tpu_custom_call.1} parent=1 // pred_fallthru
      _
    // Predicated region
    $region126: #{tpu_custom_call.1} parent=1 // pred_check
      _
    $region127: #{tpu_custom_call.1} parent=1 // pred_check_branch
      %370 = sbr.rel (0) target = $region129
    $region128: #{tpu_custom_call.1} parent=1 // pred_region
      %372 = dma.done [#allocation9], 3072
    $region129: #{tpu_custom_call.1} parent=1 // pred_fallthru
      _
    // Predicated region
    $region130: #{tpu_custom_call.1} parent=1 // pred_check
      _
    $region131: #{tpu_custom_call.1} parent=1 // pred_check_branch
      %374 = sbr.rel (0) target = $region133
    $region132: #{tpu_custom_call.1} parent=1 // pred_region
      %376 = dma.done [#allocation12], 16
    $region133: #{tpu_custom_call.1} parent=1 // pred_fallthru
      _
    // Predicated region
    $region134: #{tpu_custom_call.1} parent=1 // pred_check
      _
    $region135: #{tpu_custom_call.1} parent=1 // pred_check_branch
      %378 = sbr.rel (0) target = $region137
    $region136: #{tpu_custom_call.1} parent=1 // pred_region
      %380 = dma.done [#allocation12], 16
    $region137: #{tpu_custom_call.1} parent=1 // pred_fallthru
      _
    // Predicated region
    $region138: #{tpu_custom_call.1} parent=1 // pred_check
      _
    $region139: #{tpu_custom_call.1} parent=1 // pred_check_branch
      %382 = sbr.rel (0) target = $region141
    $region140: #{tpu_custom_call.1} parent=1 // pred_region
      %384 = dma.done [#allocation15], 16
    $region141: #{tpu_custom_call.1} parent=1 // pred_fallthru
      _
    // Predicated region
    $region142: #{tpu_custom_call.1} parent=1 // pred_check
      _
    $region143: #{tpu_custom_call.1} parent=1 // pred_check_branch
      %386 = sbr.rel (0) target = $region145
    $region144: #{tpu_custom_call.1} parent=1 // pred_region
      %388 = dma.done [#allocation15], 3072
    $region145: #{tpu_custom_call.1} parent=1 // pred_fallthru
      _
    // Predicated region
    $region146: #{tpu_custom_call.1} parent=1 // pred_check
      _
    $region147: #{tpu_custom_call.1} parent=1 // pred_check_branch
      %390 = sbr.rel (0) target = $region149
    $region148: #{tpu_custom_call.1} parent=1 // pred_region
      %392 = dma.done [#allocation18], 16
    $region149: #{tpu_custom_call.1} parent=1 // pred_fallthru
      _
    // Predicated region
    $region150: #{tpu_custom_call.1} parent=1 // pred_check
      _
    $region151: #{tpu_custom_call.1} parent=1 // pred_check_branch
      %394 = sbr.rel (0) target = $region153
    $region152: #{tpu_custom_call.1} parent=1 // pred_region
      %396 = dma.done [#allocation18], 16
    $region153: #{tpu_custom_call.1} parent=1 // pred_fallthru
      _
    // Predicated region
    $region154: #{tpu_custom_call.1} parent=1 // pred_check
      _
    $region155: #{tpu_custom_call.1} parent=1 // pred_check_branch
      %398 = sbr.rel (0) target = $region157
    $region156: #{tpu_custom_call.1} parent=1 // pred_region
      %400 = dma.done [#allocation21], 16
    $region157: #{tpu_custom_call.1} parent=1 // pred_fallthru
      _
    // Predicated region
    $region158: #{tpu_custom_call.1} parent=1 // pred_check
      _
    $region159: #{tpu_custom_call.1} parent=1 // pred_check_branch
      %402 = sbr.rel (0) target = $region161
    $region160: #{tpu_custom_call.1} parent=1 // pred_region
      %404 = dma.done [#allocation21], 3072
    $region161: #{tpu_custom_call.1} parent=1 // pred_fallthru
      _
    // Predicated region
    $region162: #{tpu_custom_call.1} parent=1 // pred_check
      _
    $region163: #{tpu_custom_call.1} parent=1 // pred_check_branch
      %406 = sbr.rel (0) target = $region165
    $region164: #{tpu_custom_call.1} parent=1 // pred_region
      %408 = dma.done [#allocation24], 16
    $region165: #{tpu_custom_call.1} parent=1 // pred_fallthru
      _
    // Predicated region
    $region166: #{tpu_custom_call.1} parent=1 // pred_check
      _
    $region167: #{tpu_custom_call.1} parent=1 // pred_check_branch
      %410 = sbr.rel (0) target = $region169
    $region168: #{tpu_custom_call.1} parent=1 // pred_region
      %412 = dma.done [#allocation24], 16
    $region169: #{tpu_custom_call.1} parent=1 // pred_fallthru
      _
    // Predicated region
    $region170: #{tpu_custom_call.1} parent=1 // pred_check
      _
    $region171: #{tpu_custom_call.1} parent=1 // pred_check_branch
      %414 = sbr.rel (0) target = $region173
    $region172: #{tpu_custom_call.1} parent=1 // pred_region
      %416 = dma.done [#allocation27], 16
    $region173: #{tpu_custom_call.1} parent=1 // pred_fallthru
      _
    // Predicated region
    $region174: #{tpu_custom_call.1} parent=1 // pred_check
      _
    $region175: #{tpu_custom_call.1} parent=1 // pred_check_branch
      %418 = sbr.rel (0) target = $region177
    $region176: #{tpu_custom_call.1} parent=1 // pred_region
      %420 = dma.done [#allocation27], 3072
    $region177: #{tpu_custom_call.1} parent=1 // pred_fallthru
      _
    // Predicated region
    $region178: #{tpu_custom_call.1} parent=1 // pred_check
      _
    $region179: #{tpu_custom_call.1} parent=1 // pred_check_branch
      %422 = sbr.rel (0) target = $region181
    $region180: #{tpu_custom_call.1} parent=1 // pred_region
      %424 = dma.done [#allocation30], 16
    $region181: #{tpu_custom_call.1} parent=1 // pred_fallthru
      _
    // Predicated region
    $region182: #{tpu_custom_call.1} parent=1 // pred_check
      _
    $region183: #{tpu_custom_call.1} parent=1 // pred_check_branch
      %426 = sbr.rel (0) target = $region185
    $region184: #{tpu_custom_call.1} parent=1 // pred_region
      %428 = dma.done [#allocation30], 8192
    $region185: #{tpu_custom_call.1} parent=1 // pred_fallthru
      _
    // Predicated region
    $region186: #{tpu_custom_call.1} parent=1 // pred_check
      _
    $region187: #{tpu_custom_call.1} parent=1 // pred_check_branch
      %430 = sbr.rel (0) target = $region189
    $region188: #{tpu_custom_call.1} parent=1 // pred_region
      %432 = dma.done [#allocation33], 128
    $region189: #{tpu_custom_call.1} parent=1 // pred_fallthru
      _
    // Predicated region
    $region190: #{tpu_custom_call.1} parent=1 // pred_check
      _
    $region191: #{tpu_custom_call.1} parent=1 // pred_check_branch
      %434 = sbr.rel (0) target = $region193
    $region192: #{tpu_custom_call.1} parent=1 // pred_region
      %436 = dma.done [#allocation33], 65536
    $region193: #{tpu_custom_call.1} parent=1 // pred_fallthru
      _
    // Predicated region
    $region194: #{tpu_custom_call.1} parent=1 // pred_check
      _
    $region195: #{tpu_custom_call.1} parent=1 // pred_check_branch
      %438 = sbr.rel (0) target = $region197
    $region196: #{tpu_custom_call.1} parent=1 // pred_region
      %440 = dma.done [#allocation36], 128
    $region197: #{tpu_custom_call.1} parent=1 // pred_fallthru
      _
    // Predicated region
    $region198: #{tpu_custom_call.1} parent=1 // pred_check
      _
    $region199: #{tpu_custom_call.1} parent=1 // pred_check_branch
      %442 = sbr.rel (0) target = $region201
    $region200: #{tpu_custom_call.1} parent=1 // pred_region
      %444 = dma.done [#allocation36], 32768
    $region201: #{tpu_custom_call.1} parent=1 // pred_fallthru
      _
    // Predicated region
    $region202: #{tpu_custom_call.1} parent=1 // pred_check
      _
    $region203: #{tpu_custom_call.1} parent=1 // pred_check_branch
      %446 = sbr.rel (0) target = $region205
    $region204: #{tpu_custom_call.1} parent=1 // pred_region
      %448 = dma.done [#allocation39], 64
    $region205: #{tpu_custom_call.1} parent=1 // pred_fallthru
      _
    // Predicated region
    $region206: #{tpu_custom_call.1} parent=1 // pred_check
      _
    $region207: #{tpu_custom_call.1} parent=1 // pred_check_branch
      %450 = sbr.rel (0) target = $region209
    $region208: #{tpu_custom_call.1} parent=1 // pred_region
      %452 = dma.done [#allocation39], 4096
    $region209: #{tpu_custom_call.1} parent=1 // pred_fallthru
      _
    // Predicated region
    $region210: #{tpu_custom_call.1} parent=1 // pred_check
      _
    $region211: #{tpu_custom_call.1} parent=1 // pred_check_branch
      %454 = sbr.rel (0) target = $region213
    $region212: #{tpu_custom_call.1} parent=1 // pred_region
      %456 = dma.done [#allocation42], 16
    $region213: #{tpu_custom_call.1} parent=1 // pred_fallthru
      _
    %v457 = vld [vmem:[#allocation2] sm:$0x3]
    %v458 = vlaneseq
    %v459 = vand.u32 %v458, 127
    %v460 = vperm.slane %v457, 0
    %v461 = vlaneseq
    %v462 = vshrl.u32 %v461, 7
    %464 = vset.pattern.permute.xlu0 %v462
    %465 = vperm.xlu0 %464, %v460
    %v466 = vpop.permute.xlu0 %465
    %v467 = vlaneseq
    %v468 = vshrl.u32 %v467, 7
    %v469 = vadd.s32 %v468, 8
    %470 = vset.pattern.permute.xlu0 %v469
    %471 = vperm.xlu0 %470, %v460
    %v472 = vpop.permute.xlu0 %471
    %v473 = vperm.slane %v457, 1
    %v474 = vlaneseq
    %v475 = vshrl.u32 %v474, 7
    %477 = vset.pattern.permute.xlu0 %v475
    %478 = vperm.xlu0 %477, %v473
    %v479 = vpop.permute.xlu0 %478
    %v480 = vlaneseq
    %v481 = vshrl.u32 %v480, 7
    %v482 = vadd.s32 %v481, 8
    %483 = vset.pattern.permute.xlu0 %v482
    %484 = vperm.xlu0 %483, %v473
    %v485 = vpop.permute.xlu0 %484
    %vm486 = vcmp.eq.s32.totalorder %v459, %v466
    %vm487 = vcmp.eq.s32.totalorder %v459, %v472
    %vm488 = vcmp.eq.s32.totalorder %v459, %v479
    %vm489 = vcmp.eq.s32.totalorder %v459, %v485
    %v490 = vsel %vm486, 1.0, 0.0
    %v491 = vsel %vm487, 1.0, 0.0
    %v492 = vsel %vm488, 1.0, 0.0
    %v493 = vsel %vm489, 1.0, 0.0
    %v494 = vpack.c.bf16 %v490, %v490
    %v495 = vpack.c.bf16 %v491, %v491
    %v496 = vpack.c.bf16 %v492, %v492
    %v497 = vpack.c.bf16 %v493, %v493
    %v498 = vld [vmem:[#allocation5] sm:$0xf]
    %v499 = vld [vmem:[#allocation5 + $0x4] sm:$0xf]
    %v500 = vld [vmem:[#allocation5 + $0x8] sm:$0xf]
    %v501 = vld [vmem:[#allocation5 + $0xc] sm:$0xf]
    %v502 = vld [vmem:[#allocation5 + $0x10] sm:$0xf]
    %v503 = vld [vmem:[#allocation5 + $0x14] sm:$0xf]
    %v504 = vld [vmem:[#allocation5 + $0x18] sm:$0xf]
    %v505 = vld [vmem:[#allocation5 + $0x1c] sm:$0xf]
    %v506 = vld [vmem:[#allocation5 + $0x20] sm:$0xf]
    %v507 = vld [vmem:[#allocation5 + $0x24] sm:$0xf]
    %v508 = vld [vmem:[#allocation5 + $0x28] sm:$0xf]
    %v509 = vld [vmem:[#allocation5 + $0x2c] sm:$0xf]
    %v510 = vld [vmem:[#allocation5 + $0x30] sm:$0xf]
    %v511 = vld [vmem:[#allocation5 + $0x34] sm:$0xf]
    %v512 = vld [vmem:[#allocation5 + $0x38] sm:$0xf]
    %v513 = vld [vmem:[#allocation5 + $0x3c] sm:$0xf]
    %v518 = vunpack.c.l.b16 %v494
    %v519 = vunpack.c.l.b16 %v495
    %v520 = vunpack.c.l.b16 %v496
    %v521 = vunpack.c.l.b16 %v497
    %v522 = vpack.c.b16 %v519, %v518
    %v523 = vpack.c.b16 %v521, %v520
    %v542 = vunpack.c.l.b16 %v498
    %v543 = vunpack.c.l.b16 %v499
    %v544 = vunpack.c.l.b16 %v500
    %v545 = vunpack.c.l.b16 %v501
    %v546 = vunpack.c.l.b16 %v502
    %v547 = vunpack.c.l.b16 %v503
    %v548 = vunpack.c.l.b16 %v504
    %v549 = vunpack.c.l.b16 %v505
    %v550 = vunpack.c.l.b16 %v506
    %v551 = vunpack.c.l.b16 %v507
    %v552 = vunpack.c.l.b16 %v508
    %v553 = vunpack.c.l.b16 %v509
    %v554 = vunpack.c.l.b16 %v510
    %v555 = vunpack.c.l.b16 %v511
    %v556 = vunpack.c.l.b16 %v512
    %v557 = vunpack.c.l.b16 %v513
    %v558 = vpack.c.b16 %v543, %v542
    %v559 = vpack.c.b16 %v545, %v544
    %v560 = vpack.c.b16 %v547, %v546
    %v561 = vpack.c.b16 %v549, %v548
    %v562 = vpack.c.b16 %v551, %v550
    %v563 = vpack.c.b16 %v553, %v552
    %v564 = vpack.c.b16 %v555, %v554
    %v565 = vpack.c.b16 %v557, %v556
    %574 = vmatpush.bf16.msra.mxu0 %v565
    %575 = vmatpush.bf16.msra.mxu0 %v564
    %576 = vmatpush.bf16.msra.mxu0 %v563
    %577 = vmatpush.bf16.msra.mxu0 %v562
    %578 = vmatpush.bf16.msra.mxu0 %v561
    %579 = vmatpush.bf16.msra.mxu0 %v560
    %580 = vmatpush.bf16.msra.mxu0 %v559
    %581 = vmatpush.bf16.msra.mxu0 %v558
    %582 = vmatmul.bf16.gmra.mxu0 %v522
    %v583 = vpop.f32.mrf.mxu0
    %v584 = vadd.f32 0.0, %v583
    %v585 = vpop.f32.mrf.mxu0
    %v586 = vadd.f32 0.0, %v585
    %587 = vmatmul.bf16.gmra.mxu0 %v523
    %v588 = vpop.f32.mrf.mxu0
    %v589 = vadd.f32 0.0, %v588
    %v590 = vpop.f32.mrf.mxu0
    %v591 = vadd.f32 0.0, %v590
    %592 = vdwg.mxu0
    %v593 = vlaneseq
    %v594 = vshrl.u32 %v593, 7
    %v595 = vadd.s32 %v594, 8
    %vm596 = vcmp.ne.s32.totalorder %v594, 0
    %vm597 = vcmp.ne.s32.totalorder %v595, 0
    %v598 = vsel %vm596, 1, 0
    %v599 = vsel %vm597, 1, 0
    %v600 = vcvt.s32.f32 %v598
    %v601 = vcvt.s32.f32 %v599
    %vm602 = vcmp.ne.s32.totalorder %v594, 15
    %vm603 = vcmp.ne.s32.totalorder %v595, 15
    %v604 = vsel %vm602, 1, 0
    %v605 = vsel %vm603, 1, 0
    %v606 = vcvt.s32.f32 %v604
    %v607 = vcvt.s32.f32 %v605
    %v608 = vld [vmem:[#allocation7] sm:$0x1]
    %v610 = vperm.slane %v608, 0
    %v612 = vmul.f32 %v584, %v610
    %v613 = vmul.f32 %v586, %v610
    %v614 = vmul.f32 %v589, %v610
    %v615 = vmul.f32 %v591, %v610
    %v616 = vld [vmem:[#allocation8] sm:$0x1]
    %v618 = vperm.slane %v616, 0
    %v620 = vadd.f32 %v612, %v618
    %v621 = vadd.f32 %v613, %v618
    %v622 = vadd.f32 %v614, %v618
    %v623 = vadd.f32 %v615, %v618
    %v624 = vpack.c.bf16 %v621, %v620
    %v625 = vpack.c.bf16 %v623, %v622
    %v626 = vld [vmem:[#allocation10] sm:$0xff]
    %v627 = vld [vmem:[#allocation10 + $0x8] sm:$0xf]
    %v628 = vld [vmem:[#allocation10 + $0xc] sm:$0xff]
    %v629 = vld [vmem:[#allocation10 + $0x14] sm:$0xf]
    %v630 = vld [vmem:[#allocation10 + $0x18] sm:$0xff]
    %v631 = vld [vmem:[#allocation10 + $0x20] sm:$0xf]
    %v632 = vld [vmem:[#allocation10 + $0x24] sm:$0xff]
    %v633 = vld [vmem:[#allocation10 + $0x2c] sm:$0xf]
    %v634 = vld [vmem:[#allocation10 + $0x30] sm:$0xff]
    %v635 = vld [vmem:[#allocation10 + $0x38] sm:$0xf]
    %v636 = vld [vmem:[#allocation10 + $0x3c] sm:$0xff]
    %v637 = vld [vmem:[#allocation10 + $0x44] sm:$0xf]
    %v638 = vld [vmem:[#allocation10 + $0x48] sm:$0xff]
    %v639 = vld [vmem:[#allocation10 + $0x50] sm:$0xf]
    %v640 = vld [vmem:[#allocation10 + $0x54] sm:$0xff]
    %v641 = vld [vmem:[#allocation10 + $0x5c] sm:$0xf]
    %v642 = vld [vmem:[#allocation10 + $0x60] sm:$0xff]
    %v643 = vld [vmem:[#allocation10 + $0x68] sm:$0xf]
    %v644 = vld [vmem:[#allocation10 + $0x6c] sm:$0xff]
    %v645 = vld [vmem:[#allocation10 + $0x74] sm:$0xf]
    %v646 = vld [vmem:[#allocation10 + $0x78] sm:$0xff]
    %v647 = vld [vmem:[#allocation10 + $0x80] sm:$0xf]
    %v648 = vld [vmem:[#allocation10 + $0x84] sm:$0xff]
    %v649 = vld [vmem:[#allocation10 + $0x8c] sm:$0xf]
    %v650 = vld [vmem:[#allocation10 + $0x90] sm:$0xff]
    %v651 = vld [vmem:[#allocation10 + $0x98] sm:$0xf]
    %v652 = vld [vmem:[#allocation10 + $0x9c] sm:$0xff]
    %v653 = vld [vmem:[#allocation10 + $0xa4] sm:$0xf]
    %v654 = vld [vmem:[#allocation10 + $0xa8] sm:$0xff]
    %v655 = vld [vmem:[#allocation10 + $0xb0] sm:$0xf]
    %v656 = vld [vmem:[#allocation10 + $0xb4] sm:$0xff]
    %v657 = vld [vmem:[#allocation10 + $0xbc] sm:$0xf]
    %v690 = vunpack.c.l.b16 %v626
    %v691 = vunpack.c.h.b16 %v626
    %v692 = vunpack.c.l.b16 %v627
    %v693 = vunpack.c.l.b16 %v628
    %v694 = vunpack.c.h.b16 %v628
    %v695 = vunpack.c.l.b16 %v629
    %v696 = vunpack.c.l.b16 %v630
    %v697 = vunpack.c.h.b16 %v630
    %v698 = vunpack.c.l.b16 %v631
    %v699 = vunpack.c.l.b16 %v632
    %v700 = vunpack.c.h.b16 %v632
    %v701 = vunpack.c.l.b16 %v633
    %v702 = vunpack.c.l.b16 %v634
    %v703 = vunpack.c.h.b16 %v634
    %v704 = vunpack.c.l.b16 %v635
    %v705 = vunpack.c.l.b16 %v636
    %v706 = vunpack.c.h.b16 %v636
    %v707 = vunpack.c.l.b16 %v637
    %v708 = vunpack.c.l.b16 %v638
    %v709 = vunpack.c.h.b16 %v638
    %v710 = vunpack.c.l.b16 %v639
    %v711 = vunpack.c.l.b16 %v640
    %v712 = vunpack.c.h.b16 %v640
    %v713 = vunpack.c.l.b16 %v641
    %v714 = vunpack.c.l.b16 %v642
    %v715 = vunpack.c.h.b16 %v642
    %v716 = vunpack.c.l.b16 %v643
    %v717 = vunpack.c.l.b16 %v644
    %v718 = vunpack.c.h.b16 %v644
    %v719 = vunpack.c.l.b16 %v645
    %v720 = vunpack.c.l.b16 %v646
    %v721 = vunpack.c.h.b16 %v646
    %v722 = vunpack.c.l.b16 %v647
    %v723 = vunpack.c.l.b16 %v648
    %v724 = vunpack.c.h.b16 %v648
    %v725 = vunpack.c.l.b16 %v649
    %v726 = vunpack.c.l.b16 %v650
    %v727 = vunpack.c.h.b16 %v650
    %v728 = vunpack.c.l.b16 %v651
    %v729 = vunpack.c.l.b16 %v652
    %v730 = vunpack.c.h.b16 %v652
    %v731 = vunpack.c.l.b16 %v653
    %v732 = vunpack.c.l.b16 %v654
    %v733 = vunpack.c.h.b16 %v654
    %v734 = vunpack.c.l.b16 %v655
    %v735 = vunpack.c.l.b16 %v656
    %v736 = vunpack.c.h.b16 %v656
    %v737 = vunpack.c.l.b16 %v657
    %v738 = vpack.c.b16 %v693, %v690
    %v739 = vpack.c.b16 %v694, %v691
    %v740 = vpack.c.b16 %v695, %v692
    %v741 = vpack.c.b16 %v699, %v696
    %v742 = vpack.c.b16 %v700, %v697
    %v743 = vpack.c.b16 %v701, %v698
    %v744 = vpack.c.b16 %v705, %v702
    %v745 = vpack.c.b16 %v706, %v703
    %v746 = vpack.c.b16 %v707, %v704
    %v747 = vpack.c.b16 %v711, %v708
    %v748 = vpack.c.b16 %v712, %v709
    %v749 = vpack.c.b16 %v713, %v710
    %v750 = vpack.c.b16 %v717, %v714
    %v751 = vpack.c.b16 %v718, %v715
    %v752 = vpack.c.b16 %v719, %v716
    %v753 = vpack.c.b16 %v723, %v720
    %v754 = vpack.c.b16 %v724, %v721
    %v755 = vpack.c.b16 %v725, %v722
    %v756 = vpack.c.b16 %v729, %v726
    %v757 = vpack.c.b16 %v730, %v727
    %v758 = vpack.c.b16 %v731, %v728
    %v759 = vpack.c.b16 %v735, %v732
    %v760 = vpack.c.b16 %v736, %v733
    %v761 = vpack.c.b16 %v737, %v734
    %786 = vmatpush.bf16.msra.mxu0 %v759
    %787 = vmatpush.bf16.msra.mxu0 %v756
    %788 = vmatpush.bf16.msra.mxu0 %v753
    %789 = vmatpush.bf16.msra.mxu0 %v750
    %790 = vmatpush.bf16.msra.mxu0 %v747
    %791 = vmatpush.bf16.msra.mxu0 %v744
    %792 = vmatpush.bf16.msra.mxu0 %v741
    %793 = vmatpush.bf16.msra.mxu0 %v738
    %794 = vmatmul.bf16.gmra.mxu0 %v624
    %v795 = vpop.f32.mrf.mxu0
    %v796 = vadd.f32 0.0, %v795
    %v797 = vpop.f32.mrf.mxu0
    %v798 = vadd.f32 0.0, %v797
    %799 = vmatmul.bf16.gmra.mxu0 %v625
    %v800 = vpop.f32.mrf.mxu0
    %v801 = vadd.f32 0.0, %v800
    %v802 = vpop.f32.mrf.mxu0
    %v803 = vadd.f32 0.0, %v802
    %804 = vdwg.mxu0
    %805 = vmatpush.bf16.msra.mxu0 %v760
    %806 = vmatpush.bf16.msra.mxu0 %v757
    %807 = vmatpush.bf16.msra.mxu0 %v754
    %808 = vmatpush.bf16.msra.mxu0 %v751
    %809 = vmatpush.bf16.msra.mxu0 %v748
    %810 = vmatpush.bf16.msra.mxu0 %v745
    %811 = vmatpush.bf16.msra.mxu0 %v742
    %812 = vmatpush.bf16.msra.mxu0 %v739
    %813 = vmatmul.bf16.gmra.mxu0 %v624
    %v814 = vpop.f32.mrf.mxu0
    %v815 = vadd.f32 0.0, %v814
    %v816 = vpop.f32.mrf.mxu0
    %v817 = vadd.f32 0.0, %v816
    %818 = vmatmul.bf16.gmra.mxu0 %v625
    %v819 = vpop.f32.mrf.mxu0
    %v820 = vadd.f32 0.0, %v819
    %v821 = vpop.f32.mrf.mxu0
    %v822 = vadd.f32 0.0, %v821
    %823 = vdwg.mxu0
    %824 = vmatpush.bf16.msra.mxu0 %v761
    %825 = vmatpush.bf16.msra.mxu0 %v758
    %826 = vmatpush.bf16.msra.mxu0 %v755
    %827 = vmatpush.bf16.msra.mxu0 %v752
    %828 = vmatpush.bf16.msra.mxu0 %v749
    %829 = vmatpush.bf16.msra.mxu0 %v746
    %830 = vmatpush.bf16.msra.mxu0 %v743
    %831 = vmatpush.bf16.msra.mxu0 %v740
    %832 = vmatmul.bf16.gmra.mxu0 %v624
    %v833 = vpop.f32.mrf.mxu0
    %v834 = vadd.f32 0.0, %v833
    %v835 = vpop.f32.mrf.mxu0
    %v836 = vadd.f32 0.0, %v835
    %837 = vmatmul.bf16.gmra.mxu0 %v625
    %v838 = vpop.f32.mrf.mxu0
    %v839 = vadd.f32 0.0, %v838
    %v840 = vpop.f32.mrf.mxu0
    %v841 = vadd.f32 0.0, %v840
    %842 = vdwg.mxu0
    %vm847 = vcmask 1040384
    %v848 = vrot.slane %v796, 7
    %v849 = vrot.slane %v798, 7
    %v850 = vsel %vm847, %v848, %v849
    %v851 = vrot.slane %v801, 7
    %v852 = vsel %vm847, %v849, %v851
    %v853 = vrot.slane %v803, 7
    %v854 = vsel %vm847, %v851, %v853
    %v859 = vsel %vm847, 0.0, %v848
    %v860 = vmul.f32 %v859, %v600
    %v861 = vmul.f32 %v850, %v601
    %v862 = vmul.f32 %v852, %v600
    %v863 = vmul.f32 %v854, %v601
    %vm868 = vcmask 1046528
    %v869 = vrot.slane %v834, 1
    %v870 = vrot.slane %v836, 1
    %v871 = vsel %vm868, %v869, %v870
    %v872 = vrot.slane %v839, 1
    %v873 = vsel %vm868, %v870, %v872
    %v874 = vrot.slane %v841, 1
    %v875 = vsel %vm868, %v872, %v874
    %v880 = vsel %vm868, %v874, 0.0
    %v881 = vmul.f32 %v871, %v606
    %v882 = vmul.f32 %v873, %v607
    %v883 = vmul.f32 %v875, %v606
    %v884 = vmul.f32 %v880, %v607
    %v885 = vadd.f32 %v815, %v860
    %v886 = vadd.f32 %v817, %v861
    %v887 = vadd.f32 %v820, %v862
    %v888 = vadd.f32 %v822, %v863
    %v889 = vadd.f32 %v885, %v881
    %v890 = vadd.f32 %v886, %v882
    %v891 = vadd.f32 %v887, %v883
    %v892 = vadd.f32 %v888, %v884
    %v893 = vld [vmem:[#allocation11] sm:$0x1]
    %v895 = vperm.slane %v893, 0
    %v897 = vadd.f32 %v889, %v895
    %v898 = vadd.f32 %v890, %v895
    %v899 = vadd.f32 %v891, %v895
    %v900 = vadd.f32 %v892, %v895
    %v901 = vmax.f32 %v897, 0.0
    %v902 = vmax.f32 %v898, 0.0
    %v903 = vmax.f32 %v899, 0.0
    %v904 = vmax.f32 %v900, 0.0
    %v905 = vld [vmem:[#allocation13] sm:$0x1]
    %v907 = vperm.slane %v905, 0
    %v909 = vmul.f32 %v901, %v907
    %v910 = vmul.f32 %v902, %v907
    %v911 = vmul.f32 %v903, %v907
    %v912 = vmul.f32 %v904, %v907
    %v913 = vld [vmem:[#allocation14] sm:$0x1]
    %v915 = vperm.slane %v913, 0
    %v917 = vadd.f32 %v909, %v915
    %v918 = vadd.f32 %v910, %v915
    %v919 = vadd.f32 %v911, %v915
    %v920 = vadd.f32 %v912, %v915
    %v921 = vpack.c.bf16 %v918, %v917
    %v922 = vpack.c.bf16 %v920, %v919
    %v923 = vld [vmem:[#allocation16] sm:$0xff]
    %v924 = vld [vmem:[#allocation16 + $0x8] sm:$0xf]
    %v925 = vld [vmem:[#allocation16 + $0xc] sm:$0xff]
    %v926 = vld [vmem:[#allocation16 + $0x14] sm:$0xf]
    %v927 = vld [vmem:[#allocation16 + $0x18] sm:$0xff]
    %v928 = vld [vmem:[#allocation16 + $0x20] sm:$0xf]
    %v929 = vld [vmem:[#allocation16 + $0x24] sm:$0xff]
    %v930 = vld [vmem:[#allocation16 + $0x2c] sm:$0xf]
    %v931 = vld [vmem:[#allocation16 + $0x30] sm:$0xff]
    %v932 = vld [vmem:[#allocation16 + $0x38] sm:$0xf]
    %v933 = vld [vmem:[#allocation16 + $0x3c] sm:$0xff]
    %v934 = vld [vmem:[#allocation16 + $0x44] sm:$0xf]
    %v935 = vld [vmem:[#allocation16 + $0x48] sm:$0xff]
    %v936 = vld [vmem:[#allocation16 + $0x50] sm:$0xf]
    %v937 = vld [vmem:[#allocation16 + $0x54] sm:$0xff]
    %v938 = vld [vmem:[#allocation16 + $0x5c] sm:$0xf]
    %v939 = vld [vmem:[#allocation16 + $0x60] sm:$0xff]
    %v940 = vld [vmem:[#allocation16 + $0x68] sm:$0xf]
    %v941 = vld [vmem:[#allocation16 + $0x6c] sm:$0xff]
    %v942 = vld [vmem:[#allocation16 + $0x74] sm:$0xf]
    %v943 = vld [vmem:[#allocation16 + $0x78] sm:$0xff]
    %v944 = vld [vmem:[#allocation16 + $0x80] sm:$0xf]
    %v945 = vld [vmem:[#allocation16 + $0x84] sm:$0xff]
    %v946 = vld [vmem:[#allocation16 + $0x8c] sm:$0xf]
    %v947 = vld [vmem:[#allocation16 + $0x90] sm:$0xff]
    %v948 = vld [vmem:[#allocation16 + $0x98] sm:$0xf]
    %v949 = vld [vmem:[#allocation16 + $0x9c] sm:$0xff]
    %v950 = vld [vmem:[#allocation16 + $0xa4] sm:$0xf]
    %v951 = vld [vmem:[#allocation16 + $0xa8] sm:$0xff]
    %v952 = vld [vmem:[#allocation16 + $0xb0] sm:$0xf]
    %v953 = vld [vmem:[#allocation16 + $0xb4] sm:$0xff]
    %v954 = vld [vmem:[#allocation16 + $0xbc] sm:$0xf]
    %v987 = vunpack.c.l.b16 %v923
    %v988 = vunpack.c.h.b16 %v923
    %v989 = vunpack.c.l.b16 %v924
    %v990 = vunpack.c.l.b16 %v925
    %v991 = vunpack.c.h.b16 %v925
    %v992 = vunpack.c.l.b16 %v926
    %v993 = vunpack.c.l.b16 %v927
    %v994 = vunpack.c.h.b16 %v927
    %v995 = vunpack.c.l.b16 %v928
    %v996 = vunpack.c.l.b16 %v929
    %v997 = vunpack.c.h.b16 %v929
    %v998 = vunpack.c.l.b16 %v930
    %v999 = vunpack.c.l.b16 %v931
    %v1000 = vunpack.c.h.b16 %v931
    %v1001 = vunpack.c.l.b16 %v932
    %v1002 = vunpack.c.l.b16 %v933
    %v1003 = vunpack.c.h.b16 %v933
    %v1004 = vunpack.c.l.b16 %v934
    %v1005 = vunpack.c.l.b16 %v935
    %v1006 = vunpack.c.h.b16 %v935
    %v1007 = vunpack.c.l.b16 %v936
    %v1008 = vunpack.c.l.b16 %v937
    %v1009 = vunpack.c.h.b16 %v937
    %v1010 = vunpack.c.l.b16 %v938
    %v1011 = vunpack.c.l.b16 %v939
    %v1012 = vunpack.c.h.b16 %v939
    %v1013 = vunpack.c.l.b16 %v940
    %v1014 = vunpack.c.l.b16 %v941
    %v1015 = vunpack.c.h.b16 %v941
    %v1016 = vunpack.c.l.b16 %v942
    %v1017 = vunpack.c.l.b16 %v943
    %v1018 = vunpack.c.h.b16 %v943
    %v1019 = vunpack.c.l.b16 %v944
    %v1020 = vunpack.c.l.b16 %v945
    %v1021 = vunpack.c.h.b16 %v945
    %v1022 = vunpack.c.l.b16 %v946
    %v1023 = vunpack.c.l.b16 %v947
    %v1024 = vunpack.c.h.b16 %v947
    %v1025 = vunpack.c.l.b16 %v948
    %v1026 = vunpack.c.l.b16 %v949
    %v1027 = vunpack.c.h.b16 %v949
    %v1028 = vunpack.c.l.b16 %v950
    %v1029 = vunpack.c.l.b16 %v951
    %v1030 = vunpack.c.h.b16 %v951
    %v1031 = vunpack.c.l.b16 %v952
    %v1032 = vunpack.c.l.b16 %v953
    %v1033 = vunpack.c.h.b16 %v953
    %v1034 = vunpack.c.l.b16 %v954
    %v1035 = vpack.c.b16 %v990, %v987
    %v1036 = vpack.c.b16 %v991, %v988
    %v1037 = vpack.c.b16 %v992, %v989
    %v1038 = vpack.c.b16 %v996, %v993
    %v1039 = vpack.c.b16 %v997, %v994
    %v1040 = vpack.c.b16 %v998, %v995
    %v1041 = vpack.c.b16 %v1002, %v999
    %v1042 = vpack.c.b16 %v1003, %v1000
    %v1043 = vpack.c.b16 %v1004, %v1001
    %v1044 = vpack.c.b16 %v1008, %v1005
    %v1045 = vpack.c.b16 %v1009, %v1006
    %v1046 = vpack.c.b16 %v1010, %v1007
    %v1047 = vpack.c.b16 %v1014, %v1011
    %v1048 = vpack.c.b16 %v1015, %v1012
    %v1049 = vpack.c.b16 %v1016, %v1013
    %v1050 = vpack.c.b16 %v1020, %v1017
    %v1051 = vpack.c.b16 %v1021, %v1018
    %v1052 = vpack.c.b16 %v1022, %v1019
    %v1053 = vpack.c.b16 %v1026, %v1023
    %v1054 = vpack.c.b16 %v1027, %v1024
    %v1055 = vpack.c.b16 %v1028, %v1025
    %v1056 = vpack.c.b16 %v1032, %v1029
    %v1057 = vpack.c.b16 %v1033, %v1030
    %v1058 = vpack.c.b16 %v1034, %v1031
    %1083 = vmatpush.bf16.msra.mxu0 %v1056
    %1084 = vmatpush.bf16.msra.mxu0 %v1053
    %1085 = vmatpush.bf16.msra.mxu0 %v1050
    %1086 = vmatpush.bf16.msra.mxu0 %v1047
    %1087 = vmatpush.bf16.msra.mxu0 %v1044
    %1088 = vmatpush.bf16.msra.mxu0 %v1041
    %1089 = vmatpush.bf16.msra.mxu0 %v1038
    %1090 = vmatpush.bf16.msra.mxu0 %v1035
    %1091 = vmatmul.bf16.gmra.mxu0 %v921
    %v1092 = vpop.f32.mrf.mxu0
    %v1093 = vadd.f32 0.0, %v1092
    %v1094 = vpop.f32.mrf.mxu0
    %v1095 = vadd.f32 0.0, %v1094
    %1096 = vmatmul.bf16.gmra.mxu0 %v922
    %v1097 = vpop.f32.mrf.mxu0
    %v1098 = vadd.f32 0.0, %v1097
    %v1099 = vpop.f32.mrf.mxu0
    %v1100 = vadd.f32 0.0, %v1099
    %1101 = vdwg.mxu0
    %1102 = vmatpush.bf16.msra.mxu0 %v1057
    %1103 = vmatpush.bf16.msra.mxu0 %v1054
    %1104 = vmatpush.bf16.msra.mxu0 %v1051
    %1105 = vmatpush.bf16.msra.mxu0 %v1048
    %1106 = vmatpush.bf16.msra.mxu0 %v1045
    %1107 = vmatpush.bf16.msra.mxu0 %v1042
    %1108 = vmatpush.bf16.msra.mxu0 %v1039
    %1109 = vmatpush.bf16.msra.mxu0 %v1036
    %1110 = vmatmul.bf16.gmra.mxu0 %v921
    %v1111 = vpop.f32.mrf.mxu0
    %v1112 = vadd.f32 0.0, %v1111
    %v1113 = vpop.f32.mrf.mxu0
    %v1114 = vadd.f32 0.0, %v1113
    %1115 = vmatmul.bf16.gmra.mxu0 %v922
    %v1116 = vpop.f32.mrf.mxu0
    %v1117 = vadd.f32 0.0, %v1116
    %v1118 = vpop.f32.mrf.mxu0
    %v1119 = vadd.f32 0.0, %v1118
    %1120 = vdwg.mxu0
    %1121 = vmatpush.bf16.msra.mxu0 %v1058
    %1122 = vmatpush.bf16.msra.mxu0 %v1055
    %1123 = vmatpush.bf16.msra.mxu0 %v1052
    %1124 = vmatpush.bf16.msra.mxu0 %v1049
    %1125 = vmatpush.bf16.msra.mxu0 %v1046
    %1126 = vmatpush.bf16.msra.mxu0 %v1043
    %1127 = vmatpush.bf16.msra.mxu0 %v1040
    %1128 = vmatpush.bf16.msra.mxu0 %v1037
    %1129 = vmatmul.bf16.gmra.mxu0 %v921
    %v1130 = vpop.f32.mrf.mxu0
    %v1131 = vadd.f32 0.0, %v1130
    %v1132 = vpop.f32.mrf.mxu0
    %v1133 = vadd.f32 0.0, %v1132
    %1134 = vmatmul.bf16.gmra.mxu0 %v922
    %v1135 = vpop.f32.mrf.mxu0
    %v1136 = vadd.f32 0.0, %v1135
    %v1137 = vpop.f32.mrf.mxu0
    %v1138 = vadd.f32 0.0, %v1137
    %1139 = vdwg.mxu0
    %v1144 = vrot.slane %v1093, 7
    %v1145 = vrot.slane %v1095, 7
    %v1146 = vsel %vm847, %v1144, %v1145
    %v1147 = vrot.slane %v1098, 7
    %v1148 = vsel %vm847, %v1145, %v1147
    %v1149 = vrot.slane %v1100, 7
    %v1150 = vsel %vm847, %v1147, %v1149
    %v1155 = vsel %vm847, 0.0, %v1144
    %v1156 = vmul.f32 %v1155, %v600
    %v1157 = vmul.f32 %v1146, %v601
    %v1158 = vmul.f32 %v1148, %v600
    %v1159 = vmul.f32 %v1150, %v601
    %v1164 = vrot.slane %v1131, 1
    %v1165 = vrot.slane %v1133, 1
    %v1166 = vsel %vm868, %v1164, %v1165
    %v1167 = vrot.slane %v1136, 1
    %v1168 = vsel %vm868, %v1165, %v1167
    %v1169 = vrot.slane %v1138, 1
    %v1170 = vsel %vm868, %v1167, %v1169
    %v1175 = vsel %vm868, %v1169, 0.0
    %v1176 = vmul.f32 %v1166, %v606
    %v1177 = vmul.f32 %v1168, %v607
    %v1178 = vmul.f32 %v1170, %v606
    %v1179 = vmul.f32 %v1175, %v607
    %v1180 = vadd.f32 %v1112, %v1156
    %v1181 = vadd.f32 %v1114, %v1157
    %v1182 = vadd.f32 %v1117, %v1158
    %v1183 = vadd.f32 %v1119, %v1159
    %v1184 = vadd.f32 %v1180, %v1176
    %v1185 = vadd.f32 %v1181, %v1177
    %v1186 = vadd.f32 %v1182, %v1178
    %v1187 = vadd.f32 %v1183, %v1179
    %v1188 = vld [vmem:[#allocation17] sm:$0x1]
    %v1190 = vperm.slane %v1188, 0
    %v1192 = vadd.f32 %v1184, %v1190
    %v1193 = vadd.f32 %v1185, %v1190
    %v1194 = vadd.f32 %v1186, %v1190
    %v1195 = vadd.f32 %v1187, %v1190
    %v1196 = vmax.f32 %v1192, 0.0
    %v1197 = vmax.f32 %v1193, 0.0
    %v1198 = vmax.f32 %v1194, 0.0
    %v1199 = vmax.f32 %v1195, 0.0
    %v1200 = vadd.f32 %v1196, %v584
    %v1201 = vadd.f32 %v1197, %v586
    %v1202 = vadd.f32 %v1198, %v589
    %v1203 = vadd.f32 %v1199, %v591
    %v1204 = vld [vmem:[#allocation19] sm:$0x1]
    %v1206 = vperm.slane %v1204, 0
    %v1208 = vmul.f32 %v1200, %v1206
    %v1209 = vmul.f32 %v1201, %v1206
    %v1210 = vmul.f32 %v1202, %v1206
    %v1211 = vmul.f32 %v1203, %v1206
    %v1212 = vld [vmem:[#allocation20] sm:$0x1]
    %v1214 = vperm.slane %v1212, 0
    %v1216 = vadd.f32 %v1208, %v1214
    %v1217 = vadd.f32 %v1209, %v1214
    %v1218 = vadd.f32 %v1210, %v1214
    %v1219 = vadd.f32 %v1211, %v1214
    %v1220 = vpack.c.bf16 %v1217, %v1216
    %v1221 = vpack.c.bf16 %v1219, %v1218
    %v1222 = vld [vmem:[#allocation22] sm:$0xff]
    %v1223 = vld [vmem:[#allocation22 + $0x8] sm:$0xf]
    %v1224 = vld [vmem:[#allocation22 + $0xc] sm:$0xff]
    %v1225 = vld [vmem:[#allocation22 + $0x14] sm:$0xf]
    %v1226 = vld [vmem:[#allocation22 + $0x18] sm:$0xff]
    %v1227 = vld [vmem:[#allocation22 + $0x20] sm:$0xf]
    %v1228 = vld [vmem:[#allocation22 + $0x24] sm:$0xff]
    %v1229 = vld [vmem:[#allocation22 + $0x2c] sm:$0xf]
    %v1230 = vld [vmem:[#allocation22 + $0x30] sm:$0xff]
    %v1231 = vld [vmem:[#allocation22 + $0x38] sm:$0xf]
    %v1232 = vld [vmem:[#allocation22 + $0x3c] sm:$0xff]
    %v1233 = vld [vmem:[#allocation22 + $0x44] sm:$0xf]
    %v1234 = vld [vmem:[#allocation22 + $0x48] sm:$0xff]
    %v1235 = vld [vmem:[#allocation22 + $0x50] sm:$0xf]
    %v1236 = vld [vmem:[#allocation22 + $0x54] sm:$0xff]
    %v1237 = vld [vmem:[#allocation22 + $0x5c] sm:$0xf]
    %v1238 = vld [vmem:[#allocation22 + $0x60] sm:$0xff]
    %v1239 = vld [vmem:[#allocation22 + $0x68] sm:$0xf]
    %v1240 = vld [vmem:[#allocation22 + $0x6c] sm:$0xff]
    %v1241 = vld [vmem:[#allocation22 + $0x74] sm:$0xf]
    %v1242 = vld [vmem:[#allocation22 + $0x78] sm:$0xff]
    %v1243 = vld [vmem:[#allocation22 + $0x80] sm:$0xf]
    %v1244 = vld [vmem:[#allocation22 + $0x84] sm:$0xff]
    %v1245 = vld [vmem:[#allocation22 + $0x8c] sm:$0xf]
    %v1246 = vld [vmem:[#allocation22 + $0x90] sm:$0xff]
    %v1247 = vld [vmem:[#allocation22 + $0x98] sm:$0xf]
    %v1248 = vld [vmem:[#allocation22 + $0x9c] sm:$0xff]
    %v1249 = vld [vmem:[#allocation22 + $0xa4] sm:$0xf]
    %v1250 = vld [vmem:[#allocation22 + $0xa8] sm:$0xff]
    %v1251 = vld [vmem:[#allocation22 + $0xb0] sm:$0xf]
    %v1252 = vld [vmem:[#allocation22 + $0xb4] sm:$0xff]
    %v1253 = vld [vmem:[#allocation22 + $0xbc] sm:$0xf]
    %v1286 = vunpack.c.l.b16 %v1222
    %v1287 = vunpack.c.h.b16 %v1222
    %v1288 = vunpack.c.l.b16 %v1223
    %v1289 = vunpack.c.l.b16 %v1224
    %v1290 = vunpack.c.h.b16 %v1224
    %v1291 = vunpack.c.l.b16 %v1225
    %v1292 = vunpack.c.l.b16 %v1226
    %v1293 = vunpack.c.h.b16 %v1226
    %v1294 = vunpack.c.l.b16 %v1227
    %v1295 = vunpack.c.l.b16 %v1228
    %v1296 = vunpack.c.h.b16 %v1228
    %v1297 = vunpack.c.l.b16 %v1229
    %v1298 = vunpack.c.l.b16 %v1230
    %v1299 = vunpack.c.h.b16 %v1230
    %v1300 = vunpack.c.l.b16 %v1231
    %v1301 = vunpack.c.l.b16 %v1232
    %v1302 = vunpack.c.h.b16 %v1232
    %v1303 = vunpack.c.l.b16 %v1233
    %v1304 = vunpack.c.l.b16 %v1234
    %v1305 = vunpack.c.h.b16 %v1234
    %v1306 = vunpack.c.l.b16 %v1235
    %v1307 = vunpack.c.l.b16 %v1236
    %v1308 = vunpack.c.h.b16 %v1236
    %v1309 = vunpack.c.l.b16 %v1237
    %v1310 = vunpack.c.l.b16 %v1238
    %v1311 = vunpack.c.h.b16 %v1238
    %v1312 = vunpack.c.l.b16 %v1239
    %v1313 = vunpack.c.l.b16 %v1240
    %v1314 = vunpack.c.h.b16 %v1240
    %v1315 = vunpack.c.l.b16 %v1241
    %v1316 = vunpack.c.l.b16 %v1242
    %v1317 = vunpack.c.h.b16 %v1242
    %v1318 = vunpack.c.l.b16 %v1243
    %v1319 = vunpack.c.l.b16 %v1244
    %v1320 = vunpack.c.h.b16 %v1244
    %v1321 = vunpack.c.l.b16 %v1245
    %v1322 = vunpack.c.l.b16 %v1246
    %v1323 = vunpack.c.h.b16 %v1246
    %v1324 = vunpack.c.l.b16 %v1247
    %v1325 = vunpack.c.l.b16 %v1248
    %v1326 = vunpack.c.h.b16 %v1248
    %v1327 = vunpack.c.l.b16 %v1249
    %v1328 = vunpack.c.l.b16 %v1250
    %v1329 = vunpack.c.h.b16 %v1250
    %v1330 = vunpack.c.l.b16 %v1251
    %v1331 = vunpack.c.l.b16 %v1252
    %v1332 = vunpack.c.h.b16 %v1252
    %v1333 = vunpack.c.l.b16 %v1253
    %v1334 = vpack.c.b16 %v1289, %v1286
    %v1335 = vpack.c.b16 %v1290, %v1287
    %v1336 = vpack.c.b16 %v1291, %v1288
    %v1337 = vpack.c.b16 %v1295, %v1292
    %v1338 = vpack.c.b16 %v1296, %v1293
    %v1339 = vpack.c.b16 %v1297, %v1294
    %v1340 = vpack.c.b16 %v1301, %v1298
    %v1341 = vpack.c.b16 %v1302, %v1299
    %v1342 = vpack.c.b16 %v1303, %v1300
    %v1343 = vpack.c.b16 %v1307, %v1304
    %v1344 = vpack.c.b16 %v1308, %v1305
    %v1345 = vpack.c.b16 %v1309, %v1306
    %v1346 = vpack.c.b16 %v1313, %v1310
    %v1347 = vpack.c.b16 %v1314, %v1311
    %v1348 = vpack.c.b16 %v1315, %v1312
    %v1349 = vpack.c.b16 %v1319, %v1316
    %v1350 = vpack.c.b16 %v1320, %v1317
    %v1351 = vpack.c.b16 %v1321, %v1318
    %v1352 = vpack.c.b16 %v1325, %v1322
    %v1353 = vpack.c.b16 %v1326, %v1323
    %v1354 = vpack.c.b16 %v1327, %v1324
    %v1355 = vpack.c.b16 %v1331, %v1328
    %v1356 = vpack.c.b16 %v1332, %v1329
    %v1357 = vpack.c.b16 %v1333, %v1330
    %1382 = vmatpush.bf16.msra.mxu0 %v1355
    %1383 = vmatpush.bf16.msra.mxu0 %v1352
    %1384 = vmatpush.bf16.msra.mxu0 %v1349
    %1385 = vmatpush.bf16.msra.mxu0 %v1346
    %1386 = vmatpush.bf16.msra.mxu0 %v1343
    %1387 = vmatpush.bf16.msra.mxu0 %v1340
    %1388 = vmatpush.bf16.msra.mxu0 %v1337
    %1389 = vmatpush.bf16.msra.mxu0 %v1334
    %1390 = vmatmul.bf16.gmra.mxu0 %v1220
    %v1391 = vpop.f32.mrf.mxu0
    %v1392 = vadd.f32 0.0, %v1391
    %v1393 = vpop.f32.mrf.mxu0
    %v1394 = vadd.f32 0.0, %v1393
    %1395 = vmatmul.bf16.gmra.mxu0 %v1221
    %v1396 = vpop.f32.mrf.mxu0
    %v1397 = vadd.f32 0.0, %v1396
    %v1398 = vpop.f32.mrf.mxu0
    %v1399 = vadd.f32 0.0, %v1398
    %1400 = vdwg.mxu0
    %1401 = vmatpush.bf16.msra.mxu0 %v1356
    %1402 = vmatpush.bf16.msra.mxu0 %v1353
    %1403 = vmatpush.bf16.msra.mxu0 %v1350
    %1404 = vmatpush.bf16.msra.mxu0 %v1347
    %1405 = vmatpush.bf16.msra.mxu0 %v1344
    %1406 = vmatpush.bf16.msra.mxu0 %v1341
    %1407 = vmatpush.bf16.msra.mxu0 %v1338
    %1408 = vmatpush.bf16.msra.mxu0 %v1335
    %1409 = vmatmul.bf16.gmra.mxu0 %v1220
    %v1410 = vpop.f32.mrf.mxu0
    %v1411 = vadd.f32 0.0, %v1410
    %v1412 = vpop.f32.mrf.mxu0
    %v1413 = vadd.f32 0.0, %v1412
    %1414 = vmatmul.bf16.gmra.mxu0 %v1221
    %v1415 = vpop.f32.mrf.mxu0
    %v1416 = vadd.f32 0.0, %v1415
    %v1417 = vpop.f32.mrf.mxu0
    %v1418 = vadd.f32 0.0, %v1417
    %1419 = vdwg.mxu0
    %1420 = vmatpush.bf16.msra.mxu0 %v1357
    %1421 = vmatpush.bf16.msra.mxu0 %v1354
    %1422 = vmatpush.bf16.msra.mxu0 %v1351
    %1423 = vmatpush.bf16.msra.mxu0 %v1348
    %1424 = vmatpush.bf16.msra.mxu0 %v1345
    %1425 = vmatpush.bf16.msra.mxu0 %v1342
    %1426 = vmatpush.bf16.msra.mxu0 %v1339
    %1427 = vmatpush.bf16.msra.mxu0 %v1336
    %1428 = vmatmul.bf16.gmra.mxu0 %v1220
    %v1429 = vpop.f32.mrf.mxu0
    %v1430 = vadd.f32 0.0, %v1429
    %v1431 = vpop.f32.mrf.mxu0
    %v1432 = vadd.f32 0.0, %v1431
    %1433 = vmatmul.bf16.gmra.mxu0 %v1221
    %v1434 = vpop.f32.mrf.mxu0
    %v1435 = vadd.f32 0.0, %v1434
    %v1436 = vpop.f32.mrf.mxu0
    %v1437 = vadd.f32 0.0, %v1436
    %1438 = vdwg.mxu0
    %v1443 = vrot.slane %v1392, 7
    %v1444 = vrot.slane %v1394, 7
    %v1445 = vsel %vm847, %v1443, %v1444
    %v1446 = vrot.slane %v1397, 7
    %v1447 = vsel %vm847, %v1444, %v1446
    %v1448 = vrot.slane %v1399, 7
    %v1449 = vsel %vm847, %v1446, %v1448
    %v1454 = vsel %vm847, 0.0, %v1443
    %v1455 = vmul.f32 %v1454, %v600
    %v1456 = vmul.f32 %v1445, %v601
    %v1457 = vmul.f32 %v1447, %v600
    %v1458 = vmul.f32 %v1449, %v601
    %v1463 = vrot.slane %v1430, 1
    %v1464 = vrot.slane %v1432, 1
    %v1465 = vsel %vm868, %v1463, %v1464
    %v1466 = vrot.slane %v1435, 1
    %v1467 = vsel %vm868, %v1464, %v1466
    %v1468 = vrot.slane %v1437, 1
    %v1469 = vsel %vm868, %v1466, %v1468
    %v1474 = vsel %vm868, %v1468, 0.0
    %v1475 = vmul.f32 %v1465, %v606
    %v1476 = vmul.f32 %v1467, %v607
    %v1477 = vmul.f32 %v1469, %v606
    %v1478 = vmul.f32 %v1474, %v607
    %v1479 = vadd.f32 %v1411, %v1455
    %v1480 = vadd.f32 %v1413, %v1456
    %v1481 = vadd.f32 %v1416, %v1457
    %v1482 = vadd.f32 %v1418, %v1458
    %v1483 = vadd.f32 %v1479, %v1475
    %v1484 = vadd.f32 %v1480, %v1476
    %v1485 = vadd.f32 %v1481, %v1477
    %v1486 = vadd.f32 %v1482, %v1478
    %v1487 = vld [vmem:[#allocation23] sm:$0x1]
    %v1489 = vperm.slane %v1487, 0
    %v1491 = vadd.f32 %v1483, %v1489
    %v1492 = vadd.f32 %v1484, %v1489
    %v1493 = vadd.f32 %v1485, %v1489
    %v1494 = vadd.f32 %v1486, %v1489
    %v1495 = vmax.f32 %v1491, 0.0
    %v1496 = vmax.f32 %v1492, 0.0
    %v1497 = vmax.f32 %v1493, 0.0
    %v1498 = vmax.f32 %v1494, 0.0
    %v1499 = vld [vmem:[#allocation25] sm:$0x1]
    %v1501 = vperm.slane %v1499, 0
    %v1503 = vmul.f32 %v1495, %v1501
    %v1504 = vmul.f32 %v1496, %v1501
    %v1505 = vmul.f32 %v1497, %v1501
    %v1506 = vmul.f32 %v1498, %v1501
    %v1507 = vld [vmem:[#allocation26] sm:$0x1]
    %v1509 = vperm.slane %v1507, 0
    %v1511 = vadd.f32 %v1503, %v1509
    %v1512 = vadd.f32 %v1504, %v1509
    %v1513 = vadd.f32 %v1505, %v1509
    %v1514 = vadd.f32 %v1506, %v1509
    %v1515 = vpack.c.bf16 %v1512, %v1511
    %v1516 = vpack.c.bf16 %v1514, %v1513
    %v1517 = vld [vmem:[#allocation28] sm:$0xff]
    %v1518 = vld [vmem:[#allocation28 + $0x8] sm:$0xf]
    %v1519 = vld [vmem:[#allocation28 + $0xc] sm:$0xff]
    %v1520 = vld [vmem:[#allocation28 + $0x14] sm:$0xf]
    %v1521 = vld [vmem:[#allocation28 + $0x18] sm:$0xff]
    %v1522 = vld [vmem:[#allocation28 + $0x20] sm:$0xf]
    %v1523 = vld [vmem:[#allocation28 + $0x24] sm:$0xff]
    %v1524 = vld [vmem:[#allocation28 + $0x2c] sm:$0xf]
    %v1525 = vld [vmem:[#allocation28 + $0x30] sm:$0xff]
    %v1526 = vld [vmem:[#allocation28 + $0x38] sm:$0xf]
    %v1527 = vld [vmem:[#allocation28 + $0x3c] sm:$0xff]
    %v1528 = vld [vmem:[#allocation28 + $0x44] sm:$0xf]
    %v1529 = vld [vmem:[#allocation28 + $0x48] sm:$0xff]
    %v1530 = vld [vmem:[#allocation28 + $0x50] sm:$0xf]
    %v1531 = vld [vmem:[#allocation28 + $0x54] sm:$0xff]
    %v1532 = vld [vmem:[#allocation28 + $0x5c] sm:$0xf]
    %v1533 = vld [vmem:[#allocation28 + $0x60] sm:$0xff]
    %v1534 = vld [vmem:[#allocation28 + $0x68] sm:$0xf]
    %v1535 = vld [vmem:[#allocation28 + $0x6c] sm:$0xff]
    %v1536 = vld [vmem:[#allocation28 + $0x74] sm:$0xf]
    %v1537 = vld [vmem:[#allocation28 + $0x78] sm:$0xff]
    %v1538 = vld [vmem:[#allocation28 + $0x80] sm:$0xf]
    %v1539 = vld [vmem:[#allocation28 + $0x84] sm:$0xff]
    %v1540 = vld [vmem:[#allocation28 + $0x8c] sm:$0xf]
    %v1541 = vld [vmem:[#allocation28 + $0x90] sm:$0xff]
    %v1542 = vld [vmem:[#allocation28 + $0x98] sm:$0xf]
    %v1543 = vld [vmem:[#allocation28 + $0x9c] sm:$0xff]
    %v1544 = vld [vmem:[#allocation28 + $0xa4] sm:$0xf]
    %v1545 = vld [vmem:[#allocation28 + $0xa8] sm:$0xff]
    %v1546 = vld [vmem:[#allocation28 + $0xb0] sm:$0xf]
    %v1547 = vld [vmem:[#allocation28 + $0xb4] sm:$0xff]
    %v1548 = vld [vmem:[#allocation28 + $0xbc] sm:$0xf]
    %v1581 = vunpack.c.l.b16 %v1517
    %v1582 = vunpack.c.h.b16 %v1517
    %v1583 = vunpack.c.l.b16 %v1518
    %v1584 = vunpack.c.l.b16 %v1519
    %v1585 = vunpack.c.h.b16 %v1519
    %v1586 = vunpack.c.l.b16 %v1520
    %v1587 = vunpack.c.l.b16 %v1521
    %v1588 = vunpack.c.h.b16 %v1521
    %v1589 = vunpack.c.l.b16 %v1522
    %v1590 = vunpack.c.l.b16 %v1523
    %v1591 = vunpack.c.h.b16 %v1523
    %v1592 = vunpack.c.l.b16 %v1524
    %v1593 = vunpack.c.l.b16 %v1525
    %v1594 = vunpack.c.h.b16 %v1525
    %v1595 = vunpack.c.l.b16 %v1526
    %v1596 = vunpack.c.l.b16 %v1527
    %v1597 = vunpack.c.h.b16 %v1527
    %v1598 = vunpack.c.l.b16 %v1528
    %v1599 = vunpack.c.l.b16 %v1529
    %v1600 = vunpack.c.h.b16 %v1529
    %v1601 = vunpack.c.l.b16 %v1530
    %v1602 = vunpack.c.l.b16 %v1531
    %v1603 = vunpack.c.h.b16 %v1531
    %v1604 = vunpack.c.l.b16 %v1532
    %v1605 = vunpack.c.l.b16 %v1533
    %v1606 = vunpack.c.h.b16 %v1533
    %v1607 = vunpack.c.l.b16 %v1534
    %v1608 = vunpack.c.l.b16 %v1535
    %v1609 = vunpack.c.h.b16 %v1535
    %v1610 = vunpack.c.l.b16 %v1536
    %v1611 = vunpack.c.l.b16 %v1537
    %v1612 = vunpack.c.h.b16 %v1537
    %v1613 = vunpack.c.l.b16 %v1538
    %v1614 = vunpack.c.l.b16 %v1539
    %v1615 = vunpack.c.h.b16 %v1539
    %v1616 = vunpack.c.l.b16 %v1540
    %v1617 = vunpack.c.l.b16 %v1541
    %v1618 = vunpack.c.h.b16 %v1541
    %v1619 = vunpack.c.l.b16 %v1542
    %v1620 = vunpack.c.l.b16 %v1543
    %v1621 = vunpack.c.h.b16 %v1543
    %v1622 = vunpack.c.l.b16 %v1544
    %v1623 = vunpack.c.l.b16 %v1545
    %v1624 = vunpack.c.h.b16 %v1545
    %v1625 = vunpack.c.l.b16 %v1546
    %v1626 = vunpack.c.l.b16 %v1547
    %v1627 = vunpack.c.h.b16 %v1547
    %v1628 = vunpack.c.l.b16 %v1548
    %v1629 = vpack.c.b16 %v1584, %v1581
    %v1630 = vpack.c.b16 %v1585, %v1582
    %v1631 = vpack.c.b16 %v1586, %v1583
    %v1632 = vpack.c.b16 %v1590, %v1587
    %v1633 = vpack.c.b16 %v1591, %v1588
    %v1634 = vpack.c.b16 %v1592, %v1589
    %v1635 = vpack.c.b16 %v1596, %v1593
    %v1636 = vpack.c.b16 %v1597, %v1594
    %v1637 = vpack.c.b16 %v1598, %v1595
    %v1638 = vpack.c.b16 %v1602, %v1599
    %v1639 = vpack.c.b16 %v1603, %v1600
    %v1640 = vpack.c.b16 %v1604, %v1601
    %v1641 = vpack.c.b16 %v1608, %v1605
    %v1642 = vpack.c.b16 %v1609, %v1606
    %v1643 = vpack.c.b16 %v1610, %v1607
    %v1644 = vpack.c.b16 %v1614, %v1611
    %v1645 = vpack.c.b16 %v1615, %v1612
    %v1646 = vpack.c.b16 %v1616, %v1613
    %v1647 = vpack.c.b16 %v1620, %v1617
    %v1648 = vpack.c.b16 %v1621, %v1618
    %v1649 = vpack.c.b16 %v1622, %v1619
    %v1650 = vpack.c.b16 %v1626, %v1623
    %v1651 = vpack.c.b16 %v1627, %v1624
    %v1652 = vpack.c.b16 %v1628, %v1625
    %1677 = vmatpush.bf16.msra.mxu0 %v1650
    %1678 = vmatpush.bf16.msra.mxu0 %v1647
    %1679 = vmatpush.bf16.msra.mxu0 %v1644
    %1680 = vmatpush.bf16.msra.mxu0 %v1641
    %1681 = vmatpush.bf16.msra.mxu0 %v1638
    %1682 = vmatpush.bf16.msra.mxu0 %v1635
    %1683 = vmatpush.bf16.msra.mxu0 %v1632
    %1684 = vmatpush.bf16.msra.mxu0 %v1629
    %1685 = vmatmul.bf16.gmra.mxu0 %v1515
    %v1686 = vpop.f32.mrf.mxu0
    %v1687 = vadd.f32 0.0, %v1686
    %v1688 = vpop.f32.mrf.mxu0
    %v1689 = vadd.f32 0.0, %v1688
    %1690 = vmatmul.bf16.gmra.mxu0 %v1516
    %v1691 = vpop.f32.mrf.mxu0
    %v1692 = vadd.f32 0.0, %v1691
    %v1693 = vpop.f32.mrf.mxu0
    %v1694 = vadd.f32 0.0, %v1693
    %1695 = vdwg.mxu0
    %1696 = vmatpush.bf16.msra.mxu0 %v1651
    %1697 = vmatpush.bf16.msra.mxu0 %v1648
    %1698 = vmatpush.bf16.msra.mxu0 %v1645
    %1699 = vmatpush.bf16.msra.mxu0 %v1642
    %1700 = vmatpush.bf16.msra.mxu0 %v1639
    %1701 = vmatpush.bf16.msra.mxu0 %v1636
    %1702 = vmatpush.bf16.msra.mxu0 %v1633
    %1703 = vmatpush.bf16.msra.mxu0 %v1630
    %1704 = vmatmul.bf16.gmra.mxu0 %v1515
    %v1705 = vpop.f32.mrf.mxu0
    %v1706 = vadd.f32 0.0, %v1705
    %v1707 = vpop.f32.mrf.mxu0
    %v1708 = vadd.f32 0.0, %v1707
    %1709 = vmatmul.bf16.gmra.mxu0 %v1516
    %v1710 = vpop.f32.mrf.mxu0
    %v1711 = vadd.f32 0.0, %v1710
    %v1712 = vpop.f32.mrf.mxu0
    %v1713 = vadd.f32 0.0, %v1712
    %1714 = vdwg.mxu0
    %1715 = vmatpush.bf16.msra.mxu0 %v1652
    %1716 = vmatpush.bf16.msra.mxu0 %v1649
    %1717 = vmatpush.bf16.msra.mxu0 %v1646
    %1718 = vmatpush.bf16.msra.mxu0 %v1643
    %1719 = vmatpush.bf16.msra.mxu0 %v1640
    %1720 = vmatpush.bf16.msra.mxu0 %v1637
    %1721 = vmatpush.bf16.msra.mxu0 %v1634
    %1722 = vmatpush.bf16.msra.mxu0 %v1631
    %1723 = vmatmul.bf16.gmra.mxu0 %v1515
    %v1724 = vpop.f32.mrf.mxu0
    %v1725 = vadd.f32 0.0, %v1724
    %v1726 = vpop.f32.mrf.mxu0
    %v1727 = vadd.f32 0.0, %v1726
    %1728 = vmatmul.bf16.gmra.mxu0 %v1516
    %v1729 = vpop.f32.mrf.mxu0
    %v1730 = vadd.f32 0.0, %v1729
    %v1731 = vpop.f32.mrf.mxu0
    %v1732 = vadd.f32 0.0, %v1731
    %1733 = vdwg.mxu0
    %v1738 = vrot.slane %v1687, 7
    %v1739 = vrot.slane %v1689, 7
    %v1740 = vsel %vm847, %v1738, %v1739
    %v1741 = vrot.slane %v1692, 7
    %v1742 = vsel %vm847, %v1739, %v1741
    %v1743 = vrot.slane %v1694, 7
    %v1744 = vsel %vm847, %v1741, %v1743
    %v1749 = vsel %vm847, 0.0, %v1738
    %v1750 = vmul.f32 %v1749, %v600
    %v1751 = vmul.f32 %v1740, %v601
    %v1752 = vmul.f32 %v1742, %v600
    %v1753 = vmul.f32 %v1744, %v601
    %v1758 = vrot.slane %v1725, 1
    %v1759 = vrot.slane %v1727, 1
    %v1760 = vsel %vm868, %v1758, %v1759
    %v1761 = vrot.slane %v1730, 1
    %v1762 = vsel %vm868, %v1759, %v1761
    %v1763 = vrot.slane %v1732, 1
    %v1764 = vsel %vm868, %v1761, %v1763
    %v1769 = vsel %vm868, %v1763, 0.0
    %v1770 = vmul.f32 %v1760, %v606
    %v1771 = vmul.f32 %v1762, %v607
    %v1772 = vmul.f32 %v1764, %v606
    %v1773 = vmul.f32 %v1769, %v607
    %v1774 = vadd.f32 %v1706, %v1750
    %v1775 = vadd.f32 %v1708, %v1751
    %v1776 = vadd.f32 %v1711, %v1752
    %v1777 = vadd.f32 %v1713, %v1753
    %v1778 = vadd.f32 %v1774, %v1770
    %v1779 = vadd.f32 %v1775, %v1771
    %v1780 = vadd.f32 %v1776, %v1772
    %v1781 = vadd.f32 %v1777, %v1773
    %v1782 = vld [vmem:[#allocation29] sm:$0x1]
    %v1784 = vperm.slane %v1782, 0
    %v1786 = vadd.f32 %v1778, %v1784
    %v1787 = vadd.f32 %v1779, %v1784
    %v1788 = vadd.f32 %v1780, %v1784
    %v1789 = vadd.f32 %v1781, %v1784
    %v1790 = vmax.f32 %v1786, 0.0
    %v1791 = vmax.f32 %v1787, 0.0
    %v1792 = vmax.f32 %v1788, 0.0
    %v1793 = vmax.f32 %v1789, 0.0
    %v1794 = vadd.f32 %v1790, %v1200
    %v1795 = vadd.f32 %v1791, %v1201
    %v1796 = vadd.f32 %v1792, %v1202
    %v1797 = vadd.f32 %v1793, %v1203
    %v1798 = vld [vmem:[%s1] sm:$0xff]
    %v1799 = vld [vmem:[%s1 + $0x8] sm:$0xff]
    %v1800 = vld [vmem:[%s1 + $0x10] sm:$0xff]
    %v1801 = vld [vmem:[%s1 + $0x18] sm:$0xff]
    %1803 = vset.pattern.permute.xlu0 0
    %1804 = vperm.xlu0 %1803, %v1798
    %v1805 = vpop.permute.xlu0 %1804
    %1808 = vset.pattern.permute.xlu0 0
    %1809 = vperm.xlu0 %1808, %v1799
    %v1810 = vpop.permute.xlu0 %1809
    %1813 = vset.pattern.permute.xlu0 0
    %1814 = vperm.xlu0 %1813, %v1800
    %v1815 = vpop.permute.xlu0 %1814
    %1818 = vset.pattern.permute.xlu0 0
    %1819 = vperm.xlu0 %1818, %v1801
    %v1820 = vpop.permute.xlu0 %1819
    %v1822 = vmul.f32 %v1794, %v1805
    %v1823 = vmul.f32 %v1795, %v1810
    %v1824 = vmul.f32 %v1796, %v1815
    %v1825 = vmul.f32 %v1797, %v1820
    %v1826 = vadd.f32 %v1822, %v1823
    %v1827 = vrot.slane %v1826, 4
    %v1828 = vadd.f32 %v1826, %v1827
    %v1829 = vrot.slane %v1828, 2
    %v1830 = vadd.f32 %v1828, %v1829
    %v1831 = vrot.slane %v1830, 1
    %v1832 = vadd.f32 %v1830, %v1831
    %v1833 = vadd.f32 %v1824, %v1825
    %v1834 = vrot.slane %v1833, 4
    %v1835 = vadd.f32 %v1833, %v1834
    %v1836 = vrot.slane %v1835, 2
    %v1837 = vadd.f32 %v1835, %v1836
    %v1838 = vrot.slane %v1837, 1
    %v1839 = vadd.f32 %v1837, %v1838
    %v1840 = vpack.c.bf16 %v1832, %v1832
    %v1841 = vpack.c.bf16 %v1839, %v1839
    %v1842 = vld [vmem:[#allocation31] sm:$0xff]
    %v1843 = vld [vmem:[#allocation31 + $0x8] sm:$0xff]
    %v1844 = vld [vmem:[#allocation31 + $0x10] sm:$0xff]
    %v1845 = vld [vmem:[#allocation31 + $0x18] sm:$0xff]
    %v1846 = vld [vmem:[#allocation31 + $0x20] sm:$0xff]
    %v1847 = vld [vmem:[#allocation31 + $0x28] sm:$0xff]
    %v1848 = vld [vmem:[#allocation31 + $0x30] sm:$0xff]
    %v1849 = vld [vmem:[#allocation31 + $0x38] sm:$0xff]
    %v1850 = vld [vmem:[#allocation31 + $0x40] sm:$0xff]
    %v1851 = vld [vmem:[#allocation31 + $0x48] sm:$0xff]
    %v1852 = vld [vmem:[#allocation31 + $0x50] sm:$0xff]
    %v1853 = vld [vmem:[#allocation31 + $0x58] sm:$0xff]
    %v1854 = vld [vmem:[#allocation31 + $0x60] sm:$0xff]
    %v1855 = vld [vmem:[#allocation31 + $0x68] sm:$0xff]
    %v1856 = vld [vmem:[#allocation31 + $0x70] sm:$0xff]
    %v1857 = vld [vmem:[#allocation31 + $0x78] sm:$0xff]
    %v1858 = vld [vmem:[#allocation31 + $0x80] sm:$0xff]
    %v1859 = vld [vmem:[#allocation31 + $0x88] sm:$0xff]
    %v1860 = vld [vmem:[#allocation31 + $0x90] sm:$0xff]
    %v1861 = vld [vmem:[#allocation31 + $0x98] sm:$0xff]
    %v1862 = vld [vmem:[#allocation31 + $0xa0] sm:$0xff]
    %v1863 = vld [vmem:[#allocation31 + $0xa8] sm:$0xff]
    %v1864 = vld [vmem:[#allocation31 + $0xb0] sm:$0xff]
    %v1865 = vld [vmem:[#allocation31 + $0xb8] sm:$0xff]
    %v1866 = vld [vmem:[#allocation31 + $0xc0] sm:$0xff]
    %v1867 = vld [vmem:[#allocation31 + $0xc8] sm:$0xff]
    %v1868 = vld [vmem:[#allocation31 + $0xd0] sm:$0xff]
    %v1869 = vld [vmem:[#allocation31 + $0xd8] sm:$0xff]
    %v1870 = vld [vmem:[#allocation31 + $0xe0] sm:$0xff]
    %v1871 = vld [vmem:[#allocation31 + $0xe8] sm:$0xff]
    %v1872 = vld [vmem:[#allocation31 + $0xf0] sm:$0xff]
    %v1873 = vld [vmem:[#allocation31 + $0xf8] sm:$0xff]
    %v1874 = vld [vmem:[#allocation31 + $0x100] sm:$0xff]
    %v1875 = vld [vmem:[#allocation31 + $0x108] sm:$0xff]
    %v1876 = vld [vmem:[#allocation31 + $0x110] sm:$0xff]
    %v1877 = vld [vmem:[#allocation31 + $0x118] sm:$0xff]
    %v1878 = vld [vmem:[#allocation31 + $0x120] sm:$0xff]
    %v1879 = vld [vmem:[#allocation31 + $0x128] sm:$0xff]
    %v1880 = vld [vmem:[#allocation31 + $0x130] sm:$0xff]
    %v1881 = vld [vmem:[#allocation31 + $0x138] sm:$0xff]
    %v1882 = vld [vmem:[#allocation31 + $0x140] sm:$0xff]
    %v1883 = vld [vmem:[#allocation31 + $0x148] sm:$0xff]
    %v1884 = vld [vmem:[#allocation31 + $0x150] sm:$0xff]
    %v1885 = vld [vmem:[#allocation31 + $0x158] sm:$0xff]
    %v1886 = vld [vmem:[#allocation31 + $0x160] sm:$0xff]
    %v1887 = vld [vmem:[#allocation31 + $0x168] sm:$0xff]
    %v1888 = vld [vmem:[#allocation31 + $0x170] sm:$0xff]
    %v1889 = vld [vmem:[#allocation31 + $0x178] sm:$0xff]
    %v1890 = vld [vmem:[#allocation31 + $0x180] sm:$0xff]
    %v1891 = vld [vmem:[#allocation31 + $0x188] sm:$0xff]
    %v1892 = vld [vmem:[#allocation31 + $0x190] sm:$0xff]
    %v1893 = vld [vmem:[#allocation31 + $0x198] sm:$0xff]
    %v1894 = vld [vmem:[#allocation31 + $0x1a0] sm:$0xff]
    %v1895 = vld [vmem:[#allocation31 + $0x1a8] sm:$0xff]
    %v1896 = vld [vmem:[#allocation31 + $0x1b0] sm:$0xff]
    %v1897 = vld [vmem:[#allocation31 + $0x1b8] sm:$0xff]
    %v1898 = vld [vmem:[#allocation31 + $0x1c0] sm:$0xff]
    %v1899 = vld [vmem:[#allocation31 + $0x1c8] sm:$0xff]
    %v1900 = vld [vmem:[#allocation31 + $0x1d0] sm:$0xff]
    %v1901 = vld [vmem:[#allocation31 + $0x1d8] sm:$0xff]
    %v1902 = vld [vmem:[#allocation31 + $0x1e0] sm:$0xff]
    %v1903 = vld [vmem:[#allocation31 + $0x1e8] sm:$0xff]
    %v1904 = vld [vmem:[#allocation31 + $0x1f0] sm:$0xff]
    %v1905 = vld [vmem:[#allocation31 + $0x1f8] sm:$0xff]
    %v1906 = vld [vmem:[#allocation32] sm:$0xff]
    %v1908 = vperm.slane %v1906, 0
    %v1909 = vperm.slane %v1906, 1
    %v1910 = vperm.slane %v1906, 2
    %v1911 = vperm.slane %v1906, 3
    %v1912 = vperm.slane %v1906, 4
    %v1913 = vperm.slane %v1906, 5
    %v1914 = vperm.slane %v1906, 6
    %v1915 = vperm.slane %v1906, 7
    %v1926 = vunpack.c.l.b16 %v1840
    %v1927 = vunpack.c.l.b16 %v1841
    %vm1928 = vcmask 1041409
    %v1929 = vsel %vm1928, %v1927, %v1926
    %v1930 = vpack.c.b16 %v1929, %v1929
    %v1996 = vunpack.c.l.b16 %v1842
    %v1997 = vunpack.c.h.b16 %v1842
    %v1998 = vunpack.c.l.b16 %v1843
    %v1999 = vunpack.c.h.b16 %v1843
    %v2000 = vunpack.c.l.b16 %v1844
    %v2001 = vunpack.c.h.b16 %v1844
    %v2002 = vunpack.c.l.b16 %v1845
    %v2003 = vunpack.c.h.b16 %v1845
    %v2004 = vunpack.c.l.b16 %v1846
    %v2005 = vunpack.c.h.b16 %v1846
    %v2006 = vunpack.c.l.b16 %v1847
    %v2007 = vunpack.c.h.b16 %v1847
    %v2008 = vunpack.c.l.b16 %v1848
    %v2009 = vunpack.c.h.b16 %v1848
    %v2010 = vunpack.c.l.b16 %v1849
    %v2011 = vunpack.c.h.b16 %v1849
    %v2012 = vunpack.c.l.b16 %v1850
    %v2013 = vunpack.c.h.b16 %v1850
    %v2014 = vunpack.c.l.b16 %v1851
    %v2015 = vunpack.c.h.b16 %v1851
    %v2016 = vunpack.c.l.b16 %v1852
    %v2017 = vunpack.c.h.b16 %v1852
    %v2018 = vunpack.c.l.b16 %v1853
    %v2019 = vunpack.c.h.b16 %v1853
    %v2020 = vunpack.c.l.b16 %v1854
    %v2021 = vunpack.c.h.b16 %v1854
    %v2022 = vunpack.c.l.b16 %v1855
    %v2023 = vunpack.c.h.b16 %v1855
    %v2024 = vunpack.c.l.b16 %v1856
    %v2025 = vunpack.c.h.b16 %v1856
    %v2026 = vunpack.c.l.b16 %v1857
    %v2027 = vunpack.c.h.b16 %v1857
    %v2028 = vunpack.c.l.b16 %v1858
    %v2029 = vunpack.c.h.b16 %v1858
    %v2030 = vunpack.c.l.b16 %v1859
    %v2031 = vunpack.c.h.b16 %v1859
    %v2032 = vunpack.c.l.b16 %v1860
    %v2033 = vunpack.c.h.b16 %v1860
    %v2034 = vunpack.c.l.b16 %v1861
    %v2035 = vunpack.c.h.b16 %v1861
    %v2036 = vunpack.c.l.b16 %v1862
    %v2037 = vunpack.c.h.b16 %v1862
    %v2038 = vunpack.c.l.b16 %v1863
    %v2039 = vunpack.c.h.b16 %v1863
    %v2040 = vunpack.c.l.b16 %v1864
    %v2041 = vunpack.c.h.b16 %v1864
    %v2042 = vunpack.c.l.b16 %v1865
    %v2043 = vunpack.c.h.b16 %v1865
    %v2044 = vunpack.c.l.b16 %v1866
    %v2045 = vunpack.c.h.b16 %v1866
    %v2046 = vunpack.c.l.b16 %v1867
    %v2047 = vunpack.c.h.b16 %v1867
    %v2048 = vunpack.c.l.b16 %v1868
    %v2049 = vunpack.c.h.b16 %v1868
    %v2050 = vunpack.c.l.b16 %v1869
    %v2051 = vunpack.c.h.b16 %v1869
    %v2052 = vunpack.c.l.b16 %v1870
    %v2053 = vunpack.c.h.b16 %v1870
    %v2054 = vunpack.c.l.b16 %v1871
    %v2055 = vunpack.c.h.b16 %v1871
    %v2056 = vunpack.c.l.b16 %v1872
    %v2057 = vunpack.c.h.b16 %v1872
    %v2058 = vunpack.c.l.b16 %v1873
    %v2059 = vunpack.c.h.b16 %v1873
    %v2060 = vunpack.c.l.b16 %v1874
    %v2061 = vunpack.c.h.b16 %v1874
    %v2062 = vunpack.c.l.b16 %v1875
    %v2063 = vunpack.c.h.b16 %v1875
    %v2064 = vunpack.c.l.b16 %v1876
    %v2065 = vunpack.c.h.b16 %v1876
    %v2066 = vunpack.c.l.b16 %v1877
    %v2067 = vunpack.c.h.b16 %v1877
    %v2068 = vunpack.c.l.b16 %v1878
    %v2069 = vunpack.c.h.b16 %v1878
    %v2070 = vunpack.c.l.b16 %v1879
    %v2071 = vunpack.c.h.b16 %v1879
    %v2072 = vunpack.c.l.b16 %v1880
    %v2073 = vunpack.c.h.b16 %v1880
    %v2074 = vunpack.c.l.b16 %v1881
    %v2075 = vunpack.c.h.b16 %v1881
    %v2076 = vunpack.c.l.b16 %v1882
    %v2077 = vunpack.c.h.b16 %v1882
    %v2078 = vunpack.c.l.b16 %v1883
    %v2079 = vunpack.c.h.b16 %v1883
    %v2080 = vunpack.c.l.b16 %v1884
    %v2081 = vunpack.c.h.b16 %v1884
    %v2082 = vunpack.c.l.b16 %v1885
    %v2083 = vunpack.c.h.b16 %v1885
    %v2084 = vunpack.c.l.b16 %v1886
    %v2085 = vunpack.c.h.b16 %v1886
    %v2086 = vunpack.c.l.b16 %v1887
    %v2087 = vunpack.c.h.b16 %v1887
    %v2088 = vunpack.c.l.b16 %v1888
    %v2089 = vunpack.c.h.b16 %v1888
    %v2090 = vunpack.c.l.b16 %v1889
    %v2091 = vunpack.c.h.b16 %v1889
    %v2092 = vunpack.c.l.b16 %v1890
    %v2093 = vunpack.c.h.b16 %v1890
    %v2094 = vunpack.c.l.b16 %v1891
    %v2095 = vunpack.c.h.b16 %v1891
    %v2096 = vunpack.c.l.b16 %v1892
    %v2097 = vunpack.c.h.b16 %v1892
    %v2098 = vunpack.c.l.b16 %v1893
    %v2099 = vunpack.c.h.b16 %v1893
    %v2100 = vunpack.c.l.b16 %v1894
    %v2101 = vunpack.c.h.b16 %v1894
    %v2102 = vunpack.c.l.b16 %v1895
    %v2103 = vunpack.c.h.b16 %v1895
    %v2104 = vunpack.c.l.b16 %v1896
    %v2105 = vunpack.c.h.b16 %v1896
    %v2106 = vunpack.c.l.b16 %v1897
    %v2107 = vunpack.c.h.b16 %v1897
    %v2108 = vunpack.c.l.b16 %v1898
    %v2109 = vunpack.c.h.b16 %v1898
    %v2110 = vunpack.c.l.b16 %v1899
    %v2111 = vunpack.c.h.b16 %v1899
    %v2112 = vunpack.c.l.b16 %v1900
    %v2113 = vunpack.c.h.b16 %v1900
    %v2114 = vunpack.c.l.b16 %v1901
    %v2115 = vunpack.c.h.b16 %v1901
    %v2116 = vunpack.c.l.b16 %v1902
    %v2117 = vunpack.c.h.b16 %v1902
    %v2118 = vunpack.c.l.b16 %v1903
    %v2119 = vunpack.c.h.b16 %v1903
    %v2120 = vunpack.c.l.b16 %v1904
    %v2121 = vunpack.c.h.b16 %v1904
    %v2122 = vunpack.c.l.b16 %v1905
    %v2123 = vunpack.c.h.b16 %v1905
    %v2124 = vpack.c.b16 %v2004, %v1996
    %v2125 = vpack.c.b16 %v2005, %v1997
    %v2126 = vpack.c.b16 %v2006, %v1998
    %v2127 = vpack.c.b16 %v2007, %v1999
    %v2128 = vpack.c.b16 %v2008, %v2000
    %v2129 = vpack.c.b16 %v2009, %v2001
    %v2130 = vpack.c.b16 %v2010, %v2002
    %v2131 = vpack.c.b16 %v2011, %v2003
    %v2132 = vpack.c.b16 %v2020, %v2012
    %v2133 = vpack.c.b16 %v2021, %v2013
    %v2134 = vpack.c.b16 %v2022, %v2014
    %v2135 = vpack.c.b16 %v2023, %v2015
    %v2136 = vpack.c.b16 %v2024, %v2016
    %v2137 = vpack.c.b16 %v2025, %v2017
    %v2138 = vpack.c.b16 %v2026, %v2018
    %v2139 = vpack.c.b16 %v2027, %v2019
    %v2140 = vpack.c.b16 %v2036, %v2028
    %v2141 = vpack.c.b16 %v2037, %v2029
    %v2142 = vpack.c.b16 %v2038, %v2030
    %v2143 = vpack.c.b16 %v2039, %v2031
    %v2144 = vpack.c.b16 %v2040, %v2032
    %v2145 = vpack.c.b16 %v2041, %v2033
    %v2146 = vpack.c.b16 %v2042, %v2034
    %v2147 = vpack.c.b16 %v2043, %v2035
    %v2148 = vpack.c.b16 %v2052, %v2044
    %v2149 = vpack.c.b16 %v2053, %v2045
    %v2150 = vpack.c.b16 %v2054, %v2046
    %v2151 = vpack.c.b16 %v2055, %v2047
    %v2152 = vpack.c.b16 %v2056, %v2048
    %v2153 = vpack.c.b16 %v2057, %v2049
    %v2154 = vpack.c.b16 %v2058, %v2050
    %v2155 = vpack.c.b16 %v2059, %v2051
    %v2156 = vpack.c.b16 %v2068, %v2060
    %v2157 = vpack.c.b16 %v2069, %v2061
    %v2158 = vpack.c.b16 %v2070, %v2062
    %v2159 = vpack.c.b16 %v2071, %v2063
    %v2160 = vpack.c.b16 %v2072, %v2064
    %v2161 = vpack.c.b16 %v2073, %v2065
    %v2162 = vpack.c.b16 %v2074, %v2066
    %v2163 = vpack.c.b16 %v2075, %v2067
    %v2164 = vpack.c.b16 %v2084, %v2076
    %v2165 = vpack.c.b16 %v2085, %v2077
    %v2166 = vpack.c.b16 %v2086, %v2078
    %v2167 = vpack.c.b16 %v2087, %v2079
    %v2168 = vpack.c.b16 %v2088, %v2080
    %v2169 = vpack.c.b16 %v2089, %v2081
    %v2170 = vpack.c.b16 %v2090, %v2082
    %v2171 = vpack.c.b16 %v2091, %v2083
    %v2172 = vpack.c.b16 %v2100, %v2092
    %v2173 = vpack.c.b16 %v2101, %v2093
    %v2174 = vpack.c.b16 %v2102, %v2094
    %v2175 = vpack.c.b16 %v2103, %v2095
    %v2176 = vpack.c.b16 %v2104, %v2096
    %v2177 = vpack.c.b16 %v2105, %v2097
    %v2178 = vpack.c.b16 %v2106, %v2098
    %v2179 = vpack.c.b16 %v2107, %v2099
    %v2180 = vpack.c.b16 %v2116, %v2108
    %v2181 = vpack.c.b16 %v2117, %v2109
    %v2182 = vpack.c.b16 %v2118, %v2110
    %v2183 = vpack.c.b16 %v2119, %v2111
    %v2184 = vpack.c.b16 %v2120, %v2112
    %v2185 = vpack.c.b16 %v2121, %v2113
    %v2186 = vpack.c.b16 %v2122, %v2114
    %v2187 = vpack.c.b16 %v2123, %v2115
    %2252 = vmatpush.bf16.msra.mxu0 %v2180
    %2253 = vmatpush.bf16.msra.mxu0 %v2172
    %2254 = vmatpush.bf16.msra.mxu0 %v2164
    %2255 = vmatpush.bf16.msra.mxu0 %v2156
    %2256 = vmatpush.bf16.msra.mxu0 %v2148
    %2257 = vmatpush.bf16.msra.mxu0 %v2140
    %2258 = vmatpush.bf16.msra.mxu0 %v2132
    %2259 = vmatpush.bf16.msra.mxu0 %v2124
    %2260 = vmatmul.bf16.gmra.mxu0 %v1930
    %v2261 = vpop.f32.mrf.mxu0
    %v2262 = vadd.f32 %v1908, %v2261
    %v2263 = vpop.f32.mrf.mxu0
    %2264 = vdwg.mxu0
    %2265 = vmatpush.bf16.msra.mxu0 %v2181
    %2266 = vmatpush.bf16.msra.mxu0 %v2173
    %2267 = vmatpush.bf16.msra.mxu0 %v2165
    %2268 = vmatpush.bf16.msra.mxu0 %v2157
    %2269 = vmatpush.bf16.msra.mxu0 %v2149
    %2270 = vmatpush.bf16.msra.mxu0 %v2141
    %2271 = vmatpush.bf16.msra.mxu0 %v2133
    %2272 = vmatpush.bf16.msra.mxu0 %v2125
    %2273 = vmatmul.bf16.gmra.mxu0 %v1930
    %v2274 = vpop.f32.mrf.mxu0
    %v2275 = vadd.f32 %v1909, %v2274
    %v2276 = vpop.f32.mrf.mxu0
    %2277 = vdwg.mxu0
    %2278 = vmatpush.bf16.msra.mxu0 %v2182
    %2279 = vmatpush.bf16.msra.mxu0 %v2174
    %2280 = vmatpush.bf16.msra.mxu0 %v2166
    %2281 = vmatpush.bf16.msra.mxu0 %v2158
    %2282 = vmatpush.bf16.msra.mxu0 %v2150
    %2283 = vmatpush.bf16.msra.mxu0 %v2142
    %2284 = vmatpush.bf16.msra.mxu0 %v2134
    %2285 = vmatpush.bf16.msra.mxu0 %v2126
    %2286 = vmatmul.bf16.gmra.mxu0 %v1930
    %v2287 = vpop.f32.mrf.mxu0
    %v2288 = vadd.f32 %v1910, %v2287
    %v2289 = vpop.f32.mrf.mxu0
    %2290 = vdwg.mxu0
    %2291 = vmatpush.bf16.msra.mxu0 %v2183
    %2292 = vmatpush.bf16.msra.mxu0 %v2175
    %2293 = vmatpush.bf16.msra.mxu0 %v2167
    %2294 = vmatpush.bf16.msra.mxu0 %v2159
    %2295 = vmatpush.bf16.msra.mxu0 %v2151
    %2296 = vmatpush.bf16.msra.mxu0 %v2143
    %2297 = vmatpush.bf16.msra.mxu0 %v2135
    %2298 = vmatpush.bf16.msra.mxu0 %v2127
    %2299 = vmatmul.bf16.gmra.mxu0 %v1930
    %v2300 = vpop.f32.mrf.mxu0
    %v2301 = vadd.f32 %v1911, %v2300
    %v2302 = vpop.f32.mrf.mxu0
    %2303 = vdwg.mxu0
    %2304 = vmatpush.bf16.msra.mxu0 %v2184
    %2305 = vmatpush.bf16.msra.mxu0 %v2176
    %2306 = vmatpush.bf16.msra.mxu0 %v2168
    %2307 = vmatpush.bf16.msra.mxu0 %v2160
    %2308 = vmatpush.bf16.msra.mxu0 %v2152
    %2309 = vmatpush.bf16.msra.mxu0 %v2144
    %2310 = vmatpush.bf16.msra.mxu0 %v2136
    %2311 = vmatpush.bf16.msra.mxu0 %v2128
    %2312 = vmatmul.bf16.gmra.mxu0 %v1930
    %v2313 = vpop.f32.mrf.mxu0
    %v2314 = vadd.f32 %v1912, %v2313
    %v2315 = vpop.f32.mrf.mxu0
    %2316 = vdwg.mxu0
    %2317 = vmatpush.bf16.msra.mxu0 %v2185
    %2318 = vmatpush.bf16.msra.mxu0 %v2177
    %2319 = vmatpush.bf16.msra.mxu0 %v2169
    %2320 = vmatpush.bf16.msra.mxu0 %v2161
    %2321 = vmatpush.bf16.msra.mxu0 %v2153
    %2322 = vmatpush.bf16.msra.mxu0 %v2145
    %2323 = vmatpush.bf16.msra.mxu0 %v2137
    %2324 = vmatpush.bf16.msra.mxu0 %v2129
    %2325 = vmatmul.bf16.gmra.mxu0 %v1930
    %v2326 = vpop.f32.mrf.mxu0
    %v2327 = vadd.f32 %v1913, %v2326
    %v2328 = vpop.f32.mrf.mxu0
    %2329 = vdwg.mxu0
    %2330 = vmatpush.bf16.msra.mxu0 %v2186
    %2331 = vmatpush.bf16.msra.mxu0 %v2178
    %2332 = vmatpush.bf16.msra.mxu0 %v2170
    %2333 = vmatpush.bf16.msra.mxu0 %v2162
    %2334 = vmatpush.bf16.msra.mxu0 %v2154
    %2335 = vmatpush.bf16.msra.mxu0 %v2146
    %2336 = vmatpush.bf16.msra.mxu0 %v2138
    %2337 = vmatpush.bf16.msra.mxu0 %v2130
    %2338 = vmatmul.bf16.gmra.mxu0 %v1930
    %v2339 = vpop.f32.mrf.mxu0
    %v2340 = vadd.f32 %v1914, %v2339
    %v2341 = vpop.f32.mrf.mxu0
    %2342 = vdwg.mxu0
    %2343 = vmatpush.bf16.msra.mxu0 %v2187
    %2344 = vmatpush.bf16.msra.mxu0 %v2179
    %2345 = vmatpush.bf16.msra.mxu0 %v2171
    %2346 = vmatpush.bf16.msra.mxu0 %v2163
    %2347 = vmatpush.bf16.msra.mxu0 %v2155
    %2348 = vmatpush.bf16.msra.mxu0 %v2147
    %2349 = vmatpush.bf16.msra.mxu0 %v2139
    %2350 = vmatpush.bf16.msra.mxu0 %v2131
    %2351 = vmatmul.bf16.gmra.mxu0 %v1930
    %v2352 = vpop.f32.mrf.mxu0
    %v2353 = vadd.f32 %v1915, %v2352
    %v2354 = vpop.f32.mrf.mxu0
    %2355 = vdwg.mxu0
    %v2356 = vmax.f32 %v2262, 0.0
    %v2357 = vmax.f32 %v2275, 0.0
    %v2358 = vmax.f32 %v2288, 0.0
    %v2359 = vmax.f32 %v2301, 0.0
    %v2360 = vmax.f32 %v2314, 0.0
    %v2361 = vmax.f32 %v2327, 0.0
    %v2362 = vmax.f32 %v2340, 0.0
    %v2363 = vmax.f32 %v2353, 0.0
    %v2364 = vpack.c.bf16 %v2356, %v2356
    %v2365 = vpack.c.bf16 %v2357, %v2357
    %v2366 = vpack.c.bf16 %v2358, %v2358
    %v2367 = vpack.c.bf16 %v2359, %v2359
    %v2368 = vpack.c.bf16 %v2360, %v2360
    %v2369 = vpack.c.bf16 %v2361, %v2361
    %v2370 = vpack.c.bf16 %v2362, %v2362
    %v2371 = vpack.c.bf16 %v2363, %v2363
    %v2372 = vld [vmem:[#allocation34] sm:$0xff]
    %v2373 = vld [vmem:[#allocation34 + $0x8] sm:$0xff]
    %v2374 = vld [vmem:[#allocation34 + $0x10] sm:$0xff]
    %v2375 = vld [vmem:[#allocation34 + $0x18] sm:$0xff]
    %v2376 = vld [vmem:[#allocation34 + $0x20] sm:$0xff]
    %v2377 = vld [vmem:[#allocation34 + $0x28] sm:$0xff]
    %v2378 = vld [vmem:[#allocation34 + $0x30] sm:$0xff]
    %v2379 = vld [vmem:[#allocation34 + $0x38] sm:$0xff]
    %v2380 = vld [vmem:[#allocation34 + $0x40] sm:$0xff]
    %v2381 = vld [vmem:[#allocation34 + $0x48] sm:$0xff]
    %v2382 = vld [vmem:[#allocation34 + $0x50] sm:$0xff]
    %v2383 = vld [vmem:[#allocation34 + $0x58] sm:$0xff]
    %v2384 = vld [vmem:[#allocation34 + $0x60] sm:$0xff]
    %v2385 = vld [vmem:[#allocation34 + $0x68] sm:$0xff]
    %v2386 = vld [vmem:[#allocation34 + $0x70] sm:$0xff]
    %v2387 = vld [vmem:[#allocation34 + $0x78] sm:$0xff]
    %v2388 = vld [vmem:[#allocation34 + $0x80] sm:$0xff]
    %v2389 = vld [vmem:[#allocation34 + $0x88] sm:$0xff]
    %v2390 = vld [vmem:[#allocation34 + $0x90] sm:$0xff]
    %v2391 = vld [vmem:[#allocation34 + $0x98] sm:$0xff]
    %v2392 = vld [vmem:[#allocation34 + $0xa0] sm:$0xff]
    %v2393 = vld [vmem:[#allocation34 + $0xa8] sm:$0xff]
    %v2394 = vld [vmem:[#allocation34 + $0xb0] sm:$0xff]
    %v2395 = vld [vmem:[#allocation34 + $0xb8] sm:$0xff]
    %v2396 = vld [vmem:[#allocation34 + $0xc0] sm:$0xff]
    %v2397 = vld [vmem:[#allocation34 + $0xc8] sm:$0xff]
    %v2398 = vld [vmem:[#allocation34 + $0xd0] sm:$0xff]
    %v2399 = vld [vmem:[#allocation34 + $0xd8] sm:$0xff]
    %v2400 = vld [vmem:[#allocation34 + $0xe0] sm:$0xff]
    %v2401 = vld [vmem:[#allocation34 + $0xe8] sm:$0xff]
    %v2402 = vld [vmem:[#allocation34 + $0xf0] sm:$0xff]
    %v2403 = vld [vmem:[#allocation34 + $0xf8] sm:$0xff]
    %v2404 = vld [vmem:[#allocation34 + $0x100] sm:$0xff]
    %v2405 = vld [vmem:[#allocation34 + $0x108] sm:$0xff]
    %v2406 = vld [vmem:[#allocation34 + $0x110] sm:$0xff]
    %v2407 = vld [vmem:[#allocation34 + $0x118] sm:$0xff]
    %v2408 = vld [vmem:[#allocation34 + $0x120] sm:$0xff]
    %v2409 = vld [vmem:[#allocation34 + $0x128] sm:$0xff]
    %v2410 = vld [vmem:[#allocation34 + $0x130] sm:$0xff]
    %v2411 = vld [vmem:[#allocation34 + $0x138] sm:$0xff]
    %v2412 = vld [vmem:[#allocation34 + $0x140] sm:$0xff]
    %v2413 = vld [vmem:[#allocation34 + $0x148] sm:$0xff]
    %v2414 = vld [vmem:[#allocation34 + $0x150] sm:$0xff]
    %v2415 = vld [vmem:[#allocation34 + $0x158] sm:$0xff]
    %v2416 = vld [vmem:[#allocation34 + $0x160] sm:$0xff]
    %v2417 = vld [vmem:[#allocation34 + $0x168] sm:$0xff]
    %v2418 = vld [vmem:[#allocation34 + $0x170] sm:$0xff]
    %v2419 = vld [vmem:[#allocation34 + $0x178] sm:$0xff]
    %v2420 = vld [vmem:[#allocation34 + $0x180] sm:$0xff]
    %v2421 = vld [vmem:[#allocation34 + $0x188] sm:$0xff]
    %v2422 = vld [vmem:[#allocation34 + $0x190] sm:$0xff]
    %v2423 = vld [vmem:[#allocation34 + $0x198] sm:$0xff]
    %v2424 = vld [vmem:[#allocation34 + $0x1a0] sm:$0xff]
    %v2425 = vld [vmem:[#allocation34 + $0x1a8] sm:$0xff]
    %v2426 = vld [vmem:[#allocation34 + $0x1b0] sm:$0xff]
    %v2427 = vld [vmem:[#allocation34 + $0x1b8] sm:$0xff]
    %v2428 = vld [vmem:[#allocation34 + $0x1c0] sm:$0xff]
    %v2429 = vld [vmem:[#allocation34 + $0x1c8] sm:$0xff]
    %v2430 = vld [vmem:[#allocation34 + $0x1d0] sm:$0xff]
    %v2431 = vld [vmem:[#allocation34 + $0x1d8] sm:$0xff]
    %v2432 = vld [vmem:[#allocation34 + $0x1e0] sm:$0xff]
    %v2433 = vld [vmem:[#allocation34 + $0x1e8] sm:$0xff]
    %v2434 = vld [vmem:[#allocation34 + $0x1f0] sm:$0xff]
    %v2435 = vld [vmem:[#allocation34 + $0x1f8] sm:$0xff]
    %v2436 = vld [vmem:[#allocation34 + $0x200] sm:$0xff]
    %v2437 = vld [vmem:[#allocation34 + $0x208] sm:$0xff]
    %v2438 = vld [vmem:[#allocation34 + $0x210] sm:$0xff]
    %v2439 = vld [vmem:[#allocation34 + $0x218] sm:$0xff]
    %v2440 = vld [vmem:[#allocation34 + $0x220] sm:$0xff]
    %v2441 = vld [vmem:[#allocation34 + $0x228] sm:$0xff]
    %v2442 = vld [vmem:[#allocation34 + $0x230] sm:$0xff]
    %v2443 = vld [vmem:[#allocation34 + $0x238] sm:$0xff]
    %v2444 = vld [vmem:[#allocation34 + $0x240] sm:$0xff]
    %v2445 = vld [vmem:[#allocation34 + $0x248] sm:$0xff]
    %v2446 = vld [vmem:[#allocation34 + $0x250] sm:$0xff]
    %v2447 = vld [vmem:[#allocation34 + $0x258] sm:$0xff]
    %v2448 = vld [vmem:[#allocation34 + $0x260] sm:$0xff]
    %v2449 = vld [vmem:[#allocation34 + $0x268] sm:$0xff]
    %v2450 = vld [vmem:[#allocation34 + $0x270] sm:$0xff]
    %v2451 = vld [vmem:[#allocation34 + $0x278] sm:$0xff]
    %v2452 = vld [vmem:[#allocation34 + $0x280] sm:$0xff]
    %v2453 = vld [vmem:[#allocation34 + $0x288] sm:$0xff]
    %v2454 = vld [vmem:[#allocation34 + $0x290] sm:$0xff]
    %v2455 = vld [vmem:[#allocation34 + $0x298] sm:$0xff]
    %v2456 = vld [vmem:[#allocation34 + $0x2a0] sm:$0xff]
    %v2457 = vld [vmem:[#allocation34 + $0x2a8] sm:$0xff]
    %v2458 = vld [vmem:[#allocation34 + $0x2b0] sm:$0xff]
    %v2459 = vld [vmem:[#allocation34 + $0x2b8] sm:$0xff]
    %v2460 = vld [vmem:[#allocation34 + $0x2c0] sm:$0xff]
    %v2461 = vld [vmem:[#allocation34 + $0x2c8] sm:$0xff]
    %v2462 = vld [vmem:[#allocation34 + $0x2d0] sm:$0xff]
    %v2463 = vld [vmem:[#allocation34 + $0x2d8] sm:$0xff]
    %v2464 = vld [vmem:[#allocation34 + $0x2e0] sm:$0xff]
    %v2465 = vld [vmem:[#allocation34 + $0x2e8] sm:$0xff]
    %v2466 = vld [vmem:[#allocation34 + $0x2f0] sm:$0xff]
    %v2467 = vld [vmem:[#allocation34 + $0x2f8] sm:$0xff]
    %v2468 = vld [vmem:[#allocation34 + $0x300] sm:$0xff]
    %v2469 = vld [vmem:[#allocation34 + $0x308] sm:$0xff]
    %v2470 = vld [vmem:[#allocation34 + $0x310] sm:$0xff]
    %v2471 = vld [vmem:[#allocation34 + $0x318] sm:$0xff]
    %v2472 = vld [vmem:[#allocation34 + $0x320] sm:$0xff]
    %v2473 = vld [vmem:[#allocation34 + $0x328] sm:$0xff]
    %v2474 = vld [vmem:[#allocation34 + $0x330] sm:$0xff]
    %v2475 = vld [vmem:[#allocation34 + $0x338] sm:$0xff]
    %v2476 = vld [vmem:[#allocation34 + $0x340] sm:$0xff]
    %v2477 = vld [vmem:[#allocation34 + $0x348] sm:$0xff]
    %v2478 = vld [vmem:[#allocation34 + $0x350] sm:$0xff]
    %v2479 = vld [vmem:[#allocation34 + $0x358] sm:$0xff]
    %v2480 = vld [vmem:[#allocation34 + $0x360] sm:$0xff]
    %v2481 = vld [vmem:[#allocation34 + $0x368] sm:$0xff]
    %v2482 = vld [vmem:[#allocation34 + $0x370] sm:$0xff]
    %v2483 = vld [vmem:[#allocation34 + $0x378] sm:$0xff]
    %v2484 = vld [vmem:[#allocation34 + $0x380] sm:$0xff]
    %v2485 = vld [vmem:[#allocation34 + $0x388] sm:$0xff]
    %v2486 = vld [vmem:[#allocation34 + $0x390] sm:$0xff]
    %v2487 = vld [vmem:[#allocation34 + $0x398] sm:$0xff]
    %v2488 = vld [vmem:[#allocation34 + $0x3a0] sm:$0xff]
    %v2489 = vld [vmem:[#allocation34 + $0x3a8] sm:$0xff]
    %v2490 = vld [vmem:[#allocation34 + $0x3b0] sm:$0xff]
    %v2491 = vld [vmem:[#allocation34 + $0x3b8] sm:$0xff]
    %v2492 = vld [vmem:[#allocation34 + $0x3c0] sm:$0xff]
    %v2493 = vld [vmem:[#allocation34 + $0x3c8] sm:$0xff]
    %v2494 = vld [vmem:[#allocation34 + $0x3d0] sm:$0xff]
    %v2495 = vld [vmem:[#allocation34 + $0x3d8] sm:$0xff]
    %v2496 = vld [vmem:[#allocation34 + $0x3e0] sm:$0xff]
    %v2497 = vld [vmem:[#allocation34 + $0x3e8] sm:$0xff]
    %v2498 = vld [vmem:[#allocation34 + $0x3f0] sm:$0xff]
    %v2499 = vld [vmem:[#allocation34 + $0x3f8] sm:$0xff]
    %v2500 = vld [vmem:[#allocation34 + $0x400] sm:$0xff]
    %v2501 = vld [vmem:[#allocation34 + $0x408] sm:$0xff]
    %v2502 = vld [vmem:[#allocation34 + $0x410] sm:$0xff]
    %v2503 = vld [vmem:[#allocation34 + $0x418] sm:$0xff]
    %v2504 = vld [vmem:[#allocation34 + $0x420] sm:$0xff]
    %v2505 = vld [vmem:[#allocation34 + $0x428] sm:$0xff]
    %v2506 = vld [vmem:[#allocation34 + $0x430] sm:$0xff]
    %v2507 = vld [vmem:[#allocation34 + $0x438] sm:$0xff]
    %v2508 = vld [vmem:[#allocation34 + $0x440] sm:$0xff]
    %v2509 = vld [vmem:[#allocation34 + $0x448] sm:$0xff]
    %v2510 = vld [vmem:[#allocation34 + $0x450] sm:$0xff]
    %v2511 = vld [vmem:[#allocation34 + $0x458] sm:$0xff]
    %v2512 = vld [vmem:[#allocation34 + $0x460] sm:$0xff]
    %v2513 = vld [vmem:[#allocation34 + $0x468] sm:$0xff]
    %v2514 = vld [vmem:[#allocation34 + $0x470] sm:$0xff]
    %v2515 = vld [vmem:[#allocation34 + $0x478] sm:$0xff]
    %v2516 = vld [vmem:[#allocation34 + $0x480] sm:$0xff]
    %v2517 = vld [vmem:[#allocation34 + $0x488] sm:$0xff]
    %v2518 = vld [vmem:[#allocation34 + $0x490] sm:$0xff]
    %v2519 = vld [vmem:[#allocation34 + $0x498] sm:$0xff]
    %v2520 = vld [vmem:[#allocation34 + $0x4a0] sm:$0xff]
    %v2521 = vld [vmem:[#allocation34 + $0x4a8] sm:$0xff]
    %v2522 = vld [vmem:[#allocation34 + $0x4b0] sm:$0xff]
    %v2523 = vld [vmem:[#allocation34 + $0x4b8] sm:$0xff]
    %v2524 = vld [vmem:[#allocation34 + $0x4c0] sm:$0xff]
    %v2525 = vld [vmem:[#allocation34 + $0x4c8] sm:$0xff]
    %v2526 = vld [vmem:[#allocation34 + $0x4d0] sm:$0xff]
    %v2527 = vld [vmem:[#allocation34 + $0x4d8] sm:$0xff]
    %v2528 = vld [vmem:[#allocation34 + $0x4e0] sm:$0xff]
    %v2529 = vld [vmem:[#allocation34 + $0x4e8] sm:$0xff]
    %v2530 = vld [vmem:[#allocation34 + $0x4f0] sm:$0xff]
    %v2531 = vld [vmem:[#allocation34 + $0x4f8] sm:$0xff]
    %v2532 = vld [vmem:[#allocation34 + $0x500] sm:$0xff]
    %v2533 = vld [vmem:[#allocation34 + $0x508] sm:$0xff]
    %v2534 = vld [vmem:[#allocation34 + $0x510] sm:$0xff]
    %v2535 = vld [vmem:[#allocation34 + $0x518] sm:$0xff]
    %v2536 = vld [vmem:[#allocation34 + $0x520] sm:$0xff]
    %v2537 = vld [vmem:[#allocation34 + $0x528] sm:$0xff]
    %v2538 = vld [vmem:[#allocation34 + $0x530] sm:$0xff]
    %v2539 = vld [vmem:[#allocation34 + $0x538] sm:$0xff]
    %v2540 = vld [vmem:[#allocation34 + $0x540] sm:$0xff]
    %v2541 = vld [vmem:[#allocation34 + $0x548] sm:$0xff]
    %v2542 = vld [vmem:[#allocation34 + $0x550] sm:$0xff]
    %v2543 = vld [vmem:[#allocation34 + $0x558] sm:$0xff]
    %v2544 = vld [vmem:[#allocation34 + $0x560] sm:$0xff]
    %v2545 = vld [vmem:[#allocation34 + $0x568] sm:$0xff]
    %v2546 = vld [vmem:[#allocation34 + $0x570] sm:$0xff]
    %v2547 = vld [vmem:[#allocation34 + $0x578] sm:$0xff]
    %v2548 = vld [vmem:[#allocation34 + $0x580] sm:$0xff]
    %v2549 = vld [vmem:[#allocation34 + $0x588] sm:$0xff]
    %v2550 = vld [vmem:[#allocation34 + $0x590] sm:$0xff]
    %v2551 = vld [vmem:[#allocation34 + $0x598] sm:$0xff]
    %v2552 = vld [vmem:[#allocation34 + $0x5a0] sm:$0xff]
    %v2553 = vld [vmem:[#allocation34 + $0x5a8] sm:$0xff]
    %v2554 = vld [vmem:[#allocation34 + $0x5b0] sm:$0xff]
    %v2555 = vld [vmem:[#allocation34 + $0x5b8] sm:$0xff]
    %v2556 = vld [vmem:[#allocation34 + $0x5c0] sm:$0xff]
    %v2557 = vld [vmem:[#allocation34 + $0x5c8] sm:$0xff]
    %v2558 = vld [vmem:[#allocation34 + $0x5d0] sm:$0xff]
    %v2559 = vld [vmem:[#allocation34 + $0x5d8] sm:$0xff]
    %v2560 = vld [vmem:[#allocation34 + $0x5e0] sm:$0xff]
    %v2561 = vld [vmem:[#allocation34 + $0x5e8] sm:$0xff]
    %v2562 = vld [vmem:[#allocation34 + $0x5f0] sm:$0xff]
    %v2563 = vld [vmem:[#allocation34 + $0x5f8] sm:$0xff]
    %v2564 = vld [vmem:[#allocation34 + $0x600] sm:$0xff]
    %v2565 = vld [vmem:[#allocation34 + $0x608] sm:$0xff]
    %v2566 = vld [vmem:[#allocation34 + $0x610] sm:$0xff]
    %v2567 = vld [vmem:[#allocation34 + $0x618] sm:$0xff]
    %v2568 = vld [vmem:[#allocation34 + $0x620] sm:$0xff]
    %v2569 = vld [vmem:[#allocation34 + $0x628] sm:$0xff]
    %v2570 = vld [vmem:[#allocation34 + $0x630] sm:$0xff]
    %v2571 = vld [vmem:[#allocation34 + $0x638] sm:$0xff]
    %v2572 = vld [vmem:[#allocation34 + $0x640] sm:$0xff]
    %v2573 = vld [vmem:[#allocation34 + $0x648] sm:$0xff]
    %v2574 = vld [vmem:[#allocation34 + $0x650] sm:$0xff]
    %v2575 = vld [vmem:[#allocation34 + $0x658] sm:$0xff]
    %v2576 = vld [vmem:[#allocation34 + $0x660] sm:$0xff]
    %v2577 = vld [vmem:[#allocation34 + $0x668] sm:$0xff]
    %v2578 = vld [vmem:[#allocation34 + $0x670] sm:$0xff]
    %v2579 = vld [vmem:[#allocation34 + $0x678] sm:$0xff]
    %v2580 = vld [vmem:[#allocation34 + $0x680] sm:$0xff]
    %v2581 = vld [vmem:[#allocation34 + $0x688] sm:$0xff]
    %v2582 = vld [vmem:[#allocation34 + $0x690] sm:$0xff]
    %v2583 = vld [vmem:[#allocation34 + $0x698] sm:$0xff]
    %v2584 = vld [vmem:[#allocation34 + $0x6a0] sm:$0xff]
    %v2585 = vld [vmem:[#allocation34 + $0x6a8] sm:$0xff]
    %v2586 = vld [vmem:[#allocation34 + $0x6b0] sm:$0xff]
    %v2587 = vld [vmem:[#allocation34 + $0x6b8] sm:$0xff]
    %v2588 = vld [vmem:[#allocation34 + $0x6c0] sm:$0xff]
    %v2589 = vld [vmem:[#allocation34 + $0x6c8] sm:$0xff]
    %v2590 = vld [vmem:[#allocation34 + $0x6d0] sm:$0xff]
    %v2591 = vld [vmem:[#allocation34 + $0x6d8] sm:$0xff]
    %v2592 = vld [vmem:[#allocation34 + $0x6e0] sm:$0xff]
    %v2593 = vld [vmem:[#allocation34 + $0x6e8] sm:$0xff]
    %v2594 = vld [vmem:[#allocation34 + $0x6f0] sm:$0xff]
    %v2595 = vld [vmem:[#allocation34 + $0x6f8] sm:$0xff]
    %v2596 = vld [vmem:[#allocation34 + $0x700] sm:$0xff]
    %v2597 = vld [vmem:[#allocation34 + $0x708] sm:$0xff]
    %v2598 = vld [vmem:[#allocation34 + $0x710] sm:$0xff]
    %v2599 = vld [vmem:[#allocation34 + $0x718] sm:$0xff]
    %v2600 = vld [vmem:[#allocation34 + $0x720] sm:$0xff]
    %v2601 = vld [vmem:[#allocation34 + $0x728] sm:$0xff]
    %v2602 = vld [vmem:[#allocation34 + $0x730] sm:$0xff]
    %v2603 = vld [vmem:[#allocation34 + $0x738] sm:$0xff]
    %v2604 = vld [vmem:[#allocation34 + $0x740] sm:$0xff]
    %v2605 = vld [vmem:[#allocation34 + $0x748] sm:$0xff]
    %v2606 = vld [vmem:[#allocation34 + $0x750] sm:$0xff]
    %v2607 = vld [vmem:[#allocation34 + $0x758] sm:$0xff]
    %v2608 = vld [vmem:[#allocation34 + $0x760] sm:$0xff]
    %v2609 = vld [vmem:[#allocation34 + $0x768] sm:$0xff]
    %v2610 = vld [vmem:[#allocation34 + $0x770] sm:$0xff]
    %v2611 = vld [vmem:[#allocation34 + $0x778] sm:$0xff]
    %v2612 = vld [vmem:[#allocation34 + $0x780] sm:$0xff]
    %v2613 = vld [vmem:[#allocation34 + $0x788] sm:$0xff]
    %v2614 = vld [vmem:[#allocation34 + $0x790] sm:$0xff]
    %v2615 = vld [vmem:[#allocation34 + $0x798] sm:$0xff]
    %v2616 = vld [vmem:[#allocation34 + $0x7a0] sm:$0xff]
    %v2617 = vld [vmem:[#allocation34 + $0x7a8] sm:$0xff]
    %v2618 = vld [vmem:[#allocation34 + $0x7b0] sm:$0xff]
    %v2619 = vld [vmem:[#allocation34 + $0x7b8] sm:$0xff]
    %v2620 = vld [vmem:[#allocation34 + $0x7c0] sm:$0xff]
    %v2621 = vld [vmem:[#allocation34 + $0x7c8] sm:$0xff]
    %v2622 = vld [vmem:[#allocation34 + $0x7d0] sm:$0xff]
    %v2623 = vld [vmem:[#allocation34 + $0x7d8] sm:$0xff]
    %v2624 = vld [vmem:[#allocation34 + $0x7e0] sm:$0xff]
    %v2625 = vld [vmem:[#allocation34 + $0x7e8] sm:$0xff]
    %v2626 = vld [vmem:[#allocation34 + $0x7f0] sm:$0xff]
    %v2627 = vld [vmem:[#allocation34 + $0x7f8] sm:$0xff]
    %v2628 = vld [vmem:[#allocation34 + $0x800] sm:$0xff]
    %v2629 = vld [vmem:[#allocation34 + $0x808] sm:$0xff]
    %v2630 = vld [vmem:[#allocation34 + $0x810] sm:$0xff]
    %v2631 = vld [vmem:[#allocation34 + $0x818] sm:$0xff]
    %v2632 = vld [vmem:[#allocation34 + $0x820] sm:$0xff]
    %v2633 = vld [vmem:[#allocation34 + $0x828] sm:$0xff]
    %v2634 = vld [vmem:[#allocation34 + $0x830] sm:$0xff]
    %v2635 = vld [vmem:[#allocation34 + $0x838] sm:$0xff]
    %v2636 = vld [vmem:[#allocation34 + $0x840] sm:$0xff]
    %v2637 = vld [vmem:[#allocation34 + $0x848] sm:$0xff]
    %v2638 = vld [vmem:[#allocation34 + $0x850] sm:$0xff]
    %v2639 = vld [vmem:[#allocation34 + $0x858] sm:$0xff]
    %v2640 = vld [vmem:[#allocation34 + $0x860] sm:$0xff]
    %v2641 = vld [vmem:[#allocation34 + $0x868] sm:$0xff]
    %v2642 = vld [vmem:[#allocation34 + $0x870] sm:$0xff]
    %v2643 = vld [vmem:[#allocation34 + $0x878] sm:$0xff]
    %v2644 = vld [vmem:[#allocation34 + $0x880] sm:$0xff]
    %v2645 = vld [vmem:[#allocation34 + $0x888] sm:$0xff]
    %v2646 = vld [vmem:[#allocation34 + $0x890] sm:$0xff]
    %v2647 = vld [vmem:[#allocation34 + $0x898] sm:$0xff]
    %v2648 = vld [vmem:[#allocation34 + $0x8a0] sm:$0xff]
    %v2649 = vld [vmem:[#allocation34 + $0x8a8] sm:$0xff]
    %v2650 = vld [vmem:[#allocation34 + $0x8b0] sm:$0xff]
    %v2651 = vld [vmem:[#allocation34 + $0x8b8] sm:$0xff]
    %v2652 = vld [vmem:[#allocation34 + $0x8c0] sm:$0xff]
    %v2653 = vld [vmem:[#allocation34 + $0x8c8] sm:$0xff]
    %v2654 = vld [vmem:[#allocation34 + $0x8d0] sm:$0xff]
    %v2655 = vld [vmem:[#allocation34 + $0x8d8] sm:$0xff]
    %v2656 = vld [vmem:[#allocation34 + $0x8e0] sm:$0xff]
    %v2657 = vld [vmem:[#allocation34 + $0x8e8] sm:$0xff]
    %v2658 = vld [vmem:[#allocation34 + $0x8f0] sm:$0xff]
    %v2659 = vld [vmem:[#allocation34 + $0x8f8] sm:$0xff]
    %v2660 = vld [vmem:[#allocation34 + $0x900] sm:$0xff]
    %v2661 = vld [vmem:[#allocation34 + $0x908] sm:$0xff]
    %v2662 = vld [vmem:[#allocation34 + $0x910] sm:$0xff]
    %v2663 = vld [vmem:[#allocation34 + $0x918] sm:$0xff]
    %v2664 = vld [vmem:[#allocation34 + $0x920] sm:$0xff]
    %v2665 = vld [vmem:[#allocation34 + $0x928] sm:$0xff]
    %v2666 = vld [vmem:[#allocation34 + $0x930] sm:$0xff]
    %v2667 = vld [vmem:[#allocation34 + $0x938] sm:$0xff]
    %v2668 = vld [vmem:[#allocation34 + $0x940] sm:$0xff]
    %v2669 = vld [vmem:[#allocation34 + $0x948] sm:$0xff]
    %v2670 = vld [vmem:[#allocation34 + $0x950] sm:$0xff]
    %v2671 = vld [vmem:[#allocation34 + $0x958] sm:$0xff]
    %v2672 = vld [vmem:[#allocation34 + $0x960] sm:$0xff]
    %v2673 = vld [vmem:[#allocation34 + $0x968] sm:$0xff]
    %v2674 = vld [vmem:[#allocation34 + $0x970] sm:$0xff]
    %v2675 = vld [vmem:[#allocation34 + $0x978] sm:$0xff]
    %v2676 = vld [vmem:[#allocation34 + $0x980] sm:$0xff]
    %v2677 = vld [vmem:[#allocation34 + $0x988] sm:$0xff]
    %v2678 = vld [vmem:[#allocation34 + $0x990] sm:$0xff]
    %v2679 = vld [vmem:[#allocation34 + $0x998] sm:$0xff]
    %v2680 = vld [vmem:[#allocation34 + $0x9a0] sm:$0xff]
    %v2681 = vld [vmem:[#allocation34 + $0x9a8] sm:$0xff]
    %v2682 = vld [vmem:[#allocation34 + $0x9b0] sm:$0xff]
    %v2683 = vld [vmem:[#allocation34 + $0x9b8] sm:$0xff]
    %v2684 = vld [vmem:[#allocation34 + $0x9c0] sm:$0xff]
    %v2685 = vld [vmem:[#allocation34 + $0x9c8] sm:$0xff]
    %v2686 = vld [vmem:[#allocation34 + $0x9d0] sm:$0xff]
    %v2687 = vld [vmem:[#allocation34 + $0x9d8] sm:$0xff]
    %v2688 = vld [vmem:[#allocation34 + $0x9e0] sm:$0xff]
    %v2689 = vld [vmem:[#allocation34 + $0x9e8] sm:$0xff]
    %v2690 = vld [vmem:[#allocation34 + $0x9f0] sm:$0xff]
    %v2691 = vld [vmem:[#allocation34 + $0x9f8] sm:$0xff]
    %v2692 = vld [vmem:[#allocation34 + $0xa00] sm:$0xff]
    %v2693 = vld [vmem:[#allocation34 + $0xa08] sm:$0xff]
    %v2694 = vld [vmem:[#allocation34 + $0xa10] sm:$0xff]
    %v2695 = vld [vmem:[#allocation34 + $0xa18] sm:$0xff]
    %v2696 = vld [vmem:[#allocation34 + $0xa20] sm:$0xff]
    %v2697 = vld [vmem:[#allocation34 + $0xa28] sm:$0xff]
    %v2698 = vld [vmem:[#allocation34 + $0xa30] sm:$0xff]
    %v2699 = vld [vmem:[#allocation34 + $0xa38] sm:$0xff]
    %v2700 = vld [vmem:[#allocation34 + $0xa40] sm:$0xff]
    %v2701 = vld [vmem:[#allocation34 + $0xa48] sm:$0xff]
    %v2702 = vld [vmem:[#allocation34 + $0xa50] sm:$0xff]
    %v2703 = vld [vmem:[#allocation34 + $0xa58] sm:$0xff]
    %v2704 = vld [vmem:[#allocation34 + $0xa60] sm:$0xff]
    %v2705 = vld [vmem:[#allocation34 + $0xa68] sm:$0xff]
    %v2706 = vld [vmem:[#allocation34 + $0xa70] sm:$0xff]
    %v2707 = vld [vmem:[#allocation34 + $0xa78] sm:$0xff]
    %v2708 = vld [vmem:[#allocation34 + $0xa80] sm:$0xff]
    %v2709 = vld [vmem:[#allocation34 + $0xa88] sm:$0xff]
    %v2710 = vld [vmem:[#allocation34 + $0xa90] sm:$0xff]
    %v2711 = vld [vmem:[#allocation34 + $0xa98] sm:$0xff]
    %v2712 = vld [vmem:[#allocation34 + $0xaa0] sm:$0xff]
    %v2713 = vld [vmem:[#allocation34 + $0xaa8] sm:$0xff]
    %v2714 = vld [vmem:[#allocation34 + $0xab0] sm:$0xff]
    %v2715 = vld [vmem:[#allocation34 + $0xab8] sm:$0xff]
    %v2716 = vld [vmem:[#allocation34 + $0xac0] sm:$0xff]
    %v2717 = vld [vmem:[#allocation34 + $0xac8] sm:$0xff]
    %v2718 = vld [vmem:[#allocation34 + $0xad0] sm:$0xff]
    %v2719 = vld [vmem:[#allocation34 + $0xad8] sm:$0xff]
    %v2720 = vld [vmem:[#allocation34 + $0xae0] sm:$0xff]
    %v2721 = vld [vmem:[#allocation34 + $0xae8] sm:$0xff]
    %v2722 = vld [vmem:[#allocation34 + $0xaf0] sm:$0xff]
    %v2723 = vld [vmem:[#allocation34 + $0xaf8] sm:$0xff]
    %v2724 = vld [vmem:[#allocation34 + $0xb00] sm:$0xff]
    %v2725 = vld [vmem:[#allocation34 + $0xb08] sm:$0xff]
    %v2726 = vld [vmem:[#allocation34 + $0xb10] sm:$0xff]
    %v2727 = vld [vmem:[#allocation34 + $0xb18] sm:$0xff]
    %v2728 = vld [vmem:[#allocation34 + $0xb20] sm:$0xff]
    %v2729 = vld [vmem:[#allocation34 + $0xb28] sm:$0xff]
    %v2730 = vld [vmem:[#allocation34 + $0xb30] sm:$0xff]
    %v2731 = vld [vmem:[#allocation34 + $0xb38] sm:$0xff]
    %v2732 = vld [vmem:[#allocation34 + $0xb40] sm:$0xff]
    %v2733 = vld [vmem:[#allocation34 + $0xb48] sm:$0xff]
    %v2734 = vld [vmem:[#allocation34 + $0xb50] sm:$0xff]
    %v2735 = vld [vmem:[#allocation34 + $0xb58] sm:$0xff]
    %v2736 = vld [vmem:[#allocation34 + $0xb60] sm:$0xff]
    %v2737 = vld [vmem:[#allocation34 + $0xb68] sm:$0xff]
    %v2738 = vld [vmem:[#allocation34 + $0xb70] sm:$0xff]
    %v2739 = vld [vmem:[#allocation34 + $0xb78] sm:$0xff]
    %v2740 = vld [vmem:[#allocation34 + $0xb80] sm:$0xff]
    %v2741 = vld [vmem:[#allocation34 + $0xb88] sm:$0xff]
    %v2742 = vld [vmem:[#allocation34 + $0xb90] sm:$0xff]
    %v2743 = vld [vmem:[#allocation34 + $0xb98] sm:$0xff]
    %v2744 = vld [vmem:[#allocation34 + $0xba0] sm:$0xff]
    %v2745 = vld [vmem:[#allocation34 + $0xba8] sm:$0xff]
    %v2746 = vld [vmem:[#allocation34 + $0xbb0] sm:$0xff]
    %v2747 = vld [vmem:[#allocation34 + $0xbb8] sm:$0xff]
    %v2748 = vld [vmem:[#allocation34 + $0xbc0] sm:$0xff]
    %v2749 = vld [vmem:[#allocation34 + $0xbc8] sm:$0xff]
    %v2750 = vld [vmem:[#allocation34 + $0xbd0] sm:$0xff]
    %v2751 = vld [vmem:[#allocation34 + $0xbd8] sm:$0xff]
    %v2752 = vld [vmem:[#allocation34 + $0xbe0] sm:$0xff]
    %v2753 = vld [vmem:[#allocation34 + $0xbe8] sm:$0xff]
    %v2754 = vld [vmem:[#allocation34 + $0xbf0] sm:$0xff]
    %v2755 = vld [vmem:[#allocation34 + $0xbf8] sm:$0xff]
    %v2756 = vld [vmem:[#allocation34 + $0xc00] sm:$0xff]
    %v2757 = vld [vmem:[#allocation34 + $0xc08] sm:$0xff]
    %v2758 = vld [vmem:[#allocation34 + $0xc10] sm:$0xff]
    %v2759 = vld [vmem:[#allocation34 + $0xc18] sm:$0xff]
    %v2760 = vld [vmem:[#allocation34 + $0xc20] sm:$0xff]
    %v2761 = vld [vmem:[#allocation34 + $0xc28] sm:$0xff]
    %v2762 = vld [vmem:[#allocation34 + $0xc30] sm:$0xff]
    %v2763 = vld [vmem:[#allocation34 + $0xc38] sm:$0xff]
    %v2764 = vld [vmem:[#allocation34 + $0xc40] sm:$0xff]
    %v2765 = vld [vmem:[#allocation34 + $0xc48] sm:$0xff]
    %v2766 = vld [vmem:[#allocation34 + $0xc50] sm:$0xff]
    %v2767 = vld [vmem:[#allocation34 + $0xc58] sm:$0xff]
    %v2768 = vld [vmem:[#allocation34 + $0xc60] sm:$0xff]
    %v2769 = vld [vmem:[#allocation34 + $0xc68] sm:$0xff]
    %v2770 = vld [vmem:[#allocation34 + $0xc70] sm:$0xff]
    %v2771 = vld [vmem:[#allocation34 + $0xc78] sm:$0xff]
    %v2772 = vld [vmem:[#allocation34 + $0xc80] sm:$0xff]
    %v2773 = vld [vmem:[#allocation34 + $0xc88] sm:$0xff]
    %v2774 = vld [vmem:[#allocation34 + $0xc90] sm:$0xff]
    %v2775 = vld [vmem:[#allocation34 + $0xc98] sm:$0xff]
    %v2776 = vld [vmem:[#allocation34 + $0xca0] sm:$0xff]
    %v2777 = vld [vmem:[#allocation34 + $0xca8] sm:$0xff]
    %v2778 = vld [vmem:[#allocation34 + $0xcb0] sm:$0xff]
    %v2779 = vld [vmem:[#allocation34 + $0xcb8] sm:$0xff]
    %v2780 = vld [vmem:[#allocation34 + $0xcc0] sm:$0xff]
    %v2781 = vld [vmem:[#allocation34 + $0xcc8] sm:$0xff]
    %v2782 = vld [vmem:[#allocation34 + $0xcd0] sm:$0xff]
    %v2783 = vld [vmem:[#allocation34 + $0xcd8] sm:$0xff]
    %v2784 = vld [vmem:[#allocation34 + $0xce0] sm:$0xff]
    %v2785 = vld [vmem:[#allocation34 + $0xce8] sm:$0xff]
    %v2786 = vld [vmem:[#allocation34 + $0xcf0] sm:$0xff]
    %v2787 = vld [vmem:[#allocation34 + $0xcf8] sm:$0xff]
    %v2788 = vld [vmem:[#allocation34 + $0xd00] sm:$0xff]
    %v2789 = vld [vmem:[#allocation34 + $0xd08] sm:$0xff]
    %v2790 = vld [vmem:[#allocation34 + $0xd10] sm:$0xff]
    %v2791 = vld [vmem:[#allocation34 + $0xd18] sm:$0xff]
    %v2792 = vld [vmem:[#allocation34 + $0xd20] sm:$0xff]
    %v2793 = vld [vmem:[#allocation34 + $0xd28] sm:$0xff]
    %v2794 = vld [vmem:[#allocation34 + $0xd30] sm:$0xff]
    %v2795 = vld [vmem:[#allocation34 + $0xd38] sm:$0xff]
    %v2796 = vld [vmem:[#allocation34 + $0xd40] sm:$0xff]
    %v2797 = vld [vmem:[#allocation34 + $0xd48] sm:$0xff]
    %v2798 = vld [vmem:[#allocation34 + $0xd50] sm:$0xff]
    %v2799 = vld [vmem:[#allocation34 + $0xd58] sm:$0xff]
    %v2800 = vld [vmem:[#allocation34 + $0xd60] sm:$0xff]
    %v2801 = vld [vmem:[#allocation34 + $0xd68] sm:$0xff]
    %v2802 = vld [vmem:[#allocation34 + $0xd70] sm:$0xff]
    %v2803 = vld [vmem:[#allocation34 + $0xd78] sm:$0xff]
    %v2804 = vld [vmem:[#allocation34 + $0xd80] sm:$0xff]
    %v2805 = vld [vmem:[#allocation34 + $0xd88] sm:$0xff]
    %v2806 = vld [vmem:[#allocation34 + $0xd90] sm:$0xff]
    %v2807 = vld [vmem:[#allocation34 + $0xd98] sm:$0xff]
    %v2808 = vld [vmem:[#allocation34 + $0xda0] sm:$0xff]
    %v2809 = vld [vmem:[#allocation34 + $0xda8] sm:$0xff]
    %v2810 = vld [vmem:[#allocation34 + $0xdb0] sm:$0xff]
    %v2811 = vld [vmem:[#allocation34 + $0xdb8] sm:$0xff]
    %v2812 = vld [vmem:[#allocation34 + $0xdc0] sm:$0xff]
    %v2813 = vld [vmem:[#allocation34 + $0xdc8] sm:$0xff]
    %v2814 = vld [vmem:[#allocation34 + $0xdd0] sm:$0xff]
    %v2815 = vld [vmem:[#allocation34 + $0xdd8] sm:$0xff]
    %v2816 = vld [vmem:[#allocation34 + $0xde0] sm:$0xff]
    %v2817 = vld [vmem:[#allocation34 + $0xde8] sm:$0xff]
    %v2818 = vld [vmem:[#allocation34 + $0xdf0] sm:$0xff]
    %v2819 = vld [vmem:[#allocation34 + $0xdf8] sm:$0xff]
    %v2820 = vld [vmem:[#allocation34 + $0xe00] sm:$0xff]
    %v2821 = vld [vmem:[#allocation34 + $0xe08] sm:$0xff]
    %v2822 = vld [vmem:[#allocation34 + $0xe10] sm:$0xff]
    %v2823 = vld [vmem:[#allocation34 + $0xe18] sm:$0xff]
    %v2824 = vld [vmem:[#allocation34 + $0xe20] sm:$0xff]
    %v2825 = vld [vmem:[#allocation34 + $0xe28] sm:$0xff]
    %v2826 = vld [vmem:[#allocation34 + $0xe30] sm:$0xff]
    %v2827 = vld [vmem:[#allocation34 + $0xe38] sm:$0xff]
    %v2828 = vld [vmem:[#allocation34 + $0xe40] sm:$0xff]
    %v2829 = vld [vmem:[#allocation34 + $0xe48] sm:$0xff]
    %v2830 = vld [vmem:[#allocation34 + $0xe50] sm:$0xff]
    %v2831 = vld [vmem:[#allocation34 + $0xe58] sm:$0xff]
    %v2832 = vld [vmem:[#allocation34 + $0xe60] sm:$0xff]
    %v2833 = vld [vmem:[#allocation34 + $0xe68] sm:$0xff]
    %v2834 = vld [vmem:[#allocation34 + $0xe70] sm:$0xff]
    %v2835 = vld [vmem:[#allocation34 + $0xe78] sm:$0xff]
    %v2836 = vld [vmem:[#allocation34 + $0xe80] sm:$0xff]
    %v2837 = vld [vmem:[#allocation34 + $0xe88] sm:$0xff]
    %v2838 = vld [vmem:[#allocation34 + $0xe90] sm:$0xff]
    %v2839 = vld [vmem:[#allocation34 + $0xe98] sm:$0xff]
    %v2840 = vld [vmem:[#allocation34 + $0xea0] sm:$0xff]
    %v2841 = vld [vmem:[#allocation34 + $0xea8] sm:$0xff]
    %v2842 = vld [vmem:[#allocation34 + $0xeb0] sm:$0xff]
    %v2843 = vld [vmem:[#allocation34 + $0xeb8] sm:$0xff]
    %v2844 = vld [vmem:[#allocation34 + $0xec0] sm:$0xff]
    %v2845 = vld [vmem:[#allocation34 + $0xec8] sm:$0xff]
    %v2846 = vld [vmem:[#allocation34 + $0xed0] sm:$0xff]
    %v2847 = vld [vmem:[#allocation34 + $0xed8] sm:$0xff]
    %v2848 = vld [vmem:[#allocation34 + $0xee0] sm:$0xff]
    %v2849 = vld [vmem:[#allocation34 + $0xee8] sm:$0xff]
    %v2850 = vld [vmem:[#allocation34 + $0xef0] sm:$0xff]
    %v2851 = vld [vmem:[#allocation34 + $0xef8] sm:$0xff]
    %v2852 = vld [vmem:[#allocation34 + $0xf00] sm:$0xff]
    %v2853 = vld [vmem:[#allocation34 + $0xf08] sm:$0xff]
    %v2854 = vld [vmem:[#allocation34 + $0xf10] sm:$0xff]
    %v2855 = vld [vmem:[#allocation34 + $0xf18] sm:$0xff]
    %v2856 = vld [vmem:[#allocation34 + $0xf20] sm:$0xff]
    %v2857 = vld [vmem:[#allocation34 + $0xf28] sm:$0xff]
    %v2858 = vld [vmem:[#allocation34 + $0xf30] sm:$0xff]
    %v2859 = vld [vmem:[#allocation34 + $0xf38] sm:$0xff]
    %v2860 = vld [vmem:[#allocation34 + $0xf40] sm:$0xff]
    %v2861 = vld [vmem:[#allocation34 + $0xf48] sm:$0xff]
    %v2862 = vld [vmem:[#allocation34 + $0xf50] sm:$0xff]
    %v2863 = vld [vmem:[#allocation34 + $0xf58] sm:$0xff]
    %v2864 = vld [vmem:[#allocation34 + $0xf60] sm:$0xff]
    %v2865 = vld [vmem:[#allocation34 + $0xf68] sm:$0xff]
    %v2866 = vld [vmem:[#allocation34 + $0xf70] sm:$0xff]
    %v2867 = vld [vmem:[#allocation34 + $0xf78] sm:$0xff]
    %v2868 = vld [vmem:[#allocation34 + $0xf80] sm:$0xff]
    %v2869 = vld [vmem:[#allocation34 + $0xf88] sm:$0xff]
    %v2870 = vld [vmem:[#allocation34 + $0xf90] sm:$0xff]
    %v2871 = vld [vmem:[#allocation34 + $0xf98] sm:$0xff]
    %v2872 = vld [vmem:[#allocation34 + $0xfa0] sm:$0xff]
    %v2873 = vld [vmem:[#allocation34 + $0xfa8] sm:$0xff]
    %v2874 = vld [vmem:[#allocation34 + $0xfb0] sm:$0xff]
    %v2875 = vld [vmem:[#allocation34 + $0xfb8] sm:$0xff]
    %v2876 = vld [vmem:[#allocation34 + $0xfc0] sm:$0xff]
    %v2877 = vld [vmem:[#allocation34 + $0xfc8] sm:$0xff]
    %v2878 = vld [vmem:[#allocation34 + $0xfd0] sm:$0xff]
    %v2879 = vld [vmem:[#allocation34 + $0xfd8] sm:$0xff]
    %v2880 = vld [vmem:[#allocation34 + $0xfe0] sm:$0xff]
    %v2881 = vld [vmem:[#allocation34 + $0xfe8] sm:$0xff]
    %v2882 = vld [vmem:[#allocation34 + $0xff0] sm:$0xff]
    %v2883 = vld [vmem:[#allocation34 + $0xff8] sm:$0xff]
    %v2884 = vld [vmem:[#allocation35] sm:$0xff]
    %v2886 = vperm.slane %v2884, 0
    %v2887 = vperm.slane %v2884, 1
    %v2888 = vperm.slane %v2884, 2
    %v2889 = vperm.slane %v2884, 3
    %v2890 = vperm.slane %v2884, 4
    %v2891 = vperm.slane %v2884, 5
    %v2892 = vperm.slane %v2884, 6
    %v2893 = vperm.slane %v2884, 7
    %v3414 = vunpack.c.l.b16 %v2372
    %v3415 = vunpack.c.h.b16 %v2372
    %v3416 = vunpack.c.l.b16 %v2373
    %v3417 = vunpack.c.h.b16 %v2373
    %v3418 = vunpack.c.l.b16 %v2374
    %v3419 = vunpack.c.h.b16 %v2374
    %v3420 = vunpack.c.l.b16 %v2375
    %v3421 = vunpack.c.h.b16 %v2375
    %v3422 = vunpack.c.l.b16 %v2376
    %v3423 = vunpack.c.h.b16 %v2376
    %v3424 = vunpack.c.l.b16 %v2377
    %v3425 = vunpack.c.h.b16 %v2377
    %v3426 = vunpack.c.l.b16 %v2378
    %v3427 = vunpack.c.h.b16 %v2378
    %v3428 = vunpack.c.l.b16 %v2379
    %v3429 = vunpack.c.h.b16 %v2379
    %v3430 = vunpack.c.l.b16 %v2380
    %v3431 = vunpack.c.h.b16 %v2380
    %v3432 = vunpack.c.l.b16 %v2381
    %v3433 = vunpack.c.h.b16 %v2381
    %v3434 = vunpack.c.l.b16 %v2382
    %v3435 = vunpack.c.h.b16 %v2382
    %v3436 = vunpack.c.l.b16 %v2383
    %v3437 = vunpack.c.h.b16 %v2383
    %v3438 = vunpack.c.l.b16 %v2384
    %v3439 = vunpack.c.h.b16 %v2384
    %v3440 = vunpack.c.l.b16 %v2385
    %v3441 = vunpack.c.h.b16 %v2385
    %v3442 = vunpack.c.l.b16 %v2386
    %v3443 = vunpack.c.h.b16 %v2386
    %v3444 = vunpack.c.l.b16 %v2387
    %v3445 = vunpack.c.h.b16 %v2387
    %v3446 = vunpack.c.l.b16 %v2388
    %v3447 = vunpack.c.h.b16 %v2388
    %v3448 = vunpack.c.l.b16 %v2389
    %v3449 = vunpack.c.h.b16 %v2389
    %v3450 = vunpack.c.l.b16 %v2390
    %v3451 = vunpack.c.h.b16 %v2390
    %v3452 = vunpack.c.l.b16 %v2391
    %v3453 = vunpack.c.h.b16 %v2391
    %v3454 = vunpack.c.l.b16 %v2392
    %v3455 = vunpack.c.h.b16 %v2392
    %v3456 = vunpack.c.l.b16 %v2393
    %v3457 = vunpack.c.h.b16 %v2393
    %v3458 = vunpack.c.l.b16 %v2394
    %v3459 = vunpack.c.h.b16 %v2394
    %v3460 = vunpack.c.l.b16 %v2395
    %v3461 = vunpack.c.h.b16 %v2395
    %v3462 = vunpack.c.l.b16 %v2396
    %v3463 = vunpack.c.h.b16 %v2396
    %v3464 = vunpack.c.l.b16 %v2397
    %v3465 = vunpack.c.h.b16 %v2397
    %v3466 = vunpack.c.l.b16 %v2398
    %v3467 = vunpack.c.h.b16 %v2398
    %v3468 = vunpack.c.l.b16 %v2399
    %v3469 = vunpack.c.h.b16 %v2399
    %v3470 = vunpack.c.l.b16 %v2400
    %v3471 = vunpack.c.h.b16 %v2400
    %v3472 = vunpack.c.l.b16 %v2401
    %v3473 = vunpack.c.h.b16 %v2401
    %v3474 = vunpack.c.l.b16 %v2402
    %v3475 = vunpack.c.h.b16 %v2402
    %v3476 = vunpack.c.l.b16 %v2403
    %v3477 = vunpack.c.h.b16 %v2403
    %v3478 = vunpack.c.l.b16 %v2404
    %v3479 = vunpack.c.h.b16 %v2404
    %v3480 = vunpack.c.l.b16 %v2405
    %v3481 = vunpack.c.h.b16 %v2405
    %v3482 = vunpack.c.l.b16 %v2406
    %v3483 = vunpack.c.h.b16 %v2406
    %v3484 = vunpack.c.l.b16 %v2407
    %v3485 = vunpack.c.h.b16 %v2407
    %v3486 = vunpack.c.l.b16 %v2408
    %v3487 = vunpack.c.h.b16 %v2408
    %v3488 = vunpack.c.l.b16 %v2409
    %v3489 = vunpack.c.h.b16 %v2409
    %v3490 = vunpack.c.l.b16 %v2410
    %v3491 = vunpack.c.h.b16 %v2410
    %v3492 = vunpack.c.l.b16 %v2411
    %v3493 = vunpack.c.h.b16 %v2411
    %v3494 = vunpack.c.l.b16 %v2412
    %v3495 = vunpack.c.h.b16 %v2412
    %v3496 = vunpack.c.l.b16 %v2413
    %v3497 = vunpack.c.h.b16 %v2413
    %v3498 = vunpack.c.l.b16 %v2414
    %v3499 = vunpack.c.h.b16 %v2414
    %v3500 = vunpack.c.l.b16 %v2415
    %v3501 = vunpack.c.h.b16 %v2415
    %v3502 = vunpack.c.l.b16 %v2416
    %v3503 = vunpack.c.h.b16 %v2416
    %v3504 = vunpack.c.l.b16 %v2417
    %v3505 = vunpack.c.h.b16 %v2417
    %v3506 = vunpack.c.l.b16 %v2418
    %v3507 = vunpack.c.h.b16 %v2418
    %v3508 = vunpack.c.l.b16 %v2419
    %v3509 = vunpack.c.h.b16 %v2419
    %v3510 = vunpack.c.l.b16 %v2420
    %v3511 = vunpack.c.h.b16 %v2420
    %v3512 = vunpack.c.l.b16 %v2421
    %v3513 = vunpack.c.h.b16 %v2421
    %v3514 = vunpack.c.l.b16 %v2422
    %v3515 = vunpack.c.h.b16 %v2422
    %v3516 = vunpack.c.l.b16 %v2423
    %v3517 = vunpack.c.h.b16 %v2423
    %v3518 = vunpack.c.l.b16 %v2424
    %v3519 = vunpack.c.h.b16 %v2424
    %v3520 = vunpack.c.l.b16 %v2425
    %v3521 = vunpack.c.h.b16 %v2425
    %v3522 = vunpack.c.l.b16 %v2426
    %v3523 = vunpack.c.h.b16 %v2426
    %v3524 = vunpack.c.l.b16 %v2427
    %v3525 = vunpack.c.h.b16 %v2427
    %v3526 = vunpack.c.l.b16 %v2428
    %v3527 = vunpack.c.h.b16 %v2428
    %v3528 = vunpack.c.l.b16 %v2429
    %v3529 = vunpack.c.h.b16 %v2429
    %v3530 = vunpack.c.l.b16 %v2430
    %v3531 = vunpack.c.h.b16 %v2430
    %v3532 = vunpack.c.l.b16 %v2431
    %v3533 = vunpack.c.h.b16 %v2431
    %v3534 = vunpack.c.l.b16 %v2432
    %v3535 = vunpack.c.h.b16 %v2432
    %v3536 = vunpack.c.l.b16 %v2433
    %v3537 = vunpack.c.h.b16 %v2433
    %v3538 = vunpack.c.l.b16 %v2434
    %v3539 = vunpack.c.h.b16 %v2434
    %v3540 = vunpack.c.l.b16 %v2435
    %v3541 = vunpack.c.h.b16 %v2435
    %v3542 = vunpack.c.l.b16 %v2436
    %v3543 = vunpack.c.h.b16 %v2436
    %v3544 = vunpack.c.l.b16 %v2437
    %v3545 = vunpack.c.h.b16 %v2437
    %v3546 = vunpack.c.l.b16 %v2438
    %v3547 = vunpack.c.h.b16 %v2438
    %v3548 = vunpack.c.l.b16 %v2439
    %v3549 = vunpack.c.h.b16 %v2439
    %v3550 = vunpack.c.l.b16 %v2440
    %v3551 = vunpack.c.h.b16 %v2440
    %v3552 = vunpack.c.l.b16 %v2441
    %v3553 = vunpack.c.h.b16 %v2441
    %v3554 = vunpack.c.l.b16 %v2442
    %v3555 = vunpack.c.h.b16 %v2442
    %v3556 = vunpack.c.l.b16 %v2443
    %v3557 = vunpack.c.h.b16 %v2443
    %v3558 = vunpack.c.l.b16 %v2444
    %v3559 = vunpack.c.h.b16 %v2444
    %v3560 = vunpack.c.l.b16 %v2445
    %v3561 = vunpack.c.h.b16 %v2445
    %v3562 = vunpack.c.l.b16 %v2446
    %v3563 = vunpack.c.h.b16 %v2446
    %v3564 = vunpack.c.l.b16 %v2447
    %v3565 = vunpack.c.h.b16 %v2447
    %v3566 = vunpack.c.l.b16 %v2448
    %v3567 = vunpack.c.h.b16 %v2448
    %v3568 = vunpack.c.l.b16 %v2449
    %v3569 = vunpack.c.h.b16 %v2449
    %v3570 = vunpack.c.l.b16 %v2450
    %v3571 = vunpack.c.h.b16 %v2450
    %v3572 = vunpack.c.l.b16 %v2451
    %v3573 = vunpack.c.h.b16 %v2451
    %v3574 = vunpack.c.l.b16 %v2452
    %v3575 = vunpack.c.h.b16 %v2452
    %v3576 = vunpack.c.l.b16 %v2453
    %v3577 = vunpack.c.h.b16 %v2453
    %v3578 = vunpack.c.l.b16 %v2454
    %v3579 = vunpack.c.h.b16 %v2454
    %v3580 = vunpack.c.l.b16 %v2455
    %v3581 = vunpack.c.h.b16 %v2455
    %v3582 = vunpack.c.l.b16 %v2456
    %v3583 = vunpack.c.h.b16 %v2456
    %v3584 = vunpack.c.l.b16 %v2457
    %v3585 = vunpack.c.h.b16 %v2457
    %v3586 = vunpack.c.l.b16 %v2458
    %v3587 = vunpack.c.h.b16 %v2458
    %v3588 = vunpack.c.l.b16 %v2459
    %v3589 = vunpack.c.h.b16 %v2459
    %v3590 = vunpack.c.l.b16 %v2460
    %v3591 = vunpack.c.h.b16 %v2460
    %v3592 = vunpack.c.l.b16 %v2461
    %v3593 = vunpack.c.h.b16 %v2461
    %v3594 = vunpack.c.l.b16 %v2462
    %v3595 = vunpack.c.h.b16 %v2462
    %v3596 = vunpack.c.l.b16 %v2463
    %v3597 = vunpack.c.h.b16 %v2463
    %v3598 = vunpack.c.l.b16 %v2464
    %v3599 = vunpack.c.h.b16 %v2464
    %v3600 = vunpack.c.l.b16 %v2465
    %v3601 = vunpack.c.h.b16 %v2465
    %v3602 = vunpack.c.l.b16 %v2466
    %v3603 = vunpack.c.h.b16 %v2466
    %v3604 = vunpack.c.l.b16 %v2467
    %v3605 = vunpack.c.h.b16 %v2467
    %v3606 = vunpack.c.l.b16 %v2468
    %v3607 = vunpack.c.h.b16 %v2468
    %v3608 = vunpack.c.l.b16 %v2469
    %v3609 = vunpack.c.h.b16 %v2469
    %v3610 = vunpack.c.l.b16 %v2470
    %v3611 = vunpack.c.h.b16 %v2470
    %v3612 = vunpack.c.l.b16 %v2471
    %v3613 = vunpack.c.h.b16 %v2471
    %v3614 = vunpack.c.l.b16 %v2472
    %v3615 = vunpack.c.h.b16 %v2472
    %v3616 = vunpack.c.l.b16 %v2473
    %v3617 = vunpack.c.h.b16 %v2473
    %v3618 = vunpack.c.l.b16 %v2474
    %v3619 = vunpack.c.h.b16 %v2474
    %v3620 = vunpack.c.l.b16 %v2475
    %v3621 = vunpack.c.h.b16 %v2475
    %v3622 = vunpack.c.l.b16 %v2476
    %v3623 = vunpack.c.h.b16 %v2476
    %v3624 = vunpack.c.l.b16 %v2477
    %v3625 = vunpack.c.h.b16 %v2477
    %v3626 = vunpack.c.l.b16 %v2478
    %v3627 = vunpack.c.h.b16 %v2478
    %v3628 = vunpack.c.l.b16 %v2479
    %v3629 = vunpack.c.h.b16 %v2479
    %v3630 = vunpack.c.l.b16 %v2480
    %v3631 = vunpack.c.h.b16 %v2480
    %v3632 = vunpack.c.l.b16 %v2481
    %v3633 = vunpack.c.h.b16 %v2481
    %v3634 = vunpack.c.l.b16 %v2482
    %v3635 = vunpack.c.h.b16 %v2482
    %v3636 = vunpack.c.l.b16 %v2483
    %v3637 = vunpack.c.h.b16 %v2483
    %v3638 = vunpack.c.l.b16 %v2484
    %v3639 = vunpack.c.h.b16 %v2484
    %v3640 = vunpack.c.l.b16 %v2485
    %v3641 = vunpack.c.h.b16 %v2485
    %v3642 = vunpack.c.l.b16 %v2486
    %v3643 = vunpack.c.h.b16 %v2486
    %v3644 = vunpack.c.l.b16 %v2487
    %v3645 = vunpack.c.h.b16 %v2487
    %v3646 = vunpack.c.l.b16 %v2488
    %v3647 = vunpack.c.h.b16 %v2488
    %v3648 = vunpack.c.l.b16 %v2489
    %v3649 = vunpack.c.h.b16 %v2489
    %v3650 = vunpack.c.l.b16 %v2490
    %v3651 = vunpack.c.h.b16 %v2490
    %v3652 = vunpack.c.l.b16 %v2491
    %v3653 = vunpack.c.h.b16 %v2491
    %v3654 = vunpack.c.l.b16 %v2492
    %v3655 = vunpack.c.h.b16 %v2492
    %v3656 = vunpack.c.l.b16 %v2493
    %v3657 = vunpack.c.h.b16 %v2493
    %v3658 = vunpack.c.l.b16 %v2494
    %v3659 = vunpack.c.h.b16 %v2494
    %v3660 = vunpack.c.l.b16 %v2495
    %v3661 = vunpack.c.h.b16 %v2495
    %v3662 = vunpack.c.l.b16 %v2496
    %v3663 = vunpack.c.h.b16 %v2496
    %v3664 = vunpack.c.l.b16 %v2497
    %v3665 = vunpack.c.h.b16 %v2497
    %v3666 = vunpack.c.l.b16 %v2498
    %v3667 = vunpack.c.h.b16 %v2498
    %v3668 = vunpack.c.l.b16 %v2499
    %v3669 = vunpack.c.h.b16 %v2499
    %v3670 = vunpack.c.l.b16 %v2500
    %v3671 = vunpack.c.h.b16 %v2500
    %v3672 = vunpack.c.l.b16 %v2501
    %v3673 = vunpack.c.h.b16 %v2501
    %v3674 = vunpack.c.l.b16 %v2502
    %v3675 = vunpack.c.h.b16 %v2502
    %v3676 = vunpack.c.l.b16 %v2503
    %v3677 = vunpack.c.h.b16 %v2503
    %v3678 = vunpack.c.l.b16 %v2504
    %v3679 = vunpack.c.h.b16 %v2504
    %v3680 = vunpack.c.l.b16 %v2505
    %v3681 = vunpack.c.h.b16 %v2505
    %v3682 = vunpack.c.l.b16 %v2506
    %v3683 = vunpack.c.h.b16 %v2506
    %v3684 = vunpack.c.l.b16 %v2507
    %v3685 = vunpack.c.h.b16 %v2507
    %v3686 = vunpack.c.l.b16 %v2508
    %v3687 = vunpack.c.h.b16 %v2508
    %v3688 = vunpack.c.l.b16 %v2509
    %v3689 = vunpack.c.h.b16 %v2509
    %v3690 = vunpack.c.l.b16 %v2510
    %v3691 = vunpack.c.h.b16 %v2510
    %v3692 = vunpack.c.l.b16 %v2511
    %v3693 = vunpack.c.h.b16 %v2511
    %v3694 = vunpack.c.l.b16 %v2512
    %v3695 = vunpack.c.h.b16 %v2512
    %v3696 = vunpack.c.l.b16 %v2513
    %v3697 = vunpack.c.h.b16 %v2513
    %v3698 = vunpack.c.l.b16 %v2514
    %v3699 = vunpack.c.h.b16 %v2514
    %v3700 = vunpack.c.l.b16 %v2515
    %v3701 = vunpack.c.h.b16 %v2515
    %v3702 = vunpack.c.l.b16 %v2516
    %v3703 = vunpack.c.h.b16 %v2516
    %v3704 = vunpack.c.l.b16 %v2517
    %v3705 = vunpack.c.h.b16 %v2517
    %v3706 = vunpack.c.l.b16 %v2518
    %v3707 = vunpack.c.h.b16 %v2518
    %v3708 = vunpack.c.l.b16 %v2519
    %v3709 = vunpack.c.h.b16 %v2519
    %v3710 = vunpack.c.l.b16 %v2520
    %v3711 = vunpack.c.h.b16 %v2520
    %v3712 = vunpack.c.l.b16 %v2521
    %v3713 = vunpack.c.h.b16 %v2521
    %v3714 = vunpack.c.l.b16 %v2522
    %v3715 = vunpack.c.h.b16 %v2522
    %v3716 = vunpack.c.l.b16 %v2523
    %v3717 = vunpack.c.h.b16 %v2523
    %v3718 = vunpack.c.l.b16 %v2524
    %v3719 = vunpack.c.h.b16 %v2524
    %v3720 = vunpack.c.l.b16 %v2525
    %v3721 = vunpack.c.h.b16 %v2525
    %v3722 = vunpack.c.l.b16 %v2526
    %v3723 = vunpack.c.h.b16 %v2526
    %v3724 = vunpack.c.l.b16 %v2527
    %v3725 = vunpack.c.h.b16 %v2527
    %v3726 = vunpack.c.l.b16 %v2528
    %v3727 = vunpack.c.h.b16 %v2528
    %v3728 = vunpack.c.l.b16 %v2529
    %v3729 = vunpack.c.h.b16 %v2529
    %v3730 = vunpack.c.l.b16 %v2530
    %v3731 = vunpack.c.h.b16 %v2530
    %v3732 = vunpack.c.l.b16 %v2531
    %v3733 = vunpack.c.h.b16 %v2531
    %v3734 = vunpack.c.l.b16 %v2532
    %v3735 = vunpack.c.h.b16 %v2532
    %v3736 = vunpack.c.l.b16 %v2533
    %v3737 = vunpack.c.h.b16 %v2533
    %v3738 = vunpack.c.l.b16 %v2534
    %v3739 = vunpack.c.h.b16 %v2534
    %v3740 = vunpack.c.l.b16 %v2535
    %v3741 = vunpack.c.h.b16 %v2535
    %v3742 = vunpack.c.l.b16 %v2536
    %v3743 = vunpack.c.h.b16 %v2536
    %v3744 = vunpack.c.l.b16 %v2537
    %v3745 = vunpack.c.h.b16 %v2537
    %v3746 = vunpack.c.l.b16 %v2538
    %v3747 = vunpack.c.h.b16 %v2538
    %v3748 = vunpack.c.l.b16 %v2539
    %v3749 = vunpack.c.h.b16 %v2539
    %v3750 = vunpack.c.l.b16 %v2540
    %v3751 = vunpack.c.h.b16 %v2540
    %v3752 = vunpack.c.l.b16 %v2541
    %v3753 = vunpack.c.h.b16 %v2541
    %v3754 = vunpack.c.l.b16 %v2542
    %v3755 = vunpack.c.h.b16 %v2542
    %v3756 = vunpack.c.l.b16 %v2543
    %v3757 = vunpack.c.h.b16 %v2543
    %v3758 = vunpack.c.l.b16 %v2544
    %v3759 = vunpack.c.h.b16 %v2544
    %v3760 = vunpack.c.l.b16 %v2545
    %v3761 = vunpack.c.h.b16 %v2545
    %v3762 = vunpack.c.l.b16 %v2546
    %v3763 = vunpack.c.h.b16 %v2546
    %v3764 = vunpack.c.l.b16 %v2547
    %v3765 = vunpack.c.h.b16 %v2547
    %v3766 = vunpack.c.l.b16 %v2548
    %v3767 = vunpack.c.h.b16 %v2548
    %v3768 = vunpack.c.l.b16 %v2549
    %v3769 = vunpack.c.h.b16 %v2549
    %v3770 = vunpack.c.l.b16 %v2550
    %v3771 = vunpack.c.h.b16 %v2550
    %v3772 = vunpack.c.l.b16 %v2551
    %v3773 = vunpack.c.h.b16 %v2551
    %v3774 = vunpack.c.l.b16 %v2552
    %v3775 = vunpack.c.h.b16 %v2552
    %v3776 = vunpack.c.l.b16 %v2553
    %v3777 = vunpack.c.h.b16 %v2553
    %v3778 = vunpack.c.l.b16 %v2554
    %v3779 = vunpack.c.h.b16 %v2554
    %v3780 = vunpack.c.l.b16 %v2555
    %v3781 = vunpack.c.h.b16 %v2555
    %v3782 = vunpack.c.l.b16 %v2556
    %v3783 = vunpack.c.h.b16 %v2556
    %v3784 = vunpack.c.l.b16 %v2557
    %v3785 = vunpack.c.h.b16 %v2557
    %v3786 = vunpack.c.l.b16 %v2558
    %v3787 = vunpack.c.h.b16 %v2558
    %v3788 = vunpack.c.l.b16 %v2559
    %v3789 = vunpack.c.h.b16 %v2559
    %v3790 = vunpack.c.l.b16 %v2560
    %v3791 = vunpack.c.h.b16 %v2560
    %v3792 = vunpack.c.l.b16 %v2561
    %v3793 = vunpack.c.h.b16 %v2561
    %v3794 = vunpack.c.l.b16 %v2562
    %v3795 = vunpack.c.h.b16 %v2562
    %v3796 = vunpack.c.l.b16 %v2563
    %v3797 = vunpack.c.h.b16 %v2563
    %v3798 = vunpack.c.l.b16 %v2564
    %v3799 = vunpack.c.h.b16 %v2564
    %v3800 = vunpack.c.l.b16 %v2565
    %v3801 = vunpack.c.h.b16 %v2565
    %v3802 = vunpack.c.l.b16 %v2566
    %v3803 = vunpack.c.h.b16 %v2566
    %v3804 = vunpack.c.l.b16 %v2567
    %v3805 = vunpack.c.h.b16 %v2567
    %v3806 = vunpack.c.l.b16 %v2568
    %v3807 = vunpack.c.h.b16 %v2568
    %v3808 = vunpack.c.l.b16 %v2569
    %v3809 = vunpack.c.h.b16 %v2569
    %v3810 = vunpack.c.l.b16 %v2570
    %v3811 = vunpack.c.h.b16 %v2570
    %v3812 = vunpack.c.l.b16 %v2571
    %v3813 = vunpack.c.h.b16 %v2571
    %v3814 = vunpack.c.l.b16 %v2572
    %v3815 = vunpack.c.h.b16 %v2572
    %v3816 = vunpack.c.l.b16 %v2573
    %v3817 = vunpack.c.h.b16 %v2573
    %v3818 = vunpack.c.l.b16 %v2574
    %v3819 = vunpack.c.h.b16 %v2574
    %v3820 = vunpack.c.l.b16 %v2575
    %v3821 = vunpack.c.h.b16 %v2575
    %v3822 = vunpack.c.l.b16 %v2576
    %v3823 = vunpack.c.h.b16 %v2576
    %v3824 = vunpack.c.l.b16 %v2577
    %v3825 = vunpack.c.h.b16 %v2577
    %v3826 = vunpack.c.l.b16 %v2578
    %v3827 = vunpack.c.h.b16 %v2578
    %v3828 = vunpack.c.l.b16 %v2579
    %v3829 = vunpack.c.h.b16 %v2579
    %v3830 = vunpack.c.l.b16 %v2580
    %v3831 = vunpack.c.h.b16 %v2580
    %v3832 = vunpack.c.l.b16 %v2581
    %v3833 = vunpack.c.h.b16 %v2581
    %v3834 = vunpack.c.l.b16 %v2582
    %v3835 = vunpack.c.h.b16 %v2582
    %v3836 = vunpack.c.l.b16 %v2583
    %v3837 = vunpack.c.h.b16 %v2583
    %v3838 = vunpack.c.l.b16 %v2584
    %v3839 = vunpack.c.h.b16 %v2584
    %v3840 = vunpack.c.l.b16 %v2585
    %v3841 = vunpack.c.h.b16 %v2585
    %v3842 = vunpack.c.l.b16 %v2586
    %v3843 = vunpack.c.h.b16 %v2586
    %v3844 = vunpack.c.l.b16 %v2587
    %v3845 = vunpack.c.h.b16 %v2587
    %v3846 = vunpack.c.l.b16 %v2588
    %v3847 = vunpack.c.h.b16 %v2588
    %v3848 = vunpack.c.l.b16 %v2589
    %v3849 = vunpack.c.h.b16 %v2589
    %v3850 = vunpack.c.l.b16 %v2590
    %v3851 = vunpack.c.h.b16 %v2590
    %v3852 = vunpack.c.l.b16 %v2591
    %v3853 = vunpack.c.h.b16 %v2591
    %v3854 = vunpack.c.l.b16 %v2592
    %v3855 = vunpack.c.h.b16 %v2592
    %v3856 = vunpack.c.l.b16 %v2593
    %v3857 = vunpack.c.h.b16 %v2593
    %v3858 = vunpack.c.l.b16 %v2594
    %v3859 = vunpack.c.h.b16 %v2594
    %v3860 = vunpack.c.l.b16 %v2595
    %v3861 = vunpack.c.h.b16 %v2595
    %v3862 = vunpack.c.l.b16 %v2596
    %v3863 = vunpack.c.h.b16 %v2596
    %v3864 = vunpack.c.l.b16 %v2597
    %v3865 = vunpack.c.h.b16 %v2597
    %v3866 = vunpack.c.l.b16 %v2598
    %v3867 = vunpack.c.h.b16 %v2598
    %v3868 = vunpack.c.l.b16 %v2599
    %v3869 = vunpack.c.h.b16 %v2599
    %v3870 = vunpack.c.l.b16 %v2600
    %v3871 = vunpack.c.h.b16 %v2600
    %v3872 = vunpack.c.l.b16 %v2601
    %v3873 = vunpack.c.h.b16 %v2601
    %v3874 = vunpack.c.l.b16 %v2602
    %v3875 = vunpack.c.h.b16 %v2602
    %v3876 = vunpack.c.l.b16 %v2603
    %v3877 = vunpack.c.h.b16 %v2603
    %v3878 = vunpack.c.l.b16 %v2604
    %v3879 = vunpack.c.h.b16 %v2604
    %v3880 = vunpack.c.l.b16 %v2605
    %v3881 = vunpack.c.h.b16 %v2605
    %v3882 = vunpack.c.l.b16 %v2606
    %v3883 = vunpack.c.h.b16 %v2606
    %v3884 = vunpack.c.l.b16 %v2607
    %v3885 = vunpack.c.h.b16 %v2607
    %v3886 = vunpack.c.l.b16 %v2608
    %v3887 = vunpack.c.h.b16 %v2608
    %v3888 = vunpack.c.l.b16 %v2609
    %v3889 = vunpack.c.h.b16 %v2609
    %v3890 = vunpack.c.l.b16 %v2610
    %v3891 = vunpack.c.h.b16 %v2610
    %v3892 = vunpack.c.l.b16 %v2611
    %v3893 = vunpack.c.h.b16 %v2611
    %v3894 = vunpack.c.l.b16 %v2612
    %v3895 = vunpack.c.h.b16 %v2612
    %v3896 = vunpack.c.l.b16 %v2613
    %v3897 = vunpack.c.h.b16 %v2613
    %v3898 = vunpack.c.l.b16 %v2614
    %v3899 = vunpack.c.h.b16 %v2614
    %v3900 = vunpack.c.l.b16 %v2615
    %v3901 = vunpack.c.h.b16 %v2615
    %v3902 = vunpack.c.l.b16 %v2616
    %v3903 = vunpack.c.h.b16 %v2616
    %v3904 = vunpack.c.l.b16 %v2617
    %v3905 = vunpack.c.h.b16 %v2617
    %v3906 = vunpack.c.l.b16 %v2618
    %v3907 = vunpack.c.h.b16 %v2618
    %v3908 = vunpack.c.l.b16 %v2619
    %v3909 = vunpack.c.h.b16 %v2619
    %v3910 = vunpack.c.l.b16 %v2620
    %v3911 = vunpack.c.h.b16 %v2620
    %v3912 = vunpack.c.l.b16 %v2621
    %v3913 = vunpack.c.h.b16 %v2621
    %v3914 = vunpack.c.l.b16 %v2622
    %v3915 = vunpack.c.h.b16 %v2622
    %v3916 = vunpack.c.l.b16 %v2623
    %v3917 = vunpack.c.h.b16 %v2623
    %v3918 = vunpack.c.l.b16 %v2624
    %v3919 = vunpack.c.h.b16 %v2624
    %v3920 = vunpack.c.l.b16 %v2625
    %v3921 = vunpack.c.h.b16 %v2625
    %v3922 = vunpack.c.l.b16 %v2626
    %v3923 = vunpack.c.h.b16 %v2626
    %v3924 = vunpack.c.l.b16 %v2627
    %v3925 = vunpack.c.h.b16 %v2627
    %v3926 = vunpack.c.l.b16 %v2628
    %v3927 = vunpack.c.h.b16 %v2628
    %v3928 = vunpack.c.l.b16 %v2629
    %v3929 = vunpack.c.h.b16 %v2629
    %v3930 = vunpack.c.l.b16 %v2630
    %v3931 = vunpack.c.h.b16 %v2630
    %v3932 = vunpack.c.l.b16 %v2631
    %v3933 = vunpack.c.h.b16 %v2631
    %v3934 = vunpack.c.l.b16 %v2632
    %v3935 = vunpack.c.h.b16 %v2632
    %v3936 = vunpack.c.l.b16 %v2633
    %v3937 = vunpack.c.h.b16 %v2633
    %v3938 = vunpack.c.l.b16 %v2634
    %v3939 = vunpack.c.h.b16 %v2634
    %v3940 = vunpack.c.l.b16 %v2635
    %v3941 = vunpack.c.h.b16 %v2635
    %v3942 = vunpack.c.l.b16 %v2636
    %v3943 = vunpack.c.h.b16 %v2636
    %v3944 = vunpack.c.l.b16 %v2637
    %v3945 = vunpack.c.h.b16 %v2637
    %v3946 = vunpack.c.l.b16 %v2638
    %v3947 = vunpack.c.h.b16 %v2638
    %v3948 = vunpack.c.l.b16 %v2639
    %v3949 = vunpack.c.h.b16 %v2639
    %v3950 = vunpack.c.l.b16 %v2640
    %v3951 = vunpack.c.h.b16 %v2640
    %v3952 = vunpack.c.l.b16 %v2641
    %v3953 = vunpack.c.h.b16 %v2641
    %v3954 = vunpack.c.l.b16 %v2642
    %v3955 = vunpack.c.h.b16 %v2642
    %v3956 = vunpack.c.l.b16 %v2643
    %v3957 = vunpack.c.h.b16 %v2643
    %v3958 = vunpack.c.l.b16 %v2644
    %v3959 = vunpack.c.h.b16 %v2644
    %v3960 = vunpack.c.l.b16 %v2645
    %v3961 = vunpack.c.h.b16 %v2645
    %v3962 = vunpack.c.l.b16 %v2646
    %v3963 = vunpack.c.h.b16 %v2646
    %v3964 = vunpack.c.l.b16 %v2647
    %v3965 = vunpack.c.h.b16 %v2647
    %v3966 = vunpack.c.l.b16 %v2648
    %v3967 = vunpack.c.h.b16 %v2648
    %v3968 = vunpack.c.l.b16 %v2649
    %v3969 = vunpack.c.h.b16 %v2649
    %v3970 = vunpack.c.l.b16 %v2650
    %v3971 = vunpack.c.h.b16 %v2650
    %v3972 = vunpack.c.l.b16 %v2651
    %v3973 = vunpack.c.h.b16 %v2651
    %v3974 = vunpack.c.l.b16 %v2652
    %v3975 = vunpack.c.h.b16 %v2652
    %v3976 = vunpack.c.l.b16 %v2653
    %v3977 = vunpack.c.h.b16 %v2653
    %v3978 = vunpack.c.l.b16 %v2654
    %v3979 = vunpack.c.h.b16 %v2654
    %v3980 = vunpack.c.l.b16 %v2655
    %v3981 = vunpack.c.h.b16 %v2655
    %v3982 = vunpack.c.l.b16 %v2656
    %v3983 = vunpack.c.h.b16 %v2656
    %v3984 = vunpack.c.l.b16 %v2657
    %v3985 = vunpack.c.h.b16 %v2657
    %v3986 = vunpack.c.l.b16 %v2658
    %v3987 = vunpack.c.h.b16 %v2658
    %v3988 = vunpack.c.l.b16 %v2659
    %v3989 = vunpack.c.h.b16 %v2659
    %v3990 = vunpack.c.l.b16 %v2660
    %v3991 = vunpack.c.h.b16 %v2660
    %v3992 = vunpack.c.l.b16 %v2661
    %v3993 = vunpack.c.h.b16 %v2661
    %v3994 = vunpack.c.l.b16 %v2662
    %v3995 = vunpack.c.h.b16 %v2662
    %v3996 = vunpack.c.l.b16 %v2663
    %v3997 = vunpack.c.h.b16 %v2663
    %v3998 = vunpack.c.l.b16 %v2664
    %v3999 = vunpack.c.h.b16 %v2664
    %v4000 = vunpack.c.l.b16 %v2665
    %v4001 = vunpack.c.h.b16 %v2665
    %v4002 = vunpack.c.l.b16 %v2666
    %v4003 = vunpack.c.h.b16 %v2666
    %v4004 = vunpack.c.l.b16 %v2667
    %v4005 = vunpack.c.h.b16 %v2667
    %v4006 = vunpack.c.l.b16 %v2668
    %v4007 = vunpack.c.h.b16 %v2668
    %v4008 = vunpack.c.l.b16 %v2669
    %v4009 = vunpack.c.h.b16 %v2669
    %v4010 = vunpack.c.l.b16 %v2670
    %v4011 = vunpack.c.h.b16 %v2670
    %v4012 = vunpack.c.l.b16 %v2671
    %v4013 = vunpack.c.h.b16 %v2671
    %v4014 = vunpack.c.l.b16 %v2672
    %v4015 = vunpack.c.h.b16 %v2672
    %v4016 = vunpack.c.l.b16 %v2673
    %v4017 = vunpack.c.h.b16 %v2673
    %v4018 = vunpack.c.l.b16 %v2674
    %v4019 = vunpack.c.h.b16 %v2674
    %v4020 = vunpack.c.l.b16 %v2675
    %v4021 = vunpack.c.h.b16 %v2675
    %v4022 = vunpack.c.l.b16 %v2676
    %v4023 = vunpack.c.h.b16 %v2676
    %v4024 = vunpack.c.l.b16 %v2677
    %v4025 = vunpack.c.h.b16 %v2677
    %v4026 = vunpack.c.l.b16 %v2678
    %v4027 = vunpack.c.h.b16 %v2678
    %v4028 = vunpack.c.l.b16 %v2679
    %v4029 = vunpack.c.h.b16 %v2679
    %v4030 = vunpack.c.l.b16 %v2680
    %v4031 = vunpack.c.h.b16 %v2680
    %v4032 = vunpack.c.l.b16 %v2681
    %v4033 = vunpack.c.h.b16 %v2681
    %v4034 = vunpack.c.l.b16 %v2682
    %v4035 = vunpack.c.h.b16 %v2682
    %v4036 = vunpack.c.l.b16 %v2683
    %v4037 = vunpack.c.h.b16 %v2683
    %v4038 = vunpack.c.l.b16 %v2684
    %v4039 = vunpack.c.h.b16 %v2684
    %v4040 = vunpack.c.l.b16 %v2685
    %v4041 = vunpack.c.h.b16 %v2685
    %v4042 = vunpack.c.l.b16 %v2686
    %v4043 = vunpack.c.h.b16 %v2686
    %v4044 = vunpack.c.l.b16 %v2687
    %v4045 = vunpack.c.h.b16 %v2687
    %v4046 = vunpack.c.l.b16 %v2688
    %v4047 = vunpack.c.h.b16 %v2688
    %v4048 = vunpack.c.l.b16 %v2689
    %v4049 = vunpack.c.h.b16 %v2689
    %v4050 = vunpack.c.l.b16 %v2690
    %v4051 = vunpack.c.h.b16 %v2690
    %v4052 = vunpack.c.l.b16 %v2691
    %v4053 = vunpack.c.h.b16 %v2691
    %v4054 = vunpack.c.l.b16 %v2692
    %v4055 = vunpack.c.h.b16 %v2692
    %v4056 = vunpack.c.l.b16 %v2693
    %v4057 = vunpack.c.h.b16 %v2693
    %v4058 = vunpack.c.l.b16 %v2694
    %v4059 = vunpack.c.h.b16 %v2694
    %v4060 = vunpack.c.l.b16 %v2695
    %v4061 = vunpack.c.h.b16 %v2695
    %v4062 = vunpack.c.l.b16 %v2696
    %v4063 = vunpack.c.h.b16 %v2696
    %v4064 = vunpack.c.l.b16 %v2697
    %v4065 = vunpack.c.h.b16 %v2697
    %v4066 = vunpack.c.l.b16 %v2698
    %v4067 = vunpack.c.h.b16 %v2698
    %v4068 = vunpack.c.l.b16 %v2699
    %v4069 = vunpack.c.h.b16 %v2699
    %v4070 = vunpack.c.l.b16 %v2700
    %v4071 = vunpack.c.h.b16 %v2700
    %v4072 = vunpack.c.l.b16 %v2701
    %v4073 = vunpack.c.h.b16 %v2701
    %v4074 = vunpack.c.l.b16 %v2702
    %v4075 = vunpack.c.h.b16 %v2702
    %v4076 = vunpack.c.l.b16 %v2703
    %v4077 = vunpack.c.h.b16 %v2703
    %v4078 = vunpack.c.l.b16 %v2704
    %v4079 = vunpack.c.h.b16 %v2704
    %v4080 = vunpack.c.l.b16 %v2705
    %v4081 = vunpack.c.h.b16 %v2705
    %v4082 = vunpack.c.l.b16 %v2706
    %v4083 = vunpack.c.h.b16 %v2706
    %v4084 = vunpack.c.l.b16 %v2707
    %v4085 = vunpack.c.h.b16 %v2707
    %v4086 = vunpack.c.l.b16 %v2708
    %v4087 = vunpack.c.h.b16 %v2708
    %v4088 = vunpack.c.l.b16 %v2709
    %v4089 = vunpack.c.h.b16 %v2709
    %v4090 = vunpack.c.l.b16 %v2710
    %v4091 = vunpack.c.h.b16 %v2710
    %v4092 = vunpack.c.l.b16 %v2711
    %v4093 = vunpack.c.h.b16 %v2711
    %v4094 = vunpack.c.l.b16 %v2712
    %v4095 = vunpack.c.h.b16 %v2712
    %v4096 = vunpack.c.l.b16 %v2713
    %v4097 = vunpack.c.h.b16 %v2713
    %v4098 = vunpack.c.l.b16 %v2714
    %v4099 = vunpack.c.h.b16 %v2714
    %v4100 = vunpack.c.l.b16 %v2715
    %v4101 = vunpack.c.h.b16 %v2715
    %v4102 = vunpack.c.l.b16 %v2716
    %v4103 = vunpack.c.h.b16 %v2716
    %v4104 = vunpack.c.l.b16 %v2717
    %v4105 = vunpack.c.h.b16 %v2717
    %v4106 = vunpack.c.l.b16 %v2718
    %v4107 = vunpack.c.h.b16 %v2718
    %v4108 = vunpack.c.l.b16 %v2719
    %v4109 = vunpack.c.h.b16 %v2719
    %v4110 = vunpack.c.l.b16 %v2720
    %v4111 = vunpack.c.h.b16 %v2720
    %v4112 = vunpack.c.l.b16 %v2721
    %v4113 = vunpack.c.h.b16 %v2721
    %v4114 = vunpack.c.l.b16 %v2722
    %v4115 = vunpack.c.h.b16 %v2722
    %v4116 = vunpack.c.l.b16 %v2723
    %v4117 = vunpack.c.h.b16 %v2723
    %v4118 = vunpack.c.l.b16 %v2724
    %v4119 = vunpack.c.h.b16 %v2724
    %v4120 = vunpack.c.l.b16 %v2725
    %v4121 = vunpack.c.h.b16 %v2725
    %v4122 = vunpack.c.l.b16 %v2726
    %v4123 = vunpack.c.h.b16 %v2726
    %v4124 = vunpack.c.l.b16 %v2727
    %v4125 = vunpack.c.h.b16 %v2727
    %v4126 = vunpack.c.l.b16 %v2728
    %v4127 = vunpack.c.h.b16 %v2728
    %v4128 = vunpack.c.l.b16 %v2729
    %v4129 = vunpack.c.h.b16 %v2729
    %v4130 = vunpack.c.l.b16 %v2730
    %v4131 = vunpack.c.h.b16 %v2730
    %v4132 = vunpack.c.l.b16 %v2731
    %v4133 = vunpack.c.h.b16 %v2731
    %v4134 = vunpack.c.l.b16 %v2732
    %v4135 = vunpack.c.h.b16 %v2732
    %v4136 = vunpack.c.l.b16 %v2733
    %v4137 = vunpack.c.h.b16 %v2733
    %v4138 = vunpack.c.l.b16 %v2734
    %v4139 = vunpack.c.h.b16 %v2734
    %v4140 = vunpack.c.l.b16 %v2735
    %v4141 = vunpack.c.h.b16 %v2735
    %v4142 = vunpack.c.l.b16 %v2736
    %v4143 = vunpack.c.h.b16 %v2736
    %v4144 = vunpack.c.l.b16 %v2737
    %v4145 = vunpack.c.h.b16 %v2737
    %v4146 = vunpack.c.l.b16 %v2738
    %v4147 = vunpack.c.h.b16 %v2738
    %v4148 = vunpack.c.l.b16 %v2739
    %v4149 = vunpack.c.h.b16 %v2739
    %v4150 = vunpack.c.l.b16 %v2740
    %v4151 = vunpack.c.h.b16 %v2740
    %v4152 = vunpack.c.l.b16 %v2741
    %v4153 = vunpack.c.h.b16 %v2741
    %v4154 = vunpack.c.l.b16 %v2742
    %v4155 = vunpack.c.h.b16 %v2742
    %v4156 = vunpack.c.l.b16 %v2743
    %v4157 = vunpack.c.h.b16 %v2743
    %v4158 = vunpack.c.l.b16 %v2744
    %v4159 = vunpack.c.h.b16 %v2744
    %v4160 = vunpack.c.l.b16 %v2745
    %v4161 = vunpack.c.h.b16 %v2745
    %v4162 = vunpack.c.l.b16 %v2746
    %v4163 = vunpack.c.h.b16 %v2746
    %v4164 = vunpack.c.l.b16 %v2747
    %v4165 = vunpack.c.h.b16 %v2747
    %v4166 = vunpack.c.l.b16 %v2748
    %v4167 = vunpack.c.h.b16 %v2748
    %v4168 = vunpack.c.l.b16 %v2749
    %v4169 = vunpack.c.h.b16 %v2749
    %v4170 = vunpack.c.l.b16 %v2750
    %v4171 = vunpack.c.h.b16 %v2750
    %v4172 = vunpack.c.l.b16 %v2751
    %v4173 = vunpack.c.h.b16 %v2751
    %v4174 = vunpack.c.l.b16 %v2752
    %v4175 = vunpack.c.h.b16 %v2752
    %v4176 = vunpack.c.l.b16 %v2753
    %v4177 = vunpack.c.h.b16 %v2753
    %v4178 = vunpack.c.l.b16 %v2754
    %v4179 = vunpack.c.h.b16 %v2754
    %v4180 = vunpack.c.l.b16 %v2755
    %v4181 = vunpack.c.h.b16 %v2755
    %v4182 = vunpack.c.l.b16 %v2756
    %v4183 = vunpack.c.h.b16 %v2756
    %v4184 = vunpack.c.l.b16 %v2757
    %v4185 = vunpack.c.h.b16 %v2757
    %v4186 = vunpack.c.l.b16 %v2758
    %v4187 = vunpack.c.h.b16 %v2758
    %v4188 = vunpack.c.l.b16 %v2759
    %v4189 = vunpack.c.h.b16 %v2759
    %v4190 = vunpack.c.l.b16 %v2760
    %v4191 = vunpack.c.h.b16 %v2760
    %v4192 = vunpack.c.l.b16 %v2761
    %v4193 = vunpack.c.h.b16 %v2761
    %v4194 = vunpack.c.l.b16 %v2762
    %v4195 = vunpack.c.h.b16 %v2762
    %v4196 = vunpack.c.l.b16 %v2763
    %v4197 = vunpack.c.h.b16 %v2763
    %v4198 = vunpack.c.l.b16 %v2764
    %v4199 = vunpack.c.h.b16 %v2764
    %v4200 = vunpack.c.l.b16 %v2765
    %v4201 = vunpack.c.h.b16 %v2765
    %v4202 = vunpack.c.l.b16 %v2766
    %v4203 = vunpack.c.h.b16 %v2766
    %v4204 = vunpack.c.l.b16 %v2767
    %v4205 = vunpack.c.h.b16 %v2767
    %v4206 = vunpack.c.l.b16 %v2768
    %v4207 = vunpack.c.h.b16 %v2768
    %v4208 = vunpack.c.l.b16 %v2769
    %v4209 = vunpack.c.h.b16 %v2769
    %v4210 = vunpack.c.l.b16 %v2770
    %v4211 = vunpack.c.h.b16 %v2770
    %v4212 = vunpack.c.l.b16 %v2771
    %v4213 = vunpack.c.h.b16 %v2771
    %v4214 = vunpack.c.l.b16 %v2772
    %v4215 = vunpack.c.h.b16 %v2772
    %v4216 = vunpack.c.l.b16 %v2773
    %v4217 = vunpack.c.h.b16 %v2773
    %v4218 = vunpack.c.l.b16 %v2774
    %v4219 = vunpack.c.h.b16 %v2774
    %v4220 = vunpack.c.l.b16 %v2775
    %v4221 = vunpack.c.h.b16 %v2775
    %v4222 = vunpack.c.l.b16 %v2776
    %v4223 = vunpack.c.h.b16 %v2776
    %v4224 = vunpack.c.l.b16 %v2777
    %v4225 = vunpack.c.h.b16 %v2777
    %v4226 = vunpack.c.l.b16 %v2778
    %v4227 = vunpack.c.h.b16 %v2778
    %v4228 = vunpack.c.l.b16 %v2779
    %v4229 = vunpack.c.h.b16 %v2779
    %v4230 = vunpack.c.l.b16 %v2780
    %v4231 = vunpack.c.h.b16 %v2780
    %v4232 = vunpack.c.l.b16 %v2781
    %v4233 = vunpack.c.h.b16 %v2781
    %v4234 = vunpack.c.l.b16 %v2782
    %v4235 = vunpack.c.h.b16 %v2782
    %v4236 = vunpack.c.l.b16 %v2783
    %v4237 = vunpack.c.h.b16 %v2783
    %v4238 = vunpack.c.l.b16 %v2784
    %v4239 = vunpack.c.h.b16 %v2784
    %v4240 = vunpack.c.l.b16 %v2785
    %v4241 = vunpack.c.h.b16 %v2785
    %v4242 = vunpack.c.l.b16 %v2786
    %v4243 = vunpack.c.h.b16 %v2786
    %v4244 = vunpack.c.l.b16 %v2787
    %v4245 = vunpack.c.h.b16 %v2787
    %v4246 = vunpack.c.l.b16 %v2788
    %v4247 = vunpack.c.h.b16 %v2788
    %v4248 = vunpack.c.l.b16 %v2789
    %v4249 = vunpack.c.h.b16 %v2789
    %v4250 = vunpack.c.l.b16 %v2790
    %v4251 = vunpack.c.h.b16 %v2790
    %v4252 = vunpack.c.l.b16 %v2791
    %v4253 = vunpack.c.h.b16 %v2791
    %v4254 = vunpack.c.l.b16 %v2792
    %v4255 = vunpack.c.h.b16 %v2792
    %v4256 = vunpack.c.l.b16 %v2793
    %v4257 = vunpack.c.h.b16 %v2793
    %v4258 = vunpack.c.l.b16 %v2794
    %v4259 = vunpack.c.h.b16 %v2794
    %v4260 = vunpack.c.l.b16 %v2795
    %v4261 = vunpack.c.h.b16 %v2795
    %v4262 = vunpack.c.l.b16 %v2796
    %v4263 = vunpack.c.h.b16 %v2796
    %v4264 = vunpack.c.l.b16 %v2797
    %v4265 = vunpack.c.h.b16 %v2797
    %v4266 = vunpack.c.l.b16 %v2798
    %v4267 = vunpack.c.h.b16 %v2798
    %v4268 = vunpack.c.l.b16 %v2799
    %v4269 = vunpack.c.h.b16 %v2799
    %v4270 = vunpack.c.l.b16 %v2800
    %v4271 = vunpack.c.h.b16 %v2800
    %v4272 = vunpack.c.l.b16 %v2801
    %v4273 = vunpack.c.h.b16 %v2801
    %v4274 = vunpack.c.l.b16 %v2802
    %v4275 = vunpack.c.h.b16 %v2802
    %v4276 = vunpack.c.l.b16 %v2803
    %v4277 = vunpack.c.h.b16 %v2803
    %v4278 = vunpack.c.l.b16 %v2804
    %v4279 = vunpack.c.h.b16 %v2804
    %v4280 = vunpack.c.l.b16 %v2805
    %v4281 = vunpack.c.h.b16 %v2805
    %v4282 = vunpack.c.l.b16 %v2806
    %v4283 = vunpack.c.h.b16 %v2806
    %v4284 = vunpack.c.l.b16 %v2807
    %v4285 = vunpack.c.h.b16 %v2807
    %v4286 = vunpack.c.l.b16 %v2808
    %v4287 = vunpack.c.h.b16 %v2808
    %v4288 = vunpack.c.l.b16 %v2809
    %v4289 = vunpack.c.h.b16 %v2809
    %v4290 = vunpack.c.l.b16 %v2810
    %v4291 = vunpack.c.h.b16 %v2810
    %v4292 = vunpack.c.l.b16 %v2811
    %v4293 = vunpack.c.h.b16 %v2811
    %v4294 = vunpack.c.l.b16 %v2812
    %v4295 = vunpack.c.h.b16 %v2812
    %v4296 = vunpack.c.l.b16 %v2813
    %v4297 = vunpack.c.h.b16 %v2813
    %v4298 = vunpack.c.l.b16 %v2814
    %v4299 = vunpack.c.h.b16 %v2814
    %v4300 = vunpack.c.l.b16 %v2815
    %v4301 = vunpack.c.h.b16 %v2815
    %v4302 = vunpack.c.l.b16 %v2816
    %v4303 = vunpack.c.h.b16 %v2816
    %v4304 = vunpack.c.l.b16 %v2817
    %v4305 = vunpack.c.h.b16 %v2817
    %v4306 = vunpack.c.l.b16 %v2818
    %v4307 = vunpack.c.h.b16 %v2818
    %v4308 = vunpack.c.l.b16 %v2819
    %v4309 = vunpack.c.h.b16 %v2819
    %v4310 = vunpack.c.l.b16 %v2820
    %v4311 = vunpack.c.h.b16 %v2820
    %v4312 = vunpack.c.l.b16 %v2821
    %v4313 = vunpack.c.h.b16 %v2821
    %v4314 = vunpack.c.l.b16 %v2822
    %v4315 = vunpack.c.h.b16 %v2822
    %v4316 = vunpack.c.l.b16 %v2823
    %v4317 = vunpack.c.h.b16 %v2823
    %v4318 = vunpack.c.l.b16 %v2824
    %v4319 = vunpack.c.h.b16 %v2824
    %v4320 = vunpack.c.l.b16 %v2825
    %v4321 = vunpack.c.h.b16 %v2825
    %v4322 = vunpack.c.l.b16 %v2826
    %v4323 = vunpack.c.h.b16 %v2826
    %v4324 = vunpack.c.l.b16 %v2827
    %v4325 = vunpack.c.h.b16 %v2827
    %v4326 = vunpack.c.l.b16 %v2828
    %v4327 = vunpack.c.h.b16 %v2828
    %v4328 = vunpack.c.l.b16 %v2829
    %v4329 = vunpack.c.h.b16 %v2829
    %v4330 = vunpack.c.l.b16 %v2830
    %v4331 = vunpack.c.h.b16 %v2830
    %v4332 = vunpack.c.l.b16 %v2831
    %v4333 = vunpack.c.h.b16 %v2831
    %v4334 = vunpack.c.l.b16 %v2832
    %v4335 = vunpack.c.h.b16 %v2832
    %v4336 = vunpack.c.l.b16 %v2833
    %v4337 = vunpack.c.h.b16 %v2833
    %v4338 = vunpack.c.l.b16 %v2834
    %v4339 = vunpack.c.h.b16 %v2834
    %v4340 = vunpack.c.l.b16 %v2835
    %v4341 = vunpack.c.h.b16 %v2835
    %v4342 = vunpack.c.l.b16 %v2836
    %v4343 = vunpack.c.h.b16 %v2836
    %v4344 = vunpack.c.l.b16 %v2837
    %v4345 = vunpack.c.h.b16 %v2837
    %v4346 = vunpack.c.l.b16 %v2838
    %v4347 = vunpack.c.h.b16 %v2838
    %v4348 = vunpack.c.l.b16 %v2839
    %v4349 = vunpack.c.h.b16 %v2839
    %v4350 = vunpack.c.l.b16 %v2840
    %v4351 = vunpack.c.h.b16 %v2840
    %v4352 = vunpack.c.l.b16 %v2841
    %v4353 = vunpack.c.h.b16 %v2841
    %v4354 = vunpack.c.l.b16 %v2842
    %v4355 = vunpack.c.h.b16 %v2842
    %v4356 = vunpack.c.l.b16 %v2843
    %v4357 = vunpack.c.h.b16 %v2843
    %v4358 = vunpack.c.l.b16 %v2844
    %v4359 = vunpack.c.h.b16 %v2844
    %v4360 = vunpack.c.l.b16 %v2845
    %v4361 = vunpack.c.h.b16 %v2845
    %v4362 = vunpack.c.l.b16 %v2846
    %v4363 = vunpack.c.h.b16 %v2846
    %v4364 = vunpack.c.l.b16 %v2847
    %v4365 = vunpack.c.h.b16 %v2847
    %v4366 = vunpack.c.l.b16 %v2848
    %v4367 = vunpack.c.h.b16 %v2848
    %v4368 = vunpack.c.l.b16 %v2849
    %v4369 = vunpack.c.h.b16 %v2849
    %v4370 = vunpack.c.l.b16 %v2850
    %v4371 = vunpack.c.h.b16 %v2850
    %v4372 = vunpack.c.l.b16 %v2851
    %v4373 = vunpack.c.h.b16 %v2851
    %v4374 = vunpack.c.l.b16 %v2852
    %v4375 = vunpack.c.h.b16 %v2852
    %v4376 = vunpack.c.l.b16 %v2853
    %v4377 = vunpack.c.h.b16 %v2853
    %v4378 = vunpack.c.l.b16 %v2854
    %v4379 = vunpack.c.h.b16 %v2854
    %v4380 = vunpack.c.l.b16 %v2855
    %v4381 = vunpack.c.h.b16 %v2855
    %v4382 = vunpack.c.l.b16 %v2856
    %v4383 = vunpack.c.h.b16 %v2856
    %v4384 = vunpack.c.l.b16 %v2857
    %v4385 = vunpack.c.h.b16 %v2857
    %v4386 = vunpack.c.l.b16 %v2858
    %v4387 = vunpack.c.h.b16 %v2858
    %v4388 = vunpack.c.l.b16 %v2859
    %v4389 = vunpack.c.h.b16 %v2859
    %v4390 = vunpack.c.l.b16 %v2860
    %v4391 = vunpack.c.h.b16 %v2860
    %v4392 = vunpack.c.l.b16 %v2861
    %v4393 = vunpack.c.h.b16 %v2861
    %v4394 = vunpack.c.l.b16 %v2862
    %v4395 = vunpack.c.h.b16 %v2862
    %v4396 = vunpack.c.l.b16 %v2863
    %v4397 = vunpack.c.h.b16 %v2863
    %v4398 = vunpack.c.l.b16 %v2864
    %v4399 = vunpack.c.h.b16 %v2864
    %v4400 = vunpack.c.l.b16 %v2865
    %v4401 = vunpack.c.h.b16 %v2865
    %v4402 = vunpack.c.l.b16 %v2866
    %v4403 = vunpack.c.h.b16 %v2866
    %v4404 = vunpack.c.l.b16 %v2867
    %v4405 = vunpack.c.h.b16 %v2867
    %v4406 = vunpack.c.l.b16 %v2868
    %v4407 = vunpack.c.h.b16 %v2868
    %v4408 = vunpack.c.l.b16 %v2869
    %v4409 = vunpack.c.h.b16 %v2869
    %v4410 = vunpack.c.l.b16 %v2870
    %v4411 = vunpack.c.h.b16 %v2870
    %v4412 = vunpack.c.l.b16 %v2871
    %v4413 = vunpack.c.h.b16 %v2871
    %v4414 = vunpack.c.l.b16 %v2872
    %v4415 = vunpack.c.h.b16 %v2872
    %v4416 = vunpack.c.l.b16 %v2873
    %v4417 = vunpack.c.h.b16 %v2873
    %v4418 = vunpack.c.l.b16 %v2874
    %v4419 = vunpack.c.h.b16 %v2874
    %v4420 = vunpack.c.l.b16 %v2875
    %v4421 = vunpack.c.h.b16 %v2875
    %v4422 = vunpack.c.l.b16 %v2876
    %v4423 = vunpack.c.h.b16 %v2876
    %v4424 = vunpack.c.l.b16 %v2877
    %v4425 = vunpack.c.h.b16 %v2877
    %v4426 = vunpack.c.l.b16 %v2878
    %v4427 = vunpack.c.h.b16 %v2878
    %v4428 = vunpack.c.l.b16 %v2879
    %v4429 = vunpack.c.h.b16 %v2879
    %v4430 = vunpack.c.l.b16 %v2880
    %v4431 = vunpack.c.h.b16 %v2880
    %v4432 = vunpack.c.l.b16 %v2881
    %v4433 = vunpack.c.h.b16 %v2881
    %v4434 = vunpack.c.l.b16 %v2882
    %v4435 = vunpack.c.h.b16 %v2882
    %v4436 = vunpack.c.l.b16 %v2883
    %v4437 = vunpack.c.h.b16 %v2883
    %v4438 = vpack.c.b16 %v3422, %v3414
    %v4439 = vpack.c.b16 %v3423, %v3415
    %v4440 = vpack.c.b16 %v3424, %v3416
    %v4441 = vpack.c.b16 %v3425, %v3417
    %v4442 = vpack.c.b16 %v3426, %v3418
    %v4443 = vpack.c.b16 %v3427, %v3419
    %v4444 = vpack.c.b16 %v3428, %v3420
    %v4445 = vpack.c.b16 %v3429, %v3421
    %v4446 = vpack.c.b16 %v3438, %v3430
    %v4447 = vpack.c.b16 %v3439, %v3431
    %v4448 = vpack.c.b16 %v3440, %v3432
    %v4449 = vpack.c.b16 %v3441, %v3433
    %v4450 = vpack.c.b16 %v3442, %v3434
    %v4451 = vpack.c.b16 %v3443, %v3435
    %v4452 = vpack.c.b16 %v3444, %v3436
    %v4453 = vpack.c.b16 %v3445, %v3437
    %v4454 = vpack.c.b16 %v3454, %v3446
    %v4455 = vpack.c.b16 %v3455, %v3447
    %v4456 = vpack.c.b16 %v3456, %v3448
    %v4457 = vpack.c.b16 %v3457, %v3449
    %v4458 = vpack.c.b16 %v3458, %v3450
    %v4459 = vpack.c.b16 %v3459, %v3451
    %v4460 = vpack.c.b16 %v3460, %v3452
    %v4461 = vpack.c.b16 %v3461, %v3453
    %v4462 = vpack.c.b16 %v3470, %v3462
    %v4463 = vpack.c.b16 %v3471, %v3463
    %v4464 = vpack.c.b16 %v3472, %v3464
    %v4465 = vpack.c.b16 %v3473, %v3465
    %v4466 = vpack.c.b16 %v3474, %v3466
    %v4467 = vpack.c.b16 %v3475, %v3467
    %v4468 = vpack.c.b16 %v3476, %v3468
    %v4469 = vpack.c.b16 %v3477, %v3469
    %v4470 = vpack.c.b16 %v3486, %v3478
    %v4471 = vpack.c.b16 %v3487, %v3479
    %v4472 = vpack.c.b16 %v3488, %v3480
    %v4473 = vpack.c.b16 %v3489, %v3481
    %v4474 = vpack.c.b16 %v3490, %v3482
    %v4475 = vpack.c.b16 %v3491, %v3483
    %v4476 = vpack.c.b16 %v3492, %v3484
    %v4477 = vpack.c.b16 %v3493, %v3485
    %v4478 = vpack.c.b16 %v3502, %v3494
    %v4479 = vpack.c.b16 %v3503, %v3495
    %v4480 = vpack.c.b16 %v3504, %v3496
    %v4481 = vpack.c.b16 %v3505, %v3497
    %v4482 = vpack.c.b16 %v3506, %v3498
    %v4483 = vpack.c.b16 %v3507, %v3499
    %v4484 = vpack.c.b16 %v3508, %v3500
    %v4485 = vpack.c.b16 %v3509, %v3501
    %v4486 = vpack.c.b16 %v3518, %v3510
    %v4487 = vpack.c.b16 %v3519, %v3511
    %v4488 = vpack.c.b16 %v3520, %v3512
    %v4489 = vpack.c.b16 %v3521, %v3513
    %v4490 = vpack.c.b16 %v3522, %v3514
    %v4491 = vpack.c.b16 %v3523, %v3515
    %v4492 = vpack.c.b16 %v3524, %v3516
    %v4493 = vpack.c.b16 %v3525, %v3517
    %v4494 = vpack.c.b16 %v3534, %v3526
    %v4495 = vpack.c.b16 %v3535, %v3527
    %v4496 = vpack.c.b16 %v3536, %v3528
    %v4497 = vpack.c.b16 %v3537, %v3529
    %v4498 = vpack.c.b16 %v3538, %v3530
    %v4499 = vpack.c.b16 %v3539, %v3531
    %v4500 = vpack.c.b16 %v3540, %v3532
    %v4501 = vpack.c.b16 %v3541, %v3533
    %v4502 = vpack.c.b16 %v3550, %v3542
    %v4503 = vpack.c.b16 %v3551, %v3543
    %v4504 = vpack.c.b16 %v3552, %v3544
    %v4505 = vpack.c.b16 %v3553, %v3545
    %v4506 = vpack.c.b16 %v3554, %v3546
    %v4507 = vpack.c.b16 %v3555, %v3547
    %v4508 = vpack.c.b16 %v3556, %v3548
    %v4509 = vpack.c.b16 %v3557, %v3549
    %v4510 = vpack.c.b16 %v3566, %v3558
    %v4511 = vpack.c.b16 %v3567, %v3559
    %v4512 = vpack.c.b16 %v3568, %v3560
    %v4513 = vpack.c.b16 %v3569, %v3561
    %v4514 = vpack.c.b16 %v3570, %v3562
    %v4515 = vpack.c.b16 %v3571, %v3563
    %v4516 = vpack.c.b16 %v3572, %v3564
    %v4517 = vpack.c.b16 %v3573, %v3565
    %v4518 = vpack.c.b16 %v3582, %v3574
    %v4519 = vpack.c.b16 %v3583, %v3575
    %v4520 = vpack.c.b16 %v3584, %v3576
    %v4521 = vpack.c.b16 %v3585, %v3577
    %v4522 = vpack.c.b16 %v3586, %v3578
    %v4523 = vpack.c.b16 %v3587, %v3579
    %v4524 = vpack.c.b16 %v3588, %v3580
    %v4525 = vpack.c.b16 %v3589, %v3581
    %v4526 = vpack.c.b16 %v3598, %v3590
    %v4527 = vpack.c.b16 %v3599, %v3591
    %v4528 = vpack.c.b16 %v3600, %v3592
    %v4529 = vpack.c.b16 %v3601, %v3593
    %v4530 = vpack.c.b16 %v3602, %v3594
    %v4531 = vpack.c.b16 %v3603, %v3595
    %v4532 = vpack.c.b16 %v3604, %v3596
    %v4533 = vpack.c.b16 %v3605, %v3597
    %v4534 = vpack.c.b16 %v3614, %v3606
    %v4535 = vpack.c.b16 %v3615, %v3607
    %v4536 = vpack.c.b16 %v3616, %v3608
    %v4537 = vpack.c.b16 %v3617, %v3609
    %v4538 = vpack.c.b16 %v3618, %v3610
    %v4539 = vpack.c.b16 %v3619, %v3611
    %v4540 = vpack.c.b16 %v3620, %v3612
    %v4541 = vpack.c.b16 %v3621, %v3613
    %v4542 = vpack.c.b16 %v3630, %v3622
    %v4543 = vpack.c.b16 %v3631, %v3623
    %v4544 = vpack.c.b16 %v3632, %v3624
    %v4545 = vpack.c.b16 %v3633, %v3625
    %v4546 = vpack.c.b16 %v3634, %v3626
    %v4547 = vpack.c.b16 %v3635, %v3627
    %v4548 = vpack.c.b16 %v3636, %v3628
    %v4549 = vpack.c.b16 %v3637, %v3629
    %v4550 = vpack.c.b16 %v3646, %v3638
    %v4551 = vpack.c.b16 %v3647, %v3639
    %v4552 = vpack.c.b16 %v3648, %v3640
    %v4553 = vpack.c.b16 %v3649, %v3641
    %v4554 = vpack.c.b16 %v3650, %v3642
    %v4555 = vpack.c.b16 %v3651, %v3643
    %v4556 = vpack.c.b16 %v3652, %v3644
    %v4557 = vpack.c.b16 %v3653, %v3645
    %v4558 = vpack.c.b16 %v3662, %v3654
    %v4559 = vpack.c.b16 %v3663, %v3655
    %v4560 = vpack.c.b16 %v3664, %v3656
    %v4561 = vpack.c.b16 %v3665, %v3657
    %v4562 = vpack.c.b16 %v3666, %v3658
    %v4563 = vpack.c.b16 %v3667, %v3659
    %v4564 = vpack.c.b16 %v3668, %v3660
    %v4565 = vpack.c.b16 %v3669, %v3661
    %v4566 = vpack.c.b16 %v3678, %v3670
    %v4567 = vpack.c.b16 %v3679, %v3671
    %v4568 = vpack.c.b16 %v3680, %v3672
    %v4569 = vpack.c.b16 %v3681, %v3673
    %v4570 = vpack.c.b16 %v3682, %v3674
    %v4571 = vpack.c.b16 %v3683, %v3675
    %v4572 = vpack.c.b16 %v3684, %v3676
    %v4573 = vpack.c.b16 %v3685, %v3677
    %v4574 = vpack.c.b16 %v3694, %v3686
    %v4575 = vpack.c.b16 %v3695, %v3687
    %v4576 = vpack.c.b16 %v3696, %v3688
    %v4577 = vpack.c.b16 %v3697, %v3689
    %v4578 = vpack.c.b16 %v3698, %v3690
    %v4579 = vpack.c.b16 %v3699, %v3691
    %v4580 = vpack.c.b16 %v3700, %v3692
    %v4581 = vpack.c.b16 %v3701, %v3693
    %v4582 = vpack.c.b16 %v3710, %v3702
    %v4583 = vpack.c.b16 %v3711, %v3703
    %v4584 = vpack.c.b16 %v3712, %v3704
    %v4585 = vpack.c.b16 %v3713, %v3705
    %v4586 = vpack.c.b16 %v3714, %v3706
    %v4587 = vpack.c.b16 %v3715, %v3707
    %v4588 = vpack.c.b16 %v3716, %v3708
    %v4589 = vpack.c.b16 %v3717, %v3709
    %v4590 = vpack.c.b16 %v3726, %v3718
    %v4591 = vpack.c.b16 %v3727, %v3719
    %v4592 = vpack.c.b16 %v3728, %v3720
    %v4593 = vpack.c.b16 %v3729, %v3721
    %v4594 = vpack.c.b16 %v3730, %v3722
    %v4595 = vpack.c.b16 %v3731, %v3723
    %v4596 = vpack.c.b16 %v3732, %v3724
    %v4597 = vpack.c.b16 %v3733, %v3725
    %v4598 = vpack.c.b16 %v3742, %v3734
    %v4599 = vpack.c.b16 %v3743, %v3735
    %v4600 = vpack.c.b16 %v3744, %v3736
    %v4601 = vpack.c.b16 %v3745, %v3737
    %v4602 = vpack.c.b16 %v3746, %v3738
    %v4603 = vpack.c.b16 %v3747, %v3739
    %v4604 = vpack.c.b16 %v3748, %v3740
    %v4605 = vpack.c.b16 %v3749, %v3741
    %v4606 = vpack.c.b16 %v3758, %v3750
    %v4607 = vpack.c.b16 %v3759, %v3751
    %v4608 = vpack.c.b16 %v3760, %v3752
    %v4609 = vpack.c.b16 %v3761, %v3753
    %v4610 = vpack.c.b16 %v3762, %v3754
    %v4611 = vpack.c.b16 %v3763, %v3755
    %v4612 = vpack.c.b16 %v3764, %v3756
    %v4613 = vpack.c.b16 %v3765, %v3757
    %v4614 = vpack.c.b16 %v3774, %v3766
    %v4615 = vpack.c.b16 %v3775, %v3767
    %v4616 = vpack.c.b16 %v3776, %v3768
    %v4617 = vpack.c.b16 %v3777, %v3769
    %v4618 = vpack.c.b16 %v3778, %v3770
    %v4619 = vpack.c.b16 %v3779, %v3771
    %v4620 = vpack.c.b16 %v3780, %v3772
    %v4621 = vpack.c.b16 %v3781, %v3773
    %v4622 = vpack.c.b16 %v3790, %v3782
    %v4623 = vpack.c.b16 %v3791, %v3783
    %v4624 = vpack.c.b16 %v3792, %v3784
    %v4625 = vpack.c.b16 %v3793, %v3785
    %v4626 = vpack.c.b16 %v3794, %v3786
    %v4627 = vpack.c.b16 %v3795, %v3787
    %v4628 = vpack.c.b16 %v3796, %v3788
    %v4629 = vpack.c.b16 %v3797, %v3789
    %v4630 = vpack.c.b16 %v3806, %v3798
    %v4631 = vpack.c.b16 %v3807, %v3799
    %v4632 = vpack.c.b16 %v3808, %v3800
    %v4633 = vpack.c.b16 %v3809, %v3801
    %v4634 = vpack.c.b16 %v3810, %v3802
    %v4635 = vpack.c.b16 %v3811, %v3803
    %v4636 = vpack.c.b16 %v3812, %v3804
    %v4637 = vpack.c.b16 %v3813, %v3805
    %v4638 = vpack.c.b16 %v3822, %v3814
    %v4639 = vpack.c.b16 %v3823, %v3815
    %v4640 = vpack.c.b16 %v3824, %v3816
    %v4641 = vpack.c.b16 %v3825, %v3817
    %v4642 = vpack.c.b16 %v3826, %v3818
    %v4643 = vpack.c.b16 %v3827, %v3819
    %v4644 = vpack.c.b16 %v3828, %v3820
    %v4645 = vpack.c.b16 %v3829, %v3821
    %v4646 = vpack.c.b16 %v3838, %v3830
    %v4647 = vpack.c.b16 %v3839, %v3831
    %v4648 = vpack.c.b16 %v3840, %v3832
    %v4649 = vpack.c.b16 %v3841, %v3833
    %v4650 = vpack.c.b16 %v3842, %v3834
    %v4651 = vpack.c.b16 %v3843, %v3835
    %v4652 = vpack.c.b16 %v3844, %v3836
    %v4653 = vpack.c.b16 %v3845, %v3837
    %v4654 = vpack.c.b16 %v3854, %v3846
    %v4655 = vpack.c.b16 %v3855, %v3847
    %v4656 = vpack.c.b16 %v3856, %v3848
    %v4657 = vpack.c.b16 %v3857, %v3849
    %v4658 = vpack.c.b16 %v3858, %v3850
    %v4659 = vpack.c.b16 %v3859, %v3851
    %v4660 = vpack.c.b16 %v3860, %v3852
    %v4661 = vpack.c.b16 %v3861, %v3853
    %v4662 = vpack.c.b16 %v3870, %v3862
    %v4663 = vpack.c.b16 %v3871, %v3863
    %v4664 = vpack.c.b16 %v3872, %v3864
    %v4665 = vpack.c.b16 %v3873, %v3865
    %v4666 = vpack.c.b16 %v3874, %v3866
    %v4667 = vpack.c.b16 %v3875, %v3867
    %v4668 = vpack.c.b16 %v3876, %v3868
    %v4669 = vpack.c.b16 %v3877, %v3869
    %v4670 = vpack.c.b16 %v3886, %v3878
    %v4671 = vpack.c.b16 %v3887, %v3879
    %v4672 = vpack.c.b16 %v3888, %v3880
    %v4673 = vpack.c.b16 %v3889, %v3881
    %v4674 = vpack.c.b16 %v3890, %v3882
    %v4675 = vpack.c.b16 %v3891, %v3883
    %v4676 = vpack.c.b16 %v3892, %v3884
    %v4677 = vpack.c.b16 %v3893, %v3885
    %v4678 = vpack.c.b16 %v3902, %v3894
    %v4679 = vpack.c.b16 %v3903, %v3895
    %v4680 = vpack.c.b16 %v3904, %v3896
    %v4681 = vpack.c.b16 %v3905, %v3897
    %v4682 = vpack.c.b16 %v3906, %v3898
    %v4683 = vpack.c.b16 %v3907, %v3899
    %v4684 = vpack.c.b16 %v3908, %v3900
    %v4685 = vpack.c.b16 %v3909, %v3901
    %v4686 = vpack.c.b16 %v3918, %v3910
    %v4687 = vpack.c.b16 %v3919, %v3911
    %v4688 = vpack.c.b16 %v3920, %v3912
    %v4689 = vpack.c.b16 %v3921, %v3913
    %v4690 = vpack.c.b16 %v3922, %v3914
    %v4691 = vpack.c.b16 %v3923, %v3915
    %v4692 = vpack.c.b16 %v3924, %v3916
    %v4693 = vpack.c.b16 %v3925, %v3917
    %v4694 = vpack.c.b16 %v3934, %v3926
    %v4695 = vpack.c.b16 %v3935, %v3927
    %v4696 = vpack.c.b16 %v3936, %v3928
    %v4697 = vpack.c.b16 %v3937, %v3929
    %v4698 = vpack.c.b16 %v3938, %v3930
    %v4699 = vpack.c.b16 %v3939, %v3931
    %v4700 = vpack.c.b16 %v3940, %v3932
    %v4701 = vpack.c.b16 %v3941, %v3933
    %v4702 = vpack.c.b16 %v3950, %v3942
    %v4703 = vpack.c.b16 %v3951, %v3943
    %v4704 = vpack.c.b16 %v3952, %v3944
    %v4705 = vpack.c.b16 %v3953, %v3945
    %v4706 = vpack.c.b16 %v3954, %v3946
    %v4707 = vpack.c.b16 %v3955, %v3947
    %v4708 = vpack.c.b16 %v3956, %v3948
    %v4709 = vpack.c.b16 %v3957, %v3949
    %v4710 = vpack.c.b16 %v3966, %v3958
    %v4711 = vpack.c.b16 %v3967, %v3959
    %v4712 = vpack.c.b16 %v3968, %v3960
    %v4713 = vpack.c.b16 %v3969, %v3961
    %v4714 = vpack.c.b16 %v3970, %v3962
    %v4715 = vpack.c.b16 %v3971, %v3963
    %v4716 = vpack.c.b16 %v3972, %v3964
    %v4717 = vpack.c.b16 %v3973, %v3965
    %v4718 = vpack.c.b16 %v3982, %v3974
    %v4719 = vpack.c.b16 %v3983, %v3975
    %v4720 = vpack.c.b16 %v3984, %v3976
    %v4721 = vpack.c.b16 %v3985, %v3977
    %v4722 = vpack.c.b16 %v3986, %v3978
    %v4723 = vpack.c.b16 %v3987, %v3979
    %v4724 = vpack.c.b16 %v3988, %v3980
    %v4725 = vpack.c.b16 %v3989, %v3981
    %v4726 = vpack.c.b16 %v3998, %v3990
    %v4727 = vpack.c.b16 %v3999, %v3991
    %v4728 = vpack.c.b16 %v4000, %v3992
    %v4729 = vpack.c.b16 %v4001, %v3993
    %v4730 = vpack.c.b16 %v4002, %v3994
    %v4731 = vpack.c.b16 %v4003, %v3995
    %v4732 = vpack.c.b16 %v4004, %v3996
    %v4733 = vpack.c.b16 %v4005, %v3997
    %v4734 = vpack.c.b16 %v4014, %v4006
    %v4735 = vpack.c.b16 %v4015, %v4007
    %v4736 = vpack.c.b16 %v4016, %v4008
    %v4737 = vpack.c.b16 %v4017, %v4009
    %v4738 = vpack.c.b16 %v4018, %v4010
    %v4739 = vpack.c.b16 %v4019, %v4011
    %v4740 = vpack.c.b16 %v4020, %v4012
    %v4741 = vpack.c.b16 %v4021, %v4013
    %v4742 = vpack.c.b16 %v4030, %v4022
    %v4743 = vpack.c.b16 %v4031, %v4023
    %v4744 = vpack.c.b16 %v4032, %v4024
    %v4745 = vpack.c.b16 %v4033, %v4025
    %v4746 = vpack.c.b16 %v4034, %v4026
    %v4747 = vpack.c.b16 %v4035, %v4027
    %v4748 = vpack.c.b16 %v4036, %v4028
    %v4749 = vpack.c.b16 %v4037, %v4029
    %v4750 = vpack.c.b16 %v4046, %v4038
    %v4751 = vpack.c.b16 %v4047, %v4039
    %v4752 = vpack.c.b16 %v4048, %v4040
    %v4753 = vpack.c.b16 %v4049, %v4041
    %v4754 = vpack.c.b16 %v4050, %v4042
    %v4755 = vpack.c.b16 %v4051, %v4043
    %v4756 = vpack.c.b16 %v4052, %v4044
    %v4757 = vpack.c.b16 %v4053, %v4045
    %v4758 = vpack.c.b16 %v4062, %v4054
    %v4759 = vpack.c.b16 %v4063, %v4055
    %v4760 = vpack.c.b16 %v4064, %v4056
    %v4761 = vpack.c.b16 %v4065, %v4057
    %v4762 = vpack.c.b16 %v4066, %v4058
    %v4763 = vpack.c.b16 %v4067, %v4059
    %v4764 = vpack.c.b16 %v4068, %v4060
    %v4765 = vpack.c.b16 %v4069, %v4061
    %v4766 = vpack.c.b16 %v4078, %v4070
    %v4767 = vpack.c.b16 %v4079, %v4071
    %v4768 = vpack.c.b16 %v4080, %v4072
    %v4769 = vpack.c.b16 %v4081, %v4073
    %v4770 = vpack.c.b16 %v4082, %v4074
    %v4771 = vpack.c.b16 %v4083, %v4075
    %v4772 = vpack.c.b16 %v4084, %v4076
    %v4773 = vpack.c.b16 %v4085, %v4077
    %v4774 = vpack.c.b16 %v4094, %v4086
    %v4775 = vpack.c.b16 %v4095, %v4087
    %v4776 = vpack.c.b16 %v4096, %v4088
    %v4777 = vpack.c.b16 %v4097, %v4089
    %v4778 = vpack.c.b16 %v4098, %v4090
    %v4779 = vpack.c.b16 %v4099, %v4091
    %v4780 = vpack.c.b16 %v4100, %v4092
    %v4781 = vpack.c.b16 %v4101, %v4093
    %v4782 = vpack.c.b16 %v4110, %v4102
    %v4783 = vpack.c.b16 %v4111, %v4103
    %v4784 = vpack.c.b16 %v4112, %v4104
    %v4785 = vpack.c.b16 %v4113, %v4105
    %v4786 = vpack.c.b16 %v4114, %v4106
    %v4787 = vpack.c.b16 %v4115, %v4107
    %v4788 = vpack.c.b16 %v4116, %v4108
    %v4789 = vpack.c.b16 %v4117, %v4109
    %v4790 = vpack.c.b16 %v4126, %v4118
    %v4791 = vpack.c.b16 %v4127, %v4119
    %v4792 = vpack.c.b16 %v4128, %v4120
    %v4793 = vpack.c.b16 %v4129, %v4121
    %v4794 = vpack.c.b16 %v4130, %v4122
    %v4795 = vpack.c.b16 %v4131, %v4123
    %v4796 = vpack.c.b16 %v4132, %v4124
    %v4797 = vpack.c.b16 %v4133, %v4125
    %v4798 = vpack.c.b16 %v4142, %v4134
    %v4799 = vpack.c.b16 %v4143, %v4135
    %v4800 = vpack.c.b16 %v4144, %v4136
    %v4801 = vpack.c.b16 %v4145, %v4137
    %v4802 = vpack.c.b16 %v4146, %v4138
    %v4803 = vpack.c.b16 %v4147, %v4139
    %v4804 = vpack.c.b16 %v4148, %v4140
    %v4805 = vpack.c.b16 %v4149, %v4141
    %v4806 = vpack.c.b16 %v4158, %v4150
    %v4807 = vpack.c.b16 %v4159, %v4151
    %v4808 = vpack.c.b16 %v4160, %v4152
    %v4809 = vpack.c.b16 %v4161, %v4153
    %v4810 = vpack.c.b16 %v4162, %v4154
    %v4811 = vpack.c.b16 %v4163, %v4155
    %v4812 = vpack.c.b16 %v4164, %v4156
    %v4813 = vpack.c.b16 %v4165, %v4157
    %v4814 = vpack.c.b16 %v4174, %v4166
    %v4815 = vpack.c.b16 %v4175, %v4167
    %v4816 = vpack.c.b16 %v4176, %v4168
    %v4817 = vpack.c.b16 %v4177, %v4169
    %v4818 = vpack.c.b16 %v4178, %v4170
    %v4819 = vpack.c.b16 %v4179, %v4171
    %v4820 = vpack.c.b16 %v4180, %v4172
    %v4821 = vpack.c.b16 %v4181, %v4173
    %v4822 = vpack.c.b16 %v4190, %v4182
    %v4823 = vpack.c.b16 %v4191, %v4183
    %v4824 = vpack.c.b16 %v4192, %v4184
    %v4825 = vpack.c.b16 %v4193, %v4185
    %v4826 = vpack.c.b16 %v4194, %v4186
    %v4827 = vpack.c.b16 %v4195, %v4187
    %v4828 = vpack.c.b16 %v4196, %v4188
    %v4829 = vpack.c.b16 %v4197, %v4189
    %v4830 = vpack.c.b16 %v4206, %v4198
    %v4831 = vpack.c.b16 %v4207, %v4199
    %v4832 = vpack.c.b16 %v4208, %v4200
    %v4833 = vpack.c.b16 %v4209, %v4201
    %v4834 = vpack.c.b16 %v4210, %v4202
    %v4835 = vpack.c.b16 %v4211, %v4203
    %v4836 = vpack.c.b16 %v4212, %v4204
    %v4837 = vpack.c.b16 %v4213, %v4205
    %v4838 = vpack.c.b16 %v4222, %v4214
    %v4839 = vpack.c.b16 %v4223, %v4215
    %v4840 = vpack.c.b16 %v4224, %v4216
    %v4841 = vpack.c.b16 %v4225, %v4217
    %v4842 = vpack.c.b16 %v4226, %v4218
    %v4843 = vpack.c.b16 %v4227, %v4219
    %v4844 = vpack.c.b16 %v4228, %v4220
    %v4845 = vpack.c.b16 %v4229, %v4221
    %v4846 = vpack.c.b16 %v4238, %v4230
    %v4847 = vpack.c.b16 %v4239, %v4231
    %v4848 = vpack.c.b16 %v4240, %v4232
    %v4849 = vpack.c.b16 %v4241, %v4233
    %v4850 = vpack.c.b16 %v4242, %v4234
    %v4851 = vpack.c.b16 %v4243, %v4235
    %v4852 = vpack.c.b16 %v4244, %v4236
    %v4853 = vpack.c.b16 %v4245, %v4237
    %v4854 = vpack.c.b16 %v4254, %v4246
    %v4855 = vpack.c.b16 %v4255, %v4247
    %v4856 = vpack.c.b16 %v4256, %v4248
    %v4857 = vpack.c.b16 %v4257, %v4249
    %v4858 = vpack.c.b16 %v4258, %v4250
    %v4859 = vpack.c.b16 %v4259, %v4251
    %v4860 = vpack.c.b16 %v4260, %v4252
    %v4861 = vpack.c.b16 %v4261, %v4253
    %v4862 = vpack.c.b16 %v4270, %v4262
    %v4863 = vpack.c.b16 %v4271, %v4263
    %v4864 = vpack.c.b16 %v4272, %v4264
    %v4865 = vpack.c.b16 %v4273, %v4265
    %v4866 = vpack.c.b16 %v4274, %v4266
    %v4867 = vpack.c.b16 %v4275, %v4267
    %v4868 = vpack.c.b16 %v4276, %v4268
    %v4869 = vpack.c.b16 %v4277, %v4269
    %v4870 = vpack.c.b16 %v4286, %v4278
    %v4871 = vpack.c.b16 %v4287, %v4279
    %v4872 = vpack.c.b16 %v4288, %v4280
    %v4873 = vpack.c.b16 %v4289, %v4281
    %v4874 = vpack.c.b16 %v4290, %v4282
    %v4875 = vpack.c.b16 %v4291, %v4283
    %v4876 = vpack.c.b16 %v4292, %v4284
    %v4877 = vpack.c.b16 %v4293, %v4285
    %v4878 = vpack.c.b16 %v4302, %v4294
    %v4879 = vpack.c.b16 %v4303, %v4295
    %v4880 = vpack.c.b16 %v4304, %v4296
    %v4881 = vpack.c.b16 %v4305, %v4297
    %v4882 = vpack.c.b16 %v4306, %v4298
    %v4883 = vpack.c.b16 %v4307, %v4299
    %v4884 = vpack.c.b16 %v4308, %v4300
    %v4885 = vpack.c.b16 %v4309, %v4301
    %v4886 = vpack.c.b16 %v4318, %v4310
    %v4887 = vpack.c.b16 %v4319, %v4311
    %v4888 = vpack.c.b16 %v4320, %v4312
    %v4889 = vpack.c.b16 %v4321, %v4313
    %v4890 = vpack.c.b16 %v4322, %v4314
    %v4891 = vpack.c.b16 %v4323, %v4315
    %v4892 = vpack.c.b16 %v4324, %v4316
    %v4893 = vpack.c.b16 %v4325, %v4317
    %v4894 = vpack.c.b16 %v4334, %v4326
    %v4895 = vpack.c.b16 %v4335, %v4327
    %v4896 = vpack.c.b16 %v4336, %v4328
    %v4897 = vpack.c.b16 %v4337, %v4329
    %v4898 = vpack.c.b16 %v4338, %v4330
    %v4899 = vpack.c.b16 %v4339, %v4331
    %v4900 = vpack.c.b16 %v4340, %v4332
    %v4901 = vpack.c.b16 %v4341, %v4333
    %v4902 = vpack.c.b16 %v4350, %v4342
    %v4903 = vpack.c.b16 %v4351, %v4343
    %v4904 = vpack.c.b16 %v4352, %v4344
    %v4905 = vpack.c.b16 %v4353, %v4345
    %v4906 = vpack.c.b16 %v4354, %v4346
    %v4907 = vpack.c.b16 %v4355, %v4347
    %v4908 = vpack.c.b16 %v4356, %v4348
    %v4909 = vpack.c.b16 %v4357, %v4349
    %v4910 = vpack.c.b16 %v4366, %v4358
    %v4911 = vpack.c.b16 %v4367, %v4359
    %v4912 = vpack.c.b16 %v4368, %v4360
    %v4913 = vpack.c.b16 %v4369, %v4361
    %v4914 = vpack.c.b16 %v4370, %v4362
    %v4915 = vpack.c.b16 %v4371, %v4363
    %v4916 = vpack.c.b16 %v4372, %v4364
    %v4917 = vpack.c.b16 %v4373, %v4365
    %v4918 = vpack.c.b16 %v4382, %v4374
    %v4919 = vpack.c.b16 %v4383, %v4375
    %v4920 = vpack.c.b16 %v4384, %v4376
    %v4921 = vpack.c.b16 %v4385, %v4377
    %v4922 = vpack.c.b16 %v4386, %v4378
    %v4923 = vpack.c.b16 %v4387, %v4379
    %v4924 = vpack.c.b16 %v4388, %v4380
    %v4925 = vpack.c.b16 %v4389, %v4381
    %v4926 = vpack.c.b16 %v4398, %v4390
    %v4927 = vpack.c.b16 %v4399, %v4391
    %v4928 = vpack.c.b16 %v4400, %v4392
    %v4929 = vpack.c.b16 %v4401, %v4393
    %v4930 = vpack.c.b16 %v4402, %v4394
    %v4931 = vpack.c.b16 %v4403, %v4395
    %v4932 = vpack.c.b16 %v4404, %v4396
    %v4933 = vpack.c.b16 %v4405, %v4397
    %v4934 = vpack.c.b16 %v4414, %v4406
    %v4935 = vpack.c.b16 %v4415, %v4407
    %v4936 = vpack.c.b16 %v4416, %v4408
    %v4937 = vpack.c.b16 %v4417, %v4409
    %v4938 = vpack.c.b16 %v4418, %v4410
    %v4939 = vpack.c.b16 %v4419, %v4411
    %v4940 = vpack.c.b16 %v4420, %v4412
    %v4941 = vpack.c.b16 %v4421, %v4413
    %v4942 = vpack.c.b16 %v4430, %v4422
    %v4943 = vpack.c.b16 %v4431, %v4423
    %v4944 = vpack.c.b16 %v4432, %v4424
    %v4945 = vpack.c.b16 %v4433, %v4425
    %v4946 = vpack.c.b16 %v4434, %v4426
    %v4947 = vpack.c.b16 %v4435, %v4427
    %v4948 = vpack.c.b16 %v4436, %v4428
    %v4949 = vpack.c.b16 %v4437, %v4429
    %5462 = vmatpush.bf16.msra.mxu0 %v4494
    %5463 = vmatpush.bf16.msra.mxu0 %v4486
    %5464 = vmatpush.bf16.msra.mxu0 %v4478
    %5465 = vmatpush.bf16.msra.mxu0 %v4470
    %5466 = vmatpush.bf16.msra.mxu0 %v4462
    %5467 = vmatpush.bf16.msra.mxu0 %v4454
    %5468 = vmatpush.bf16.msra.mxu0 %v4446
    %5469 = vmatpush.bf16.msra.mxu0 %v4438
    %5470 = vmatmul.bf16.gmra.mxu0 %v2364
    %v5471 = vpop.f32.mrf.mxu0
    %v5472 = vadd.f32 %v2886, %v5471
    %v5473 = vpop.f32.mrf.mxu0
    %5474 = vdwg.mxu0
    %5475 = vmatpush.bf16.msra.mxu0 %v4558
    %5476 = vmatpush.bf16.msra.mxu0 %v4550
    %5477 = vmatpush.bf16.msra.mxu0 %v4542
    %5478 = vmatpush.bf16.msra.mxu0 %v4534
    %5479 = vmatpush.bf16.msra.mxu0 %v4526
    %5480 = vmatpush.bf16.msra.mxu0 %v4518
    %5481 = vmatpush.bf16.msra.mxu0 %v4510
    %5482 = vmatpush.bf16.msra.mxu0 %v4502
    %5483 = vmatmul.bf16.gmra.mxu0 %v2365
    %v5484 = vpop.f32.mrf.mxu0
    %v5485 = vadd.f32 %v5472, %v5484
    %v5486 = vpop.f32.mrf.mxu0
    %5487 = vdwg.mxu0
    %5488 = vmatpush.bf16.msra.mxu0 %v4622
    %5489 = vmatpush.bf16.msra.mxu0 %v4614
    %5490 = vmatpush.bf16.msra.mxu0 %v4606
    %5491 = vmatpush.bf16.msra.mxu0 %v4598
    %5492 = vmatpush.bf16.msra.mxu0 %v4590
    %5493 = vmatpush.bf16.msra.mxu0 %v4582
    %5494 = vmatpush.bf16.msra.mxu0 %v4574
    %5495 = vmatpush.bf16.msra.mxu0 %v4566
    %5496 = vmatmul.bf16.gmra.mxu0 %v2366
    %v5497 = vpop.f32.mrf.mxu0
    %v5498 = vadd.f32 %v5485, %v5497
    %v5499 = vpop.f32.mrf.mxu0
    %5500 = vdwg.mxu0
    %5501 = vmatpush.bf16.msra.mxu0 %v4686
    %5502 = vmatpush.bf16.msra.mxu0 %v4678
    %5503 = vmatpush.bf16.msra.mxu0 %v4670
    %5504 = vmatpush.bf16.msra.mxu0 %v4662
    %5505 = vmatpush.bf16.msra.mxu0 %v4654
    %5506 = vmatpush.bf16.msra.mxu0 %v4646
    %5507 = vmatpush.bf16.msra.mxu0 %v4638
    %5508 = vmatpush.bf16.msra.mxu0 %v4630
    %5509 = vmatmul.bf16.gmra.mxu0 %v2367
    %v5510 = vpop.f32.mrf.mxu0
    %v5511 = vadd.f32 %v5498, %v5510
    %v5512 = vpop.f32.mrf.mxu0
    %5513 = vdwg.mxu0
    %5514 = vmatpush.bf16.msra.mxu0 %v4750
    %5515 = vmatpush.bf16.msra.mxu0 %v4742
    %5516 = vmatpush.bf16.msra.mxu0 %v4734
    %5517 = vmatpush.bf16.msra.mxu0 %v4726
    %5518 = vmatpush.bf16.msra.mxu0 %v4718
    %5519 = vmatpush.bf16.msra.mxu0 %v4710
    %5520 = vmatpush.bf16.msra.mxu0 %v4702
    %5521 = vmatpush.bf16.msra.mxu0 %v4694
    %5522 = vmatmul.bf16.gmra.mxu0 %v2368
    %v5523 = vpop.f32.mrf.mxu0
    %v5524 = vadd.f32 %v5511, %v5523
    %v5525 = vpop.f32.mrf.mxu0
    %5526 = vdwg.mxu0
    %5527 = vmatpush.bf16.msra.mxu0 %v4814
    %5528 = vmatpush.bf16.msra.mxu0 %v4806
    %5529 = vmatpush.bf16.msra.mxu0 %v4798
    %5530 = vmatpush.bf16.msra.mxu0 %v4790
    %5531 = vmatpush.bf16.msra.mxu0 %v4782
    %5532 = vmatpush.bf16.msra.mxu0 %v4774
    %5533 = vmatpush.bf16.msra.mxu0 %v4766
    %5534 = vmatpush.bf16.msra.mxu0 %v4758
    %5535 = vmatmul.bf16.gmra.mxu0 %v2369
    %v5536 = vpop.f32.mrf.mxu0
    %v5537 = vadd.f32 %v5524, %v5536
    %v5538 = vpop.f32.mrf.mxu0
    %5539 = vdwg.mxu0
    %5540 = vmatpush.bf16.msra.mxu0 %v4878
    %5541 = vmatpush.bf16.msra.mxu0 %v4870
    %5542 = vmatpush.bf16.msra.mxu0 %v4862
    %5543 = vmatpush.bf16.msra.mxu0 %v4854
    %5544 = vmatpush.bf16.msra.mxu0 %v4846
    %5545 = vmatpush.bf16.msra.mxu0 %v4838
    %5546 = vmatpush.bf16.msra.mxu0 %v4830
    %5547 = vmatpush.bf16.msra.mxu0 %v4822
    %5548 = vmatmul.bf16.gmra.mxu0 %v2370
    %v5549 = vpop.f32.mrf.mxu0
    %v5550 = vadd.f32 %v5537, %v5549
    %v5551 = vpop.f32.mrf.mxu0
    %5552 = vdwg.mxu0
    %5553 = vmatpush.bf16.msra.mxu0 %v4942
    %5554 = vmatpush.bf16.msra.mxu0 %v4934
    %5555 = vmatpush.bf16.msra.mxu0 %v4926
    %5556 = vmatpush.bf16.msra.mxu0 %v4918
    %5557 = vmatpush.bf16.msra.mxu0 %v4910
    %5558 = vmatpush.bf16.msra.mxu0 %v4902
    %5559 = vmatpush.bf16.msra.mxu0 %v4894
    %5560 = vmatpush.bf16.msra.mxu0 %v4886
    %5561 = vmatmul.bf16.gmra.mxu0 %v2371
    %v5562 = vpop.f32.mrf.mxu0
    %v5563 = vadd.f32 %v5550, %v5562
    %v5564 = vpop.f32.mrf.mxu0
    %5565 = vdwg.mxu0
    %5566 = vmatpush.bf16.msra.mxu0 %v4495
    %5567 = vmatpush.bf16.msra.mxu0 %v4487
    %5568 = vmatpush.bf16.msra.mxu0 %v4479
    %5569 = vmatpush.bf16.msra.mxu0 %v4471
    %5570 = vmatpush.bf16.msra.mxu0 %v4463
    %5571 = vmatpush.bf16.msra.mxu0 %v4455
    %5572 = vmatpush.bf16.msra.mxu0 %v4447
    %5573 = vmatpush.bf16.msra.mxu0 %v4439
    %5574 = vmatmul.bf16.gmra.mxu0 %v2364
    %v5575 = vpop.f32.mrf.mxu0
    %v5576 = vadd.f32 %v2887, %v5575
    %v5577 = vpop.f32.mrf.mxu0
    %5578 = vdwg.mxu0
    %5579 = vmatpush.bf16.msra.mxu0 %v4559
    %5580 = vmatpush.bf16.msra.mxu0 %v4551
    %5581 = vmatpush.bf16.msra.mxu0 %v4543
    %5582 = vmatpush.bf16.msra.mxu0 %v4535
    %5583 = vmatpush.bf16.msra.mxu0 %v4527
    %5584 = vmatpush.bf16.msra.mxu0 %v4519
    %5585 = vmatpush.bf16.msra.mxu0 %v4511
    %5586 = vmatpush.bf16.msra.mxu0 %v4503
    %5587 = vmatmul.bf16.gmra.mxu0 %v2365
    %v5588 = vpop.f32.mrf.mxu0
    %v5589 = vadd.f32 %v5576, %v5588
    %v5590 = vpop.f32.mrf.mxu0
    %5591 = vdwg.mxu0
    %5592 = vmatpush.bf16.msra.mxu0 %v4623
    %5593 = vmatpush.bf16.msra.mxu0 %v4615
    %5594 = vmatpush.bf16.msra.mxu0 %v4607
    %5595 = vmatpush.bf16.msra.mxu0 %v4599
    %5596 = vmatpush.bf16.msra.mxu0 %v4591
    %5597 = vmatpush.bf16.msra.mxu0 %v4583
    %5598 = vmatpush.bf16.msra.mxu0 %v4575
    %5599 = vmatpush.bf16.msra.mxu0 %v4567
    %5600 = vmatmul.bf16.gmra.mxu0 %v2366
    %v5601 = vpop.f32.mrf.mxu0
    %v5602 = vadd.f32 %v5589, %v5601
    %v5603 = vpop.f32.mrf.mxu0
    %5604 = vdwg.mxu0
    %5605 = vmatpush.bf16.msra.mxu0 %v4687
    %5606 = vmatpush.bf16.msra.mxu0 %v4679
    %5607 = vmatpush.bf16.msra.mxu0 %v4671
    %5608 = vmatpush.bf16.msra.mxu0 %v4663
    %5609 = vmatpush.bf16.msra.mxu0 %v4655
    %5610 = vmatpush.bf16.msra.mxu0 %v4647
    %5611 = vmatpush.bf16.msra.mxu0 %v4639
    %5612 = vmatpush.bf16.msra.mxu0 %v4631
    %5613 = vmatmul.bf16.gmra.mxu0 %v2367
    %v5614 = vpop.f32.mrf.mxu0
    %v5615 = vadd.f32 %v5602, %v5614
    %v5616 = vpop.f32.mrf.mxu0
    %5617 = vdwg.mxu0
    %5618 = vmatpush.bf16.msra.mxu0 %v4751
    %5619 = vmatpush.bf16.msra.mxu0 %v4743
    %5620 = vmatpush.bf16.msra.mxu0 %v4735
    %5621 = vmatpush.bf16.msra.mxu0 %v4727
    %5622 = vmatpush.bf16.msra.mxu0 %v4719
    %5623 = vmatpush.bf16.msra.mxu0 %v4711
    %5624 = vmatpush.bf16.msra.mxu0 %v4703
    %5625 = vmatpush.bf16.msra.mxu0 %v4695
    %5626 = vmatmul.bf16.gmra.mxu0 %v2368
    %v5627 = vpop.f32.mrf.mxu0
    %v5628 = vadd.f32 %v5615, %v5627
    %v5629 = vpop.f32.mrf.mxu0
    %5630 = vdwg.mxu0
    %5631 = vmatpush.bf16.msra.mxu0 %v4815
    %5632 = vmatpush.bf16.msra.mxu0 %v4807
    %5633 = vmatpush.bf16.msra.mxu0 %v4799
    %5634 = vmatpush.bf16.msra.mxu0 %v4791
    %5635 = vmatpush.bf16.msra.mxu0 %v4783
    %5636 = vmatpush.bf16.msra.mxu0 %v4775
    %5637 = vmatpush.bf16.msra.mxu0 %v4767
    %5638 = vmatpush.bf16.msra.mxu0 %v4759
    %5639 = vmatmul.bf16.gmra.mxu0 %v2369
    %v5640 = vpop.f32.mrf.mxu0
    %v5641 = vadd.f32 %v5628, %v5640
    %v5642 = vpop.f32.mrf.mxu0
    %5643 = vdwg.mxu0
    %5644 = vmatpush.bf16.msra.mxu0 %v4879
    %5645 = vmatpush.bf16.msra.mxu0 %v4871
    %5646 = vmatpush.bf16.msra.mxu0 %v4863
    %5647 = vmatpush.bf16.msra.mxu0 %v4855
    %5648 = vmatpush.bf16.msra.mxu0 %v4847
    %5649 = vmatpush.bf16.msra.mxu0 %v4839
    %5650 = vmatpush.bf16.msra.mxu0 %v4831
    %5651 = vmatpush.bf16.msra.mxu0 %v4823
    %5652 = vmatmul.bf16.gmra.mxu0 %v2370
    %v5653 = vpop.f32.mrf.mxu0
    %v5654 = vadd.f32 %v5641, %v5653
    %v5655 = vpop.f32.mrf.mxu0
    %5656 = vdwg.mxu0
    %5657 = vmatpush.bf16.msra.mxu0 %v4943
    %5658 = vmatpush.bf16.msra.mxu0 %v4935
    %5659 = vmatpush.bf16.msra.mxu0 %v4927
    %5660 = vmatpush.bf16.msra.mxu0 %v4919
    %5661 = vmatpush.bf16.msra.mxu0 %v4911
    %5662 = vmatpush.bf16.msra.mxu0 %v4903
    %5663 = vmatpush.bf16.msra.mxu0 %v4895
    %5664 = vmatpush.bf16.msra.mxu0 %v4887
    %5665 = vmatmul.bf16.gmra.mxu0 %v2371
    %v5666 = vpop.f32.mrf.mxu0
    %v5667 = vadd.f32 %v5654, %v5666
    %v5668 = vpop.f32.mrf.mxu0
    %5669 = vdwg.mxu0
    %5670 = vmatpush.bf16.msra.mxu0 %v4496
    %5671 = vmatpush.bf16.msra.mxu0 %v4488
    %5672 = vmatpush.bf16.msra.mxu0 %v4480
    %5673 = vmatpush.bf16.msra.mxu0 %v4472
    %5674 = vmatpush.bf16.msra.mxu0 %v4464
    %5675 = vmatpush.bf16.msra.mxu0 %v4456
    %5676 = vmatpush.bf16.msra.mxu0 %v4448
    %5677 = vmatpush.bf16.msra.mxu0 %v4440
    %5678 = vmatmul.bf16.gmra.mxu0 %v2364
    %v5679 = vpop.f32.mrf.mxu0
    %v5680 = vadd.f32 %v2888, %v5679
    %v5681 = vpop.f32.mrf.mxu0
    %5682 = vdwg.mxu0
    %5683 = vmatpush.bf16.msra.mxu0 %v4560
    %5684 = vmatpush.bf16.msra.mxu0 %v4552
    %5685 = vmatpush.bf16.msra.mxu0 %v4544
    %5686 = vmatpush.bf16.msra.mxu0 %v4536
    %5687 = vmatpush.bf16.msra.mxu0 %v4528
    %5688 = vmatpush.bf16.msra.mxu0 %v4520
    %5689 = vmatpush.bf16.msra.mxu0 %v4512
    %5690 = vmatpush.bf16.msra.mxu0 %v4504
    %5691 = vmatmul.bf16.gmra.mxu0 %v2365
    %v5692 = vpop.f32.mrf.mxu0
    %v5693 = vadd.f32 %v5680, %v5692
    %v5694 = vpop.f32.mrf.mxu0
    %5695 = vdwg.mxu0
    %5696 = vmatpush.bf16.msra.mxu0 %v4624
    %5697 = vmatpush.bf16.msra.mxu0 %v4616
    %5698 = vmatpush.bf16.msra.mxu0 %v4608
    %5699 = vmatpush.bf16.msra.mxu0 %v4600
    %5700 = vmatpush.bf16.msra.mxu0 %v4592
    %5701 = vmatpush.bf16.msra.mxu0 %v4584
    %5702 = vmatpush.bf16.msra.mxu0 %v4576
    %5703 = vmatpush.bf16.msra.mxu0 %v4568
    %5704 = vmatmul.bf16.gmra.mxu0 %v2366
    %v5705 = vpop.f32.mrf.mxu0
    %v5706 = vadd.f32 %v5693, %v5705
    %v5707 = vpop.f32.mrf.mxu0
    %5708 = vdwg.mxu0
    %5709 = vmatpush.bf16.msra.mxu0 %v4688
    %5710 = vmatpush.bf16.msra.mxu0 %v4680
    %5711 = vmatpush.bf16.msra.mxu0 %v4672
    %5712 = vmatpush.bf16.msra.mxu0 %v4664
    %5713 = vmatpush.bf16.msra.mxu0 %v4656
    %5714 = vmatpush.bf16.msra.mxu0 %v4648
    %5715 = vmatpush.bf16.msra.mxu0 %v4640
    %5716 = vmatpush.bf16.msra.mxu0 %v4632
    %5717 = vmatmul.bf16.gmra.mxu0 %v2367
    %v5718 = vpop.f32.mrf.mxu0
    %v5719 = vadd.f32 %v5706, %v5718
    %v5720 = vpop.f32.mrf.mxu0
    %5721 = vdwg.mxu0
    %5722 = vmatpush.bf16.msra.mxu0 %v4752
    %5723 = vmatpush.bf16.msra.mxu0 %v4744
    %5724 = vmatpush.bf16.msra.mxu0 %v4736
    %5725 = vmatpush.bf16.msra.mxu0 %v4728
    %5726 = vmatpush.bf16.msra.mxu0 %v4720
    %5727 = vmatpush.bf16.msra.mxu0 %v4712
    %5728 = vmatpush.bf16.msra.mxu0 %v4704
    %5729 = vmatpush.bf16.msra.mxu0 %v4696
    %5730 = vmatmul.bf16.gmra.mxu0 %v2368
    %v5731 = vpop.f32.mrf.mxu0
    %v5732 = vadd.f32 %v5719, %v5731
    %v5733 = vpop.f32.mrf.mxu0
    %5734 = vdwg.mxu0
    %5735 = vmatpush.bf16.msra.mxu0 %v4816
    %5736 = vmatpush.bf16.msra.mxu0 %v4808
    %5737 = vmatpush.bf16.msra.mxu0 %v4800
    %5738 = vmatpush.bf16.msra.mxu0 %v4792
    %5739 = vmatpush.bf16.msra.mxu0 %v4784
    %5740 = vmatpush.bf16.msra.mxu0 %v4776
    %5741 = vmatpush.bf16.msra.mxu0 %v4768
    %5742 = vmatpush.bf16.msra.mxu0 %v4760
    %5743 = vmatmul.bf16.gmra.mxu0 %v2369
    %v5744 = vpop.f32.mrf.mxu0
    %v5745 = vadd.f32 %v5732, %v5744
    %v5746 = vpop.f32.mrf.mxu0
    %5747 = vdwg.mxu0
    %5748 = vmatpush.bf16.msra.mxu0 %v4880
    %5749 = vmatpush.bf16.msra.mxu0 %v4872
    %5750 = vmatpush.bf16.msra.mxu0 %v4864
    %5751 = vmatpush.bf16.msra.mxu0 %v4856
    %5752 = vmatpush.bf16.msra.mxu0 %v4848
    %5753 = vmatpush.bf16.msra.mxu0 %v4840
    %5754 = vmatpush.bf16.msra.mxu0 %v4832
    %5755 = vmatpush.bf16.msra.mxu0 %v4824
    %5756 = vmatmul.bf16.gmra.mxu0 %v2370
    %v5757 = vpop.f32.mrf.mxu0
    %v5758 = vadd.f32 %v5745, %v5757
    %v5759 = vpop.f32.mrf.mxu0
    %5760 = vdwg.mxu0
    %5761 = vmatpush.bf16.msra.mxu0 %v4944
    %5762 = vmatpush.bf16.msra.mxu0 %v4936
    %5763 = vmatpush.bf16.msra.mxu0 %v4928
    %5764 = vmatpush.bf16.msra.mxu0 %v4920
    %5765 = vmatpush.bf16.msra.mxu0 %v4912
    %5766 = vmatpush.bf16.msra.mxu0 %v4904
    %5767 = vmatpush.bf16.msra.mxu0 %v4896
    %5768 = vmatpush.bf16.msra.mxu0 %v4888
    %5769 = vmatmul.bf16.gmra.mxu0 %v2371
    %v5770 = vpop.f32.mrf.mxu0
    %v5771 = vadd.f32 %v5758, %v5770
    %v5772 = vpop.f32.mrf.mxu0
    %5773 = vdwg.mxu0
    %5774 = vmatpush.bf16.msra.mxu0 %v4497
    %5775 = vmatpush.bf16.msra.mxu0 %v4489
    %5776 = vmatpush.bf16.msra.mxu0 %v4481
    %5777 = vmatpush.bf16.msra.mxu0 %v4473
    %5778 = vmatpush.bf16.msra.mxu0 %v4465
    %5779 = vmatpush.bf16.msra.mxu0 %v4457
    %5780 = vmatpush.bf16.msra.mxu0 %v4449
    %5781 = vmatpush.bf16.msra.mxu0 %v4441
    %5782 = vmatmul.bf16.gmra.mxu0 %v2364
    %v5783 = vpop.f32.mrf.mxu0
    %v5784 = vadd.f32 %v2889, %v5783
    %v5785 = vpop.f32.mrf.mxu0
    %5786 = vdwg.mxu0
    %5787 = vmatpush.bf16.msra.mxu0 %v4561
    %5788 = vmatpush.bf16.msra.mxu0 %v4553
    %5789 = vmatpush.bf16.msra.mxu0 %v4545
    %5790 = vmatpush.bf16.msra.mxu0 %v4537
    %5791 = vmatpush.bf16.msra.mxu0 %v4529
    %5792 = vmatpush.bf16.msra.mxu0 %v4521
    %5793 = vmatpush.bf16.msra.mxu0 %v4513
    %5794 = vmatpush.bf16.msra.mxu0 %v4505
    %5795 = vmatmul.bf16.gmra.mxu0 %v2365
    %v5796 = vpop.f32.mrf.mxu0
    %v5797 = vadd.f32 %v5784, %v5796
    %v5798 = vpop.f32.mrf.mxu0
    %5799 = vdwg.mxu0
    %5800 = vmatpush.bf16.msra.mxu0 %v4625
    %5801 = vmatpush.bf16.msra.mxu0 %v4617
    %5802 = vmatpush.bf16.msra.mxu0 %v4609
    %5803 = vmatpush.bf16.msra.mxu0 %v4601
    %5804 = vmatpush.bf16.msra.mxu0 %v4593
    %5805 = vmatpush.bf16.msra.mxu0 %v4585
    %5806 = vmatpush.bf16.msra.mxu0 %v4577
    %5807 = vmatpush.bf16.msra.mxu0 %v4569
    %5808 = vmatmul.bf16.gmra.mxu0 %v2366
    %v5809 = vpop.f32.mrf.mxu0
    %v5810 = vadd.f32 %v5797, %v5809
    %v5811 = vpop.f32.mrf.mxu0
    %5812 = vdwg.mxu0
    %5813 = vmatpush.bf16.msra.mxu0 %v4689
    %5814 = vmatpush.bf16.msra.mxu0 %v4681
    %5815 = vmatpush.bf16.msra.mxu0 %v4673
    %5816 = vmatpush.bf16.msra.mxu0 %v4665
    %5817 = vmatpush.bf16.msra.mxu0 %v4657
    %5818 = vmatpush.bf16.msra.mxu0 %v4649
    %5819 = vmatpush.bf16.msra.mxu0 %v4641
    %5820 = vmatpush.bf16.msra.mxu0 %v4633
    %5821 = vmatmul.bf16.gmra.mxu0 %v2367
    %v5822 = vpop.f32.mrf.mxu0
    %v5823 = vadd.f32 %v5810, %v5822
    %v5824 = vpop.f32.mrf.mxu0
    %5825 = vdwg.mxu0
    %5826 = vmatpush.bf16.msra.mxu0 %v4753
    %5827 = vmatpush.bf16.msra.mxu0 %v4745
    %5828 = vmatpush.bf16.msra.mxu0 %v4737
    %5829 = vmatpush.bf16.msra.mxu0 %v4729
    %5830 = vmatpush.bf16.msra.mxu0 %v4721
    %5831 = vmatpush.bf16.msra.mxu0 %v4713
    %5832 = vmatpush.bf16.msra.mxu0 %v4705
    %5833 = vmatpush.bf16.msra.mxu0 %v4697
    %5834 = vmatmul.bf16.gmra.mxu0 %v2368
    %v5835 = vpop.f32.mrf.mxu0
    %v5836 = vadd.f32 %v5823, %v5835
    %v5837 = vpop.f32.mrf.mxu0
    %5838 = vdwg.mxu0
    %5839 = vmatpush.bf16.msra.mxu0 %v4817
    %5840 = vmatpush.bf16.msra.mxu0 %v4809
    %5841 = vmatpush.bf16.msra.mxu0 %v4801
    %5842 = vmatpush.bf16.msra.mxu0 %v4793
    %5843 = vmatpush.bf16.msra.mxu0 %v4785
    %5844 = vmatpush.bf16.msra.mxu0 %v4777
    %5845 = vmatpush.bf16.msra.mxu0 %v4769
    %5846 = vmatpush.bf16.msra.mxu0 %v4761
    %5847 = vmatmul.bf16.gmra.mxu0 %v2369
    %v5848 = vpop.f32.mrf.mxu0
    %v5849 = vadd.f32 %v5836, %v5848
    %v5850 = vpop.f32.mrf.mxu0
    %5851 = vdwg.mxu0
    %5852 = vmatpush.bf16.msra.mxu0 %v4881
    %5853 = vmatpush.bf16.msra.mxu0 %v4873
    %5854 = vmatpush.bf16.msra.mxu0 %v4865
    %5855 = vmatpush.bf16.msra.mxu0 %v4857
    %5856 = vmatpush.bf16.msra.mxu0 %v4849
    %5857 = vmatpush.bf16.msra.mxu0 %v4841
    %5858 = vmatpush.bf16.msra.mxu0 %v4833
    %5859 = vmatpush.bf16.msra.mxu0 %v4825
    %5860 = vmatmul.bf16.gmra.mxu0 %v2370
    %v5861 = vpop.f32.mrf.mxu0
    %v5862 = vadd.f32 %v5849, %v5861
    %v5863 = vpop.f32.mrf.mxu0
    %5864 = vdwg.mxu0
    %5865 = vmatpush.bf16.msra.mxu0 %v4945
    %5866 = vmatpush.bf16.msra.mxu0 %v4937
    %5867 = vmatpush.bf16.msra.mxu0 %v4929
    %5868 = vmatpush.bf16.msra.mxu0 %v4921
    %5869 = vmatpush.bf16.msra.mxu0 %v4913
    %5870 = vmatpush.bf16.msra.mxu0 %v4905
    %5871 = vmatpush.bf16.msra.mxu0 %v4897
    %5872 = vmatpush.bf16.msra.mxu0 %v4889
    %5873 = vmatmul.bf16.gmra.mxu0 %v2371
    %v5874 = vpop.f32.mrf.mxu0
    %v5875 = vadd.f32 %v5862, %v5874
    %v5876 = vpop.f32.mrf.mxu0
    %5877 = vdwg.mxu0
    %5878 = vmatpush.bf16.msra.mxu0 %v4498
    %5879 = vmatpush.bf16.msra.mxu0 %v4490
    %5880 = vmatpush.bf16.msra.mxu0 %v4482
    %5881 = vmatpush.bf16.msra.mxu0 %v4474
    %5882 = vmatpush.bf16.msra.mxu0 %v4466
    %5883 = vmatpush.bf16.msra.mxu0 %v4458
    %5884 = vmatpush.bf16.msra.mxu0 %v4450
    %5885 = vmatpush.bf16.msra.mxu0 %v4442
    %5886 = vmatmul.bf16.gmra.mxu0 %v2364
    %v5887 = vpop.f32.mrf.mxu0
    %v5888 = vadd.f32 %v2890, %v5887
    %v5889 = vpop.f32.mrf.mxu0
    %5890 = vdwg.mxu0
    %5891 = vmatpush.bf16.msra.mxu0 %v4562
    %5892 = vmatpush.bf16.msra.mxu0 %v4554
    %5893 = vmatpush.bf16.msra.mxu0 %v4546
    %5894 = vmatpush.bf16.msra.mxu0 %v4538
    %5895 = vmatpush.bf16.msra.mxu0 %v4530
    %5896 = vmatpush.bf16.msra.mxu0 %v4522
    %5897 = vmatpush.bf16.msra.mxu0 %v4514
    %5898 = vmatpush.bf16.msra.mxu0 %v4506
    %5899 = vmatmul.bf16.gmra.mxu0 %v2365
    %v5900 = vpop.f32.mrf.mxu0
    %v5901 = vadd.f32 %v5888, %v5900
    %v5902 = vpop.f32.mrf.mxu0
    %5903 = vdwg.mxu0
    %5904 = vmatpush.bf16.msra.mxu0 %v4626
    %5905 = vmatpush.bf16.msra.mxu0 %v4618
    %5906 = vmatpush.bf16.msra.mxu0 %v4610
    %5907 = vmatpush.bf16.msra.mxu0 %v4602
    %5908 = vmatpush.bf16.msra.mxu0 %v4594
    %5909 = vmatpush.bf16.msra.mxu0 %v4586
    %5910 = vmatpush.bf16.msra.mxu0 %v4578
    %5911 = vmatpush.bf16.msra.mxu0 %v4570
    %5912 = vmatmul.bf16.gmra.mxu0 %v2366
    %v5913 = vpop.f32.mrf.mxu0
    %v5914 = vadd.f32 %v5901, %v5913
    %v5915 = vpop.f32.mrf.mxu0
    %5916 = vdwg.mxu0
    %5917 = vmatpush.bf16.msra.mxu0 %v4690
    %5918 = vmatpush.bf16.msra.mxu0 %v4682
    %5919 = vmatpush.bf16.msra.mxu0 %v4674
    %5920 = vmatpush.bf16.msra.mxu0 %v4666
    %5921 = vmatpush.bf16.msra.mxu0 %v4658
    %5922 = vmatpush.bf16.msra.mxu0 %v4650
    %5923 = vmatpush.bf16.msra.mxu0 %v4642
    %5924 = vmatpush.bf16.msra.mxu0 %v4634
    %5925 = vmatmul.bf16.gmra.mxu0 %v2367
    %v5926 = vpop.f32.mrf.mxu0
    %v5927 = vadd.f32 %v5914, %v5926
    %v5928 = vpop.f32.mrf.mxu0
    %5929 = vdwg.mxu0
    %5930 = vmatpush.bf16.msra.mxu0 %v4754
    %5931 = vmatpush.bf16.msra.mxu0 %v4746
    %5932 = vmatpush.bf16.msra.mxu0 %v4738
    %5933 = vmatpush.bf16.msra.mxu0 %v4730
    %5934 = vmatpush.bf16.msra.mxu0 %v4722
    %5935 = vmatpush.bf16.msra.mxu0 %v4714
    %5936 = vmatpush.bf16.msra.mxu0 %v4706
    %5937 = vmatpush.bf16.msra.mxu0 %v4698
    %5938 = vmatmul.bf16.gmra.mxu0 %v2368
    %v5939 = vpop.f32.mrf.mxu0
    %v5940 = vadd.f32 %v5927, %v5939
    %v5941 = vpop.f32.mrf.mxu0
    %5942 = vdwg.mxu0
    %5943 = vmatpush.bf16.msra.mxu0 %v4818
    %5944 = vmatpush.bf16.msra.mxu0 %v4810
    %5945 = vmatpush.bf16.msra.mxu0 %v4802
    %5946 = vmatpush.bf16.msra.mxu0 %v4794
    %5947 = vmatpush.bf16.msra.mxu0 %v4786
    %5948 = vmatpush.bf16.msra.mxu0 %v4778
    %5949 = vmatpush.bf16.msra.mxu0 %v4770
    %5950 = vmatpush.bf16.msra.mxu0 %v4762
    %5951 = vmatmul.bf16.gmra.mxu0 %v2369
    %v5952 = vpop.f32.mrf.mxu0
    %v5953 = vadd.f32 %v5940, %v5952
    %v5954 = vpop.f32.mrf.mxu0
    %5955 = vdwg.mxu0
    %5956 = vmatpush.bf16.msra.mxu0 %v4882
    %5957 = vmatpush.bf16.msra.mxu0 %v4874
    %5958 = vmatpush.bf16.msra.mxu0 %v4866
    %5959 = vmatpush.bf16.msra.mxu0 %v4858
    %5960 = vmatpush.bf16.msra.mxu0 %v4850
    %5961 = vmatpush.bf16.msra.mxu0 %v4842
    %5962 = vmatpush.bf16.msra.mxu0 %v4834
    %5963 = vmatpush.bf16.msra.mxu0 %v4826
    %5964 = vmatmul.bf16.gmra.mxu0 %v2370
    %v5965 = vpop.f32.mrf.mxu0
    %v5966 = vadd.f32 %v5953, %v5965
    %v5967 = vpop.f32.mrf.mxu0
    %5968 = vdwg.mxu0
    %5969 = vmatpush.bf16.msra.mxu0 %v4946
    %5970 = vmatpush.bf16.msra.mxu0 %v4938
    %5971 = vmatpush.bf16.msra.mxu0 %v4930
    %5972 = vmatpush.bf16.msra.mxu0 %v4922
    %5973 = vmatpush.bf16.msra.mxu0 %v4914
    %5974 = vmatpush.bf16.msra.mxu0 %v4906
    %5975 = vmatpush.bf16.msra.mxu0 %v4898
    %5976 = vmatpush.bf16.msra.mxu0 %v4890
    %5977 = vmatmul.bf16.gmra.mxu0 %v2371
    %v5978 = vpop.f32.mrf.mxu0
    %v5979 = vadd.f32 %v5966, %v5978
    %v5980 = vpop.f32.mrf.mxu0
    %5981 = vdwg.mxu0
    %5982 = vmatpush.bf16.msra.mxu0 %v4499
    %5983 = vmatpush.bf16.msra.mxu0 %v4491
    %5984 = vmatpush.bf16.msra.mxu0 %v4483
    %5985 = vmatpush.bf16.msra.mxu0 %v4475
    %5986 = vmatpush.bf16.msra.mxu0 %v4467
    %5987 = vmatpush.bf16.msra.mxu0 %v4459
    %5988 = vmatpush.bf16.msra.mxu0 %v4451
    %5989 = vmatpush.bf16.msra.mxu0 %v4443
    %5990 = vmatmul.bf16.gmra.mxu0 %v2364
    %v5991 = vpop.f32.mrf.mxu0
    %v5992 = vadd.f32 %v2891, %v5991
    %v5993 = vpop.f32.mrf.mxu0
    %5994 = vdwg.mxu0
    %5995 = vmatpush.bf16.msra.mxu0 %v4563
    %5996 = vmatpush.bf16.msra.mxu0 %v4555
    %5997 = vmatpush.bf16.msra.mxu0 %v4547
    %5998 = vmatpush.bf16.msra.mxu0 %v4539
    %5999 = vmatpush.bf16.msra.mxu0 %v4531
    %6000 = vmatpush.bf16.msra.mxu0 %v4523
    %6001 = vmatpush.bf16.msra.mxu0 %v4515
    %6002 = vmatpush.bf16.msra.mxu0 %v4507
    %6003 = vmatmul.bf16.gmra.mxu0 %v2365
    %v6004 = vpop.f32.mrf.mxu0
    %v6005 = vadd.f32 %v5992, %v6004
    %v6006 = vpop.f32.mrf.mxu0
    %6007 = vdwg.mxu0
    %6008 = vmatpush.bf16.msra.mxu0 %v4627
    %6009 = vmatpush.bf16.msra.mxu0 %v4619
    %6010 = vmatpush.bf16.msra.mxu0 %v4611
    %6011 = vmatpush.bf16.msra.mxu0 %v4603
    %6012 = vmatpush.bf16.msra.mxu0 %v4595
    %6013 = vmatpush.bf16.msra.mxu0 %v4587
    %6014 = vmatpush.bf16.msra.mxu0 %v4579
    %6015 = vmatpush.bf16.msra.mxu0 %v4571
    %6016 = vmatmul.bf16.gmra.mxu0 %v2366
    %v6017 = vpop.f32.mrf.mxu0
    %v6018 = vadd.f32 %v6005, %v6017
    %v6019 = vpop.f32.mrf.mxu0
    %6020 = vdwg.mxu0
    %6021 = vmatpush.bf16.msra.mxu0 %v4691
    %6022 = vmatpush.bf16.msra.mxu0 %v4683
    %6023 = vmatpush.bf16.msra.mxu0 %v4675
    %6024 = vmatpush.bf16.msra.mxu0 %v4667
    %6025 = vmatpush.bf16.msra.mxu0 %v4659
    %6026 = vmatpush.bf16.msra.mxu0 %v4651
    %6027 = vmatpush.bf16.msra.mxu0 %v4643
    %6028 = vmatpush.bf16.msra.mxu0 %v4635
    %6029 = vmatmul.bf16.gmra.mxu0 %v2367
    %v6030 = vpop.f32.mrf.mxu0
    %v6031 = vadd.f32 %v6018, %v6030
    %v6032 = vpop.f32.mrf.mxu0
    %6033 = vdwg.mxu0
    %6034 = vmatpush.bf16.msra.mxu0 %v4755
    %6035 = vmatpush.bf16.msra.mxu0 %v4747
    %6036 = vmatpush.bf16.msra.mxu0 %v4739
    %6037 = vmatpush.bf16.msra.mxu0 %v4731
    %6038 = vmatpush.bf16.msra.mxu0 %v4723
    %6039 = vmatpush.bf16.msra.mxu0 %v4715
    %6040 = vmatpush.bf16.msra.mxu0 %v4707
    %6041 = vmatpush.bf16.msra.mxu0 %v4699
    %6042 = vmatmul.bf16.gmra.mxu0 %v2368
    %v6043 = vpop.f32.mrf.mxu0
    %v6044 = vadd.f32 %v6031, %v6043
    %v6045 = vpop.f32.mrf.mxu0
    %6046 = vdwg.mxu0
    %6047 = vmatpush.bf16.msra.mxu0 %v4819
    %6048 = vmatpush.bf16.msra.mxu0 %v4811
    %6049 = vmatpush.bf16.msra.mxu0 %v4803
    %6050 = vmatpush.bf16.msra.mxu0 %v4795
    %6051 = vmatpush.bf16.msra.mxu0 %v4787
    %6052 = vmatpush.bf16.msra.mxu0 %v4779
    %6053 = vmatpush.bf16.msra.mxu0 %v4771
    %6054 = vmatpush.bf16.msra.mxu0 %v4763
    %6055 = vmatmul.bf16.gmra.mxu0 %v2369
    %v6056 = vpop.f32.mrf.mxu0
    %v6057 = vadd.f32 %v6044, %v6056
    %v6058 = vpop.f32.mrf.mxu0
    %6059 = vdwg.mxu0
    %6060 = vmatpush.bf16.msra.mxu0 %v4883
    %6061 = vmatpush.bf16.msra.mxu0 %v4875
    %6062 = vmatpush.bf16.msra.mxu0 %v4867
    %6063 = vmatpush.bf16.msra.mxu0 %v4859
    %6064 = vmatpush.bf16.msra.mxu0 %v4851
    %6065 = vmatpush.bf16.msra.mxu0 %v4843
    %6066 = vmatpush.bf16.msra.mxu0 %v4835
    %6067 = vmatpush.bf16.msra.mxu0 %v4827
    %6068 = vmatmul.bf16.gmra.mxu0 %v2370
    %v6069 = vpop.f32.mrf.mxu0
    %v6070 = vadd.f32 %v6057, %v6069
    %v6071 = vpop.f32.mrf.mxu0
    %6072 = vdwg.mxu0
    %6073 = vmatpush.bf16.msra.mxu0 %v4947
    %6074 = vmatpush.bf16.msra.mxu0 %v4939
    %6075 = vmatpush.bf16.msra.mxu0 %v4931
    %6076 = vmatpush.bf16.msra.mxu0 %v4923
    %6077 = vmatpush.bf16.msra.mxu0 %v4915
    %6078 = vmatpush.bf16.msra.mxu0 %v4907
    %6079 = vmatpush.bf16.msra.mxu0 %v4899
    %6080 = vmatpush.bf16.msra.mxu0 %v4891
    %6081 = vmatmul.bf16.gmra.mxu0 %v2371
    %v6082 = vpop.f32.mrf.mxu0
    %v6083 = vadd.f32 %v6070, %v6082
    %v6084 = vpop.f32.mrf.mxu0
    %6085 = vdwg.mxu0
    %6086 = vmatpush.bf16.msra.mxu0 %v4500
    %6087 = vmatpush.bf16.msra.mxu0 %v4492
    %6088 = vmatpush.bf16.msra.mxu0 %v4484
    %6089 = vmatpush.bf16.msra.mxu0 %v4476
    %6090 = vmatpush.bf16.msra.mxu0 %v4468
    %6091 = vmatpush.bf16.msra.mxu0 %v4460
    %6092 = vmatpush.bf16.msra.mxu0 %v4452
    %6093 = vmatpush.bf16.msra.mxu0 %v4444
    %6094 = vmatmul.bf16.gmra.mxu0 %v2364
    %v6095 = vpop.f32.mrf.mxu0
    %v6096 = vadd.f32 %v2892, %v6095
    %v6097 = vpop.f32.mrf.mxu0
    %6098 = vdwg.mxu0
    %6099 = vmatpush.bf16.msra.mxu0 %v4564
    %6100 = vmatpush.bf16.msra.mxu0 %v4556
    %6101 = vmatpush.bf16.msra.mxu0 %v4548
    %6102 = vmatpush.bf16.msra.mxu0 %v4540
    %6103 = vmatpush.bf16.msra.mxu0 %v4532
    %6104 = vmatpush.bf16.msra.mxu0 %v4524
    %6105 = vmatpush.bf16.msra.mxu0 %v4516
    %6106 = vmatpush.bf16.msra.mxu0 %v4508
    %6107 = vmatmul.bf16.gmra.mxu0 %v2365
    %v6108 = vpop.f32.mrf.mxu0
    %v6109 = vadd.f32 %v6096, %v6108
    %v6110 = vpop.f32.mrf.mxu0
    %6111 = vdwg.mxu0
    %6112 = vmatpush.bf16.msra.mxu0 %v4628
    %6113 = vmatpush.bf16.msra.mxu0 %v4620
    %6114 = vmatpush.bf16.msra.mxu0 %v4612
    %6115 = vmatpush.bf16.msra.mxu0 %v4604
    %6116 = vmatpush.bf16.msra.mxu0 %v4596
    %6117 = vmatpush.bf16.msra.mxu0 %v4588
    %6118 = vmatpush.bf16.msra.mxu0 %v4580
    %6119 = vmatpush.bf16.msra.mxu0 %v4572
    %6120 = vmatmul.bf16.gmra.mxu0 %v2366
    %v6121 = vpop.f32.mrf.mxu0
    %v6122 = vadd.f32 %v6109, %v6121
    %v6123 = vpop.f32.mrf.mxu0
    %6124 = vdwg.mxu0
    %6125 = vmatpush.bf16.msra.mxu0 %v4692
    %6126 = vmatpush.bf16.msra.mxu0 %v4684
    %6127 = vmatpush.bf16.msra.mxu0 %v4676
    %6128 = vmatpush.bf16.msra.mxu0 %v4668
    %6129 = vmatpush.bf16.msra.mxu0 %v4660
    %6130 = vmatpush.bf16.msra.mxu0 %v4652
    %6131 = vmatpush.bf16.msra.mxu0 %v4644
    %6132 = vmatpush.bf16.msra.mxu0 %v4636
    %6133 = vmatmul.bf16.gmra.mxu0 %v2367
    %v6134 = vpop.f32.mrf.mxu0
    %v6135 = vadd.f32 %v6122, %v6134
    %v6136 = vpop.f32.mrf.mxu0
    %6137 = vdwg.mxu0
    %6138 = vmatpush.bf16.msra.mxu0 %v4756
    %6139 = vmatpush.bf16.msra.mxu0 %v4748
    %6140 = vmatpush.bf16.msra.mxu0 %v4740
    %6141 = vmatpush.bf16.msra.mxu0 %v4732
    %6142 = vmatpush.bf16.msra.mxu0 %v4724
    %6143 = vmatpush.bf16.msra.mxu0 %v4716
    %6144 = vmatpush.bf16.msra.mxu0 %v4708
    %6145 = vmatpush.bf16.msra.mxu0 %v4700
    %6146 = vmatmul.bf16.gmra.mxu0 %v2368
    %v6147 = vpop.f32.mrf.mxu0
    %v6148 = vadd.f32 %v6135, %v6147
    %v6149 = vpop.f32.mrf.mxu0
    %6150 = vdwg.mxu0
    %6151 = vmatpush.bf16.msra.mxu0 %v4820
    %6152 = vmatpush.bf16.msra.mxu0 %v4812
    %6153 = vmatpush.bf16.msra.mxu0 %v4804
    %6154 = vmatpush.bf16.msra.mxu0 %v4796
    %6155 = vmatpush.bf16.msra.mxu0 %v4788
    %6156 = vmatpush.bf16.msra.mxu0 %v4780
    %6157 = vmatpush.bf16.msra.mxu0 %v4772
    %6158 = vmatpush.bf16.msra.mxu0 %v4764
    %6159 = vmatmul.bf16.gmra.mxu0 %v2369
    %v6160 = vpop.f32.mrf.mxu0
    %v6161 = vadd.f32 %v6148, %v6160
    %v6162 = vpop.f32.mrf.mxu0
    %6163 = vdwg.mxu0
    %6164 = vmatpush.bf16.msra.mxu0 %v4884
    %6165 = vmatpush.bf16.msra.mxu0 %v4876
    %6166 = vmatpush.bf16.msra.mxu0 %v4868
    %6167 = vmatpush.bf16.msra.mxu0 %v4860
    %6168 = vmatpush.bf16.msra.mxu0 %v4852
    %6169 = vmatpush.bf16.msra.mxu0 %v4844
    %6170 = vmatpush.bf16.msra.mxu0 %v4836
    %6171 = vmatpush.bf16.msra.mxu0 %v4828
    %6172 = vmatmul.bf16.gmra.mxu0 %v2370
    %v6173 = vpop.f32.mrf.mxu0
    %v6174 = vadd.f32 %v6161, %v6173
    %v6175 = vpop.f32.mrf.mxu0
    %6176 = vdwg.mxu0
    %6177 = vmatpush.bf16.msra.mxu0 %v4948
    %6178 = vmatpush.bf16.msra.mxu0 %v4940
    %6179 = vmatpush.bf16.msra.mxu0 %v4932
    %6180 = vmatpush.bf16.msra.mxu0 %v4924
    %6181 = vmatpush.bf16.msra.mxu0 %v4916
    %6182 = vmatpush.bf16.msra.mxu0 %v4908
    %6183 = vmatpush.bf16.msra.mxu0 %v4900
    %6184 = vmatpush.bf16.msra.mxu0 %v4892
    %6185 = vmatmul.bf16.gmra.mxu0 %v2371
    %v6186 = vpop.f32.mrf.mxu0
    %v6187 = vadd.f32 %v6174, %v6186
    %v6188 = vpop.f32.mrf.mxu0
    %6189 = vdwg.mxu0
    %6190 = vmatpush.bf16.msra.mxu0 %v4501
    %6191 = vmatpush.bf16.msra.mxu0 %v4493
    %6192 = vmatpush.bf16.msra.mxu0 %v4485
    %6193 = vmatpush.bf16.msra.mxu0 %v4477
    %6194 = vmatpush.bf16.msra.mxu0 %v4469
    %6195 = vmatpush.bf16.msra.mxu0 %v4461
    %6196 = vmatpush.bf16.msra.mxu0 %v4453
    %6197 = vmatpush.bf16.msra.mxu0 %v4445
    %6198 = vmatmul.bf16.gmra.mxu0 %v2364
    %v6199 = vpop.f32.mrf.mxu0
    %v6200 = vadd.f32 %v2893, %v6199
    %v6201 = vpop.f32.mrf.mxu0
    %6202 = vdwg.mxu0
    %6203 = vmatpush.bf16.msra.mxu0 %v4565
    %6204 = vmatpush.bf16.msra.mxu0 %v4557
    %6205 = vmatpush.bf16.msra.mxu0 %v4549
    %6206 = vmatpush.bf16.msra.mxu0 %v4541
    %6207 = vmatpush.bf16.msra.mxu0 %v4533
    %6208 = vmatpush.bf16.msra.mxu0 %v4525
    %6209 = vmatpush.bf16.msra.mxu0 %v4517
    %6210 = vmatpush.bf16.msra.mxu0 %v4509
    %6211 = vmatmul.bf16.gmra.mxu0 %v2365
    %v6212 = vpop.f32.mrf.mxu0
    %v6213 = vadd.f32 %v6200, %v6212
    %v6214 = vpop.f32.mrf.mxu0
    %6215 = vdwg.mxu0
    %6216 = vmatpush.bf16.msra.mxu0 %v4629
    %6217 = vmatpush.bf16.msra.mxu0 %v4621
    %6218 = vmatpush.bf16.msra.mxu0 %v4613
    %6219 = vmatpush.bf16.msra.mxu0 %v4605
    %6220 = vmatpush.bf16.msra.mxu0 %v4597
    %6221 = vmatpush.bf16.msra.mxu0 %v4589
    %6222 = vmatpush.bf16.msra.mxu0 %v4581
    %6223 = vmatpush.bf16.msra.mxu0 %v4573
    %6224 = vmatmul.bf16.gmra.mxu0 %v2366
    %v6225 = vpop.f32.mrf.mxu0
    %v6226 = vadd.f32 %v6213, %v6225
    %v6227 = vpop.f32.mrf.mxu0
    %6228 = vdwg.mxu0
    %6229 = vmatpush.bf16.msra.mxu0 %v4693
    %6230 = vmatpush.bf16.msra.mxu0 %v4685
    %6231 = vmatpush.bf16.msra.mxu0 %v4677
    %6232 = vmatpush.bf16.msra.mxu0 %v4669
    %6233 = vmatpush.bf16.msra.mxu0 %v4661
    %6234 = vmatpush.bf16.msra.mxu0 %v4653
    %6235 = vmatpush.bf16.msra.mxu0 %v4645
    %6236 = vmatpush.bf16.msra.mxu0 %v4637
    %6237 = vmatmul.bf16.gmra.mxu0 %v2367
    %v6238 = vpop.f32.mrf.mxu0
    %v6239 = vadd.f32 %v6226, %v6238
    %v6240 = vpop.f32.mrf.mxu0
    %6241 = vdwg.mxu0
    %6242 = vmatpush.bf16.msra.mxu0 %v4757
    %6243 = vmatpush.bf16.msra.mxu0 %v4749
    %6244 = vmatpush.bf16.msra.mxu0 %v4741
    %6245 = vmatpush.bf16.msra.mxu0 %v4733
    %6246 = vmatpush.bf16.msra.mxu0 %v4725
    %6247 = vmatpush.bf16.msra.mxu0 %v4717
    %6248 = vmatpush.bf16.msra.mxu0 %v4709
    %6249 = vmatpush.bf16.msra.mxu0 %v4701
    %6250 = vmatmul.bf16.gmra.mxu0 %v2368
    %v6251 = vpop.f32.mrf.mxu0
    %v6252 = vadd.f32 %v6239, %v6251
    %v6253 = vpop.f32.mrf.mxu0
    %6254 = vdwg.mxu0
    %6255 = vmatpush.bf16.msra.mxu0 %v4821
    %6256 = vmatpush.bf16.msra.mxu0 %v4813
    %6257 = vmatpush.bf16.msra.mxu0 %v4805
    %6258 = vmatpush.bf16.msra.mxu0 %v4797
    %6259 = vmatpush.bf16.msra.mxu0 %v4789
    %6260 = vmatpush.bf16.msra.mxu0 %v4781
    %6261 = vmatpush.bf16.msra.mxu0 %v4773
    %6262 = vmatpush.bf16.msra.mxu0 %v4765
    %6263 = vmatmul.bf16.gmra.mxu0 %v2369
    %v6264 = vpop.f32.mrf.mxu0
    %v6265 = vadd.f32 %v6252, %v6264
    %v6266 = vpop.f32.mrf.mxu0
    %6267 = vdwg.mxu0
    %6268 = vmatpush.bf16.msra.mxu0 %v4885
    %6269 = vmatpush.bf16.msra.mxu0 %v4877
    %6270 = vmatpush.bf16.msra.mxu0 %v4869
    %6271 = vmatpush.bf16.msra.mxu0 %v4861
    %6272 = vmatpush.bf16.msra.mxu0 %v4853
    %6273 = vmatpush.bf16.msra.mxu0 %v4845
    %6274 = vmatpush.bf16.msra.mxu0 %v4837
    %6275 = vmatpush.bf16.msra.mxu0 %v4829
    %6276 = vmatmul.bf16.gmra.mxu0 %v2370
    %v6277 = vpop.f32.mrf.mxu0
    %v6278 = vadd.f32 %v6265, %v6277
    %v6279 = vpop.f32.mrf.mxu0
    %6280 = vdwg.mxu0
    %6281 = vmatpush.bf16.msra.mxu0 %v4949
    %6282 = vmatpush.bf16.msra.mxu0 %v4941
    %6283 = vmatpush.bf16.msra.mxu0 %v4933
    %6284 = vmatpush.bf16.msra.mxu0 %v4925
    %6285 = vmatpush.bf16.msra.mxu0 %v4917
    %6286 = vmatpush.bf16.msra.mxu0 %v4909
    %6287 = vmatpush.bf16.msra.mxu0 %v4901
    %6288 = vmatpush.bf16.msra.mxu0 %v4893
    %6289 = vmatmul.bf16.gmra.mxu0 %v2371
    %v6290 = vpop.f32.mrf.mxu0
    %v6291 = vadd.f32 %v6278, %v6290
    %v6292 = vpop.f32.mrf.mxu0
    %6293 = vdwg.mxu0
    %v6294 = vmax.f32 %v5563, 0.0
    %v6295 = vmax.f32 %v5667, 0.0
    %v6296 = vmax.f32 %v5771, 0.0
    %v6297 = vmax.f32 %v5875, 0.0
    %v6298 = vmax.f32 %v5979, 0.0
    %v6299 = vmax.f32 %v6083, 0.0
    %v6300 = vmax.f32 %v6187, 0.0
    %v6301 = vmax.f32 %v6291, 0.0
    %v6302 = vpack.c.bf16 %v6294, %v6294
    %v6303 = vpack.c.bf16 %v6295, %v6295
    %v6304 = vpack.c.bf16 %v6296, %v6296
    %v6305 = vpack.c.bf16 %v6297, %v6297
    %v6306 = vpack.c.bf16 %v6298, %v6298
    %v6307 = vpack.c.bf16 %v6299, %v6299
    %v6308 = vpack.c.bf16 %v6300, %v6300
    %v6309 = vpack.c.bf16 %v6301, %v6301
    %v6310 = vld [vmem:[#allocation37] sm:$0xff]
    %v6311 = vld [vmem:[#allocation37 + $0x8] sm:$0xff]
    %v6312 = vld [vmem:[#allocation37 + $0x10] sm:$0xff]
    %v6313 = vld [vmem:[#allocation37 + $0x18] sm:$0xff]
    %v6314 = vld [vmem:[#allocation37 + $0x20] sm:$0xff]
    %v6315 = vld [vmem:[#allocation37 + $0x28] sm:$0xff]
    %v6316 = vld [vmem:[#allocation37 + $0x30] sm:$0xff]
    %v6317 = vld [vmem:[#allocation37 + $0x38] sm:$0xff]
    %v6318 = vld [vmem:[#allocation37 + $0x40] sm:$0xff]
    %v6319 = vld [vmem:[#allocation37 + $0x48] sm:$0xff]
    %v6320 = vld [vmem:[#allocation37 + $0x50] sm:$0xff]
    %v6321 = vld [vmem:[#allocation37 + $0x58] sm:$0xff]
    %v6322 = vld [vmem:[#allocation37 + $0x60] sm:$0xff]
    %v6323 = vld [vmem:[#allocation37 + $0x68] sm:$0xff]
    %v6324 = vld [vmem:[#allocation37 + $0x70] sm:$0xff]
    %v6325 = vld [vmem:[#allocation37 + $0x78] sm:$0xff]
    %v6326 = vld [vmem:[#allocation37 + $0x80] sm:$0xff]
    %v6327 = vld [vmem:[#allocation37 + $0x88] sm:$0xff]
    %v6328 = vld [vmem:[#allocation37 + $0x90] sm:$0xff]
    %v6329 = vld [vmem:[#allocation37 + $0x98] sm:$0xff]
    %v6330 = vld [vmem:[#allocation37 + $0xa0] sm:$0xff]
    %v6331 = vld [vmem:[#allocation37 + $0xa8] sm:$0xff]
    %v6332 = vld [vmem:[#allocation37 + $0xb0] sm:$0xff]
    %v6333 = vld [vmem:[#allocation37 + $0xb8] sm:$0xff]
    %v6334 = vld [vmem:[#allocation37 + $0xc0] sm:$0xff]
    %v6335 = vld [vmem:[#allocation37 + $0xc8] sm:$0xff]
    %v6336 = vld [vmem:[#allocation37 + $0xd0] sm:$0xff]
    %v6337 = vld [vmem:[#allocation37 + $0xd8] sm:$0xff]
    %v6338 = vld [vmem:[#allocation37 + $0xe0] sm:$0xff]
    %v6339 = vld [vmem:[#allocation37 + $0xe8] sm:$0xff]
    %v6340 = vld [vmem:[#allocation37 + $0xf0] sm:$0xff]
    %v6341 = vld [vmem:[#allocation37 + $0xf8] sm:$0xff]
    %v6342 = vld [vmem:[#allocation37 + $0x100] sm:$0xff]
    %v6343 = vld [vmem:[#allocation37 + $0x108] sm:$0xff]
    %v6344 = vld [vmem:[#allocation37 + $0x110] sm:$0xff]
    %v6345 = vld [vmem:[#allocation37 + $0x118] sm:$0xff]
    %v6346 = vld [vmem:[#allocation37 + $0x120] sm:$0xff]
    %v6347 = vld [vmem:[#allocation37 + $0x128] sm:$0xff]
    %v6348 = vld [vmem:[#allocation37 + $0x130] sm:$0xff]
    %v6349 = vld [vmem:[#allocation37 + $0x138] sm:$0xff]
    %v6350 = vld [vmem:[#allocation37 + $0x140] sm:$0xff]
    %v6351 = vld [vmem:[#allocation37 + $0x148] sm:$0xff]
    %v6352 = vld [vmem:[#allocation37 + $0x150] sm:$0xff]
    %v6353 = vld [vmem:[#allocation37 + $0x158] sm:$0xff]
    %v6354 = vld [vmem:[#allocation37 + $0x160] sm:$0xff]
    %v6355 = vld [vmem:[#allocation37 + $0x168] sm:$0xff]
    %v6356 = vld [vmem:[#allocation37 + $0x170] sm:$0xff]
    %v6357 = vld [vmem:[#allocation37 + $0x178] sm:$0xff]
    %v6358 = vld [vmem:[#allocation37 + $0x180] sm:$0xff]
    %v6359 = vld [vmem:[#allocation37 + $0x188] sm:$0xff]
    %v6360 = vld [vmem:[#allocation37 + $0x190] sm:$0xff]
    %v6361 = vld [vmem:[#allocation37 + $0x198] sm:$0xff]
    %v6362 = vld [vmem:[#allocation37 + $0x1a0] sm:$0xff]
    %v6363 = vld [vmem:[#allocation37 + $0x1a8] sm:$0xff]
    %v6364 = vld [vmem:[#allocation37 + $0x1b0] sm:$0xff]
    %v6365 = vld [vmem:[#allocation37 + $0x1b8] sm:$0xff]
    %v6366 = vld [vmem:[#allocation37 + $0x1c0] sm:$0xff]
    %v6367 = vld [vmem:[#allocation37 + $0x1c8] sm:$0xff]
    %v6368 = vld [vmem:[#allocation37 + $0x1d0] sm:$0xff]
    %v6369 = vld [vmem:[#allocation37 + $0x1d8] sm:$0xff]
    %v6370 = vld [vmem:[#allocation37 + $0x1e0] sm:$0xff]
    %v6371 = vld [vmem:[#allocation37 + $0x1e8] sm:$0xff]
    %v6372 = vld [vmem:[#allocation37 + $0x1f0] sm:$0xff]
    %v6373 = vld [vmem:[#allocation37 + $0x1f8] sm:$0xff]
    %v6374 = vld [vmem:[#allocation37 + $0x200] sm:$0xff]
    %v6375 = vld [vmem:[#allocation37 + $0x208] sm:$0xff]
    %v6376 = vld [vmem:[#allocation37 + $0x210] sm:$0xff]
    %v6377 = vld [vmem:[#allocation37 + $0x218] sm:$0xff]
    %v6378 = vld [vmem:[#allocation37 + $0x220] sm:$0xff]
    %v6379 = vld [vmem:[#allocation37 + $0x228] sm:$0xff]
    %v6380 = vld [vmem:[#allocation37 + $0x230] sm:$0xff]
    %v6381 = vld [vmem:[#allocation37 + $0x238] sm:$0xff]
    %v6382 = vld [vmem:[#allocation37 + $0x240] sm:$0xff]
    %v6383 = vld [vmem:[#allocation37 + $0x248] sm:$0xff]
    %v6384 = vld [vmem:[#allocation37 + $0x250] sm:$0xff]
    %v6385 = vld [vmem:[#allocation37 + $0x258] sm:$0xff]
    %v6386 = vld [vmem:[#allocation37 + $0x260] sm:$0xff]
    %v6387 = vld [vmem:[#allocation37 + $0x268] sm:$0xff]
    %v6388 = vld [vmem:[#allocation37 + $0x270] sm:$0xff]
    %v6389 = vld [vmem:[#allocation37 + $0x278] sm:$0xff]
    %v6390 = vld [vmem:[#allocation37 + $0x280] sm:$0xff]
    %v6391 = vld [vmem:[#allocation37 + $0x288] sm:$0xff]
    %v6392 = vld [vmem:[#allocation37 + $0x290] sm:$0xff]
    %v6393 = vld [vmem:[#allocation37 + $0x298] sm:$0xff]
    %v6394 = vld [vmem:[#allocation37 + $0x2a0] sm:$0xff]
    %v6395 = vld [vmem:[#allocation37 + $0x2a8] sm:$0xff]
    %v6396 = vld [vmem:[#allocation37 + $0x2b0] sm:$0xff]
    %v6397 = vld [vmem:[#allocation37 + $0x2b8] sm:$0xff]
    %v6398 = vld [vmem:[#allocation37 + $0x2c0] sm:$0xff]
    %v6399 = vld [vmem:[#allocation37 + $0x2c8] sm:$0xff]
    %v6400 = vld [vmem:[#allocation37 + $0x2d0] sm:$0xff]
    %v6401 = vld [vmem:[#allocation37 + $0x2d8] sm:$0xff]
    %v6402 = vld [vmem:[#allocation37 + $0x2e0] sm:$0xff]
    %v6403 = vld [vmem:[#allocation37 + $0x2e8] sm:$0xff]
    %v6404 = vld [vmem:[#allocation37 + $0x2f0] sm:$0xff]
    %v6405 = vld [vmem:[#allocation37 + $0x2f8] sm:$0xff]
    %v6406 = vld [vmem:[#allocation37 + $0x300] sm:$0xff]
    %v6407 = vld [vmem:[#allocation37 + $0x308] sm:$0xff]
    %v6408 = vld [vmem:[#allocation37 + $0x310] sm:$0xff]
    %v6409 = vld [vmem:[#allocation37 + $0x318] sm:$0xff]
    %v6410 = vld [vmem:[#allocation37 + $0x320] sm:$0xff]
    %v6411 = vld [vmem:[#allocation37 + $0x328] sm:$0xff]
    %v6412 = vld [vmem:[#allocation37 + $0x330] sm:$0xff]
    %v6413 = vld [vmem:[#allocation37 + $0x338] sm:$0xff]
    %v6414 = vld [vmem:[#allocation37 + $0x340] sm:$0xff]
    %v6415 = vld [vmem:[#allocation37 + $0x348] sm:$0xff]
    %v6416 = vld [vmem:[#allocation37 + $0x350] sm:$0xff]
    %v6417 = vld [vmem:[#allocation37 + $0x358] sm:$0xff]
    %v6418 = vld [vmem:[#allocation37 + $0x360] sm:$0xff]
    %v6419 = vld [vmem:[#allocation37 + $0x368] sm:$0xff]
    %v6420 = vld [vmem:[#allocation37 + $0x370] sm:$0xff]
    %v6421 = vld [vmem:[#allocation37 + $0x378] sm:$0xff]
    %v6422 = vld [vmem:[#allocation37 + $0x380] sm:$0xff]
    %v6423 = vld [vmem:[#allocation37 + $0x388] sm:$0xff]
    %v6424 = vld [vmem:[#allocation37 + $0x390] sm:$0xff]
    %v6425 = vld [vmem:[#allocation37 + $0x398] sm:$0xff]
    %v6426 = vld [vmem:[#allocation37 + $0x3a0] sm:$0xff]
    %v6427 = vld [vmem:[#allocation37 + $0x3a8] sm:$0xff]
    %v6428 = vld [vmem:[#allocation37 + $0x3b0] sm:$0xff]
    %v6429 = vld [vmem:[#allocation37 + $0x3b8] sm:$0xff]
    %v6430 = vld [vmem:[#allocation37 + $0x3c0] sm:$0xff]
    %v6431 = vld [vmem:[#allocation37 + $0x3c8] sm:$0xff]
    %v6432 = vld [vmem:[#allocation37 + $0x3d0] sm:$0xff]
    %v6433 = vld [vmem:[#allocation37 + $0x3d8] sm:$0xff]
    %v6434 = vld [vmem:[#allocation37 + $0x3e0] sm:$0xff]
    %v6435 = vld [vmem:[#allocation37 + $0x3e8] sm:$0xff]
    %v6436 = vld [vmem:[#allocation37 + $0x3f0] sm:$0xff]
    %v6437 = vld [vmem:[#allocation37 + $0x3f8] sm:$0xff]
    %v6438 = vld [vmem:[#allocation37 + $0x400] sm:$0xff]
    %v6439 = vld [vmem:[#allocation37 + $0x408] sm:$0xff]
    %v6440 = vld [vmem:[#allocation37 + $0x410] sm:$0xff]
    %v6441 = vld [vmem:[#allocation37 + $0x418] sm:$0xff]
    %v6442 = vld [vmem:[#allocation37 + $0x420] sm:$0xff]
    %v6443 = vld [vmem:[#allocation37 + $0x428] sm:$0xff]
    %v6444 = vld [vmem:[#allocation37 + $0x430] sm:$0xff]
    %v6445 = vld [vmem:[#allocation37 + $0x438] sm:$0xff]
    %v6446 = vld [vmem:[#allocation37 + $0x440] sm:$0xff]
    %v6447 = vld [vmem:[#allocation37 + $0x448] sm:$0xff]
    %v6448 = vld [vmem:[#allocation37 + $0x450] sm:$0xff]
    %v6449 = vld [vmem:[#allocation37 + $0x458] sm:$0xff]
    %v6450 = vld [vmem:[#allocation37 + $0x460] sm:$0xff]
    %v6451 = vld [vmem:[#allocation37 + $0x468] sm:$0xff]
    %v6452 = vld [vmem:[#allocation37 + $0x470] sm:$0xff]
    %v6453 = vld [vmem:[#allocation37 + $0x478] sm:$0xff]
    %v6454 = vld [vmem:[#allocation37 + $0x480] sm:$0xff]
    %v6455 = vld [vmem:[#allocation37 + $0x488] sm:$0xff]
    %v6456 = vld [vmem:[#allocation37 + $0x490] sm:$0xff]
    %v6457 = vld [vmem:[#allocation37 + $0x498] sm:$0xff]
    %v6458 = vld [vmem:[#allocation37 + $0x4a0] sm:$0xff]
    %v6459 = vld [vmem:[#allocation37 + $0x4a8] sm:$0xff]
    %v6460 = vld [vmem:[#allocation37 + $0x4b0] sm:$0xff]
    %v6461 = vld [vmem:[#allocation37 + $0x4b8] sm:$0xff]
    %v6462 = vld [vmem:[#allocation37 + $0x4c0] sm:$0xff]
    %v6463 = vld [vmem:[#allocation37 + $0x4c8] sm:$0xff]
    %v6464 = vld [vmem:[#allocation37 + $0x4d0] sm:$0xff]
    %v6465 = vld [vmem:[#allocation37 + $0x4d8] sm:$0xff]
    %v6466 = vld [vmem:[#allocation37 + $0x4e0] sm:$0xff]
    %v6467 = vld [vmem:[#allocation37 + $0x4e8] sm:$0xff]
    %v6468 = vld [vmem:[#allocation37 + $0x4f0] sm:$0xff]
    %v6469 = vld [vmem:[#allocation37 + $0x4f8] sm:$0xff]
    %v6470 = vld [vmem:[#allocation37 + $0x500] sm:$0xff]
    %v6471 = vld [vmem:[#allocation37 + $0x508] sm:$0xff]
    %v6472 = vld [vmem:[#allocation37 + $0x510] sm:$0xff]
    %v6473 = vld [vmem:[#allocation37 + $0x518] sm:$0xff]
    %v6474 = vld [vmem:[#allocation37 + $0x520] sm:$0xff]
    %v6475 = vld [vmem:[#allocation37 + $0x528] sm:$0xff]
    %v6476 = vld [vmem:[#allocation37 + $0x530] sm:$0xff]
    %v6477 = vld [vmem:[#allocation37 + $0x538] sm:$0xff]
    %v6478 = vld [vmem:[#allocation37 + $0x540] sm:$0xff]
    %v6479 = vld [vmem:[#allocation37 + $0x548] sm:$0xff]
    %v6480 = vld [vmem:[#allocation37 + $0x550] sm:$0xff]
    %v6481 = vld [vmem:[#allocation37 + $0x558] sm:$0xff]
    %v6482 = vld [vmem:[#allocation37 + $0x560] sm:$0xff]
    %v6483 = vld [vmem:[#allocation37 + $0x568] sm:$0xff]
    %v6484 = vld [vmem:[#allocation37 + $0x570] sm:$0xff]
    %v6485 = vld [vmem:[#allocation37 + $0x578] sm:$0xff]
    %v6486 = vld [vmem:[#allocation37 + $0x580] sm:$0xff]
    %v6487 = vld [vmem:[#allocation37 + $0x588] sm:$0xff]
    %v6488 = vld [vmem:[#allocation37 + $0x590] sm:$0xff]
    %v6489 = vld [vmem:[#allocation37 + $0x598] sm:$0xff]
    %v6490 = vld [vmem:[#allocation37 + $0x5a0] sm:$0xff]
    %v6491 = vld [vmem:[#allocation37 + $0x5a8] sm:$0xff]
    %v6492 = vld [vmem:[#allocation37 + $0x5b0] sm:$0xff]
    %v6493 = vld [vmem:[#allocation37 + $0x5b8] sm:$0xff]
    %v6494 = vld [vmem:[#allocation37 + $0x5c0] sm:$0xff]
    %v6495 = vld [vmem:[#allocation37 + $0x5c8] sm:$0xff]
    %v6496 = vld [vmem:[#allocation37 + $0x5d0] sm:$0xff]
    %v6497 = vld [vmem:[#allocation37 + $0x5d8] sm:$0xff]
    %v6498 = vld [vmem:[#allocation37 + $0x5e0] sm:$0xff]
    %v6499 = vld [vmem:[#allocation37 + $0x5e8] sm:$0xff]
    %v6500 = vld [vmem:[#allocation37 + $0x5f0] sm:$0xff]
    %v6501 = vld [vmem:[#allocation37 + $0x5f8] sm:$0xff]
    %v6502 = vld [vmem:[#allocation37 + $0x600] sm:$0xff]
    %v6503 = vld [vmem:[#allocation37 + $0x608] sm:$0xff]
    %v6504 = vld [vmem:[#allocation37 + $0x610] sm:$0xff]
    %v6505 = vld [vmem:[#allocation37 + $0x618] sm:$0xff]
    %v6506 = vld [vmem:[#allocation37 + $0x620] sm:$0xff]
    %v6507 = vld [vmem:[#allocation37 + $0x628] sm:$0xff]
    %v6508 = vld [vmem:[#allocation37 + $0x630] sm:$0xff]
    %v6509 = vld [vmem:[#allocation37 + $0x638] sm:$0xff]
    %v6510 = vld [vmem:[#allocation37 + $0x640] sm:$0xff]
    %v6511 = vld [vmem:[#allocation37 + $0x648] sm:$0xff]
    %v6512 = vld [vmem:[#allocation37 + $0x650] sm:$0xff]
    %v6513 = vld [vmem:[#allocation37 + $0x658] sm:$0xff]
    %v6514 = vld [vmem:[#allocation37 + $0x660] sm:$0xff]
    %v6515 = vld [vmem:[#allocation37 + $0x668] sm:$0xff]
    %v6516 = vld [vmem:[#allocation37 + $0x670] sm:$0xff]
    %v6517 = vld [vmem:[#allocation37 + $0x678] sm:$0xff]
    %v6518 = vld [vmem:[#allocation37 + $0x680] sm:$0xff]
    %v6519 = vld [vmem:[#allocation37 + $0x688] sm:$0xff]
    %v6520 = vld [vmem:[#allocation37 + $0x690] sm:$0xff]
    %v6521 = vld [vmem:[#allocation37 + $0x698] sm:$0xff]
    %v6522 = vld [vmem:[#allocation37 + $0x6a0] sm:$0xff]
    %v6523 = vld [vmem:[#allocation37 + $0x6a8] sm:$0xff]
    %v6524 = vld [vmem:[#allocation37 + $0x6b0] sm:$0xff]
    %v6525 = vld [vmem:[#allocation37 + $0x6b8] sm:$0xff]
    %v6526 = vld [vmem:[#allocation37 + $0x6c0] sm:$0xff]
    %v6527 = vld [vmem:[#allocation37 + $0x6c8] sm:$0xff]
    %v6528 = vld [vmem:[#allocation37 + $0x6d0] sm:$0xff]
    %v6529 = vld [vmem:[#allocation37 + $0x6d8] sm:$0xff]
    %v6530 = vld [vmem:[#allocation37 + $0x6e0] sm:$0xff]
    %v6531 = vld [vmem:[#allocation37 + $0x6e8] sm:$0xff]
    %v6532 = vld [vmem:[#allocation37 + $0x6f0] sm:$0xff]
    %v6533 = vld [vmem:[#allocation37 + $0x6f8] sm:$0xff]
    %v6534 = vld [vmem:[#allocation37 + $0x700] sm:$0xff]
    %v6535 = vld [vmem:[#allocation37 + $0x708] sm:$0xff]
    %v6536 = vld [vmem:[#allocation37 + $0x710] sm:$0xff]
    %v6537 = vld [vmem:[#allocation37 + $0x718] sm:$0xff]
    %v6538 = vld [vmem:[#allocation37 + $0x720] sm:$0xff]
    %v6539 = vld [vmem:[#allocation37 + $0x728] sm:$0xff]
    %v6540 = vld [vmem:[#allocation37 + $0x730] sm:$0xff]
    %v6541 = vld [vmem:[#allocation37 + $0x738] sm:$0xff]
    %v6542 = vld [vmem:[#allocation37 + $0x740] sm:$0xff]
    %v6543 = vld [vmem:[#allocation37 + $0x748] sm:$0xff]
    %v6544 = vld [vmem:[#allocation37 + $0x750] sm:$0xff]
    %v6545 = vld [vmem:[#allocation37 + $0x758] sm:$0xff]
    %v6546 = vld [vmem:[#allocation37 + $0x760] sm:$0xff]
    %v6547 = vld [vmem:[#allocation37 + $0x768] sm:$0xff]
    %v6548 = vld [vmem:[#allocation37 + $0x770] sm:$0xff]
    %v6549 = vld [vmem:[#allocation37 + $0x778] sm:$0xff]
    %v6550 = vld [vmem:[#allocation37 + $0x780] sm:$0xff]
    %v6551 = vld [vmem:[#allocation37 + $0x788] sm:$0xff]
    %v6552 = vld [vmem:[#allocation37 + $0x790] sm:$0xff]
    %v6553 = vld [vmem:[#allocation37 + $0x798] sm:$0xff]
    %v6554 = vld [vmem:[#allocation37 + $0x7a0] sm:$0xff]
    %v6555 = vld [vmem:[#allocation37 + $0x7a8] sm:$0xff]
    %v6556 = vld [vmem:[#allocation37 + $0x7b0] sm:$0xff]
    %v6557 = vld [vmem:[#allocation37 + $0x7b8] sm:$0xff]
    %v6558 = vld [vmem:[#allocation37 + $0x7c0] sm:$0xff]
    %v6559 = vld [vmem:[#allocation37 + $0x7c8] sm:$0xff]
    %v6560 = vld [vmem:[#allocation37 + $0x7d0] sm:$0xff]
    %v6561 = vld [vmem:[#allocation37 + $0x7d8] sm:$0xff]
    %v6562 = vld [vmem:[#allocation37 + $0x7e0] sm:$0xff]
    %v6563 = vld [vmem:[#allocation37 + $0x7e8] sm:$0xff]
    %v6564 = vld [vmem:[#allocation37 + $0x7f0] sm:$0xff]
    %v6565 = vld [vmem:[#allocation37 + $0x7f8] sm:$0xff]
    %v6566 = vld [vmem:[#allocation38] sm:$0xf]
    %v6568 = vperm.slane %v6566, 0
    %v6569 = vperm.slane %v6566, 1
    %v6570 = vperm.slane %v6566, 2
    %v6571 = vperm.slane %v6566, 3
    %v6832 = vunpack.c.l.b16 %v6310
    %v6833 = vunpack.c.h.b16 %v6310
    %v6834 = vunpack.c.l.b16 %v6311
    %v6835 = vunpack.c.h.b16 %v6311
    %v6836 = vunpack.c.l.b16 %v6312
    %v6837 = vunpack.c.h.b16 %v6312
    %v6838 = vunpack.c.l.b16 %v6313
    %v6839 = vunpack.c.h.b16 %v6313
    %v6840 = vunpack.c.l.b16 %v6314
    %v6841 = vunpack.c.h.b16 %v6314
    %v6842 = vunpack.c.l.b16 %v6315
    %v6843 = vunpack.c.h.b16 %v6315
    %v6844 = vunpack.c.l.b16 %v6316
    %v6845 = vunpack.c.h.b16 %v6316
    %v6846 = vunpack.c.l.b16 %v6317
    %v6847 = vunpack.c.h.b16 %v6317
    %v6848 = vunpack.c.l.b16 %v6318
    %v6849 = vunpack.c.h.b16 %v6318
    %v6850 = vunpack.c.l.b16 %v6319
    %v6851 = vunpack.c.h.b16 %v6319
    %v6852 = vunpack.c.l.b16 %v6320
    %v6853 = vunpack.c.h.b16 %v6320
    %v6854 = vunpack.c.l.b16 %v6321
    %v6855 = vunpack.c.h.b16 %v6321
    %v6856 = vunpack.c.l.b16 %v6322
    %v6857 = vunpack.c.h.b16 %v6322
    %v6858 = vunpack.c.l.b16 %v6323
    %v6859 = vunpack.c.h.b16 %v6323
    %v6860 = vunpack.c.l.b16 %v6324
    %v6861 = vunpack.c.h.b16 %v6324
    %v6862 = vunpack.c.l.b16 %v6325
    %v6863 = vunpack.c.h.b16 %v6325
    %v6864 = vunpack.c.l.b16 %v6326
    %v6865 = vunpack.c.h.b16 %v6326
    %v6866 = vunpack.c.l.b16 %v6327
    %v6867 = vunpack.c.h.b16 %v6327
    %v6868 = vunpack.c.l.b16 %v6328
    %v6869 = vunpack.c.h.b16 %v6328
    %v6870 = vunpack.c.l.b16 %v6329
    %v6871 = vunpack.c.h.b16 %v6329
    %v6872 = vunpack.c.l.b16 %v6330
    %v6873 = vunpack.c.h.b16 %v6330
    %v6874 = vunpack.c.l.b16 %v6331
    %v6875 = vunpack.c.h.b16 %v6331
    %v6876 = vunpack.c.l.b16 %v6332
    %v6877 = vunpack.c.h.b16 %v6332
    %v6878 = vunpack.c.l.b16 %v6333
    %v6879 = vunpack.c.h.b16 %v6333
    %v6880 = vunpack.c.l.b16 %v6334
    %v6881 = vunpack.c.h.b16 %v6334
    %v6882 = vunpack.c.l.b16 %v6335
    %v6883 = vunpack.c.h.b16 %v6335
    %v6884 = vunpack.c.l.b16 %v6336
    %v6885 = vunpack.c.h.b16 %v6336
    %v6886 = vunpack.c.l.b16 %v6337
    %v6887 = vunpack.c.h.b16 %v6337
    %v6888 = vunpack.c.l.b16 %v6338
    %v6889 = vunpack.c.h.b16 %v6338
    %v6890 = vunpack.c.l.b16 %v6339
    %v6891 = vunpack.c.h.b16 %v6339
    %v6892 = vunpack.c.l.b16 %v6340
    %v6893 = vunpack.c.h.b16 %v6340
    %v6894 = vunpack.c.l.b16 %v6341
    %v6895 = vunpack.c.h.b16 %v6341
    %v6896 = vunpack.c.l.b16 %v6342
    %v6897 = vunpack.c.h.b16 %v6342
    %v6898 = vunpack.c.l.b16 %v6343
    %v6899 = vunpack.c.h.b16 %v6343
    %v6900 = vunpack.c.l.b16 %v6344
    %v6901 = vunpack.c.h.b16 %v6344
    %v6902 = vunpack.c.l.b16 %v6345
    %v6903 = vunpack.c.h.b16 %v6345
    %v6904 = vunpack.c.l.b16 %v6346
    %v6905 = vunpack.c.h.b16 %v6346
    %v6906 = vunpack.c.l.b16 %v6347
    %v6907 = vunpack.c.h.b16 %v6347
    %v6908 = vunpack.c.l.b16 %v6348
    %v6909 = vunpack.c.h.b16 %v6348
    %v6910 = vunpack.c.l.b16 %v6349
    %v6911 = vunpack.c.h.b16 %v6349
    %v6912 = vunpack.c.l.b16 %v6350
    %v6913 = vunpack.c.h.b16 %v6350
    %v6914 = vunpack.c.l.b16 %v6351
    %v6915 = vunpack.c.h.b16 %v6351
    %v6916 = vunpack.c.l.b16 %v6352
    %v6917 = vunpack.c.h.b16 %v6352
    %v6918 = vunpack.c.l.b16 %v6353
    %v6919 = vunpack.c.h.b16 %v6353
    %v6920 = vunpack.c.l.b16 %v6354
    %v6921 = vunpack.c.h.b16 %v6354
    %v6922 = vunpack.c.l.b16 %v6355
    %v6923 = vunpack.c.h.b16 %v6355
    %v6924 = vunpack.c.l.b16 %v6356
    %v6925 = vunpack.c.h.b16 %v6356
    %v6926 = vunpack.c.l.b16 %v6357
    %v6927 = vunpack.c.h.b16 %v6357
    %v6928 = vunpack.c.l.b16 %v6358
    %v6929 = vunpack.c.h.b16 %v6358
    %v6930 = vunpack.c.l.b16 %v6359
    %v6931 = vunpack.c.h.b16 %v6359
    %v6932 = vunpack.c.l.b16 %v6360
    %v6933 = vunpack.c.h.b16 %v6360
    %v6934 = vunpack.c.l.b16 %v6361
    %v6935 = vunpack.c.h.b16 %v6361
    %v6936 = vunpack.c.l.b16 %v6362
    %v6937 = vunpack.c.h.b16 %v6362
    %v6938 = vunpack.c.l.b16 %v6363
    %v6939 = vunpack.c.h.b16 %v6363
    %v6940 = vunpack.c.l.b16 %v6364
    %v6941 = vunpack.c.h.b16 %v6364
    %v6942 = vunpack.c.l.b16 %v6365
    %v6943 = vunpack.c.h.b16 %v6365
    %v6944 = vunpack.c.l.b16 %v6366
    %v6945 = vunpack.c.h.b16 %v6366
    %v6946 = vunpack.c.l.b16 %v6367
    %v6947 = vunpack.c.h.b16 %v6367
    %v6948 = vunpack.c.l.b16 %v6368
    %v6949 = vunpack.c.h.b16 %v6368
    %v6950 = vunpack.c.l.b16 %v6369
    %v6951 = vunpack.c.h.b16 %v6369
    %v6952 = vunpack.c.l.b16 %v6370
    %v6953 = vunpack.c.h.b16 %v6370
    %v6954 = vunpack.c.l.b16 %v6371
    %v6955 = vunpack.c.h.b16 %v6371
    %v6956 = vunpack.c.l.b16 %v6372
    %v6957 = vunpack.c.h.b16 %v6372
    %v6958 = vunpack.c.l.b16 %v6373
    %v6959 = vunpack.c.h.b16 %v6373
    %v6960 = vunpack.c.l.b16 %v6374
    %v6961 = vunpack.c.h.b16 %v6374
    %v6962 = vunpack.c.l.b16 %v6375
    %v6963 = vunpack.c.h.b16 %v6375
    %v6964 = vunpack.c.l.b16 %v6376
    %v6965 = vunpack.c.h.b16 %v6376
    %v6966 = vunpack.c.l.b16 %v6377
    %v6967 = vunpack.c.h.b16 %v6377
    %v6968 = vunpack.c.l.b16 %v6378
    %v6969 = vunpack.c.h.b16 %v6378
    %v6970 = vunpack.c.l.b16 %v6379
    %v6971 = vunpack.c.h.b16 %v6379
    %v6972 = vunpack.c.l.b16 %v6380
    %v6973 = vunpack.c.h.b16 %v6380
    %v6974 = vunpack.c.l.b16 %v6381
    %v6975 = vunpack.c.h.b16 %v6381
    %v6976 = vunpack.c.l.b16 %v6382
    %v6977 = vunpack.c.h.b16 %v6382
    %v6978 = vunpack.c.l.b16 %v6383
    %v6979 = vunpack.c.h.b16 %v6383
    %v6980 = vunpack.c.l.b16 %v6384
    %v6981 = vunpack.c.h.b16 %v6384
    %v6982 = vunpack.c.l.b16 %v6385
    %v6983 = vunpack.c.h.b16 %v6385
    %v6984 = vunpack.c.l.b16 %v6386
    %v6985 = vunpack.c.h.b16 %v6386
    %v6986 = vunpack.c.l.b16 %v6387
    %v6987 = vunpack.c.h.b16 %v6387
    %v6988 = vunpack.c.l.b16 %v6388
    %v6989 = vunpack.c.h.b16 %v6388
    %v6990 = vunpack.c.l.b16 %v6389
    %v6991 = vunpack.c.h.b16 %v6389
    %v6992 = vunpack.c.l.b16 %v6390
    %v6993 = vunpack.c.h.b16 %v6390
    %v6994 = vunpack.c.l.b16 %v6391
    %v6995 = vunpack.c.h.b16 %v6391
    %v6996 = vunpack.c.l.b16 %v6392
    %v6997 = vunpack.c.h.b16 %v6392
    %v6998 = vunpack.c.l.b16 %v6393
    %v6999 = vunpack.c.h.b16 %v6393
    %v7000 = vunpack.c.l.b16 %v6394
    %v7001 = vunpack.c.h.b16 %v6394
    %v7002 = vunpack.c.l.b16 %v6395
    %v7003 = vunpack.c.h.b16 %v6395
    %v7004 = vunpack.c.l.b16 %v6396
    %v7005 = vunpack.c.h.b16 %v6396
    %v7006 = vunpack.c.l.b16 %v6397
    %v7007 = vunpack.c.h.b16 %v6397
    %v7008 = vunpack.c.l.b16 %v6398
    %v7009 = vunpack.c.h.b16 %v6398
    %v7010 = vunpack.c.l.b16 %v6399
    %v7011 = vunpack.c.h.b16 %v6399
    %v7012 = vunpack.c.l.b16 %v6400
    %v7013 = vunpack.c.h.b16 %v6400
    %v7014 = vunpack.c.l.b16 %v6401
    %v7015 = vunpack.c.h.b16 %v6401
    %v7016 = vunpack.c.l.b16 %v6402
    %v7017 = vunpack.c.h.b16 %v6402
    %v7018 = vunpack.c.l.b16 %v6403
    %v7019 = vunpack.c.h.b16 %v6403
    %v7020 = vunpack.c.l.b16 %v6404
    %v7021 = vunpack.c.h.b16 %v6404
    %v7022 = vunpack.c.l.b16 %v6405
    %v7023 = vunpack.c.h.b16 %v6405
    %v7024 = vunpack.c.l.b16 %v6406
    %v7025 = vunpack.c.h.b16 %v6406
    %v7026 = vunpack.c.l.b16 %v6407
    %v7027 = vunpack.c.h.b16 %v6407
    %v7028 = vunpack.c.l.b16 %v6408
    %v7029 = vunpack.c.h.b16 %v6408
    %v7030 = vunpack.c.l.b16 %v6409
    %v7031 = vunpack.c.h.b16 %v6409
    %v7032 = vunpack.c.l.b16 %v6410
    %v7033 = vunpack.c.h.b16 %v6410
    %v7034 = vunpack.c.l.b16 %v6411
    %v7035 = vunpack.c.h.b16 %v6411
    %v7036 = vunpack.c.l.b16 %v6412
    %v7037 = vunpack.c.h.b16 %v6412
    %v7038 = vunpack.c.l.b16 %v6413
    %v7039 = vunpack.c.h.b16 %v6413
    %v7040 = vunpack.c.l.b16 %v6414
    %v7041 = vunpack.c.h.b16 %v6414
    %v7042 = vunpack.c.l.b16 %v6415
    %v7043 = vunpack.c.h.b16 %v6415
    %v7044 = vunpack.c.l.b16 %v6416
    %v7045 = vunpack.c.h.b16 %v6416
    %v7046 = vunpack.c.l.b16 %v6417
    %v7047 = vunpack.c.h.b16 %v6417
    %v7048 = vunpack.c.l.b16 %v6418
    %v7049 = vunpack.c.h.b16 %v6418
    %v7050 = vunpack.c.l.b16 %v6419
    %v7051 = vunpack.c.h.b16 %v6419
    %v7052 = vunpack.c.l.b16 %v6420
    %v7053 = vunpack.c.h.b16 %v6420
    %v7054 = vunpack.c.l.b16 %v6421
    %v7055 = vunpack.c.h.b16 %v6421
    %v7056 = vunpack.c.l.b16 %v6422
    %v7057 = vunpack.c.h.b16 %v6422
    %v7058 = vunpack.c.l.b16 %v6423
    %v7059 = vunpack.c.h.b16 %v6423
    %v7060 = vunpack.c.l.b16 %v6424
    %v7061 = vunpack.c.h.b16 %v6424
    %v7062 = vunpack.c.l.b16 %v6425
    %v7063 = vunpack.c.h.b16 %v6425
    %v7064 = vunpack.c.l.b16 %v6426
    %v7065 = vunpack.c.h.b16 %v6426
    %v7066 = vunpack.c.l.b16 %v6427
    %v7067 = vunpack.c.h.b16 %v6427
    %v7068 = vunpack.c.l.b16 %v6428
    %v7069 = vunpack.c.h.b16 %v6428
    %v7070 = vunpack.c.l.b16 %v6429
    %v7071 = vunpack.c.h.b16 %v6429
    %v7072 = vunpack.c.l.b16 %v6430
    %v7073 = vunpack.c.h.b16 %v6430
    %v7074 = vunpack.c.l.b16 %v6431
    %v7075 = vunpack.c.h.b16 %v6431
    %v7076 = vunpack.c.l.b16 %v6432
    %v7077 = vunpack.c.h.b16 %v6432
    %v7078 = vunpack.c.l.b16 %v6433
    %v7079 = vunpack.c.h.b16 %v6433
    %v7080 = vunpack.c.l.b16 %v6434
    %v7081 = vunpack.c.h.b16 %v6434
    %v7082 = vunpack.c.l.b16 %v6435
    %v7083 = vunpack.c.h.b16 %v6435
    %v7084 = vunpack.c.l.b16 %v6436
    %v7085 = vunpack.c.h.b16 %v6436
    %v7086 = vunpack.c.l.b16 %v6437
    %v7087 = vunpack.c.h.b16 %v6437
    %v7088 = vunpack.c.l.b16 %v6438
    %v7089 = vunpack.c.h.b16 %v6438
    %v7090 = vunpack.c.l.b16 %v6439
    %v7091 = vunpack.c.h.b16 %v6439
    %v7092 = vunpack.c.l.b16 %v6440
    %v7093 = vunpack.c.h.b16 %v6440
    %v7094 = vunpack.c.l.b16 %v6441
    %v7095 = vunpack.c.h.b16 %v6441
    %v7096 = vunpack.c.l.b16 %v6442
    %v7097 = vunpack.c.h.b16 %v6442
    %v7098 = vunpack.c.l.b16 %v6443
    %v7099 = vunpack.c.h.b16 %v6443
    %v7100 = vunpack.c.l.b16 %v6444
    %v7101 = vunpack.c.h.b16 %v6444
    %v7102 = vunpack.c.l.b16 %v6445
    %v7103 = vunpack.c.h.b16 %v6445
    %v7104 = vunpack.c.l.b16 %v6446
    %v7105 = vunpack.c.h.b16 %v6446
    %v7106 = vunpack.c.l.b16 %v6447
    %v7107 = vunpack.c.h.b16 %v6447
    %v7108 = vunpack.c.l.b16 %v6448
    %v7109 = vunpack.c.h.b16 %v6448
    %v7110 = vunpack.c.l.b16 %v6449
    %v7111 = vunpack.c.h.b16 %v6449
    %v7112 = vunpack.c.l.b16 %v6450
    %v7113 = vunpack.c.h.b16 %v6450
    %v7114 = vunpack.c.l.b16 %v6451
    %v7115 = vunpack.c.h.b16 %v6451
    %v7116 = vunpack.c.l.b16 %v6452
    %v7117 = vunpack.c.h.b16 %v6452
    %v7118 = vunpack.c.l.b16 %v6453
    %v7119 = vunpack.c.h.b16 %v6453
    %v7120 = vunpack.c.l.b16 %v6454
    %v7121 = vunpack.c.h.b16 %v6454
    %v7122 = vunpack.c.l.b16 %v6455
    %v7123 = vunpack.c.h.b16 %v6455
    %v7124 = vunpack.c.l.b16 %v6456
    %v7125 = vunpack.c.h.b16 %v6456
    %v7126 = vunpack.c.l.b16 %v6457
    %v7127 = vunpack.c.h.b16 %v6457
    %v7128 = vunpack.c.l.b16 %v6458
    %v7129 = vunpack.c.h.b16 %v6458
    %v7130 = vunpack.c.l.b16 %v6459
    %v7131 = vunpack.c.h.b16 %v6459
    %v7132 = vunpack.c.l.b16 %v6460
    %v7133 = vunpack.c.h.b16 %v6460
    %v7134 = vunpack.c.l.b16 %v6461
    %v7135 = vunpack.c.h.b16 %v6461
    %v7136 = vunpack.c.l.b16 %v6462
    %v7137 = vunpack.c.h.b16 %v6462
    %v7138 = vunpack.c.l.b16 %v6463
    %v7139 = vunpack.c.h.b16 %v6463
    %v7140 = vunpack.c.l.b16 %v6464
    %v7141 = vunpack.c.h.b16 %v6464
    %v7142 = vunpack.c.l.b16 %v6465
    %v7143 = vunpack.c.h.b16 %v6465
    %v7144 = vunpack.c.l.b16 %v6466
    %v7145 = vunpack.c.h.b16 %v6466
    %v7146 = vunpack.c.l.b16 %v6467
    %v7147 = vunpack.c.h.b16 %v6467
    %v7148 = vunpack.c.l.b16 %v6468
    %v7149 = vunpack.c.h.b16 %v6468
    %v7150 = vunpack.c.l.b16 %v6469
    %v7151 = vunpack.c.h.b16 %v6469
    %v7152 = vunpack.c.l.b16 %v6470
    %v7153 = vunpack.c.h.b16 %v6470
    %v7154 = vunpack.c.l.b16 %v6471
    %v7155 = vunpack.c.h.b16 %v6471
    %v7156 = vunpack.c.l.b16 %v6472
    %v7157 = vunpack.c.h.b16 %v6472
    %v7158 = vunpack.c.l.b16 %v6473
    %v7159 = vunpack.c.h.b16 %v6473
    %v7160 = vunpack.c.l.b16 %v6474
    %v7161 = vunpack.c.h.b16 %v6474
    %v7162 = vunpack.c.l.b16 %v6475
    %v7163 = vunpack.c.h.b16 %v6475
    %v7164 = vunpack.c.l.b16 %v6476
    %v7165 = vunpack.c.h.b16 %v6476
    %v7166 = vunpack.c.l.b16 %v6477
    %v7167 = vunpack.c.h.b16 %v6477
    %v7168 = vunpack.c.l.b16 %v6478
    %v7169 = vunpack.c.h.b16 %v6478
    %v7170 = vunpack.c.l.b16 %v6479
    %v7171 = vunpack.c.h.b16 %v6479
    %v7172 = vunpack.c.l.b16 %v6480
    %v7173 = vunpack.c.h.b16 %v6480
    %v7174 = vunpack.c.l.b16 %v6481
    %v7175 = vunpack.c.h.b16 %v6481
    %v7176 = vunpack.c.l.b16 %v6482
    %v7177 = vunpack.c.h.b16 %v6482
    %v7178 = vunpack.c.l.b16 %v6483
    %v7179 = vunpack.c.h.b16 %v6483
    %v7180 = vunpack.c.l.b16 %v6484
    %v7181 = vunpack.c.h.b16 %v6484
    %v7182 = vunpack.c.l.b16 %v6485
    %v7183 = vunpack.c.h.b16 %v6485
    %v7184 = vunpack.c.l.b16 %v6486
    %v7185 = vunpack.c.h.b16 %v6486
    %v7186 = vunpack.c.l.b16 %v6487
    %v7187 = vunpack.c.h.b16 %v6487
    %v7188 = vunpack.c.l.b16 %v6488
    %v7189 = vunpack.c.h.b16 %v6488
    %v7190 = vunpack.c.l.b16 %v6489
    %v7191 = vunpack.c.h.b16 %v6489
    %v7192 = vunpack.c.l.b16 %v6490
    %v7193 = vunpack.c.h.b16 %v6490
    %v7194 = vunpack.c.l.b16 %v6491
    %v7195 = vunpack.c.h.b16 %v6491
    %v7196 = vunpack.c.l.b16 %v6492
    %v7197 = vunpack.c.h.b16 %v6492
    %v7198 = vunpack.c.l.b16 %v6493
    %v7199 = vunpack.c.h.b16 %v6493
    %v7200 = vunpack.c.l.b16 %v6494
    %v7201 = vunpack.c.h.b16 %v6494
    %v7202 = vunpack.c.l.b16 %v6495
    %v7203 = vunpack.c.h.b16 %v6495
    %v7204 = vunpack.c.l.b16 %v6496
    %v7205 = vunpack.c.h.b16 %v6496
    %v7206 = vunpack.c.l.b16 %v6497
    %v7207 = vunpack.c.h.b16 %v6497
    %v7208 = vunpack.c.l.b16 %v6498
    %v7209 = vunpack.c.h.b16 %v6498
    %v7210 = vunpack.c.l.b16 %v6499
    %v7211 = vunpack.c.h.b16 %v6499
    %v7212 = vunpack.c.l.b16 %v6500
    %v7213 = vunpack.c.h.b16 %v6500
    %v7214 = vunpack.c.l.b16 %v6501
    %v7215 = vunpack.c.h.b16 %v6501
    %v7216 = vunpack.c.l.b16 %v6502
    %v7217 = vunpack.c.h.b16 %v6502
    %v7218 = vunpack.c.l.b16 %v6503
    %v7219 = vunpack.c.h.b16 %v6503
    %v7220 = vunpack.c.l.b16 %v6504
    %v7221 = vunpack.c.h.b16 %v6504
    %v7222 = vunpack.c.l.b16 %v6505
    %v7223 = vunpack.c.h.b16 %v6505
    %v7224 = vunpack.c.l.b16 %v6506
    %v7225 = vunpack.c.h.b16 %v6506
    %v7226 = vunpack.c.l.b16 %v6507
    %v7227 = vunpack.c.h.b16 %v6507
    %v7228 = vunpack.c.l.b16 %v6508
    %v7229 = vunpack.c.h.b16 %v6508
    %v7230 = vunpack.c.l.b16 %v6509
    %v7231 = vunpack.c.h.b16 %v6509
    %v7232 = vunpack.c.l.b16 %v6510
    %v7233 = vunpack.c.h.b16 %v6510
    %v7234 = vunpack.c.l.b16 %v6511
    %v7235 = vunpack.c.h.b16 %v6511
    %v7236 = vunpack.c.l.b16 %v6512
    %v7237 = vunpack.c.h.b16 %v6512
    %v7238 = vunpack.c.l.b16 %v6513
    %v7239 = vunpack.c.h.b16 %v6513
    %v7240 = vunpack.c.l.b16 %v6514
    %v7241 = vunpack.c.h.b16 %v6514
    %v7242 = vunpack.c.l.b16 %v6515
    %v7243 = vunpack.c.h.b16 %v6515
    %v7244 = vunpack.c.l.b16 %v6516
    %v7245 = vunpack.c.h.b16 %v6516
    %v7246 = vunpack.c.l.b16 %v6517
    %v7247 = vunpack.c.h.b16 %v6517
    %v7248 = vunpack.c.l.b16 %v6518
    %v7249 = vunpack.c.h.b16 %v6518
    %v7250 = vunpack.c.l.b16 %v6519
    %v7251 = vunpack.c.h.b16 %v6519
    %v7252 = vunpack.c.l.b16 %v6520
    %v7253 = vunpack.c.h.b16 %v6520
    %v7254 = vunpack.c.l.b16 %v6521
    %v7255 = vunpack.c.h.b16 %v6521
    %v7256 = vunpack.c.l.b16 %v6522
    %v7257 = vunpack.c.h.b16 %v6522
    %v7258 = vunpack.c.l.b16 %v6523
    %v7259 = vunpack.c.h.b16 %v6523
    %v7260 = vunpack.c.l.b16 %v6524
    %v7261 = vunpack.c.h.b16 %v6524
    %v7262 = vunpack.c.l.b16 %v6525
    %v7263 = vunpack.c.h.b16 %v6525
    %v7264 = vunpack.c.l.b16 %v6526
    %v7265 = vunpack.c.h.b16 %v6526
    %v7266 = vunpack.c.l.b16 %v6527
    %v7267 = vunpack.c.h.b16 %v6527
    %v7268 = vunpack.c.l.b16 %v6528
    %v7269 = vunpack.c.h.b16 %v6528
    %v7270 = vunpack.c.l.b16 %v6529
    %v7271 = vunpack.c.h.b16 %v6529
    %v7272 = vunpack.c.l.b16 %v6530
    %v7273 = vunpack.c.h.b16 %v6530
    %v7274 = vunpack.c.l.b16 %v6531
    %v7275 = vunpack.c.h.b16 %v6531
    %v7276 = vunpack.c.l.b16 %v6532
    %v7277 = vunpack.c.h.b16 %v6532
    %v7278 = vunpack.c.l.b16 %v6533
    %v7279 = vunpack.c.h.b16 %v6533
    %v7280 = vunpack.c.l.b16 %v6534
    %v7281 = vunpack.c.h.b16 %v6534
    %v7282 = vunpack.c.l.b16 %v6535
    %v7283 = vunpack.c.h.b16 %v6535
    %v7284 = vunpack.c.l.b16 %v6536
    %v7285 = vunpack.c.h.b16 %v6536
    %v7286 = vunpack.c.l.b16 %v6537
    %v7287 = vunpack.c.h.b16 %v6537
    %v7288 = vunpack.c.l.b16 %v6538
    %v7289 = vunpack.c.h.b16 %v6538
    %v7290 = vunpack.c.l.b16 %v6539
    %v7291 = vunpack.c.h.b16 %v6539
    %v7292 = vunpack.c.l.b16 %v6540
    %v7293 = vunpack.c.h.b16 %v6540
    %v7294 = vunpack.c.l.b16 %v6541
    %v7295 = vunpack.c.h.b16 %v6541
    %v7296 = vunpack.c.l.b16 %v6542
    %v7297 = vunpack.c.h.b16 %v6542
    %v7298 = vunpack.c.l.b16 %v6543
    %v7299 = vunpack.c.h.b16 %v6543
    %v7300 = vunpack.c.l.b16 %v6544
    %v7301 = vunpack.c.h.b16 %v6544
    %v7302 = vunpack.c.l.b16 %v6545
    %v7303 = vunpack.c.h.b16 %v6545
    %v7304 = vunpack.c.l.b16 %v6546
    %v7305 = vunpack.c.h.b16 %v6546
    %v7306 = vunpack.c.l.b16 %v6547
    %v7307 = vunpack.c.h.b16 %v6547
    %v7308 = vunpack.c.l.b16 %v6548
    %v7309 = vunpack.c.h.b16 %v6548
    %v7310 = vunpack.c.l.b16 %v6549
    %v7311 = vunpack.c.h.b16 %v6549
    %v7312 = vunpack.c.l.b16 %v6550
    %v7313 = vunpack.c.h.b16 %v6550
    %v7314 = vunpack.c.l.b16 %v6551
    %v7315 = vunpack.c.h.b16 %v6551
    %v7316 = vunpack.c.l.b16 %v6552
    %v7317 = vunpack.c.h.b16 %v6552
    %v7318 = vunpack.c.l.b16 %v6553
    %v7319 = vunpack.c.h.b16 %v6553
    %v7320 = vunpack.c.l.b16 %v6554
    %v7321 = vunpack.c.h.b16 %v6554
    %v7322 = vunpack.c.l.b16 %v6555
    %v7323 = vunpack.c.h.b16 %v6555
    %v7324 = vunpack.c.l.b16 %v6556
    %v7325 = vunpack.c.h.b16 %v6556
    %v7326 = vunpack.c.l.b16 %v6557
    %v7327 = vunpack.c.h.b16 %v6557
    %v7328 = vunpack.c.l.b16 %v6558
    %v7329 = vunpack.c.h.b16 %v6558
    %v7330 = vunpack.c.l.b16 %v6559
    %v7331 = vunpack.c.h.b16 %v6559
    %v7332 = vunpack.c.l.b16 %v6560
    %v7333 = vunpack.c.h.b16 %v6560
    %v7334 = vunpack.c.l.b16 %v6561
    %v7335 = vunpack.c.h.b16 %v6561
    %v7336 = vunpack.c.l.b16 %v6562
    %v7337 = vunpack.c.h.b16 %v6562
    %v7338 = vunpack.c.l.b16 %v6563
    %v7339 = vunpack.c.h.b16 %v6563
    %v7340 = vunpack.c.l.b16 %v6564
    %v7341 = vunpack.c.h.b16 %v6564
    %v7342 = vunpack.c.l.b16 %v6565
    %v7343 = vunpack.c.h.b16 %v6565
    %v7344 = vpack.c.b16 %v6836, %v6832
    %v7345 = vpack.c.b16 %v6837, %v6833
    %v7346 = vpack.c.b16 %v6838, %v6834
    %v7347 = vpack.c.b16 %v6839, %v6835
    %v7348 = vpack.c.b16 %v6844, %v6840
    %v7349 = vpack.c.b16 %v6845, %v6841
    %v7350 = vpack.c.b16 %v6846, %v6842
    %v7351 = vpack.c.b16 %v6847, %v6843
    %v7352 = vpack.c.b16 %v6852, %v6848
    %v7353 = vpack.c.b16 %v6853, %v6849
    %v7354 = vpack.c.b16 %v6854, %v6850
    %v7355 = vpack.c.b16 %v6855, %v6851
    %v7356 = vpack.c.b16 %v6860, %v6856
    %v7357 = vpack.c.b16 %v6861, %v6857
    %v7358 = vpack.c.b16 %v6862, %v6858
    %v7359 = vpack.c.b16 %v6863, %v6859
    %v7360 = vpack.c.b16 %v6868, %v6864
    %v7361 = vpack.c.b16 %v6869, %v6865
    %v7362 = vpack.c.b16 %v6870, %v6866
    %v7363 = vpack.c.b16 %v6871, %v6867
    %v7364 = vpack.c.b16 %v6876, %v6872
    %v7365 = vpack.c.b16 %v6877, %v6873
    %v7366 = vpack.c.b16 %v6878, %v6874
    %v7367 = vpack.c.b16 %v6879, %v6875
    %v7368 = vpack.c.b16 %v6884, %v6880
    %v7369 = vpack.c.b16 %v6885, %v6881
    %v7370 = vpack.c.b16 %v6886, %v6882
    %v7371 = vpack.c.b16 %v6887, %v6883
    %v7372 = vpack.c.b16 %v6892, %v6888
    %v7373 = vpack.c.b16 %v6893, %v6889
    %v7374 = vpack.c.b16 %v6894, %v6890
    %v7375 = vpack.c.b16 %v6895, %v6891
    %v7376 = vpack.c.b16 %v6900, %v6896
    %v7377 = vpack.c.b16 %v6901, %v6897
    %v7378 = vpack.c.b16 %v6902, %v6898
    %v7379 = vpack.c.b16 %v6903, %v6899
    %v7380 = vpack.c.b16 %v6908, %v6904
    %v7381 = vpack.c.b16 %v6909, %v6905
    %v7382 = vpack.c.b16 %v6910, %v6906
    %v7383 = vpack.c.b16 %v6911, %v6907
    %v7384 = vpack.c.b16 %v6916, %v6912
    %v7385 = vpack.c.b16 %v6917, %v6913
    %v7386 = vpack.c.b16 %v6918, %v6914
    %v7387 = vpack.c.b16 %v6919, %v6915
    %v7388 = vpack.c.b16 %v6924, %v6920
    %v7389 = vpack.c.b16 %v6925, %v6921
    %v7390 = vpack.c.b16 %v6926, %v6922
    %v7391 = vpack.c.b16 %v6927, %v6923
    %v7392 = vpack.c.b16 %v6932, %v6928
    %v7393 = vpack.c.b16 %v6933, %v6929
    %v7394 = vpack.c.b16 %v6934, %v6930
    %v7395 = vpack.c.b16 %v6935, %v6931
    %v7396 = vpack.c.b16 %v6940, %v6936
    %v7397 = vpack.c.b16 %v6941, %v6937
    %v7398 = vpack.c.b16 %v6942, %v6938
    %v7399 = vpack.c.b16 %v6943, %v6939
    %v7400 = vpack.c.b16 %v6948, %v6944
    %v7401 = vpack.c.b16 %v6949, %v6945
    %v7402 = vpack.c.b16 %v6950, %v6946
    %v7403 = vpack.c.b16 %v6951, %v6947
    %v7404 = vpack.c.b16 %v6956, %v6952
    %v7405 = vpack.c.b16 %v6957, %v6953
    %v7406 = vpack.c.b16 %v6958, %v6954
    %v7407 = vpack.c.b16 %v6959, %v6955
    %v7408 = vpack.c.b16 %v6964, %v6960
    %v7409 = vpack.c.b16 %v6965, %v6961
    %v7410 = vpack.c.b16 %v6966, %v6962
    %v7411 = vpack.c.b16 %v6967, %v6963
    %v7412 = vpack.c.b16 %v6972, %v6968
    %v7413 = vpack.c.b16 %v6973, %v6969
    %v7414 = vpack.c.b16 %v6974, %v6970
    %v7415 = vpack.c.b16 %v6975, %v6971
    %v7416 = vpack.c.b16 %v6980, %v6976
    %v7417 = vpack.c.b16 %v6981, %v6977
    %v7418 = vpack.c.b16 %v6982, %v6978
    %v7419 = vpack.c.b16 %v6983, %v6979
    %v7420 = vpack.c.b16 %v6988, %v6984
    %v7421 = vpack.c.b16 %v6989, %v6985
    %v7422 = vpack.c.b16 %v6990, %v6986
    %v7423 = vpack.c.b16 %v6991, %v6987
    %v7424 = vpack.c.b16 %v6996, %v6992
    %v7425 = vpack.c.b16 %v6997, %v6993
    %v7426 = vpack.c.b16 %v6998, %v6994
    %v7427 = vpack.c.b16 %v6999, %v6995
    %v7428 = vpack.c.b16 %v7004, %v7000
    %v7429 = vpack.c.b16 %v7005, %v7001
    %v7430 = vpack.c.b16 %v7006, %v7002
    %v7431 = vpack.c.b16 %v7007, %v7003
    %v7432 = vpack.c.b16 %v7012, %v7008
    %v7433 = vpack.c.b16 %v7013, %v7009
    %v7434 = vpack.c.b16 %v7014, %v7010
    %v7435 = vpack.c.b16 %v7015, %v7011
    %v7436 = vpack.c.b16 %v7020, %v7016
    %v7437 = vpack.c.b16 %v7021, %v7017
    %v7438 = vpack.c.b16 %v7022, %v7018
    %v7439 = vpack.c.b16 %v7023, %v7019
    %v7440 = vpack.c.b16 %v7028, %v7024
    %v7441 = vpack.c.b16 %v7029, %v7025
    %v7442 = vpack.c.b16 %v7030, %v7026
    %v7443 = vpack.c.b16 %v7031, %v7027
    %v7444 = vpack.c.b16 %v7036, %v7032
    %v7445 = vpack.c.b16 %v7037, %v7033
    %v7446 = vpack.c.b16 %v7038, %v7034
    %v7447 = vpack.c.b16 %v7039, %v7035
    %v7448 = vpack.c.b16 %v7044, %v7040
    %v7449 = vpack.c.b16 %v7045, %v7041
    %v7450 = vpack.c.b16 %v7046, %v7042
    %v7451 = vpack.c.b16 %v7047, %v7043
    %v7452 = vpack.c.b16 %v7052, %v7048
    %v7453 = vpack.c.b16 %v7053, %v7049
    %v7454 = vpack.c.b16 %v7054, %v7050
    %v7455 = vpack.c.b16 %v7055, %v7051
    %v7456 = vpack.c.b16 %v7060, %v7056
    %v7457 = vpack.c.b16 %v7061, %v7057
    %v7458 = vpack.c.b16 %v7062, %v7058
    %v7459 = vpack.c.b16 %v7063, %v7059
    %v7460 = vpack.c.b16 %v7068, %v7064
    %v7461 = vpack.c.b16 %v7069, %v7065
    %v7462 = vpack.c.b16 %v7070, %v7066
    %v7463 = vpack.c.b16 %v7071, %v7067
    %v7464 = vpack.c.b16 %v7076, %v7072
    %v7465 = vpack.c.b16 %v7077, %v7073
    %v7466 = vpack.c.b16 %v7078, %v7074
    %v7467 = vpack.c.b16 %v7079, %v7075
    %v7468 = vpack.c.b16 %v7084, %v7080
    %v7469 = vpack.c.b16 %v7085, %v7081
    %v7470 = vpack.c.b16 %v7086, %v7082
    %v7471 = vpack.c.b16 %v7087, %v7083
    %v7472 = vpack.c.b16 %v7092, %v7088
    %v7473 = vpack.c.b16 %v7093, %v7089
    %v7474 = vpack.c.b16 %v7094, %v7090
    %v7475 = vpack.c.b16 %v7095, %v7091
    %v7476 = vpack.c.b16 %v7100, %v7096
    %v7477 = vpack.c.b16 %v7101, %v7097
    %v7478 = vpack.c.b16 %v7102, %v7098
    %v7479 = vpack.c.b16 %v7103, %v7099
    %v7480 = vpack.c.b16 %v7108, %v7104
    %v7481 = vpack.c.b16 %v7109, %v7105
    %v7482 = vpack.c.b16 %v7110, %v7106
    %v7483 = vpack.c.b16 %v7111, %v7107
    %v7484 = vpack.c.b16 %v7116, %v7112
    %v7485 = vpack.c.b16 %v7117, %v7113
    %v7486 = vpack.c.b16 %v7118, %v7114
    %v7487 = vpack.c.b16 %v7119, %v7115
    %v7488 = vpack.c.b16 %v7124, %v7120
    %v7489 = vpack.c.b16 %v7125, %v7121
    %v7490 = vpack.c.b16 %v7126, %v7122
    %v7491 = vpack.c.b16 %v7127, %v7123
    %v7492 = vpack.c.b16 %v7132, %v7128
    %v7493 = vpack.c.b16 %v7133, %v7129
    %v7494 = vpack.c.b16 %v7134, %v7130
    %v7495 = vpack.c.b16 %v7135, %v7131
    %v7496 = vpack.c.b16 %v7140, %v7136
    %v7497 = vpack.c.b16 %v7141, %v7137
    %v7498 = vpack.c.b16 %v7142, %v7138
    %v7499 = vpack.c.b16 %v7143, %v7139
    %v7500 = vpack.c.b16 %v7148, %v7144
    %v7501 = vpack.c.b16 %v7149, %v7145
    %v7502 = vpack.c.b16 %v7150, %v7146
    %v7503 = vpack.c.b16 %v7151, %v7147
    %v7504 = vpack.c.b16 %v7156, %v7152
    %v7505 = vpack.c.b16 %v7157, %v7153
    %v7506 = vpack.c.b16 %v7158, %v7154
    %v7507 = vpack.c.b16 %v7159, %v7155
    %v7508 = vpack.c.b16 %v7164, %v7160
    %v7509 = vpack.c.b16 %v7165, %v7161
    %v7510 = vpack.c.b16 %v7166, %v7162
    %v7511 = vpack.c.b16 %v7167, %v7163
    %v7512 = vpack.c.b16 %v7172, %v7168
    %v7513 = vpack.c.b16 %v7173, %v7169
    %v7514 = vpack.c.b16 %v7174, %v7170
    %v7515 = vpack.c.b16 %v7175, %v7171
    %v7516 = vpack.c.b16 %v7180, %v7176
    %v7517 = vpack.c.b16 %v7181, %v7177
    %v7518 = vpack.c.b16 %v7182, %v7178
    %v7519 = vpack.c.b16 %v7183, %v7179
    %v7520 = vpack.c.b16 %v7188, %v7184
    %v7521 = vpack.c.b16 %v7189, %v7185
    %v7522 = vpack.c.b16 %v7190, %v7186
    %v7523 = vpack.c.b16 %v7191, %v7187
    %v7524 = vpack.c.b16 %v7196, %v7192
    %v7525 = vpack.c.b16 %v7197, %v7193
    %v7526 = vpack.c.b16 %v7198, %v7194
    %v7527 = vpack.c.b16 %v7199, %v7195
    %v7528 = vpack.c.b16 %v7204, %v7200
    %v7529 = vpack.c.b16 %v7205, %v7201
    %v7530 = vpack.c.b16 %v7206, %v7202
    %v7531 = vpack.c.b16 %v7207, %v7203
    %v7532 = vpack.c.b16 %v7212, %v7208
    %v7533 = vpack.c.b16 %v7213, %v7209
    %v7534 = vpack.c.b16 %v7214, %v7210
    %v7535 = vpack.c.b16 %v7215, %v7211
    %v7536 = vpack.c.b16 %v7220, %v7216
    %v7537 = vpack.c.b16 %v7221, %v7217
    %v7538 = vpack.c.b16 %v7222, %v7218
    %v7539 = vpack.c.b16 %v7223, %v7219
    %v7540 = vpack.c.b16 %v7228, %v7224
    %v7541 = vpack.c.b16 %v7229, %v7225
    %v7542 = vpack.c.b16 %v7230, %v7226
    %v7543 = vpack.c.b16 %v7231, %v7227
    %v7544 = vpack.c.b16 %v7236, %v7232
    %v7545 = vpack.c.b16 %v7237, %v7233
    %v7546 = vpack.c.b16 %v7238, %v7234
    %v7547 = vpack.c.b16 %v7239, %v7235
    %v7548 = vpack.c.b16 %v7244, %v7240
    %v7549 = vpack.c.b16 %v7245, %v7241
    %v7550 = vpack.c.b16 %v7246, %v7242
    %v7551 = vpack.c.b16 %v7247, %v7243
    %v7552 = vpack.c.b16 %v7252, %v7248
    %v7553 = vpack.c.b16 %v7253, %v7249
    %v7554 = vpack.c.b16 %v7254, %v7250
    %v7555 = vpack.c.b16 %v7255, %v7251
    %v7556 = vpack.c.b16 %v7260, %v7256
    %v7557 = vpack.c.b16 %v7261, %v7257
    %v7558 = vpack.c.b16 %v7262, %v7258
    %v7559 = vpack.c.b16 %v7263, %v7259
    %v7560 = vpack.c.b16 %v7268, %v7264
    %v7561 = vpack.c.b16 %v7269, %v7265
    %v7562 = vpack.c.b16 %v7270, %v7266
    %v7563 = vpack.c.b16 %v7271, %v7267
    %v7564 = vpack.c.b16 %v7276, %v7272
    %v7565 = vpack.c.b16 %v7277, %v7273
    %v7566 = vpack.c.b16 %v7278, %v7274
    %v7567 = vpack.c.b16 %v7279, %v7275
    %v7568 = vpack.c.b16 %v7284, %v7280
    %v7569 = vpack.c.b16 %v7285, %v7281
    %v7570 = vpack.c.b16 %v7286, %v7282
    %v7571 = vpack.c.b16 %v7287, %v7283
    %v7572 = vpack.c.b16 %v7292, %v7288
    %v7573 = vpack.c.b16 %v7293, %v7289
    %v7574 = vpack.c.b16 %v7294, %v7290
    %v7575 = vpack.c.b16 %v7295, %v7291
    %v7576 = vpack.c.b16 %v7300, %v7296
    %v7577 = vpack.c.b16 %v7301, %v7297
    %v7578 = vpack.c.b16 %v7302, %v7298
    %v7579 = vpack.c.b16 %v7303, %v7299
    %v7580 = vpack.c.b16 %v7308, %v7304
    %v7581 = vpack.c.b16 %v7309, %v7305
    %v7582 = vpack.c.b16 %v7310, %v7306
    %v7583 = vpack.c.b16 %v7311, %v7307
    %v7584 = vpack.c.b16 %v7316, %v7312
    %v7585 = vpack.c.b16 %v7317, %v7313
    %v7586 = vpack.c.b16 %v7318, %v7314
    %v7587 = vpack.c.b16 %v7319, %v7315
    %v7588 = vpack.c.b16 %v7324, %v7320
    %v7589 = vpack.c.b16 %v7325, %v7321
    %v7590 = vpack.c.b16 %v7326, %v7322
    %v7591 = vpack.c.b16 %v7327, %v7323
    %v7592 = vpack.c.b16 %v7332, %v7328
    %v7593 = vpack.c.b16 %v7333, %v7329
    %v7594 = vpack.c.b16 %v7334, %v7330
    %v7595 = vpack.c.b16 %v7335, %v7331
    %v7596 = vpack.c.b16 %v7340, %v7336
    %v7597 = vpack.c.b16 %v7341, %v7337
    %v7598 = vpack.c.b16 %v7342, %v7338
    %v7599 = vpack.c.b16 %v7343, %v7339
    %7856 = vmatpush.bf16.msra.mxu0 %v7372
    %7857 = vmatpush.bf16.msra.mxu0 %v7368
    %7858 = vmatpush.bf16.msra.mxu0 %v7364
    %7859 = vmatpush.bf16.msra.mxu0 %v7360
    %7860 = vmatpush.bf16.msra.mxu0 %v7356
    %7861 = vmatpush.bf16.msra.mxu0 %v7352
    %7862 = vmatpush.bf16.msra.mxu0 %v7348
    %7863 = vmatpush.bf16.msra.mxu0 %v7344
    %7864 = vmatmul.bf16.gmra.mxu0 %v6302
    %v7865 = vpop.f32.mrf.mxu0
    %v7866 = vadd.f32 %v6568, %v7865
    %v7867 = vpop.f32.mrf.mxu0
    %7868 = vdwg.mxu0
    %7869 = vmatpush.bf16.msra.mxu0 %v7404
    %7870 = vmatpush.bf16.msra.mxu0 %v7400
    %7871 = vmatpush.bf16.msra.mxu0 %v7396
    %7872 = vmatpush.bf16.msra.mxu0 %v7392
    %7873 = vmatpush.bf16.msra.mxu0 %v7388
    %7874 = vmatpush.bf16.msra.mxu0 %v7384
    %7875 = vmatpush.bf16.msra.mxu0 %v7380
    %7876 = vmatpush.bf16.msra.mxu0 %v7376
    %7877 = vmatmul.bf16.gmra.mxu0 %v6303
    %v7878 = vpop.f32.mrf.mxu0
    %v7879 = vadd.f32 %v7866, %v7878
    %v7880 = vpop.f32.mrf.mxu0
    %7881 = vdwg.mxu0
    %7882 = vmatpush.bf16.msra.mxu0 %v7436
    %7883 = vmatpush.bf16.msra.mxu0 %v7432
    %7884 = vmatpush.bf16.msra.mxu0 %v7428
    %7885 = vmatpush.bf16.msra.mxu0 %v7424
    %7886 = vmatpush.bf16.msra.mxu0 %v7420
    %7887 = vmatpush.bf16.msra.mxu0 %v7416
    %7888 = vmatpush.bf16.msra.mxu0 %v7412
    %7889 = vmatpush.bf16.msra.mxu0 %v7408
    %7890 = vmatmul.bf16.gmra.mxu0 %v6304
    %v7891 = vpop.f32.mrf.mxu0
    %v7892 = vadd.f32 %v7879, %v7891
    %v7893 = vpop.f32.mrf.mxu0
    %7894 = vdwg.mxu0
    %7895 = vmatpush.bf16.msra.mxu0 %v7468
    %7896 = vmatpush.bf16.msra.mxu0 %v7464
    %7897 = vmatpush.bf16.msra.mxu0 %v7460
    %7898 = vmatpush.bf16.msra.mxu0 %v7456
    %7899 = vmatpush.bf16.msra.mxu0 %v7452
    %7900 = vmatpush.bf16.msra.mxu0 %v7448
    %7901 = vmatpush.bf16.msra.mxu0 %v7444
    %7902 = vmatpush.bf16.msra.mxu0 %v7440
    %7903 = vmatmul.bf16.gmra.mxu0 %v6305
    %v7904 = vpop.f32.mrf.mxu0
    %v7905 = vadd.f32 %v7892, %v7904
    %v7906 = vpop.f32.mrf.mxu0
    %7907 = vdwg.mxu0
    %7908 = vmatpush.bf16.msra.mxu0 %v7500
    %7909 = vmatpush.bf16.msra.mxu0 %v7496
    %7910 = vmatpush.bf16.msra.mxu0 %v7492
    %7911 = vmatpush.bf16.msra.mxu0 %v7488
    %7912 = vmatpush.bf16.msra.mxu0 %v7484
    %7913 = vmatpush.bf16.msra.mxu0 %v7480
    %7914 = vmatpush.bf16.msra.mxu0 %v7476
    %7915 = vmatpush.bf16.msra.mxu0 %v7472
    %7916 = vmatmul.bf16.gmra.mxu0 %v6306
    %v7917 = vpop.f32.mrf.mxu0
    %v7918 = vadd.f32 %v7905, %v7917
    %v7919 = vpop.f32.mrf.mxu0
    %7920 = vdwg.mxu0
    %7921 = vmatpush.bf16.msra.mxu0 %v7532
    %7922 = vmatpush.bf16.msra.mxu0 %v7528
    %7923 = vmatpush.bf16.msra.mxu0 %v7524
    %7924 = vmatpush.bf16.msra.mxu0 %v7520
    %7925 = vmatpush.bf16.msra.mxu0 %v7516
    %7926 = vmatpush.bf16.msra.mxu0 %v7512
    %7927 = vmatpush.bf16.msra.mxu0 %v7508
    %7928 = vmatpush.bf16.msra.mxu0 %v7504
    %7929 = vmatmul.bf16.gmra.mxu0 %v6307
    %v7930 = vpop.f32.mrf.mxu0
    %v7931 = vadd.f32 %v7918, %v7930
    %v7932 = vpop.f32.mrf.mxu0
    %7933 = vdwg.mxu0
    %7934 = vmatpush.bf16.msra.mxu0 %v7564
    %7935 = vmatpush.bf16.msra.mxu0 %v7560
    %7936 = vmatpush.bf16.msra.mxu0 %v7556
    %7937 = vmatpush.bf16.msra.mxu0 %v7552
    %7938 = vmatpush.bf16.msra.mxu0 %v7548
    %7939 = vmatpush.bf16.msra.mxu0 %v7544
    %7940 = vmatpush.bf16.msra.mxu0 %v7540
    %7941 = vmatpush.bf16.msra.mxu0 %v7536
    %7942 = vmatmul.bf16.gmra.mxu0 %v6308
    %v7943 = vpop.f32.mrf.mxu0
    %v7944 = vadd.f32 %v7931, %v7943
    %v7945 = vpop.f32.mrf.mxu0
    %7946 = vdwg.mxu0
    %7947 = vmatpush.bf16.msra.mxu0 %v7596
    %7948 = vmatpush.bf16.msra.mxu0 %v7592
    %7949 = vmatpush.bf16.msra.mxu0 %v7588
    %7950 = vmatpush.bf16.msra.mxu0 %v7584
    %7951 = vmatpush.bf16.msra.mxu0 %v7580
    %7952 = vmatpush.bf16.msra.mxu0 %v7576
    %7953 = vmatpush.bf16.msra.mxu0 %v7572
    %7954 = vmatpush.bf16.msra.mxu0 %v7568
    %7955 = vmatmul.bf16.gmra.mxu0 %v6309
    %v7956 = vpop.f32.mrf.mxu0
    %v7957 = vadd.f32 %v7944, %v7956
    %v7958 = vpop.f32.mrf.mxu0
    %7959 = vdwg.mxu0
    %7960 = vmatpush.bf16.msra.mxu0 %v7373
    %7961 = vmatpush.bf16.msra.mxu0 %v7369
    %7962 = vmatpush.bf16.msra.mxu0 %v7365
    %7963 = vmatpush.bf16.msra.mxu0 %v7361
    %7964 = vmatpush.bf16.msra.mxu0 %v7357
    %7965 = vmatpush.bf16.msra.mxu0 %v7353
    %7966 = vmatpush.bf16.msra.mxu0 %v7349
    %7967 = vmatpush.bf16.msra.mxu0 %v7345
    %7968 = vmatmul.bf16.gmra.mxu0 %v6302
    %v7969 = vpop.f32.mrf.mxu0
    %v7970 = vadd.f32 %v6569, %v7969
    %v7971 = vpop.f32.mrf.mxu0
    %7972 = vdwg.mxu0
    %7973 = vmatpush.bf16.msra.mxu0 %v7405
    %7974 = vmatpush.bf16.msra.mxu0 %v7401
    %7975 = vmatpush.bf16.msra.mxu0 %v7397
    %7976 = vmatpush.bf16.msra.mxu0 %v7393
    %7977 = vmatpush.bf16.msra.mxu0 %v7389
    %7978 = vmatpush.bf16.msra.mxu0 %v7385
    %7979 = vmatpush.bf16.msra.mxu0 %v7381
    %7980 = vmatpush.bf16.msra.mxu0 %v7377
    %7981 = vmatmul.bf16.gmra.mxu0 %v6303
    %v7982 = vpop.f32.mrf.mxu0
    %v7983 = vadd.f32 %v7970, %v7982
    %v7984 = vpop.f32.mrf.mxu0
    %7985 = vdwg.mxu0
    %7986 = vmatpush.bf16.msra.mxu0 %v7437
    %7987 = vmatpush.bf16.msra.mxu0 %v7433
    %7988 = vmatpush.bf16.msra.mxu0 %v7429
    %7989 = vmatpush.bf16.msra.mxu0 %v7425
    %7990 = vmatpush.bf16.msra.mxu0 %v7421
    %7991 = vmatpush.bf16.msra.mxu0 %v7417
    %7992 = vmatpush.bf16.msra.mxu0 %v7413
    %7993 = vmatpush.bf16.msra.mxu0 %v7409
    %7994 = vmatmul.bf16.gmra.mxu0 %v6304
    %v7995 = vpop.f32.mrf.mxu0
    %v7996 = vadd.f32 %v7983, %v7995
    %v7997 = vpop.f32.mrf.mxu0
    %7998 = vdwg.mxu0
    %7999 = vmatpush.bf16.msra.mxu0 %v7469
    %8000 = vmatpush.bf16.msra.mxu0 %v7465
    %8001 = vmatpush.bf16.msra.mxu0 %v7461
    %8002 = vmatpush.bf16.msra.mxu0 %v7457
    %8003 = vmatpush.bf16.msra.mxu0 %v7453
    %8004 = vmatpush.bf16.msra.mxu0 %v7449
    %8005 = vmatpush.bf16.msra.mxu0 %v7445
    %8006 = vmatpush.bf16.msra.mxu0 %v7441
    %8007 = vmatmul.bf16.gmra.mxu0 %v6305
    %v8008 = vpop.f32.mrf.mxu0
    %v8009 = vadd.f32 %v7996, %v8008
    %v8010 = vpop.f32.mrf.mxu0
    %8011 = vdwg.mxu0
    %8012 = vmatpush.bf16.msra.mxu0 %v7501
    %8013 = vmatpush.bf16.msra.mxu0 %v7497
    %8014 = vmatpush.bf16.msra.mxu0 %v7493
    %8015 = vmatpush.bf16.msra.mxu0 %v7489
    %8016 = vmatpush.bf16.msra.mxu0 %v7485
    %8017 = vmatpush.bf16.msra.mxu0 %v7481
    %8018 = vmatpush.bf16.msra.mxu0 %v7477
    %8019 = vmatpush.bf16.msra.mxu0 %v7473
    %8020 = vmatmul.bf16.gmra.mxu0 %v6306
    %v8021 = vpop.f32.mrf.mxu0
    %v8022 = vadd.f32 %v8009, %v8021
    %v8023 = vpop.f32.mrf.mxu0
    %8024 = vdwg.mxu0
    %8025 = vmatpush.bf16.msra.mxu0 %v7533
    %8026 = vmatpush.bf16.msra.mxu0 %v7529
    %8027 = vmatpush.bf16.msra.mxu0 %v7525
    %8028 = vmatpush.bf16.msra.mxu0 %v7521
    %8029 = vmatpush.bf16.msra.mxu0 %v7517
    %8030 = vmatpush.bf16.msra.mxu0 %v7513
    %8031 = vmatpush.bf16.msra.mxu0 %v7509
    %8032 = vmatpush.bf16.msra.mxu0 %v7505
    %8033 = vmatmul.bf16.gmra.mxu0 %v6307
    %v8034 = vpop.f32.mrf.mxu0
    %v8035 = vadd.f32 %v8022, %v8034
    %v8036 = vpop.f32.mrf.mxu0
    %8037 = vdwg.mxu0
    %8038 = vmatpush.bf16.msra.mxu0 %v7565
    %8039 = vmatpush.bf16.msra.mxu0 %v7561
    %8040 = vmatpush.bf16.msra.mxu0 %v7557
    %8041 = vmatpush.bf16.msra.mxu0 %v7553
    %8042 = vmatpush.bf16.msra.mxu0 %v7549
    %8043 = vmatpush.bf16.msra.mxu0 %v7545
    %8044 = vmatpush.bf16.msra.mxu0 %v7541
    %8045 = vmatpush.bf16.msra.mxu0 %v7537
    %8046 = vmatmul.bf16.gmra.mxu0 %v6308
    %v8047 = vpop.f32.mrf.mxu0
    %v8048 = vadd.f32 %v8035, %v8047
    %v8049 = vpop.f32.mrf.mxu0
    %8050 = vdwg.mxu0
    %8051 = vmatpush.bf16.msra.mxu0 %v7597
    %8052 = vmatpush.bf16.msra.mxu0 %v7593
    %8053 = vmatpush.bf16.msra.mxu0 %v7589
    %8054 = vmatpush.bf16.msra.mxu0 %v7585
    %8055 = vmatpush.bf16.msra.mxu0 %v7581
    %8056 = vmatpush.bf16.msra.mxu0 %v7577
    %8057 = vmatpush.bf16.msra.mxu0 %v7573
    %8058 = vmatpush.bf16.msra.mxu0 %v7569
    %8059 = vmatmul.bf16.gmra.mxu0 %v6309
    %v8060 = vpop.f32.mrf.mxu0
    %v8061 = vadd.f32 %v8048, %v8060
    %v8062 = vpop.f32.mrf.mxu0
    %8063 = vdwg.mxu0
    %8064 = vmatpush.bf16.msra.mxu0 %v7374
    %8065 = vmatpush.bf16.msra.mxu0 %v7370
    %8066 = vmatpush.bf16.msra.mxu0 %v7366
    %8067 = vmatpush.bf16.msra.mxu0 %v7362
    %8068 = vmatpush.bf16.msra.mxu0 %v7358
    %8069 = vmatpush.bf16.msra.mxu0 %v7354
    %8070 = vmatpush.bf16.msra.mxu0 %v7350
    %8071 = vmatpush.bf16.msra.mxu0 %v7346
    %8072 = vmatmul.bf16.gmra.mxu0 %v6302
    %v8073 = vpop.f32.mrf.mxu0
    %v8074 = vadd.f32 %v6570, %v8073
    %v8075 = vpop.f32.mrf.mxu0
    %8076 = vdwg.mxu0
    %8077 = vmatpush.bf16.msra.mxu0 %v7406
    %8078 = vmatpush.bf16.msra.mxu0 %v7402
    %8079 = vmatpush.bf16.msra.mxu0 %v7398
    %8080 = vmatpush.bf16.msra.mxu0 %v7394
    %8081 = vmatpush.bf16.msra.mxu0 %v7390
    %8082 = vmatpush.bf16.msra.mxu0 %v7386
    %8083 = vmatpush.bf16.msra.mxu0 %v7382
    %8084 = vmatpush.bf16.msra.mxu0 %v7378
    %8085 = vmatmul.bf16.gmra.mxu0 %v6303
    %v8086 = vpop.f32.mrf.mxu0
    %v8087 = vadd.f32 %v8074, %v8086
    %v8088 = vpop.f32.mrf.mxu0
    %8089 = vdwg.mxu0
    %8090 = vmatpush.bf16.msra.mxu0 %v7438
    %8091 = vmatpush.bf16.msra.mxu0 %v7434
    %8092 = vmatpush.bf16.msra.mxu0 %v7430
    %8093 = vmatpush.bf16.msra.mxu0 %v7426
    %8094 = vmatpush.bf16.msra.mxu0 %v7422
    %8095 = vmatpush.bf16.msra.mxu0 %v7418
    %8096 = vmatpush.bf16.msra.mxu0 %v7414
    %8097 = vmatpush.bf16.msra.mxu0 %v7410
    %8098 = vmatmul.bf16.gmra.mxu0 %v6304
    %v8099 = vpop.f32.mrf.mxu0
    %v8100 = vadd.f32 %v8087, %v8099
    %v8101 = vpop.f32.mrf.mxu0
    %8102 = vdwg.mxu0
    %8103 = vmatpush.bf16.msra.mxu0 %v7470
    %8104 = vmatpush.bf16.msra.mxu0 %v7466
    %8105 = vmatpush.bf16.msra.mxu0 %v7462
    %8106 = vmatpush.bf16.msra.mxu0 %v7458
    %8107 = vmatpush.bf16.msra.mxu0 %v7454
    %8108 = vmatpush.bf16.msra.mxu0 %v7450
    %8109 = vmatpush.bf16.msra.mxu0 %v7446
    %8110 = vmatpush.bf16.msra.mxu0 %v7442
    %8111 = vmatmul.bf16.gmra.mxu0 %v6305
    %v8112 = vpop.f32.mrf.mxu0
    %v8113 = vadd.f32 %v8100, %v8112
    %v8114 = vpop.f32.mrf.mxu0
    %8115 = vdwg.mxu0
    %8116 = vmatpush.bf16.msra.mxu0 %v7502
    %8117 = vmatpush.bf16.msra.mxu0 %v7498
    %8118 = vmatpush.bf16.msra.mxu0 %v7494
    %8119 = vmatpush.bf16.msra.mxu0 %v7490
    %8120 = vmatpush.bf16.msra.mxu0 %v7486
    %8121 = vmatpush.bf16.msra.mxu0 %v7482
    %8122 = vmatpush.bf16.msra.mxu0 %v7478
    %8123 = vmatpush.bf16.msra.mxu0 %v7474
    %8124 = vmatmul.bf16.gmra.mxu0 %v6306
    %v8125 = vpop.f32.mrf.mxu0
    %v8126 = vadd.f32 %v8113, %v8125
    %v8127 = vpop.f32.mrf.mxu0
    %8128 = vdwg.mxu0
    %8129 = vmatpush.bf16.msra.mxu0 %v7534
    %8130 = vmatpush.bf16.msra.mxu0 %v7530
    %8131 = vmatpush.bf16.msra.mxu0 %v7526
    %8132 = vmatpush.bf16.msra.mxu0 %v7522
    %8133 = vmatpush.bf16.msra.mxu0 %v7518
    %8134 = vmatpush.bf16.msra.mxu0 %v7514
    %8135 = vmatpush.bf16.msra.mxu0 %v7510
    %8136 = vmatpush.bf16.msra.mxu0 %v7506
    %8137 = vmatmul.bf16.gmra.mxu0 %v6307
    %v8138 = vpop.f32.mrf.mxu0
    %v8139 = vadd.f32 %v8126, %v8138
    %v8140 = vpop.f32.mrf.mxu0
    %8141 = vdwg.mxu0
    %8142 = vmatpush.bf16.msra.mxu0 %v7566
    %8143 = vmatpush.bf16.msra.mxu0 %v7562
    %8144 = vmatpush.bf16.msra.mxu0 %v7558
    %8145 = vmatpush.bf16.msra.mxu0 %v7554
    %8146 = vmatpush.bf16.msra.mxu0 %v7550
    %8147 = vmatpush.bf16.msra.mxu0 %v7546
    %8148 = vmatpush.bf16.msra.mxu0 %v7542
    %8149 = vmatpush.bf16.msra.mxu0 %v7538
    %8150 = vmatmul.bf16.gmra.mxu0 %v6308
    %v8151 = vpop.f32.mrf.mxu0
    %v8152 = vadd.f32 %v8139, %v8151
    %v8153 = vpop.f32.mrf.mxu0
    %8154 = vdwg.mxu0
    %8155 = vmatpush.bf16.msra.mxu0 %v7598
    %8156 = vmatpush.bf16.msra.mxu0 %v7594
    %8157 = vmatpush.bf16.msra.mxu0 %v7590
    %8158 = vmatpush.bf16.msra.mxu0 %v7586
    %8159 = vmatpush.bf16.msra.mxu0 %v7582
    %8160 = vmatpush.bf16.msra.mxu0 %v7578
    %8161 = vmatpush.bf16.msra.mxu0 %v7574
    %8162 = vmatpush.bf16.msra.mxu0 %v7570
    %8163 = vmatmul.bf16.gmra.mxu0 %v6309
    %v8164 = vpop.f32.mrf.mxu0
    %v8165 = vadd.f32 %v8152, %v8164
    %v8166 = vpop.f32.mrf.mxu0
    %8167 = vdwg.mxu0
    %8168 = vmatpush.bf16.msra.mxu0 %v7375
    %8169 = vmatpush.bf16.msra.mxu0 %v7371
    %8170 = vmatpush.bf16.msra.mxu0 %v7367
    %8171 = vmatpush.bf16.msra.mxu0 %v7363
    %8172 = vmatpush.bf16.msra.mxu0 %v7359
    %8173 = vmatpush.bf16.msra.mxu0 %v7355
    %8174 = vmatpush.bf16.msra.mxu0 %v7351
    %8175 = vmatpush.bf16.msra.mxu0 %v7347
    %8176 = vmatmul.bf16.gmra.mxu0 %v6302
    %v8177 = vpop.f32.mrf.mxu0
    %v8178 = vadd.f32 %v6571, %v8177
    %v8179 = vpop.f32.mrf.mxu0
    %8180 = vdwg.mxu0
    %8181 = vmatpush.bf16.msra.mxu0 %v7407
    %8182 = vmatpush.bf16.msra.mxu0 %v7403
    %8183 = vmatpush.bf16.msra.mxu0 %v7399
    %8184 = vmatpush.bf16.msra.mxu0 %v7395
    %8185 = vmatpush.bf16.msra.mxu0 %v7391
    %8186 = vmatpush.bf16.msra.mxu0 %v7387
    %8187 = vmatpush.bf16.msra.mxu0 %v7383
    %8188 = vmatpush.bf16.msra.mxu0 %v7379
    %8189 = vmatmul.bf16.gmra.mxu0 %v6303
    %v8190 = vpop.f32.mrf.mxu0
    %v8191 = vadd.f32 %v8178, %v8190
    %v8192 = vpop.f32.mrf.mxu0
    %8193 = vdwg.mxu0
    %8194 = vmatpush.bf16.msra.mxu0 %v7439
    %8195 = vmatpush.bf16.msra.mxu0 %v7435
    %8196 = vmatpush.bf16.msra.mxu0 %v7431
    %8197 = vmatpush.bf16.msra.mxu0 %v7427
    %8198 = vmatpush.bf16.msra.mxu0 %v7423
    %8199 = vmatpush.bf16.msra.mxu0 %v7419
    %8200 = vmatpush.bf16.msra.mxu0 %v7415
    %8201 = vmatpush.bf16.msra.mxu0 %v7411
    %8202 = vmatmul.bf16.gmra.mxu0 %v6304
    %v8203 = vpop.f32.mrf.mxu0
    %v8204 = vadd.f32 %v8191, %v8203
    %v8205 = vpop.f32.mrf.mxu0
    %8206 = vdwg.mxu0
    %8207 = vmatpush.bf16.msra.mxu0 %v7471
    %8208 = vmatpush.bf16.msra.mxu0 %v7467
    %8209 = vmatpush.bf16.msra.mxu0 %v7463
    %8210 = vmatpush.bf16.msra.mxu0 %v7459
    %8211 = vmatpush.bf16.msra.mxu0 %v7455
    %8212 = vmatpush.bf16.msra.mxu0 %v7451
    %8213 = vmatpush.bf16.msra.mxu0 %v7447
    %8214 = vmatpush.bf16.msra.mxu0 %v7443
    %8215 = vmatmul.bf16.gmra.mxu0 %v6305
    %v8216 = vpop.f32.mrf.mxu0
    %v8217 = vadd.f32 %v8204, %v8216
    %v8218 = vpop.f32.mrf.mxu0
    %8219 = vdwg.mxu0
    %8220 = vmatpush.bf16.msra.mxu0 %v7503
    %8221 = vmatpush.bf16.msra.mxu0 %v7499
    %8222 = vmatpush.bf16.msra.mxu0 %v7495
    %8223 = vmatpush.bf16.msra.mxu0 %v7491
    %8224 = vmatpush.bf16.msra.mxu0 %v7487
    %8225 = vmatpush.bf16.msra.mxu0 %v7483
    %8226 = vmatpush.bf16.msra.mxu0 %v7479
    %8227 = vmatpush.bf16.msra.mxu0 %v7475
    %8228 = vmatmul.bf16.gmra.mxu0 %v6306
    %v8229 = vpop.f32.mrf.mxu0
    %v8230 = vadd.f32 %v8217, %v8229
    %v8231 = vpop.f32.mrf.mxu0
    %8232 = vdwg.mxu0
    %8233 = vmatpush.bf16.msra.mxu0 %v7535
    %8234 = vmatpush.bf16.msra.mxu0 %v7531
    %8235 = vmatpush.bf16.msra.mxu0 %v7527
    %8236 = vmatpush.bf16.msra.mxu0 %v7523
    %8237 = vmatpush.bf16.msra.mxu0 %v7519
    %8238 = vmatpush.bf16.msra.mxu0 %v7515
    %8239 = vmatpush.bf16.msra.mxu0 %v7511
    %8240 = vmatpush.bf16.msra.mxu0 %v7507
    %8241 = vmatmul.bf16.gmra.mxu0 %v6307
    %v8242 = vpop.f32.mrf.mxu0
    %v8243 = vadd.f32 %v8230, %v8242
    %v8244 = vpop.f32.mrf.mxu0
    %8245 = vdwg.mxu0
    %8246 = vmatpush.bf16.msra.mxu0 %v7567
    %8247 = vmatpush.bf16.msra.mxu0 %v7563
    %8248 = vmatpush.bf16.msra.mxu0 %v7559
    %8249 = vmatpush.bf16.msra.mxu0 %v7555
    %8250 = vmatpush.bf16.msra.mxu0 %v7551
    %8251 = vmatpush.bf16.msra.mxu0 %v7547
    %8252 = vmatpush.bf16.msra.mxu0 %v7543
    %8253 = vmatpush.bf16.msra.mxu0 %v7539
    %8254 = vmatmul.bf16.gmra.mxu0 %v6308
    %v8255 = vpop.f32.mrf.mxu0
    %v8256 = vadd.f32 %v8243, %v8255
    %v8257 = vpop.f32.mrf.mxu0
    %8258 = vdwg.mxu0
    %8259 = vmatpush.bf16.msra.mxu0 %v7599
    %8260 = vmatpush.bf16.msra.mxu0 %v7595
    %8261 = vmatpush.bf16.msra.mxu0 %v7591
    %8262 = vmatpush.bf16.msra.mxu0 %v7587
    %8263 = vmatpush.bf16.msra.mxu0 %v7583
    %8264 = vmatpush.bf16.msra.mxu0 %v7579
    %8265 = vmatpush.bf16.msra.mxu0 %v7575
    %8266 = vmatpush.bf16.msra.mxu0 %v7571
    %8267 = vmatmul.bf16.gmra.mxu0 %v6309
    %v8268 = vpop.f32.mrf.mxu0
    %v8269 = vadd.f32 %v8256, %v8268
    %v8270 = vpop.f32.mrf.mxu0
    %8271 = vdwg.mxu0
    %v8272 = vmax.f32 %v7957, 0.0
    %v8273 = vmax.f32 %v8061, 0.0
    %v8274 = vmax.f32 %v8165, 0.0
    %v8275 = vmax.f32 %v8269, 0.0
    %v8276 = vpack.c.bf16 %v8272, %v8272
    %v8277 = vpack.c.bf16 %v8273, %v8273
    %v8278 = vpack.c.bf16 %v8274, %v8274
    %v8279 = vpack.c.bf16 %v8275, %v8275
    %v8280 = vld [vmem:[#allocation40] sm:$0xf]
    %v8281 = vld [vmem:[#allocation40 + $0x4] sm:$0xf]
    %v8282 = vld [vmem:[#allocation40 + $0x8] sm:$0xf]
    %v8283 = vld [vmem:[#allocation40 + $0xc] sm:$0xf]
    %v8284 = vld [vmem:[#allocation40 + $0x10] sm:$0xf]
    %v8285 = vld [vmem:[#allocation40 + $0x14] sm:$0xf]
    %v8286 = vld [vmem:[#allocation40 + $0x18] sm:$0xf]
    %v8287 = vld [vmem:[#allocation40 + $0x1c] sm:$0xf]
    %v8288 = vld [vmem:[#allocation40 + $0x20] sm:$0xf]
    %v8289 = vld [vmem:[#allocation40 + $0x24] sm:$0xf]
    %v8290 = vld [vmem:[#allocation40 + $0x28] sm:$0xf]
    %v8291 = vld [vmem:[#allocation40 + $0x2c] sm:$0xf]
    %v8292 = vld [vmem:[#allocation40 + $0x30] sm:$0xf]
    %v8293 = vld [vmem:[#allocation40 + $0x34] sm:$0xf]
    %v8294 = vld [vmem:[#allocation40 + $0x38] sm:$0xf]
    %v8295 = vld [vmem:[#allocation40 + $0x3c] sm:$0xf]
    %v8296 = vld [vmem:[#allocation40 + $0x40] sm:$0xf]
    %v8297 = vld [vmem:[#allocation40 + $0x44] sm:$0xf]
    %v8298 = vld [vmem:[#allocation40 + $0x48] sm:$0xf]
    %v8299 = vld [vmem:[#allocation40 + $0x4c] sm:$0xf]
    %v8300 = vld [vmem:[#allocation40 + $0x50] sm:$0xf]
    %v8301 = vld [vmem:[#allocation40 + $0x54] sm:$0xf]
    %v8302 = vld [vmem:[#allocation40 + $0x58] sm:$0xf]
    %v8303 = vld [vmem:[#allocation40 + $0x5c] sm:$0xf]
    %v8304 = vld [vmem:[#allocation40 + $0x60] sm:$0xf]
    %v8305 = vld [vmem:[#allocation40 + $0x64] sm:$0xf]
    %v8306 = vld [vmem:[#allocation40 + $0x68] sm:$0xf]
    %v8307 = vld [vmem:[#allocation40 + $0x6c] sm:$0xf]
    %v8308 = vld [vmem:[#allocation40 + $0x70] sm:$0xf]
    %v8309 = vld [vmem:[#allocation40 + $0x74] sm:$0xf]
    %v8310 = vld [vmem:[#allocation40 + $0x78] sm:$0xf]
    %v8311 = vld [vmem:[#allocation40 + $0x7c] sm:$0xf]
    %v8312 = vld [vmem:[#allocation40 + $0x80] sm:$0xf]
    %v8313 = vld [vmem:[#allocation40 + $0x84] sm:$0xf]
    %v8314 = vld [vmem:[#allocation40 + $0x88] sm:$0xf]
    %v8315 = vld [vmem:[#allocation40 + $0x8c] sm:$0xf]
    %v8316 = vld [vmem:[#allocation40 + $0x90] sm:$0xf]
    %v8317 = vld [vmem:[#allocation40 + $0x94] sm:$0xf]
    %v8318 = vld [vmem:[#allocation40 + $0x98] sm:$0xf]
    %v8319 = vld [vmem:[#allocation40 + $0x9c] sm:$0xf]
    %v8320 = vld [vmem:[#allocation40 + $0xa0] sm:$0xf]
    %v8321 = vld [vmem:[#allocation40 + $0xa4] sm:$0xf]
    %v8322 = vld [vmem:[#allocation40 + $0xa8] sm:$0xf]
    %v8323 = vld [vmem:[#allocation40 + $0xac] sm:$0xf]
    %v8324 = vld [vmem:[#allocation40 + $0xb0] sm:$0xf]
    %v8325 = vld [vmem:[#allocation40 + $0xb4] sm:$0xf]
    %v8326 = vld [vmem:[#allocation40 + $0xb8] sm:$0xf]
    %v8327 = vld [vmem:[#allocation40 + $0xbc] sm:$0xf]
    %v8328 = vld [vmem:[#allocation40 + $0xc0] sm:$0xf]
    %v8329 = vld [vmem:[#allocation40 + $0xc4] sm:$0xf]
    %v8330 = vld [vmem:[#allocation40 + $0xc8] sm:$0xf]
    %v8331 = vld [vmem:[#allocation40 + $0xcc] sm:$0xf]
    %v8332 = vld [vmem:[#allocation40 + $0xd0] sm:$0xf]
    %v8333 = vld [vmem:[#allocation40 + $0xd4] sm:$0xf]
    %v8334 = vld [vmem:[#allocation40 + $0xd8] sm:$0xf]
    %v8335 = vld [vmem:[#allocation40 + $0xdc] sm:$0xf]
    %v8336 = vld [vmem:[#allocation40 + $0xe0] sm:$0xf]
    %v8337 = vld [vmem:[#allocation40 + $0xe4] sm:$0xf]
    %v8338 = vld [vmem:[#allocation40 + $0xe8] sm:$0xf]
    %v8339 = vld [vmem:[#allocation40 + $0xec] sm:$0xf]
    %v8340 = vld [vmem:[#allocation40 + $0xf0] sm:$0xf]
    %v8341 = vld [vmem:[#allocation40 + $0xf4] sm:$0xf]
    %v8342 = vld [vmem:[#allocation40 + $0xf8] sm:$0xf]
    %v8343 = vld [vmem:[#allocation40 + $0xfc] sm:$0xf]
    %v8344 = vld [vmem:[#allocation41] sm:$0x1]
    %v8346 = vperm.slane %v8344, 0
    %v8412 = vunpack.c.l.b16 %v8280
    %v8413 = vunpack.c.l.b16 %v8281
    %v8414 = vunpack.c.l.b16 %v8282
    %v8415 = vunpack.c.l.b16 %v8283
    %v8416 = vunpack.c.l.b16 %v8284
    %v8417 = vunpack.c.l.b16 %v8285
    %v8418 = vunpack.c.l.b16 %v8286
    %v8419 = vunpack.c.l.b16 %v8287
    %v8420 = vunpack.c.l.b16 %v8288
    %v8421 = vunpack.c.l.b16 %v8289
    %v8422 = vunpack.c.l.b16 %v8290
    %v8423 = vunpack.c.l.b16 %v8291
    %v8424 = vunpack.c.l.b16 %v8292
    %v8425 = vunpack.c.l.b16 %v8293
    %v8426 = vunpack.c.l.b16 %v8294
    %v8427 = vunpack.c.l.b16 %v8295
    %v8428 = vunpack.c.l.b16 %v8296
    %v8429 = vunpack.c.l.b16 %v8297
    %v8430 = vunpack.c.l.b16 %v8298
    %v8431 = vunpack.c.l.b16 %v8299
    %v8432 = vunpack.c.l.b16 %v8300
    %v8433 = vunpack.c.l.b16 %v8301
    %v8434 = vunpack.c.l.b16 %v8302
    %v8435 = vunpack.c.l.b16 %v8303
    %v8436 = vunpack.c.l.b16 %v8304
    %v8437 = vunpack.c.l.b16 %v8305
    %v8438 = vunpack.c.l.b16 %v8306
    %v8439 = vunpack.c.l.b16 %v8307
    %v8440 = vunpack.c.l.b16 %v8308
    %v8441 = vunpack.c.l.b16 %v8309
    %v8442 = vunpack.c.l.b16 %v8310
    %v8443 = vunpack.c.l.b16 %v8311
    %v8444 = vunpack.c.l.b16 %v8312
    %v8445 = vunpack.c.l.b16 %v8313
    %v8446 = vunpack.c.l.b16 %v8314
    %v8447 = vunpack.c.l.b16 %v8315
    %v8448 = vunpack.c.l.b16 %v8316
    %v8449 = vunpack.c.l.b16 %v8317
    %v8450 = vunpack.c.l.b16 %v8318
    %v8451 = vunpack.c.l.b16 %v8319
    %v8452 = vunpack.c.l.b16 %v8320
    %v8453 = vunpack.c.l.b16 %v8321
    %v8454 = vunpack.c.l.b16 %v8322
    %v8455 = vunpack.c.l.b16 %v8323
    %v8456 = vunpack.c.l.b16 %v8324
    %v8457 = vunpack.c.l.b16 %v8325
    %v8458 = vunpack.c.l.b16 %v8326
    %v8459 = vunpack.c.l.b16 %v8327
    %v8460 = vunpack.c.l.b16 %v8328
    %v8461 = vunpack.c.l.b16 %v8329
    %v8462 = vunpack.c.l.b16 %v8330
    %v8463 = vunpack.c.l.b16 %v8331
    %v8464 = vunpack.c.l.b16 %v8332
    %v8465 = vunpack.c.l.b16 %v8333
    %v8466 = vunpack.c.l.b16 %v8334
    %v8467 = vunpack.c.l.b16 %v8335
    %v8468 = vunpack.c.l.b16 %v8336
    %v8469 = vunpack.c.l.b16 %v8337
    %v8470 = vunpack.c.l.b16 %v8338
    %v8471 = vunpack.c.l.b16 %v8339
    %v8472 = vunpack.c.l.b16 %v8340
    %v8473 = vunpack.c.l.b16 %v8341
    %v8474 = vunpack.c.l.b16 %v8342
    %v8475 = vunpack.c.l.b16 %v8343
    %v8476 = vpack.c.b16 %v8413, %v8412
    %v8477 = vpack.c.b16 %v8415, %v8414
    %v8478 = vpack.c.b16 %v8417, %v8416
    %v8479 = vpack.c.b16 %v8419, %v8418
    %v8480 = vpack.c.b16 %v8421, %v8420
    %v8481 = vpack.c.b16 %v8423, %v8422
    %v8482 = vpack.c.b16 %v8425, %v8424
    %v8483 = vpack.c.b16 %v8427, %v8426
    %v8484 = vpack.c.b16 %v8429, %v8428
    %v8485 = vpack.c.b16 %v8431, %v8430
    %v8486 = vpack.c.b16 %v8433, %v8432
    %v8487 = vpack.c.b16 %v8435, %v8434
    %v8488 = vpack.c.b16 %v8437, %v8436
    %v8489 = vpack.c.b16 %v8439, %v8438
    %v8490 = vpack.c.b16 %v8441, %v8440
    %v8491 = vpack.c.b16 %v8443, %v8442
    %v8492 = vpack.c.b16 %v8445, %v8444
    %v8493 = vpack.c.b16 %v8447, %v8446
    %v8494 = vpack.c.b16 %v8449, %v8448
    %v8495 = vpack.c.b16 %v8451, %v8450
    %v8496 = vpack.c.b16 %v8453, %v8452
    %v8497 = vpack.c.b16 %v8455, %v8454
    %v8498 = vpack.c.b16 %v8457, %v8456
    %v8499 = vpack.c.b16 %v8459, %v8458
    %v8500 = vpack.c.b16 %v8461, %v8460
    %v8501 = vpack.c.b16 %v8463, %v8462
    %v8502 = vpack.c.b16 %v8465, %v8464
    %v8503 = vpack.c.b16 %v8467, %v8466
    %v8504 = vpack.c.b16 %v8469, %v8468
    %v8505 = vpack.c.b16 %v8471, %v8470
    %v8506 = vpack.c.b16 %v8473, %v8472
    %v8507 = vpack.c.b16 %v8475, %v8474
    %8540 = vmatpush.bf16.msra.mxu0 %v8483
    %8541 = vmatpush.bf16.msra.mxu0 %v8482
    %8542 = vmatpush.bf16.msra.mxu0 %v8481
    %8543 = vmatpush.bf16.msra.mxu0 %v8480
    %8544 = vmatpush.bf16.msra.mxu0 %v8479
    %8545 = vmatpush.bf16.msra.mxu0 %v8478
    %8546 = vmatpush.bf16.msra.mxu0 %v8477
    %8547 = vmatpush.bf16.msra.mxu0 %v8476
    %8548 = vmatmul.bf16.gmra.mxu0 %v8276
    %v8549 = vpop.f32.mrf.mxu0
    %v8550 = vadd.f32 %v8346, %v8549
    %v8551 = vpop.f32.mrf.mxu0
    %8552 = vdwg.mxu0
    %8553 = vmatpush.bf16.msra.mxu0 %v8491
    %8554 = vmatpush.bf16.msra.mxu0 %v8490
    %8555 = vmatpush.bf16.msra.mxu0 %v8489
    %8556 = vmatpush.bf16.msra.mxu0 %v8488
    %8557 = vmatpush.bf16.msra.mxu0 %v8487
    %8558 = vmatpush.bf16.msra.mxu0 %v8486
    %8559 = vmatpush.bf16.msra.mxu0 %v8485
    %8560 = vmatpush.bf16.msra.mxu0 %v8484
    %8561 = vmatmul.bf16.gmra.mxu0 %v8277
    %v8562 = vpop.f32.mrf.mxu0
    %v8563 = vadd.f32 %v8550, %v8562
    %v8564 = vpop.f32.mrf.mxu0
    %8565 = vdwg.mxu0
    %8566 = vmatpush.bf16.msra.mxu0 %v8499
    %8567 = vmatpush.bf16.msra.mxu0 %v8498
    %8568 = vmatpush.bf16.msra.mxu0 %v8497
    %8569 = vmatpush.bf16.msra.mxu0 %v8496
    %8570 = vmatpush.bf16.msra.mxu0 %v8495
    %8571 = vmatpush.bf16.msra.mxu0 %v8494
    %8572 = vmatpush.bf16.msra.mxu0 %v8493
    %8573 = vmatpush.bf16.msra.mxu0 %v8492
    %8574 = vmatmul.bf16.gmra.mxu0 %v8278
    %v8575 = vpop.f32.mrf.mxu0
    %v8576 = vadd.f32 %v8563, %v8575
    %v8577 = vpop.f32.mrf.mxu0
    %8578 = vdwg.mxu0
    %8579 = vmatpush.bf16.msra.mxu0 %v8507
    %8580 = vmatpush.bf16.msra.mxu0 %v8506
    %8581 = vmatpush.bf16.msra.mxu0 %v8505
    %8582 = vmatpush.bf16.msra.mxu0 %v8504
    %8583 = vmatpush.bf16.msra.mxu0 %v8503
    %8584 = vmatpush.bf16.msra.mxu0 %v8502
    %8585 = vmatpush.bf16.msra.mxu0 %v8501
    %8586 = vmatpush.bf16.msra.mxu0 %v8500
    %8587 = vmatmul.bf16.gmra.mxu0 %v8279
    %v8588 = vpop.f32.mrf.mxu0
    %v8589 = vadd.f32 %v8576, %v8588
    %v8590 = vpop.f32.mrf.mxu0
    %8591 = vdwg.mxu0
    %8592 = vst [vmem:[#allocation43] sm:$0x3] %v8589
    // Predicated region
    $region214: #{tpu_custom_call.1} parent=1 // pred_check
      _
    $region215: #{tpu_custom_call.1} parent=1 // pred_check_branch
      %8594 = sbr.rel (0) target = $region217
    $region216: #{tpu_custom_call.1} parent=1 // pred_region
      %8596 = vsyncadd [#allocation4], 0
      %s8598 = sshll.u32 [#allocation43], 4
      %s8599 = int_to_ptr.vmem [resolvable:$true] %s8598
      %s8600 = sshll.u32 %s27, 4
      %s8601 = int_to_ptr.hbm [resolvable:$true] %s8600
      %8603 = dma.vmem_to_hbm [thread:$0]  %s8599, 32, %s8601, [#allocation4]
    $region217: #{tpu_custom_call.1} parent=1 // pred_fallthru
      _
    // Predicated region
    $region218: #{tpu_custom_call.1} parent=1 // pred_check
      _
    $region219: #{tpu_custom_call.1} parent=1 // pred_check_branch
      %8605 = sbr.rel (0) target = $region221
    $region220: #{tpu_custom_call.1} parent=1 // pred_region
      %8607 = dma.done [#allocation4], 32
    $region221: #{tpu_custom_call.1} parent=1 // pred_fallthru
      _
    %8608 = vsyncpa [#allocation3], 1
    %8609 = vsyncpa [#allocation6], 1
    %8610 = vsyncpa [#allocation9], 1
    %8611 = vsyncpa [#allocation12], 1
    %8612 = vsyncpa [#allocation15], 1
    %8613 = vsyncpa [#allocation18], 1
    %8614 = vsyncpa [#allocation21], 1
    %8615 = vsyncpa [#allocation24], 1
    %8616 = vsyncpa [#allocation27], 1
    %8617 = vsyncpa [#allocation30], 1
    %8618 = vsyncpa [#allocation33], 1
    %8619 = vsyncpa [#allocation36], 1
    %8620 = vsyncpa [#allocation39], 1
    %8621 = vsyncpa [#allocation42], 1
    %8622 = vsyncpa [#allocation4], 1

</llo_original>
